<compile_context>
chip_gen: v6e
topology: v6e:2x2x1
jax: 0.10.0
libtpu: 0.0.40
codegen_flags: <defaults>
</compile_context>

<pallas_src>
import math
import numpy as np
import jax
import jax.numpy as jnp
from jax.experimental import pallas as pl
from jax.experimental.pallas import tpu as pltpu


def make_params(key, input_size, hidden_size, num_layers, freq_size):
    """Deterministic re-implementation of the module's reset_parameters()."""
    stdv = 1.0 / math.sqrt(hidden_size)

    def u(k, shape):
        return jax.random.uniform(k, shape, jnp.float32, -stdv, stdv)

    ks = jax.random.split(key, 12)
    return {
        "W_first_layer": u(ks[0], (6 * hidden_size, input_size + 2 * hidden_size)),
        "W_freq": u(ks[1], (2 * freq_size, input_size + 2 * hidden_size)),
        "B": u(ks[2], (num_layers, 6 * hidden_size)),
        "B_freq": u(ks[3], (num_layers, 2 * freq_size)),
        "row_c_w": u(ks[4], (1, freq_size)),
        "row_c_b": u(ks[5], (1,)),
        "col_c_w": u(ks[6], (1, freq_size)),
        "col_c_b": u(ks[7], (1,)),
        "row_o_w": u(ks[8], (hidden_size, hidden_size)),
        "row_o_b": u(ks[9], (hidden_size,)),
        "col_o_w": u(ks[10], (hidden_size, hidden_size)),
        "col_o_b": u(ks[11], (hidden_size,)),
        # omega is assigned after reset_parameters() in the module, so it keeps
        # its deterministic arange values.
        "omega": (2.0 * jnp.pi * jnp.arange(1, freq_size + 1, dtype=jnp.float32)
                  / freq_size)[None, :],
    }


def build_slices(x):
    """Water2sea slicing (input_transfer + time), pure glue."""
    B, row, col, In = x.shape
    if col > row:
        xp = jnp.transpose(x, (2, 0, 1, 3))
    else:
        xp = jnp.transpose(x, (1, 0, 2, 3))
    R, _, L, _ = xp.shape
    T = R + L - 1
    it = jnp.zeros((R, B, T, In), jnp.float32)
    tm = jnp.zeros((R, B, T), jnp.float32)
    for r in range(R):
        it = it.at[r, :, r:r + L, :].set(xp[r])
        tm = tm.at[r, :, r:r + L].set(
            jnp.broadcast_to(jnp.arange(r * L, (r + 1) * L, dtype=jnp.float32),
                             (B, L)))
    a = it.reshape(R * B, T, In)
    tm = tm.reshape(R * B, T)
    return a, tm, R, L, T


def witran_pallas(x, p, hidden_size, freq_size, num_layers=1):
    assert num_layers == 1
    B, row, col, In = x.shape
    H, F = hidden_size, freq_size
    FH = F * H
    G = 6 * H + 2 * F          # fused gate width
    SIGW = 4 * H + 2 * F       # sigmoid-activated region width

    a, tm, R, L, T = build_slices(x)
    RB = R * B

    # ------------------------------ glue precompute ------------------------
    # per-step time values, accounting for the per-step torch.roll of `time`
    cur = []
    tm_roll = tm
    for s in range(T):
        cur.append(tm_roll[:, s])
        tm_roll = jnp.roll(tm_roll, B, axis=0)
    cur = jnp.stack(cur, axis=0)                                   # (T, RB)

    # trig features pre-expanded to the packed (f*H + h) lane layout, packed
    # as one [cos | sin] input of width 2*F*H.
    omega_vec = p["omega"][0]
    phase = cur[:, :, None] * omega_vec[None, None, :]             # (T, RB, F)
    trig = jnp.concatenate(
        [jnp.repeat(jnp.cos(phase), H, axis=-1),
         jnp.repeat(jnp.sin(phase), H, axis=-1)], axis=-1)         # (T, RB, 2FH)

    a_k = jnp.transpose(a, (1, 0, 2))                              # (T, RB, In)

    # fused gate weight, columns [u_r | u_c | o_r | o_c | row_f | col_f | i_r | i_c]
    Wt = p["W_first_layer"].T                                      # (Din, 6H)
    Wft = p["W_freq"].T                                            # (Din, 2F)
    w_all = jnp.concatenate(
        [Wt[:, 0:H], Wt[:, 2 * H:3 * H], Wt[:, H:2 * H], Wt[:, 3 * H:4 * H],
         Wft, Wt[:, 4 * H:6 * H]], axis=1)                         # (Din, G)
    w_hh = w_all[:2 * H]                                           # (2H, G)
    w_in = w_all[2 * H:]                                           # (In, G)
    Bv, Bf = p["B"][0], p["B_freq"][0]
    b_all = jnp.concatenate(
        [Bv[0:H], Bv[2 * H:3 * H], Bv[H:2 * H], Bv[3 * H:4 * H], Bf,
         Bv[4 * H:6 * H]])                                         # (G,)

    # input projection + masked bias hoisted out of the kernel (one XLA matmul)
    t_idx = jnp.arange(T)[:, None]
    rb_idx = jnp.arange(RB)[None, :]
    bias_mask = ((t_idx < R) & (rb_idx < B * (t_idx + 1))).astype(jnp.float32)
    a_pre = (jnp.einsum('tri,ig->trg', a_k, w_in)
             + bias_mask[:, :, None] * b_all[None, None, :])       # (T, RB, G)

    # constant 0/1 expansion / tiling / fold matrices for the packed layout
    eyeH = jnp.eye(H, dtype=jnp.float32)
    exp_blk = jnp.kron(jnp.eye(F, dtype=jnp.float32),
                       jnp.ones((1, H), jnp.float32))              # (F, FH)
    expand_m = jnp.kron(jnp.eye(2, dtype=jnp.float32), exp_blk)    # (2F, 2FH)
    tile_blk = jnp.kron(jnp.ones((1, F), jnp.float32), eyeH)       # (H, FH)
    tile_m = jnp.kron(jnp.eye(4, dtype=jnp.float32), tile_blk)     # (4H, 4FH)
    fold_row = jnp.kron(p["row_c_w"][0][:, None], eyeH)            # (FH, H)
    fold_col = jnp.kron(p["col_c_w"][0][:, None], eyeH)
    zFH = jnp.zeros((FH, H), jnp.float32)
    fold_m = jnp.block([[fold_row, zFH], [zFH, fold_col]])         # (2FH, 2H)

    zH = jnp.zeros((H, H), jnp.float32)
    w_o = jnp.block([[p["row_o_w"].T, zH], [zH, p["col_o_w"].T]])  # (2H, 2H)
    b_o = jnp.concatenate([p["row_o_b"], p["col_o_b"]])[None, :]   # (1, 2H)
    c_bias = jnp.concatenate(
        [jnp.full((H,), p["row_c_b"][0]),
         jnp.full((H,), p["col_c_b"][0])])[None, :]                # (1, 2H)

    # time blocking: TS sequential steps per grid invocation
    TS = min(T, 16)
    n_blk = -(-T // TS)
    T_pad = n_blk * TS
    if T_pad > T:
        pad = ((0, T_pad - T), (0, 0), (0, 0))
        a_pre = jnp.pad(a_pre, pad)
        trig = jnp.pad(trig, pad)

    # ------------------------------ kernel ---------------------------------
    def kernel(a_ref, trig_ref, w_hh_ref, expand_ref, tile_ref, fold_ref,
               cbias_ref, wo_ref, bo_ref, out_ref,
               h_row, h_col, row_ri, col_ri):
        blk = pl.program_id(0)

        @pl.when(blk == 0)
        def _():
            h_row[...] = jnp.zeros_like(h_row)
            h_col[...] = jnp.zeros_like(h_col)
            row_ri[...] = jnp.full_like(row_ri, 0.1)
            col_ri[...] = jnp.full_like(col_ri, 0.1)

        # constants / broadcasts hoisted out of the unrolled time loop
        w_hh_v = w_hh_ref[...]
        expand_v = expand_ref[...]
        tile_v = tile_ref[...]
        fold_v = fold_ref[...]
        wo_v = wo_ref[...]
        cbias_rb = jnp.broadcast_to(cbias_ref[...], (RB, 2 * H))
        bo_rb = jnp.broadcast_to(bo_ref[...], (RB, 2 * H))

        for j in range(TS):                      # unrolled recurrence
            h_prev = jnp.concatenate([h_row[...], h_col[...]], axis=-1)
            pre = a_ref[j] + jnp.dot(h_prev, w_hh_v,
                                     preferred_element_type=jnp.float32)
            sig = jax.nn.sigmoid(pre[:, :SIGW])  # one wide sigmoid
            tnh = jnp.tanh(pre[:, SIGW:])        # (RB, 2H) = [i_r | i_c]

            u_pair = sig[:, :2 * H]              # [u_r | u_c]
            o_pair = sig[:, 2 * H:4 * H]         # [o_r | o_c]
            f_sig = sig[:, 4 * H:SIGW]           # [row_f | col_f]
            amp_pair = o_pair * tnh              # [o_r*i_r | o_c*i_c]

            # MXU-based expansion to the packed (f*H + h) layout
            fexp = jnp.dot(f_sig, expand_v, preferred_element_type=jnp.float32)
            uexp = jnp.dot(jnp.concatenate([u_pair, amp_pair], axis=-1),
                           tile_v, preferred_element_type=jnp.float32)
            rf_e, cf_e = fexp[:, :FH], fexp[:, FH:]
            u_r_t = uexp[:, 0:FH]
            u_c_t = uexp[:, FH:2 * FH]
            amp_r_t = uexp[:, 2 * FH:3 * FH]
            amp_c_t = uexp[:, 3 * FH:]

            trig_j = trig_ref[j]
            cos_e, sin_e = trig_j[:, :FH], trig_j[:, FH:]

            # lane-packed frequency-state update (full 128-lane vregs)
            row_v = row_ri[...]
            col_v = col_ri[...]
            row_ft = rf_e * u_r_t
            col_ft = cf_e * u_c_t
            n_row_re = row_ft * row_v[:, :FH] + amp_r_t * cos_e
            n_row_im = row_ft * row_v[:, FH:] + amp_r_t * sin_e
            n_col_re = col_ft * col_v[:, :FH] + amp_c_t * cos_e
            n_col_im = col_ft * col_v[:, FH:] + amp_c_t * sin_e

            row_a = n_row_re * n_row_re + n_row_im * n_row_im
            col_a = n_col_re * n_col_re + n_col_im * n_col_im

            # fused weighted F-reduction for row_c/col_c (one fold matmul)
            rc = jnp.tanh(
                jnp.dot(jnp.concatenate([row_a, col_a], axis=-1), fold_v,
                        preferred_element_type=jnp.float32) + cbias_rb)
            # fused block-diagonal output projection
            o_proj = jnp.dot(rc, wo_v, preferred_element_type=jnp.float32) + bo_rb
            new_h = jax.nn.sigmoid(
                (1.0 - u_pair) * h_prev + u_pair * tnh + o_proj) * rc

            out_ref[j] = new_h                   # merged [h_row | h_col] output

            # carry state; col-side state rolled by `batch` rows via whole-tile
            # slice writes along the sublane axis.
            h_row[...] = new_h[:, :H]
            row_ri[...] = jnp.concatenate([n_row_re, n_row_im], axis=-1)
            new_hc = new_h[:, H:]
            n_col = jnp.concatenate([n_col_re, n_col_im], axis=-1)
            if R > 1:
                h_col[pl.ds(0, B)] = new_hc[RB - B:]
                h_col[pl.ds(B, RB - B)] = new_hc[:RB - B]
                col_ri[pl.ds(0, B)] = n_col[RB - B:]
                col_ri[pl.ds(B, RB - B)] = n_col[:RB - B]
            else:
                h_col[...] = new_hc
                col_ri[...] = n_col

    grid_spec = pltpu.PrefetchScalarGridSpec(
        num_scalar_prefetch=0,
        grid=(n_blk,),
        in_specs=[
            pl.BlockSpec((TS, RB, G), lambda t: (t, 0, 0)),          # a_pre
            pl.BlockSpec((TS, RB, 2 * FH), lambda t: (t, 0, 0)),     # [cos|sin]
            pl.BlockSpec((2 * H, G), lambda t: (0, 0)),              # fused W_hh
            pl.BlockSpec((2 * F, 2 * FH), lambda t: (0, 0)),         # freq expand
            pl.BlockSpec((4 * H, 4 * FH), lambda t: (0, 0)),         # gate tile
            pl.BlockSpec((2 * FH, 2 * H), lambda t: (0, 0)),         # fold (row_c|col_c)
            pl.BlockSpec((1, 2 * H), lambda t: (0, 0)),              # row/col_c bias
            pl.BlockSpec((2 * H, 2 * H), lambda t: (0, 0)),          # block-diag W_o
            pl.BlockSpec((1, 2 * H), lambda t: (0, 0)),              # W_o bias
        ],
        out_specs=pl.BlockSpec((TS, RB, 2 * H), lambda t: (t, 0, 0)),
        scratch_shapes=[
            pltpu.VMEM((RB, H), jnp.float32),        # h_row
            pltpu.VMEM((RB, H), jnp.float32),        # h_col (post-roll)
            pltpu.VMEM((RB, 2 * FH), jnp.float32),   # row state [re | im], packed
            pltpu.VMEM((RB, 2 * FH), jnp.float32),   # col state [re | im], packed
        ],
    )

    out_T = pl.pallas_call(
        kernel,
        out_shape=jax.ShapeDtypeStruct((T_pad, RB, 2 * H), jnp.float32),
        grid_spec=grid_spec,
        compiler_params=pltpu.CompilerParams(
            dimension_semantics=("arbitrary",),
            vmem_limit_bytes=48 * 1024 * 1024),
    )(a_pre, trig, w_hh, expand_m, tile_m, fold_m, c_bias, w_o, b_o)

    out_T = out_T[:T]                                              # (T, RB, 2H)
    output_all = jnp.transpose(out_T, (1, 0, 2))                   # (RB, T, 2H)

    # hidden_row_all / hidden_col_all are slices of the per-slice outputs
    # (captured *before* the in-loop roll) -> pure glue extraction.
    hidden_row = jnp.stack(
        [out_T[L - 1 + r, r * B:(r + 1) * B, :H] for r in range(R)], axis=0)
    hidden_row = jnp.transpose(hidden_row, (1, 0, 2)).reshape(
        B, num_layers, R, H)
    hidden_col = jnp.stack(
        [out_T[R - 1 + j, (R - 1) * B:R * B, H:] for j in range(L)], axis=0)
    hidden_col = jnp.transpose(hidden_col, (1, 0, 2)).reshape(
        B, num_layers, L, H)

    if col > row:
        return output_all, hidden_col, hidden_row
    return output_all, hidden_row, hidden_col


def witran_reference(x, p, hidden_size, freq_size, num_layers=1):
    """Pure-JAX transcription of the PyTorch forward (num_layers == 1)."""
    B, row, col, In = x.shape
    H, F = hidden_size, freq_size
    a, tm, R, L, T = build_slices(x)
    RB = R * B
    omega = p["omega"]
    W, Wf = p["W_first_layer"], p["W_freq"]
    Bv, Bf = p["B"][0], p["B_freq"][0]

    h_row = jnp.zeros((RB, H)); h_col = jnp.zeros((RB, H))
    row_re = 0.1 * jnp.ones((RB, H, F)); row_im = 0.1 * jnp.ones((RB, H, F))
    col_re = 0.1 * jnp.ones((RB, H, F)); col_im = 0.1 * jnp.ones((RB, H, F))

    out_list, hrow_list, hcol_list = [], [], []
    for s in range(T):
        x_s = jnp.concatenate([h_row, h_col, a[:, s, :]], axis=-1)
        gate = x_s @ W.T
        fgate = x_s @ Wf.T
        if s < R:
            gate = gate.at[:B * (s + 1)].add(Bv)
            fgate = fgate.at[:B * (s + 1)].add(Bf)
        fgate = jax.nn.sigmoid(fgate)
        row_freq, col_freq = fgate[:, :F], fgate[:, F:]
        sig = jax.nn.sigmoid(gate[:, :4 * H]); tnh = jnp.tanh(gate[:, 4 * H:])
        i_r, i_c = tnh[:, :H], tnh[:, H:]
        u_r, o_r = sig[:, :H], sig[:, H:2 * H]
        u_c, o_c = sig[:, 2 * H:3 * H], sig[:, 3 * H:]
        row_ft = u_r[:, :, None] * row_freq[:, None, :]
        col_ft = u_c[:, :, None] * col_freq[:, None, :]
        cur_t = tm[:, s][:, None]
        cos_t = jnp.cos(cur_t * omega); sin_t = jnp.sin(cur_t * omega)
        row_re = row_ft * row_re + (o_r * i_r)[:, :, None] * cos_t[:, None, :]
        row_im = row_ft * row_im + (o_r * i_r)[:, :, None] * sin_t[:, None, :]
        col_re = col_ft * col_re + (o_c * i_c)[:, :, None] * cos_t[:, None, :]
        col_im = col_ft * col_im + (o_c * i_c)[:, :, None] * sin_t[:, None, :]
        row_a = row_re ** 2 + row_im ** 2
        col_a = col_re ** 2 + col_im ** 2
        row_c = jnp.tanh(row_a @ p["row_c_w"][0] + p["row_c_b"][0])
        col_c = jnp.tanh(col_a @ p["col_c_w"][0] + p["col_c_b"][0])
        h_row = jax.nn.sigmoid((1 - u_r) * h_row + u_r * i_r
                               + row_c @ p["row_o_w"].T + p["row_o_b"]) * row_c
        h_col = jax.nn.sigmoid((1 - u_c) * h_col + u_c * i_c
                               + col_c @ p["col_o_w"].T + p["col_o_b"]) * col_c
        out_list.append(jnp.concatenate([h_row, h_col], axis=-1))
        if s >= L - 1:
            loc = s - L + 1
            hrow_list.append(h_row[loc * B:(loc + 1) * B])
        if s >= R - 1:
            hcol_list.append(h_col[(R - 1) * B:])
        h_col = jnp.roll(h_col, B, axis=0)
        tm = jnp.roll(tm, B, axis=0)
        col_re = jnp.roll(col_re, B, axis=0)
        col_im = jnp.roll(col_im, B, axis=0)

    output_all = jnp.stack(out_list, axis=1)
    hidden_row = jnp.stack(hrow_list, axis=1).reshape(B, num_layers, R, H)
    hidden_col = jnp.stack(hcol_list, axis=1).reshape(B, num_layers, L, H)
    if col > row:
        return output_all, hidden_col, hidden_row
    return output_all, hidden_row, hidden_col


if __name__ == "__main__":
    key = jax.random.PRNGKey(0)
    batch, rows, cols, input_size = 2, 4, 4, 4
    hidden_size, freq_size, num_layers = 32, 8, 1

    k_x, k_p = jax.random.split(key)
    x = jax.random.normal(k_x, (batch, rows, cols, input_size), jnp.float32)
    params = make_params(k_p, input_size, hidden_size, num_layers, freq_size)

    out, h_row_all, h_col_all = jax.block_until_ready(
        witran_pallas(x, params, hidden_size, freq_size, num_layers))

    ref_out, ref_row, ref_col = witran_reference(
        x, params, hidden_size, freq_size, num_layers)

    # Tolerance accounts for MXU rounding on the 0/1 expansion matmuls vs the
    # reference's elementwise broadcasts (both well below real-bug magnitudes).
    np.testing.assert_allclose(np.asarray(out), np.asarray(ref_out),
                               rtol=5e-2, atol=1e-2)
    np.testing.assert_allclose(np.asarray(h_row_all), np.asarray(ref_row),
                               rtol=5e-2, atol=1e-2)
    np.testing.assert_allclose(np.asarray(h_col_all), np.asarray(ref_col),
                               rtol=5e-2, atol=1e-2)
    print("KERNEL_OK")
</pallas_src>

<mosaic_0001>
module attributes {stable_mosaic.version = 11 : i64} {
  func.func @kernel(%arg0: i32, %arg1: memref<7x8x208xf32, #tpu.memory_space<vmem>>, %arg2: memref<7x8x512xf32, #tpu.memory_space<vmem>>, %arg3: memref<64x208xf32, #tpu.memory_space<vmem>>, %arg4: memref<16x512xf32, #tpu.memory_space<vmem>>, %arg5: memref<128x1024xf32, #tpu.memory_space<vmem>>, %arg6: memref<512x64xf32, #tpu.memory_space<vmem>>, %arg7: memref<1x64xf32, #tpu.memory_space<vmem>>, %arg8: memref<64x64xf32, #tpu.memory_space<vmem>>, %arg9: memref<1x64xf32, #tpu.memory_space<vmem>>, %arg10: memref<7x8x64xf32, #tpu.memory_space<vmem>>, %arg11: memref<8x32xf32, #tpu.memory_space<vmem>>, %arg12: memref<8x32xf32, #tpu.memory_space<vmem>>, %arg13: memref<8x512xf32, #tpu.memory_space<vmem>>, %arg14: memref<8x512xf32, #tpu.memory_space<vmem>>) attributes {dimension_semantics = [#tpu.dimension_semantics<arbitrary>], iteration_bounds = array<i64: 1>, scalar_prefetch = 0 : i64, scratch_operands = 4 : i64, tpu.core_type = #tpu.core_type<tc>, window_params = [{transform_indices = @transform_0, window_bounds = array<i64: 7, 8, 208>}, {transform_indices = @transform_1, window_bounds = array<i64: 7, 8, 512>}, {pipeline_mode = #tpu.pipeline_mode<synchronous>, transform_indices = @transform_2, window_bounds = array<i64: 64, 208>}, {pipeline_mode = #tpu.pipeline_mode<synchronous>, transform_indices = @transform_3, window_bounds = array<i64: 16, 512>}, {pipeline_mode = #tpu.pipeline_mode<synchronous>, transform_indices = @transform_4, window_bounds = array<i64: 128, 1024>}, {pipeline_mode = #tpu.pipeline_mode<synchronous>, transform_indices = @transform_5, window_bounds = array<i64: 512, 64>}, {pipeline_mode = #tpu.pipeline_mode<synchronous>, transform_indices = @transform_6, window_bounds = array<i64: 1, 64>}, {pipeline_mode = #tpu.pipeline_mode<synchronous>, transform_indices = @transform_7, window_bounds = array<i64: 64, 64>}, {pipeline_mode = #tpu.pipeline_mode<synchronous>, transform_indices = @transform_8, window_bounds = array<i64: 1, 64>}, {transform_indices = @transform_9, window_bounds = array<i64: 7, 8, 64>}]} {
    %c0_i32 = arith.constant 0 : i32
    %0 = arith.cmpi eq, %arg0, %c0_i32 : i32
    %1 = arith.extui %0 : i1 to i32
    %c0_i32_0 = arith.constant 0 : i32
    %2 = arith.cmpi ne, %1, %c0_i32_0 : i32
    scf.if %2 {
      %cst_266 = arith.constant 0.000000e+00 : f32
      %665 = vector.broadcast %cst_266 : f32 to vector<8x32xf32>
      %c0_267 = arith.constant 0 : index
      %c0_268 = arith.constant 0 : index
      %666 = vector.load %arg11[%c0_267, %c0_268] : memref<8x32xf32, #tpu.memory_space<vmem>>, vector<8x32xf32>
      tpu.vector_store %arg11[%c0_267, %c0_268], %665 {strides = array<i32>} : memref<8x32xf32, #tpu.memory_space<vmem>>, vector<8x32xf32>,
      %cst_269 = arith.constant 0.000000e+00 : f32
      %667 = vector.broadcast %cst_269 : f32 to vector<8x32xf32>
      %c0_270 = arith.constant 0 : index
      %c0_271 = arith.constant 0 : index
      %668 = vector.load %arg12[%c0_270, %c0_271] : memref<8x32xf32, #tpu.memory_space<vmem>>, vector<8x32xf32>
      tpu.vector_store %arg12[%c0_270, %c0_271], %667 {strides = array<i32>} : memref<8x32xf32, #tpu.memory_space<vmem>>, vector<8x32xf32>,
      %cst_272 = arith.constant 1.000000e-01 : f32
      %669 = vector.broadcast %cst_272 : f32 to vector<8x512xf32>
      %c0_273 = arith.constant 0 : index
      %c0_274 = arith.constant 0 : index
      %670 = vector.load %arg13[%c0_273, %c0_274] : memref<8x512xf32, #tpu.memory_space<vmem>>, vector<8x512xf32>
      tpu.vector_store %arg13[%c0_273, %c0_274], %669 {strides = array<i32>} : memref<8x512xf32, #tpu.memory_space<vmem>>, vector<8x512xf32>,
      %cst_275 = arith.constant 1.000000e-01 : f32
      %671 = vector.broadcast %cst_275 : f32 to vector<8x512xf32>
      %c0_276 = arith.constant 0 : index
      %c0_277 = arith.constant 0 : index
      %672 = vector.load %arg14[%c0_276, %c0_277] : memref<8x512xf32, #tpu.memory_space<vmem>>, vector<8x512xf32>
      tpu.vector_store %arg14[%c0_276, %c0_277], %671 {strides = array<i32>} : memref<8x512xf32, #tpu.memory_space<vmem>>, vector<8x512xf32>,
    } else {
    }
    %c0 = arith.constant 0 : index
    %c0_1 = arith.constant 0 : index
    %3 = vector.load %arg3[%c0, %c0_1] : memref<64x208xf32, #tpu.memory_space<vmem>>, vector<64x208xf32>
    %c0_2 = arith.constant 0 : index
    %c0_3 = arith.constant 0 : index
    %4 = vector.load %arg4[%c0_2, %c0_3] : memref<16x512xf32, #tpu.memory_space<vmem>>, vector<16x512xf32>
    %c0_4 = arith.constant 0 : index
    %c0_5 = arith.constant 0 : index
    %5 = vector.load %arg5[%c0_4, %c0_5] : memref<128x1024xf32, #tpu.memory_space<vmem>>, vector<128x1024xf32>
    %c0_6 = arith.constant 0 : index
    %c0_7 = arith.constant 0 : index
    %6 = vector.load %arg6[%c0_6, %c0_7] : memref<512x64xf32, #tpu.memory_space<vmem>>, vector<512x64xf32>
    %c0_8 = arith.constant 0 : index
    %c0_9 = arith.constant 0 : index
    %7 = vector.load %arg8[%c0_8, %c0_9] : memref<64x64xf32, #tpu.memory_space<vmem>>, vector<64x64xf32>
    %c0_10 = arith.constant 0 : index
    %c0_11 = arith.constant 0 : index
    %8 = vector.load %arg7[%c0_10, %c0_11] : memref<1x64xf32, #tpu.memory_space<vmem>>, vector<1x64xf32>
    %9 = vector.shape_cast %8 : vector<1x64xf32> to vector<1x64xf32>
    %10 = vector.broadcast %9 : vector<1x64xf32> to vector<8x64xf32>
    %c0_12 = arith.constant 0 : index
    %c0_13 = arith.constant 0 : index
    %11 = vector.load %arg9[%c0_12, %c0_13] : memref<1x64xf32, #tpu.memory_space<vmem>>, vector<1x64xf32>
    %12 = vector.shape_cast %11 : vector<1x64xf32> to vector<1x64xf32>
    %13 = vector.broadcast %12 : vector<1x64xf32> to vector<8x64xf32>
    %c0_14 = arith.constant 0 : index
    %c0_15 = arith.constant 0 : index
    %14 = vector.load %arg11[%c0_14, %c0_15] : memref<8x32xf32, #tpu.memory_space<vmem>>, vector<8x32xf32>
    %c0_16 = arith.constant 0 : index
    %c0_17 = arith.constant 0 : index
    %15 = vector.load %arg12[%c0_16, %c0_17] : memref<8x32xf32, #tpu.memory_space<vmem>>, vector<8x32xf32>
    %16 = tpu.concatenate %14, %15 in 1 : vector<8x32xf32>, vector<8x32xf32> -> vector<8x64xf32>
    %c0_18 = arith.constant 0 : index
    %c0_19 = arith.constant 0 : index
    %c0_20 = arith.constant 0 : index
    %17 = vector.load %arg1[%c0_18, %c0_19, %c0_20] : memref<7x8x208xf32, #tpu.memory_space<vmem>>, vector<1x8x208xf32>
    %18 = vector.shape_cast %17 : vector<1x8x208xf32> to vector<8x208xf32>
    %cst = arith.constant dense<0.000000e+00> : vector<8x208xf32>
    %19 = tpu.matmul %16, %3, %cst {dimension_numbers = #tpu.dot_dimension_numbers<[1], [0], [0], [1], [0, 0, 1, 1], [], []>} : vector<8x64xf32>, vector<64x208xf32>, vector<8x208xf32> -> vector<8x208xf32>
    %20 = arith.addf %18, %19 : vector<8x208xf32>
    %21 = vector.extract_strided_slice %20 {offsets = [0, 0], sizes = [8, 144], strides = [1, 1]} : vector<8x208xf32> to vector<8x144xf32>
    %22 = arith.negf %21 : vector<8x144xf32>
    %23 = math.exp %22 : vector<8x144xf32>
    %cst_21 = arith.constant 1.000000e+00 : f32
    %24 = vector.broadcast %cst_21 : f32 to vector<8x144xf32>
    %25 = arith.addf %24, %23 : vector<8x144xf32>
    %26 = arith.divf %24, %25 : vector<8x144xf32>
    %27 = vector.extract_strided_slice %20 {offsets = [0, 144], sizes = [8, 64], strides = [1, 1]} : vector<8x208xf32> to vector<8x64xf32>
    %28 = math.tanh %27 : vector<8x64xf32>
    %29 = vector.extract_strided_slice %26 {offsets = [0, 0], sizes = [8, 64], strides = [1, 1]} : vector<8x144xf32> to vector<8x64xf32>
    %30 = vector.extract_strided_slice %26 {offsets = [0, 64], sizes = [8, 64], strides = [1, 1]} : vector<8x144xf32> to vector<8x64xf32>
    %31 = vector.extract_strided_slice %26 {offsets = [0, 128], sizes = [8, 16], strides = [1, 1]} : vector<8x144xf32> to vector<8x16xf32>
    %32 = arith.mulf %30, %28 : vector<8x64xf32>
    %cst_22 = arith.constant dense<0.000000e+00> : vector<8x512xf32>
    %33 = tpu.matmul %31, %4, %cst_22 {dimension_numbers = #tpu.dot_dimension_numbers<[1], [0], [0], [1], [0, 0, 1, 1], [], []>} : vector<8x16xf32>, vector<16x512xf32>, vector<8x512xf32> -> vector<8x512xf32>
    %34 = tpu.concatenate %29, %32 in 1 : vector<8x64xf32>, vector<8x64xf32> -> vector<8x128xf32>
    %cst_23 = arith.constant dense<0.000000e+00> : vector<8x1024xf32>
    %35 = tpu.matmul %34, %5, %cst_23 {dimension_numbers = #tpu.dot_dimension_numbers<[1], [0], [0], [1], [0, 0, 1, 1], [], []>} : vector<8x128xf32>, vector<128x1024xf32>, vector<8x1024xf32> -> vector<8x1024xf32>
    %36 = vector.extract_strided_slice %33 {offsets = [0, 0], sizes = [8, 256], strides = [1, 1]} : vector<8x512xf32> to vector<8x256xf32>
    %37 = vector.extract_strided_slice %33 {offsets = [0, 256], sizes = [8, 256], strides = [1, 1]} : vector<8x512xf32> to vector<8x256xf32>
    %38 = vector.extract_strided_slice %35 {offsets = [0, 0], sizes = [8, 256], strides = [1, 1]} : vector<8x1024xf32> to vector<8x256xf32>
    %39 = vector.extract_strided_slice %35 {offsets = [0, 256], sizes = [8, 256], strides = [1, 1]} : vector<8x1024xf32> to vector<8x256xf32>
    %40 = vector.extract_strided_slice %35 {offsets = [0, 512], sizes = [8, 256], strides = [1, 1]} : vector<8x1024xf32> to vector<8x256xf32>
    %41 = vector.extract_strided_slice %35 {offsets = [0, 768], sizes = [8, 256], strides = [1, 1]} : vector<8x1024xf32> to vector<8x256xf32>
    %c0_24 = arith.constant 0 : index
    %c0_25 = arith.constant 0 : index
    %c0_26 = arith.constant 0 : index
    %42 = vector.load %arg2[%c0_24, %c0_25, %c0_26] : memref<7x8x512xf32, #tpu.memory_space<vmem>>, vector<1x8x512xf32>
    %43 = vector.shape_cast %42 : vector<1x8x512xf32> to vector<8x512xf32>
    %44 = vector.extract_strided_slice %43 {offsets = [0, 0], sizes = [8, 256], strides = [1, 1]} : vector<8x512xf32> to vector<8x256xf32>
    %45 = vector.extract_strided_slice %43 {offsets = [0, 256], sizes = [8, 256], strides = [1, 1]} : vector<8x512xf32> to vector<8x256xf32>
    %c0_27 = arith.constant 0 : index
    %c0_28 = arith.constant 0 : index
    %46 = vector.load %arg13[%c0_27, %c0_28] : memref<8x512xf32, #tpu.memory_space<vmem>>, vector<8x512xf32>
    %c0_29 = arith.constant 0 : index
    %c0_30 = arith.constant 0 : index
    %47 = vector.load %arg14[%c0_29, %c0_30] : memref<8x512xf32, #tpu.memory_space<vmem>>, vector<8x512xf32>
    %48 = arith.mulf %36, %38 : vector<8x256xf32>
    %49 = arith.mulf %37, %39 : vector<8x256xf32>
    %50 = vector.extract_strided_slice %46 {offsets = [0, 0], sizes = [8, 256], strides = [1, 1]} : vector<8x512xf32> to vector<8x256xf32>
    %51 = arith.mulf %48, %50 : vector<8x256xf32>
    %52 = arith.mulf %40, %44 : vector<8x256xf32>
    %53 = arith.addf %51, %52 : vector<8x256xf32>
    %54 = vector.extract_strided_slice %46 {offsets = [0, 256], sizes = [8, 256], strides = [1, 1]} : vector<8x512xf32> to vector<8x256xf32>
    %55 = arith.mulf %48, %54 : vector<8x256xf32>
    %56 = arith.mulf %40, %45 : vector<8x256xf32>
    %57 = arith.addf %55, %56 : vector<8x256xf32>
    %58 = vector.extract_strided_slice %47 {offsets = [0, 0], sizes = [8, 256], strides = [1, 1]} : vector<8x512xf32> to vector<8x256xf32>
    %59 = arith.mulf %49, %58 : vector<8x256xf32>
    %60 = arith.mulf %41, %44 : vector<8x256xf32>
    %61 = arith.addf %59, %60 : vector<8x256xf32>
    %62 = vector.extract_strided_slice %47 {offsets = [0, 256], sizes = [8, 256], strides = [1, 1]} : vector<8x512xf32> to vector<8x256xf32>
    %63 = arith.mulf %49, %62 : vector<8x256xf32>
    %64 = arith.mulf %41, %45 : vector<8x256xf32>
    %65 = arith.addf %63, %64 : vector<8x256xf32>
    %66 = arith.mulf %53, %53 : vector<8x256xf32>
    %67 = arith.mulf %57, %57 : vector<8x256xf32>
    %68 = arith.addf %66, %67 : vector<8x256xf32>
    %69 = arith.mulf %61, %61 : vector<8x256xf32>
    %70 = arith.mulf %65, %65 : vector<8x256xf32>
    %71 = arith.addf %69, %70 : vector<8x256xf32>
    %72 = tpu.concatenate %68, %71 in 1 : vector<8x256xf32>, vector<8x256xf32> -> vector<8x512xf32>
    %cst_31 = arith.constant dense<0.000000e+00> : vector<8x64xf32>
    %73 = tpu.matmul %72, %6, %cst_31 {dimension_numbers = #tpu.dot_dimension_numbers<[1], [0], [0], [1], [0, 0, 1, 1], [], []>} : vector<8x512xf32>, vector<512x64xf32>, vector<8x64xf32> -> vector<8x64xf32>
    %74 = arith.addf %73, %10 : vector<8x64xf32>
    %75 = math.tanh %74 : vector<8x64xf32>
    %cst_32 = arith.constant dense<0.000000e+00> : vector<8x64xf32>
    %76 = tpu.matmul %75, %7, %cst_32 {dimension_numbers = #tpu.dot_dimension_numbers<[1], [0], [0], [1], [0, 0, 1, 1], [], []>} : vector<8x64xf32>, vector<64x64xf32>, vector<8x64xf32> -> vector<8x64xf32>
    %77 = arith.addf %76, %13 : vector<8x64xf32>
    %cst_33 = arith.constant 1.000000e+00 : f32
    %78 = vector.broadcast %cst_33 : f32 to vector<8x64xf32>
    %79 = arith.subf %78, %29 : vector<8x64xf32>
    %80 = arith.mulf %79, %16 : vector<8x64xf32>
    %81 = arith.mulf %29, %28 : vector<8x64xf32>
    %82 = arith.addf %80, %81 : vector<8x64xf32>
    %83 = arith.addf %82, %77 : vector<8x64xf32>
    %84 = arith.negf %83 : vector<8x64xf32>
    %85 = math.exp %84 : vector<8x64xf32>
    %cst_34 = arith.constant 1.000000e+00 : f32
    %86 = vector.broadcast %cst_34 : f32 to vector<8x64xf32>
    %87 = arith.addf %86, %85 : vector<8x64xf32>
    %88 = arith.divf %86, %87 : vector<8x64xf32>
    %89 = arith.mulf %88, %75 : vector<8x64xf32>
    %c0_35 = arith.constant 0 : index
    %c0_36 = arith.constant 0 : index
    %c0_37 = arith.constant 0 : index
    %90 = vector.load %arg10[%c0_35, %c0_36, %c0_37] : memref<7x8x64xf32, #tpu.memory_space<vmem>>, vector<1x8x64xf32>
    %91 = vector.shape_cast %90 : vector<1x8x64xf32> to vector<8x64xf32>
    %92 = vector.shape_cast %89 : vector<8x64xf32> to vector<1x8x64xf32>
    tpu.vector_store %arg10[%c0_35, %c0_36, %c0_37], %92 {strides = array<i32>} : memref<7x8x64xf32, #tpu.memory_space<vmem>>, vector<1x8x64xf32>,
    %93 = vector.extract_strided_slice %89 {offsets = [0, 0], sizes = [8, 32], strides = [1, 1]} : vector<8x64xf32> to vector<8x32xf32>
    %c0_38 = arith.constant 0 : index
    %c0_39 = arith.constant 0 : index
    %94 = vector.load %arg11[%c0_38, %c0_39] : memref<8x32xf32, #tpu.memory_space<vmem>>, vector<8x32xf32>
    tpu.vector_store %arg11[%c0_38, %c0_39], %93 {strides = array<i32>} : memref<8x32xf32, #tpu.memory_space<vmem>>, vector<8x32xf32>,
    %95 = tpu.concatenate %53, %57 in 1 : vector<8x256xf32>, vector<8x256xf32> -> vector<8x512xf32>
    %c0_40 = arith.constant 0 : index
    %c0_41 = arith.constant 0 : index
    %96 = vector.load %arg13[%c0_40, %c0_41] : memref<8x512xf32, #tpu.memory_space<vmem>>, vector<8x512xf32>
    tpu.vector_store %arg13[%c0_40, %c0_41], %95 {strides = array<i32>} : memref<8x512xf32, #tpu.memory_space<vmem>>, vector<8x512xf32>,
    %97 = vector.extract_strided_slice %89 {offsets = [0, 32], sizes = [8, 32], strides = [1, 1]} : vector<8x64xf32> to vector<8x32xf32>
    %98 = tpu.concatenate %61, %65 in 1 : vector<8x256xf32>, vector<8x256xf32> -> vector<8x512xf32>
    %99 = vector.extract_strided_slice %97 {offsets = [6, 0], sizes = [2, 32], strides = [1, 1]} : vector<8x32xf32> to vector<2x32xf32>
    %c0_42 = arith.constant 0 : index
    %c0_43 = arith.constant 0 : index
    %100 = vector.load %arg12[%c0_42, %c0_43] : memref<8x32xf32, #tpu.memory_space<vmem>>, vector<2x32xf32>
    tpu.vector_store %arg12[%c0_42, %c0_43], %99 {strides = array<i32>} : memref<8x32xf32, #tpu.memory_space<vmem>>, vector<2x32xf32>,
    %101 = vector.extract_strided_slice %97 {offsets = [0, 0], sizes = [6, 32], strides = [1, 1]} : vector<8x32xf32> to vector<6x32xf32>
    %c2 = arith.constant 2 : index
    %c0_44 = arith.constant 0 : index
    %102 = vector.load %arg12[%c2, %c0_44] : memref<8x32xf32, #tpu.memory_space<vmem>>, vector<6x32xf32>
    tpu.vector_store %arg12[%c2, %c0_44], %101 {strides = array<i32>} : memref<8x32xf32, #tpu.memory_space<vmem>>, vector<6x32xf32>,
    %103 = vector.extract_strided_slice %98 {offsets = [6, 0], sizes = [2, 512], strides = [1, 1]} : vector<8x512xf32> to vector<2x512xf32>
    %c0_45 = arith.constant 0 : index
    %c0_46 = arith.constant 0 : index
    %104 = vector.load %arg14[%c0_45, %c0_46] : memref<8x512xf32, #tpu.memory_space<vmem>>, vector<2x512xf32>
    tpu.vector_store %arg14[%c0_45, %c0_46], %103 {strides = array<i32>} : memref<8x512xf32, #tpu.memory_space<vmem>>, vector<2x512xf32>,
    %105 = vector.extract_strided_slice %98 {offsets = [0, 0], sizes = [6, 512], strides = [1, 1]} : vector<8x512xf32> to vector<6x512xf32>
    %c2_47 = arith.constant 2 : index
    %c0_48 = arith.constant 0 : index
    %106 = vector.load %arg14[%c2_47, %c0_48] : memref<8x512xf32, #tpu.memory_space<vmem>>, vector<6x512xf32>
    tpu.vector_store %arg14[%c2_47, %c0_48], %105 {strides = array<i32>} : memref<8x512xf32, #tpu.memory_space<vmem>>, vector<6x512xf32>,
    %c0_49 = arith.constant 0 : index
    %c0_50 = arith.constant 0 : index
    %107 = vector.load %arg11[%c0_49, %c0_50] : memref<8x32xf32, #tpu.memory_space<vmem>>, vector<8x32xf32>
    %c0_51 = arith.constant 0 : index
    %c0_52 = arith.constant 0 : index
    %108 = vector.load %arg12[%c0_51, %c0_52] : memref<8x32xf32, #tpu.memory_space<vmem>>, vector<8x32xf32>
    %109 = tpu.concatenate %107, %108 in 1 : vector<8x32xf32>, vector<8x32xf32> -> vector<8x64xf32>
    %c1 = arith.constant 1 : index
    %c0_53 = arith.constant 0 : index
    %c0_54 = arith.constant 0 : index
    %110 = vector.load %arg1[%c1, %c0_53, %c0_54] : memref<7x8x208xf32, #tpu.memory_space<vmem>>, vector<1x8x208xf32>
    %111 = vector.shape_cast %110 : vector<1x8x208xf32> to vector<8x208xf32>
    %cst_55 = arith.constant dense<0.000000e+00> : vector<8x208xf32>
    %112 = tpu.matmul %109, %3, %cst_55 {dimension_numbers = #tpu.dot_dimension_numbers<[1], [0], [0], [1], [0, 0, 1, 1], [], []>} : vector<8x64xf32>, vector<64x208xf32>, vector<8x208xf32> -> vector<8x208xf32>
    %113 = arith.addf %111, %112 : vector<8x208xf32>
    %114 = vector.extract_strided_slice %113 {offsets = [0, 0], sizes = [8, 144], strides = [1, 1]} : vector<8x208xf32> to vector<8x144xf32>
    %115 = arith.negf %114 : vector<8x144xf32>
    %116 = math.exp %115 : vector<8x144xf32>
    %cst_56 = arith.constant 1.000000e+00 : f32
    %117 = vector.broadcast %cst_56 : f32 to vector<8x144xf32>
    %118 = arith.addf %117, %116 : vector<8x144xf32>
    %119 = arith.divf %117, %118 : vector<8x144xf32>
    %120 = vector.extract_strided_slice %113 {offsets = [0, 144], sizes = [8, 64], strides = [1, 1]} : vector<8x208xf32> to vector<8x64xf32>
    %121 = math.tanh %120 : vector<8x64xf32>
    %122 = vector.extract_strided_slice %119 {offsets = [0, 0], sizes = [8, 64], strides = [1, 1]} : vector<8x144xf32> to vector<8x64xf32>
    %123 = vector.extract_strided_slice %119 {offsets = [0, 64], sizes = [8, 64], strides = [1, 1]} : vector<8x144xf32> to vector<8x64xf32>
    %124 = vector.extract_strided_slice %119 {offsets = [0, 128], sizes = [8, 16], strides = [1, 1]} : vector<8x144xf32> to vector<8x16xf32>
    %125 = arith.mulf %123, %121 : vector<8x64xf32>
    %cst_57 = arith.constant dense<0.000000e+00> : vector<8x512xf32>
    %126 = tpu.matmul %124, %4, %cst_57 {dimension_numbers = #tpu.dot_dimension_numbers<[1], [0], [0], [1], [0, 0, 1, 1], [], []>} : vector<8x16xf32>, vector<16x512xf32>, vector<8x512xf32> -> vector<8x512xf32>
    %127 = tpu.concatenate %122, %125 in 1 : vector<8x64xf32>, vector<8x64xf32> -> vector<8x128xf32>
    %cst_58 = arith.constant dense<0.000000e+00> : vector<8x1024xf32>
    %128 = tpu.matmul %127, %5, %cst_58 {dimension_numbers = #tpu.dot_dimension_numbers<[1], [0], [0], [1], [0, 0, 1, 1], [], []>} : vector<8x128xf32>, vector<128x1024xf32>, vector<8x1024xf32> -> vector<8x1024xf32>
    %129 = vector.extract_strided_slice %126 {offsets = [0, 0], sizes = [8, 256], strides = [1, 1]} : vector<8x512xf32> to vector<8x256xf32>
    %130 = vector.extract_strided_slice %126 {offsets = [0, 256], sizes = [8, 256], strides = [1, 1]} : vector<8x512xf32> to vector<8x256xf32>
    %131 = vector.extract_strided_slice %128 {offsets = [0, 0], sizes = [8, 256], strides = [1, 1]} : vector<8x1024xf32> to vector<8x256xf32>
    %132 = vector.extract_strided_slice %128 {offsets = [0, 256], sizes = [8, 256], strides = [1, 1]} : vector<8x1024xf32> to vector<8x256xf32>
    %133 = vector.extract_strided_slice %128 {offsets = [0, 512], sizes = [8, 256], strides = [1, 1]} : vector<8x1024xf32> to vector<8x256xf32>
    %134 = vector.extract_strided_slice %128 {offsets = [0, 768], sizes = [8, 256], strides = [1, 1]} : vector<8x1024xf32> to vector<8x256xf32>
    %c1_59 = arith.constant 1 : index
    %c0_60 = arith.constant 0 : index
    %c0_61 = arith.constant 0 : index
    %135 = vector.load %arg2[%c1_59, %c0_60, %c0_61] : memref<7x8x512xf32, #tpu.memory_space<vmem>>, vector<1x8x512xf32>
    %136 = vector.shape_cast %135 : vector<1x8x512xf32> to vector<8x512xf32>
    %137 = vector.extract_strided_slice %136 {offsets = [0, 0], sizes = [8, 256], strides = [1, 1]} : vector<8x512xf32> to vector<8x256xf32>
    %138 = vector.extract_strided_slice %136 {offsets = [0, 256], sizes = [8, 256], strides = [1, 1]} : vector<8x512xf32> to vector<8x256xf32>
    %c0_62 = arith.constant 0 : index
    %c0_63 = arith.constant 0 : index
    %139 = vector.load %arg13[%c0_62, %c0_63] : memref<8x512xf32, #tpu.memory_space<vmem>>, vector<8x512xf32>
    %c0_64 = arith.constant 0 : index
    %c0_65 = arith.constant 0 : index
    %140 = vector.load %arg14[%c0_64, %c0_65] : memref<8x512xf32, #tpu.memory_space<vmem>>, vector<8x512xf32>
    %141 = arith.mulf %129, %131 : vector<8x256xf32>
    %142 = arith.mulf %130, %132 : vector<8x256xf32>
    %143 = vector.extract_strided_slice %139 {offsets = [0, 0], sizes = [8, 256], strides = [1, 1]} : vector<8x512xf32> to vector<8x256xf32>
    %144 = arith.mulf %141, %143 : vector<8x256xf32>
    %145 = arith.mulf %133, %137 : vector<8x256xf32>
    %146 = arith.addf %144, %145 : vector<8x256xf32>
    %147 = vector.extract_strided_slice %139 {offsets = [0, 256], sizes = [8, 256], strides = [1, 1]} : vector<8x512xf32> to vector<8x256xf32>
    %148 = arith.mulf %141, %147 : vector<8x256xf32>
    %149 = arith.mulf %133, %138 : vector<8x256xf32>
    %150 = arith.addf %148, %149 : vector<8x256xf32>
    %151 = vector.extract_strided_slice %140 {offsets = [0, 0], sizes = [8, 256], strides = [1, 1]} : vector<8x512xf32> to vector<8x256xf32>
    %152 = arith.mulf %142, %151 : vector<8x256xf32>
    %153 = arith.mulf %134, %137 : vector<8x256xf32>
    %154 = arith.addf %152, %153 : vector<8x256xf32>
    %155 = vector.extract_strided_slice %140 {offsets = [0, 256], sizes = [8, 256], strides = [1, 1]} : vector<8x512xf32> to vector<8x256xf32>
    %156 = arith.mulf %142, %155 : vector<8x256xf32>
    %157 = arith.mulf %134, %138 : vector<8x256xf32>
    %158 = arith.addf %156, %157 : vector<8x256xf32>
    %159 = arith.mulf %146, %146 : vector<8x256xf32>
    %160 = arith.mulf %150, %150 : vector<8x256xf32>
    %161 = arith.addf %159, %160 : vector<8x256xf32>
    %162 = arith.mulf %154, %154 : vector<8x256xf32>
    %163 = arith.mulf %158, %158 : vector<8x256xf32>
    %164 = arith.addf %162, %163 : vector<8x256xf32>
    %165 = tpu.concatenate %161, %164 in 1 : vector<8x256xf32>, vector<8x256xf32> -> vector<8x512xf32>
    %cst_66 = arith.constant dense<0.000000e+00> : vector<8x64xf32>
    %166 = tpu.matmul %165, %6, %cst_66 {dimension_numbers = #tpu.dot_dimension_numbers<[1], [0], [0], [1], [0, 0, 1, 1], [], []>} : vector<8x512xf32>, vector<512x64xf32>, vector<8x64xf32> -> vector<8x64xf32>
    %167 = arith.addf %166, %10 : vector<8x64xf32>
    %168 = math.tanh %167 : vector<8x64xf32>
    %cst_67 = arith.constant dense<0.000000e+00> : vector<8x64xf32>
    %169 = tpu.matmul %168, %7, %cst_67 {dimension_numbers = #tpu.dot_dimension_numbers<[1], [0], [0], [1], [0, 0, 1, 1], [], []>} : vector<8x64xf32>, vector<64x64xf32>, vector<8x64xf32> -> vector<8x64xf32>
    %170 = arith.addf %169, %13 : vector<8x64xf32>
    %cst_68 = arith.constant 1.000000e+00 : f32
    %171 = vector.broadcast %cst_68 : f32 to vector<8x64xf32>
    %172 = arith.subf %171, %122 : vector<8x64xf32>
    %173 = arith.mulf %172, %109 : vector<8x64xf32>
    %174 = arith.mulf %122, %121 : vector<8x64xf32>
    %175 = arith.addf %173, %174 : vector<8x64xf32>
    %176 = arith.addf %175, %170 : vector<8x64xf32>
    %177 = arith.negf %176 : vector<8x64xf32>
    %178 = math.exp %177 : vector<8x64xf32>
    %cst_69 = arith.constant 1.000000e+00 : f32
    %179 = vector.broadcast %cst_69 : f32 to vector<8x64xf32>
    %180 = arith.addf %179, %178 : vector<8x64xf32>
    %181 = arith.divf %179, %180 : vector<8x64xf32>
    %182 = arith.mulf %181, %168 : vector<8x64xf32>
    %c1_70 = arith.constant 1 : index
    %c0_71 = arith.constant 0 : index
    %c0_72 = arith.constant 0 : index
    %183 = vector.load %arg10[%c1_70, %c0_71, %c0_72] : memref<7x8x64xf32, #tpu.memory_space<vmem>>, vector<1x8x64xf32>
    %184 = vector.shape_cast %183 : vector<1x8x64xf32> to vector<8x64xf32>
    %185 = vector.shape_cast %182 : vector<8x64xf32> to vector<1x8x64xf32>
    tpu.vector_store %arg10[%c1_70, %c0_71, %c0_72], %185 {strides = array<i32>} : memref<7x8x64xf32, #tpu.memory_space<vmem>>, vector<1x8x64xf32>,
    %186 = vector.extract_strided_slice %182 {offsets = [0, 0], sizes = [8, 32], strides = [1, 1]} : vector<8x64xf32> to vector<8x32xf32>
    %c0_73 = arith.constant 0 : index
    %c0_74 = arith.constant 0 : index
    %187 = vector.load %arg11[%c0_73, %c0_74] : memref<8x32xf32, #tpu.memory_space<vmem>>, vector<8x32xf32>
    tpu.vector_store %arg11[%c0_73, %c0_74], %186 {strides = array<i32>} : memref<8x32xf32, #tpu.memory_space<vmem>>, vector<8x32xf32>,
    %188 = tpu.concatenate %146, %150 in 1 : vector<8x256xf32>, vector<8x256xf32> -> vector<8x512xf32>
    %c0_75 = arith.constant 0 : index
    %c0_76 = arith.constant 0 : index
    %189 = vector.load %arg13[%c0_75, %c0_76] : memref<8x512xf32, #tpu.memory_space<vmem>>, vector<8x512xf32>
    tpu.vector_store %arg13[%c0_75, %c0_76], %188 {strides = array<i32>} : memref<8x512xf32, #tpu.memory_space<vmem>>, vector<8x512xf32>,
    %190 = vector.extract_strided_slice %182 {offsets = [0, 32], sizes = [8, 32], strides = [1, 1]} : vector<8x64xf32> to vector<8x32xf32>
    %191 = tpu.concatenate %154, %158 in 1 : vector<8x256xf32>, vector<8x256xf32> -> vector<8x512xf32>
    %192 = vector.extract_strided_slice %190 {offsets = [6, 0], sizes = [2, 32], strides = [1, 1]} : vector<8x32xf32> to vector<2x32xf32>
    %c0_77 = arith.constant 0 : index
    %c0_78 = arith.constant 0 : index
    %193 = vector.load %arg12[%c0_77, %c0_78] : memref<8x32xf32, #tpu.memory_space<vmem>>, vector<2x32xf32>
    tpu.vector_store %arg12[%c0_77, %c0_78], %192 {strides = array<i32>} : memref<8x32xf32, #tpu.memory_space<vmem>>, vector<2x32xf32>,
    %194 = vector.extract_strided_slice %190 {offsets = [0, 0], sizes = [6, 32], strides = [1, 1]} : vector<8x32xf32> to vector<6x32xf32>
    %c2_79 = arith.constant 2 : index
    %c0_80 = arith.constant 0 : index
    %195 = vector.load %arg12[%c2_79, %c0_80] : memref<8x32xf32, #tpu.memory_space<vmem>>, vector<6x32xf32>
    tpu.vector_store %arg12[%c2_79, %c0_80], %194 {strides = array<i32>} : memref<8x32xf32, #tpu.memory_space<vmem>>, vector<6x32xf32>,
    %196 = vector.extract_strided_slice %191 {offsets = [6, 0], sizes = [2, 512], strides = [1, 1]} : vector<8x512xf32> to vector<2x512xf32>
    %c0_81 = arith.constant 0 : index
    %c0_82 = arith.constant 0 : index
    %197 = vector.load %arg14[%c0_81, %c0_82] : memref<8x512xf32, #tpu.memory_space<vmem>>, vector<2x512xf32>
    tpu.vector_store %arg14[%c0_81, %c0_82], %196 {strides = array<i32>} : memref<8x512xf32, #tpu.memory_space<vmem>>, vector<2x512xf32>,
    %198 = vector.extract_strided_slice %191 {offsets = [0, 0], sizes = [6, 512], strides = [1, 1]} : vector<8x512xf32> to vector<6x512xf32>
    %c2_83 = arith.constant 2 : index
    %c0_84 = arith.constant 0 : index
    %199 = vector.load %arg14[%c2_83, %c0_84] : memref<8x512xf32, #tpu.memory_space<vmem>>, vector<6x512xf32>
    tpu.vector_store %arg14[%c2_83, %c0_84], %198 {strides = array<i32>} : memref<8x512xf32, #tpu.memory_space<vmem>>, vector<6x512xf32>,
    %c0_85 = arith.constant 0 : index
    %c0_86 = arith.constant 0 : index
    %200 = vector.load %arg11[%c0_85, %c0_86] : memref<8x32xf32, #tpu.memory_space<vmem>>, vector<8x32xf32>
    %c0_87 = arith.constant 0 : index
    %c0_88 = arith.constant 0 : index
    %201 = vector.load %arg12[%c0_87, %c0_88] : memref<8x32xf32, #tpu.memory_space<vmem>>, vector<8x32xf32>
    %202 = tpu.concatenate %200, %201 in 1 : vector<8x32xf32>, vector<8x32xf32> -> vector<8x64xf32>
    %c2_89 = arith.constant 2 : index
    %c0_90 = arith.constant 0 : index
    %c0_91 = arith.constant 0 : index
    %203 = vector.load %arg1[%c2_89, %c0_90, %c0_91] : memref<7x8x208xf32, #tpu.memory_space<vmem>>, vector<1x8x208xf32>
    %204 = vector.shape_cast %203 : vector<1x8x208xf32> to vector<8x208xf32>
    %cst_92 = arith.constant dense<0.000000e+00> : vector<8x208xf32>
    %205 = tpu.matmul %202, %3, %cst_92 {dimension_numbers = #tpu.dot_dimension_numbers<[1], [0], [0], [1], [0, 0, 1, 1], [], []>} : vector<8x64xf32>, vector<64x208xf32>, vector<8x208xf32> -> vector<8x208xf32>
    %206 = arith.addf %204, %205 : vector<8x208xf32>
    %207 = vector.extract_strided_slice %206 {offsets = [0, 0], sizes = [8, 144], strides = [1, 1]} : vector<8x208xf32> to vector<8x144xf32>
    %208 = arith.negf %207 : vector<8x144xf32>
    %209 = math.exp %208 : vector<8x144xf32>
    %cst_93 = arith.constant 1.000000e+00 : f32
    %210 = vector.broadcast %cst_93 : f32 to vector<8x144xf32>
    %211 = arith.addf %210, %209 : vector<8x144xf32>
    %212 = arith.divf %210, %211 : vector<8x144xf32>
    %213 = vector.extract_strided_slice %206 {offsets = [0, 144], sizes = [8, 64], strides = [1, 1]} : vector<8x208xf32> to vector<8x64xf32>
    %214 = math.tanh %213 : vector<8x64xf32>
    %215 = vector.extract_strided_slice %212 {offsets = [0, 0], sizes = [8, 64], strides = [1, 1]} : vector<8x144xf32> to vector<8x64xf32>
    %216 = vector.extract_strided_slice %212 {offsets = [0, 64], sizes = [8, 64], strides = [1, 1]} : vector<8x144xf32> to vector<8x64xf32>
    %217 = vector.extract_strided_slice %212 {offsets = [0, 128], sizes = [8, 16], strides = [1, 1]} : vector<8x144xf32> to vector<8x16xf32>
    %218 = arith.mulf %216, %214 : vector<8x64xf32>
    %cst_94 = arith.constant dense<0.000000e+00> : vector<8x512xf32>
    %219 = tpu.matmul %217, %4, %cst_94 {dimension_numbers = #tpu.dot_dimension_numbers<[1], [0], [0], [1], [0, 0, 1, 1], [], []>} : vector<8x16xf32>, vector<16x512xf32>, vector<8x512xf32> -> vector<8x512xf32>
    %220 = tpu.concatenate %215, %218 in 1 : vector<8x64xf32>, vector<8x64xf32> -> vector<8x128xf32>
    %cst_95 = arith.constant dense<0.000000e+00> : vector<8x1024xf32>
    %221 = tpu.matmul %220, %5, %cst_95 {dimension_numbers = #tpu.dot_dimension_numbers<[1], [0], [0], [1], [0, 0, 1, 1], [], []>} : vector<8x128xf32>, vector<128x1024xf32>, vector<8x1024xf32> -> vector<8x1024xf32>
    %222 = vector.extract_strided_slice %219 {offsets = [0, 0], sizes = [8, 256], strides = [1, 1]} : vector<8x512xf32> to vector<8x256xf32>
    %223 = vector.extract_strided_slice %219 {offsets = [0, 256], sizes = [8, 256], strides = [1, 1]} : vector<8x512xf32> to vector<8x256xf32>
    %224 = vector.extract_strided_slice %221 {offsets = [0, 0], sizes = [8, 256], strides = [1, 1]} : vector<8x1024xf32> to vector<8x256xf32>
    %225 = vector.extract_strided_slice %221 {offsets = [0, 256], sizes = [8, 256], strides = [1, 1]} : vector<8x1024xf32> to vector<8x256xf32>
    %226 = vector.extract_strided_slice %221 {offsets = [0, 512], sizes = [8, 256], strides = [1, 1]} : vector<8x1024xf32> to vector<8x256xf32>
    %227 = vector.extract_strided_slice %221 {offsets = [0, 768], sizes = [8, 256], strides = [1, 1]} : vector<8x1024xf32> to vector<8x256xf32>
    %c2_96 = arith.constant 2 : index
    %c0_97 = arith.constant 0 : index
    %c0_98 = arith.constant 0 : index
    %228 = vector.load %arg2[%c2_96, %c0_97, %c0_98] : memref<7x8x512xf32, #tpu.memory_space<vmem>>, vector<1x8x512xf32>
    %229 = vector.shape_cast %228 : vector<1x8x512xf32> to vector<8x512xf32>
    %230 = vector.extract_strided_slice %229 {offsets = [0, 0], sizes = [8, 256], strides = [1, 1]} : vector<8x512xf32> to vector<8x256xf32>
    %231 = vector.extract_strided_slice %229 {offsets = [0, 256], sizes = [8, 256], strides = [1, 1]} : vector<8x512xf32> to vector<8x256xf32>
    %c0_99 = arith.constant 0 : index
    %c0_100 = arith.constant 0 : index
    %232 = vector.load %arg13[%c0_99, %c0_100] : memref<8x512xf32, #tpu.memory_space<vmem>>, vector<8x512xf32>
    %c0_101 = arith.constant 0 : index
    %c0_102 = arith.constant 0 : index
    %233 = vector.load %arg14[%c0_101, %c0_102] : memref<8x512xf32, #tpu.memory_space<vmem>>, vector<8x512xf32>
    %234 = arith.mulf %222, %224 : vector<8x256xf32>
    %235 = arith.mulf %223, %225 : vector<8x256xf32>
    %236 = vector.extract_strided_slice %232 {offsets = [0, 0], sizes = [8, 256], strides = [1, 1]} : vector<8x512xf32> to vector<8x256xf32>
    %237 = arith.mulf %234, %236 : vector<8x256xf32>
    %238 = arith.mulf %226, %230 : vector<8x256xf32>
    %239 = arith.addf %237, %238 : vector<8x256xf32>
    %240 = vector.extract_strided_slice %232 {offsets = [0, 256], sizes = [8, 256], strides = [1, 1]} : vector<8x512xf32> to vector<8x256xf32>
    %241 = arith.mulf %234, %240 : vector<8x256xf32>
    %242 = arith.mulf %226, %231 : vector<8x256xf32>
    %243 = arith.addf %241, %242 : vector<8x256xf32>
    %244 = vector.extract_strided_slice %233 {offsets = [0, 0], sizes = [8, 256], strides = [1, 1]} : vector<8x512xf32> to vector<8x256xf32>
    %245 = arith.mulf %235, %244 : vector<8x256xf32>
    %246 = arith.mulf %227, %230 : vector<8x256xf32>
    %247 = arith.addf %245, %246 : vector<8x256xf32>
    %248 = vector.extract_strided_slice %233 {offsets = [0, 256], sizes = [8, 256], strides = [1, 1]} : vector<8x512xf32> to vector<8x256xf32>
    %249 = arith.mulf %235, %248 : vector<8x256xf32>
    %250 = arith.mulf %227, %231 : vector<8x256xf32>
    %251 = arith.addf %249, %250 : vector<8x256xf32>
    %252 = arith.mulf %239, %239 : vector<8x256xf32>
    %253 = arith.mulf %243, %243 : vector<8x256xf32>
    %254 = arith.addf %252, %253 : vector<8x256xf32>
    %255 = arith.mulf %247, %247 : vector<8x256xf32>
    %256 = arith.mulf %251, %251 : vector<8x256xf32>
    %257 = arith.addf %255, %256 : vector<8x256xf32>
    %258 = tpu.concatenate %254, %257 in 1 : vector<8x256xf32>, vector<8x256xf32> -> vector<8x512xf32>
    %cst_103 = arith.constant dense<0.000000e+00> : vector<8x64xf32>
    %259 = tpu.matmul %258, %6, %cst_103 {dimension_numbers = #tpu.dot_dimension_numbers<[1], [0], [0], [1], [0, 0, 1, 1], [], []>} : vector<8x512xf32>, vector<512x64xf32>, vector<8x64xf32> -> vector<8x64xf32>
    %260 = arith.addf %259, %10 : vector<8x64xf32>
    %261 = math.tanh %260 : vector<8x64xf32>
    %cst_104 = arith.constant dense<0.000000e+00> : vector<8x64xf32>
    %262 = tpu.matmul %261, %7, %cst_104 {dimension_numbers = #tpu.dot_dimension_numbers<[1], [0], [0], [1], [0, 0, 1, 1], [], []>} : vector<8x64xf32>, vector<64x64xf32>, vector<8x64xf32> -> vector<8x64xf32>
    %263 = arith.addf %262, %13 : vector<8x64xf32>
    %cst_105 = arith.constant 1.000000e+00 : f32
    %264 = vector.broadcast %cst_105 : f32 to vector<8x64xf32>
    %265 = arith.subf %264, %215 : vector<8x64xf32>
    %266 = arith.mulf %265, %202 : vector<8x64xf32>
    %267 = arith.mulf %215, %214 : vector<8x64xf32>
    %268 = arith.addf %266, %267 : vector<8x64xf32>
    %269 = arith.addf %268, %263 : vector<8x64xf32>
    %270 = arith.negf %269 : vector<8x64xf32>
    %271 = math.exp %270 : vector<8x64xf32>
    %cst_106 = arith.constant 1.000000e+00 : f32
    %272 = vector.broadcast %cst_106 : f32 to vector<8x64xf32>
    %273 = arith.addf %272, %271 : vector<8x64xf32>
    %274 = arith.divf %272, %273 : vector<8x64xf32>
    %275 = arith.mulf %274, %261 : vector<8x64xf32>
    %c2_107 = arith.constant 2 : index
    %c0_108 = arith.constant 0 : index
    %c0_109 = arith.constant 0 : index
    %276 = vector.load %arg10[%c2_107, %c0_108, %c0_109] : memref<7x8x64xf32, #tpu.memory_space<vmem>>, vector<1x8x64xf32>
    %277 = vector.shape_cast %276 : vector<1x8x64xf32> to vector<8x64xf32>
    %278 = vector.shape_cast %275 : vector<8x64xf32> to vector<1x8x64xf32>
    tpu.vector_store %arg10[%c2_107, %c0_108, %c0_109], %278 {strides = array<i32>} : memref<7x8x64xf32, #tpu.memory_space<vmem>>, vector<1x8x64xf32>,
    %279 = vector.extract_strided_slice %275 {offsets = [0, 0], sizes = [8, 32], strides = [1, 1]} : vector<8x64xf32> to vector<8x32xf32>
    %c0_110 = arith.constant 0 : index
    %c0_111 = arith.constant 0 : index
    %280 = vector.load %arg11[%c0_110, %c0_111] : memref<8x32xf32, #tpu.memory_space<vmem>>, vector<8x32xf32>
    tpu.vector_store %arg11[%c0_110, %c0_111], %279 {strides = array<i32>} : memref<8x32xf32, #tpu.memory_space<vmem>>, vector<8x32xf32>,
    %281 = tpu.concatenate %239, %243 in 1 : vector<8x256xf32>, vector<8x256xf32> -> vector<8x512xf32>
    %c0_112 = arith.constant 0 : index
    %c0_113 = arith.constant 0 : index
    %282 = vector.load %arg13[%c0_112, %c0_113] : memref<8x512xf32, #tpu.memory_space<vmem>>, vector<8x512xf32>
    tpu.vector_store %arg13[%c0_112, %c0_113], %281 {strides = array<i32>} : memref<8x512xf32, #tpu.memory_space<vmem>>, vector<8x512xf32>,
    %283 = vector.extract_strided_slice %275 {offsets = [0, 32], sizes = [8, 32], strides = [1, 1]} : vector<8x64xf32> to vector<8x32xf32>
    %284 = tpu.concatenate %247, %251 in 1 : vector<8x256xf32>, vector<8x256xf32> -> vector<8x512xf32>
    %285 = vector.extract_strided_slice %283 {offsets = [6, 0], sizes = [2, 32], strides = [1, 1]} : vector<8x32xf32> to vector<2x32xf32>
    %c0_114 = arith.constant 0 : index
    %c0_115 = arith.constant 0 : index
    %286 = vector.load %arg12[%c0_114, %c0_115] : memref<8x32xf32, #tpu.memory_space<vmem>>, vector<2x32xf32>
    tpu.vector_store %arg12[%c0_114, %c0_115], %285 {strides = array<i32>} : memref<8x32xf32, #tpu.memory_space<vmem>>, vector<2x32xf32>,
    %287 = vector.extract_strided_slice %283 {offsets = [0, 0], sizes = [6, 32], strides = [1, 1]} : vector<8x32xf32> to vector<6x32xf32>
    %c2_116 = arith.constant 2 : index
    %c0_117 = arith.constant 0 : index
    %288 = vector.load %arg12[%c2_116, %c0_117] : memref<8x32xf32, #tpu.memory_space<vmem>>, vector<6x32xf32>
    tpu.vector_store %arg12[%c2_116, %c0_117], %287 {strides = array<i32>} : memref<8x32xf32, #tpu.memory_space<vmem>>, vector<6x32xf32>,
    %289 = vector.extract_strided_slice %284 {offsets = [6, 0], sizes = [2, 512], strides = [1, 1]} : vector<8x512xf32> to vector<2x512xf32>
    %c0_118 = arith.constant 0 : index
    %c0_119 = arith.constant 0 : index
    %290 = vector.load %arg14[%c0_118, %c0_119] : memref<8x512xf32, #tpu.memory_space<vmem>>, vector<2x512xf32>
    tpu.vector_store %arg14[%c0_118, %c0_119], %289 {strides = array<i32>} : memref<8x512xf32, #tpu.memory_space<vmem>>, vector<2x512xf32>,
    %291 = vector.extract_strided_slice %284 {offsets = [0, 0], sizes = [6, 512], strides = [1, 1]} : vector<8x512xf32> to vector<6x512xf32>
    %c2_120 = arith.constant 2 : index
    %c0_121 = arith.constant 0 : index
    %292 = vector.load %arg14[%c2_120, %c0_121] : memref<8x512xf32, #tpu.memory_space<vmem>>, vector<6x512xf32>
    tpu.vector_store %arg14[%c2_120, %c0_121], %291 {strides = array<i32>} : memref<8x512xf32, #tpu.memory_space<vmem>>, vector<6x512xf32>,
    %c0_122 = arith.constant 0 : index
    %c0_123 = arith.constant 0 : index
    %293 = vector.load %arg11[%c0_122, %c0_123] : memref<8x32xf32, #tpu.memory_space<vmem>>, vector<8x32xf32>
    %c0_124 = arith.constant 0 : index
    %c0_125 = arith.constant 0 : index
    %294 = vector.load %arg12[%c0_124, %c0_125] : memref<8x32xf32, #tpu.memory_space<vmem>>, vector<8x32xf32>
    %295 = tpu.concatenate %293, %294 in 1 : vector<8x32xf32>, vector<8x32xf32> -> vector<8x64xf32>
    %c3 = arith.constant 3 : index
    %c0_126 = arith.constant 0 : index
    %c0_127 = arith.constant 0 : index
    %296 = vector.load %arg1[%c3, %c0_126, %c0_127] : memref<7x8x208xf32, #tpu.memory_space<vmem>>, vector<1x8x208xf32>
    %297 = vector.shape_cast %296 : vector<1x8x208xf32> to vector<8x208xf32>
    %cst_128 = arith.constant dense<0.000000e+00> : vector<8x208xf32>
    %298 = tpu.matmul %295, %3, %cst_128 {dimension_numbers = #tpu.dot_dimension_numbers<[1], [0], [0], [1], [0, 0, 1, 1], [], []>} : vector<8x64xf32>, vector<64x208xf32>, vector<8x208xf32> -> vector<8x208xf32>
    %299 = arith.addf %297, %298 : vector<8x208xf32>
    %300 = vector.extract_strided_slice %299 {offsets = [0, 0], sizes = [8, 144], strides = [1, 1]} : vector<8x208xf32> to vector<8x144xf32>
    %301 = arith.negf %300 : vector<8x144xf32>
    %302 = math.exp %301 : vector<8x144xf32>
    %cst_129 = arith.constant 1.000000e+00 : f32
    %303 = vector.broadcast %cst_129 : f32 to vector<8x144xf32>
    %304 = arith.addf %303, %302 : vector<8x144xf32>
    %305 = arith.divf %303, %304 : vector<8x144xf32>
    %306 = vector.extract_strided_slice %299 {offsets = [0, 144], sizes = [8, 64], strides = [1, 1]} : vector<8x208xf32> to vector<8x64xf32>
    %307 = math.tanh %306 : vector<8x64xf32>
    %308 = vector.extract_strided_slice %305 {offsets = [0, 0], sizes = [8, 64], strides = [1, 1]} : vector<8x144xf32> to vector<8x64xf32>
    %309 = vector.extract_strided_slice %305 {offsets = [0, 64], sizes = [8, 64], strides = [1, 1]} : vector<8x144xf32> to vector<8x64xf32>
    %310 = vector.extract_strided_slice %305 {offsets = [0, 128], sizes = [8, 16], strides = [1, 1]} : vector<8x144xf32> to vector<8x16xf32>
    %311 = arith.mulf %309, %307 : vector<8x64xf32>
    %cst_130 = arith.constant dense<0.000000e+00> : vector<8x512xf32>
    %312 = tpu.matmul %310, %4, %cst_130 {dimension_numbers = #tpu.dot_dimension_numbers<[1], [0], [0], [1], [0, 0, 1, 1], [], []>} : vector<8x16xf32>, vector<16x512xf32>, vector<8x512xf32> -> vector<8x512xf32>
    %313 = tpu.concatenate %308, %311 in 1 : vector<8x64xf32>, vector<8x64xf32> -> vector<8x128xf32>
    %cst_131 = arith.constant dense<0.000000e+00> : vector<8x1024xf32>
    %314 = tpu.matmul %313, %5, %cst_131 {dimension_numbers = #tpu.dot_dimension_numbers<[1], [0], [0], [1], [0, 0, 1, 1], [], []>} : vector<8x128xf32>, vector<128x1024xf32>, vector<8x1024xf32> -> vector<8x1024xf32>
    %315 = vector.extract_strided_slice %312 {offsets = [0, 0], sizes = [8, 256], strides = [1, 1]} : vector<8x512xf32> to vector<8x256xf32>
    %316 = vector.extract_strided_slice %312 {offsets = [0, 256], sizes = [8, 256], strides = [1, 1]} : vector<8x512xf32> to vector<8x256xf32>
    %317 = vector.extract_strided_slice %314 {offsets = [0, 0], sizes = [8, 256], strides = [1, 1]} : vector<8x1024xf32> to vector<8x256xf32>
    %318 = vector.extract_strided_slice %314 {offsets = [0, 256], sizes = [8, 256], strides = [1, 1]} : vector<8x1024xf32> to vector<8x256xf32>
    %319 = vector.extract_strided_slice %314 {offsets = [0, 512], sizes = [8, 256], strides = [1, 1]} : vector<8x1024xf32> to vector<8x256xf32>
    %320 = vector.extract_strided_slice %314 {offsets = [0, 768], sizes = [8, 256], strides = [1, 1]} : vector<8x1024xf32> to vector<8x256xf32>
    %c3_132 = arith.constant 3 : index
    %c0_133 = arith.constant 0 : index
    %c0_134 = arith.constant 0 : index
    %321 = vector.load %arg2[%c3_132, %c0_133, %c0_134] : memref<7x8x512xf32, #tpu.memory_space<vmem>>, vector<1x8x512xf32>
    %322 = vector.shape_cast %321 : vector<1x8x512xf32> to vector<8x512xf32>
    %323 = vector.extract_strided_slice %322 {offsets = [0, 0], sizes = [8, 256], strides = [1, 1]} : vector<8x512xf32> to vector<8x256xf32>
    %324 = vector.extract_strided_slice %322 {offsets = [0, 256], sizes = [8, 256], strides = [1, 1]} : vector<8x512xf32> to vector<8x256xf32>
    %c0_135 = arith.constant 0 : index
    %c0_136 = arith.constant 0 : index
    %325 = vector.load %arg13[%c0_135, %c0_136] : memref<8x512xf32, #tpu.memory_space<vmem>>, vector<8x512xf32>
    %c0_137 = arith.constant 0 : index
    %c0_138 = arith.constant 0 : index
    %326 = vector.load %arg14[%c0_137, %c0_138] : memref<8x512xf32, #tpu.memory_space<vmem>>, vector<8x512xf32>
    %327 = arith.mulf %315, %317 : vector<8x256xf32>
    %328 = arith.mulf %316, %318 : vector<8x256xf32>
    %329 = vector.extract_strided_slice %325 {offsets = [0, 0], sizes = [8, 256], strides = [1, 1]} : vector<8x512xf32> to vector<8x256xf32>
    %330 = arith.mulf %327, %329 : vector<8x256xf32>
    %331 = arith.mulf %319, %323 : vector<8x256xf32>
    %332 = arith.addf %330, %331 : vector<8x256xf32>
    %333 = vector.extract_strided_slice %325 {offsets = [0, 256], sizes = [8, 256], strides = [1, 1]} : vector<8x512xf32> to vector<8x256xf32>
    %334 = arith.mulf %327, %333 : vector<8x256xf32>
    %335 = arith.mulf %319, %324 : vector<8x256xf32>
    %336 = arith.addf %334, %335 : vector<8x256xf32>
    %337 = vector.extract_strided_slice %326 {offsets = [0, 0], sizes = [8, 256], strides = [1, 1]} : vector<8x512xf32> to vector<8x256xf32>
    %338 = arith.mulf %328, %337 : vector<8x256xf32>
    %339 = arith.mulf %320, %323 : vector<8x256xf32>
    %340 = arith.addf %338, %339 : vector<8x256xf32>
    %341 = vector.extract_strided_slice %326 {offsets = [0, 256], sizes = [8, 256], strides = [1, 1]} : vector<8x512xf32> to vector<8x256xf32>
    %342 = arith.mulf %328, %341 : vector<8x256xf32>
    %343 = arith.mulf %320, %324 : vector<8x256xf32>
    %344 = arith.addf %342, %343 : vector<8x256xf32>
    %345 = arith.mulf %332, %332 : vector<8x256xf32>
    %346 = arith.mulf %336, %336 : vector<8x256xf32>
    %347 = arith.addf %345, %346 : vector<8x256xf32>
    %348 = arith.mulf %340, %340 : vector<8x256xf32>
    %349 = arith.mulf %344, %344 : vector<8x256xf32>
    %350 = arith.addf %348, %349 : vector<8x256xf32>
    %351 = tpu.concatenate %347, %350 in 1 : vector<8x256xf32>, vector<8x256xf32> -> vector<8x512xf32>
    %cst_139 = arith.constant dense<0.000000e+00> : vector<8x64xf32>
    %352 = tpu.matmul %351, %6, %cst_139 {dimension_numbers = #tpu.dot_dimension_numbers<[1], [0], [0], [1], [0, 0, 1, 1], [], []>} : vector<8x512xf32>, vector<512x64xf32>, vector<8x64xf32> -> vector<8x64xf32>
    %353 = arith.addf %352, %10 : vector<8x64xf32>
    %354 = math.tanh %353 : vector<8x64xf32>
    %cst_140 = arith.constant dense<0.000000e+00> : vector<8x64xf32>
    %355 = tpu.matmul %354, %7, %cst_140 {dimension_numbers = #tpu.dot_dimension_numbers<[1], [0], [0], [1], [0, 0, 1, 1], [], []>} : vector<8x64xf32>, vector<64x64xf32>, vector<8x64xf32> -> vector<8x64xf32>
    %356 = arith.addf %355, %13 : vector<8x64xf32>
    %cst_141 = arith.constant 1.000000e+00 : f32
    %357 = vector.broadcast %cst_141 : f32 to vector<8x64xf32>
    %358 = arith.subf %357, %308 : vector<8x64xf32>
    %359 = arith.mulf %358, %295 : vector<8x64xf32>
    %360 = arith.mulf %308, %307 : vector<8x64xf32>
    %361 = arith.addf %359, %360 : vector<8x64xf32>
    %362 = arith.addf %361, %356 : vector<8x64xf32>
    %363 = arith.negf %362 : vector<8x64xf32>
    %364 = math.exp %363 : vector<8x64xf32>
    %cst_142 = arith.constant 1.000000e+00 : f32
    %365 = vector.broadcast %cst_142 : f32 to vector<8x64xf32>
    %366 = arith.addf %365, %364 : vector<8x64xf32>
    %367 = arith.divf %365, %366 : vector<8x64xf32>
    %368 = arith.mulf %367, %354 : vector<8x64xf32>
    %c3_143 = arith.constant 3 : index
    %c0_144 = arith.constant 0 : index
    %c0_145 = arith.constant 0 : index
    %369 = vector.load %arg10[%c3_143, %c0_144, %c0_145] : memref<7x8x64xf32, #tpu.memory_space<vmem>>, vector<1x8x64xf32>
    %370 = vector.shape_cast %369 : vector<1x8x64xf32> to vector<8x64xf32>
    %371 = vector.shape_cast %368 : vector<8x64xf32> to vector<1x8x64xf32>
    tpu.vector_store %arg10[%c3_143, %c0_144, %c0_145], %371 {strides = array<i32>} : memref<7x8x64xf32, #tpu.memory_space<vmem>>, vector<1x8x64xf32>,
    %372 = vector.extract_strided_slice %368 {offsets = [0, 0], sizes = [8, 32], strides = [1, 1]} : vector<8x64xf32> to vector<8x32xf32>
    %c0_146 = arith.constant 0 : index
    %c0_147 = arith.constant 0 : index
    %373 = vector.load %arg11[%c0_146, %c0_147] : memref<8x32xf32, #tpu.memory_space<vmem>>, vector<8x32xf32>
    tpu.vector_store %arg11[%c0_146, %c0_147], %372 {strides = array<i32>} : memref<8x32xf32, #tpu.memory_space<vmem>>, vector<8x32xf32>,
    %374 = tpu.concatenate %332, %336 in 1 : vector<8x256xf32>, vector<8x256xf32> -> vector<8x512xf32>
    %c0_148 = arith.constant 0 : index
    %c0_149 = arith.constant 0 : index
    %375 = vector.load %arg13[%c0_148, %c0_149] : memref<8x512xf32, #tpu.memory_space<vmem>>, vector<8x512xf32>
    tpu.vector_store %arg13[%c0_148, %c0_149], %374 {strides = array<i32>} : memref<8x512xf32, #tpu.memory_space<vmem>>, vector<8x512xf32>,
    %376 = vector.extract_strided_slice %368 {offsets = [0, 32], sizes = [8, 32], strides = [1, 1]} : vector<8x64xf32> to vector<8x32xf32>
    %377 = tpu.concatenate %340, %344 in 1 : vector<8x256xf32>, vector<8x256xf32> -> vector<8x512xf32>
    %378 = vector.extract_strided_slice %376 {offsets = [6, 0], sizes = [2, 32], strides = [1, 1]} : vector<8x32xf32> to vector<2x32xf32>
    %c0_150 = arith.constant 0 : index
    %c0_151 = arith.constant 0 : index
    %379 = vector.load %arg12[%c0_150, %c0_151] : memref<8x32xf32, #tpu.memory_space<vmem>>, vector<2x32xf32>
    tpu.vector_store %arg12[%c0_150, %c0_151], %378 {strides = array<i32>} : memref<8x32xf32, #tpu.memory_space<vmem>>, vector<2x32xf32>,
    %380 = vector.extract_strided_slice %376 {offsets = [0, 0], sizes = [6, 32], strides = [1, 1]} : vector<8x32xf32> to vector<6x32xf32>
    %c2_152 = arith.constant 2 : index
    %c0_153 = arith.constant 0 : index
    %381 = vector.load %arg12[%c2_152, %c0_153] : memref<8x32xf32, #tpu.memory_space<vmem>>, vector<6x32xf32>
    tpu.vector_store %arg12[%c2_152, %c0_153], %380 {strides = array<i32>} : memref<8x32xf32, #tpu.memory_space<vmem>>, vector<6x32xf32>,
    %382 = vector.extract_strided_slice %377 {offsets = [6, 0], sizes = [2, 512], strides = [1, 1]} : vector<8x512xf32> to vector<2x512xf32>
    %c0_154 = arith.constant 0 : index
    %c0_155 = arith.constant 0 : index
    %383 = vector.load %arg14[%c0_154, %c0_155] : memref<8x512xf32, #tpu.memory_space<vmem>>, vector<2x512xf32>
    tpu.vector_store %arg14[%c0_154, %c0_155], %382 {strides = array<i32>} : memref<8x512xf32, #tpu.memory_space<vmem>>, vector<2x512xf32>,
    %384 = vector.extract_strided_slice %377 {offsets = [0, 0], sizes = [6, 512], strides = [1, 1]} : vector<8x512xf32> to vector<6x512xf32>
    %c2_156 = arith.constant 2 : index
    %c0_157 = arith.constant 0 : index
    %385 = vector.load %arg14[%c2_156, %c0_157] : memref<8x512xf32, #tpu.memory_space<vmem>>, vector<6x512xf32>
    tpu.vector_store %arg14[%c2_156, %c0_157], %384 {strides = array<i32>} : memref<8x512xf32, #tpu.memory_space<vmem>>, vector<6x512xf32>,
    %c0_158 = arith.constant 0 : index
    %c0_159 = arith.constant 0 : index
    %386 = vector.load %arg11[%c0_158, %c0_159] : memref<8x32xf32, #tpu.memory_space<vmem>>, vector<8x32xf32>
    %c0_160 = arith.constant 0 : index
    %c0_161 = arith.constant 0 : index
    %387 = vector.load %arg12[%c0_160, %c0_161] : memref<8x32xf32, #tpu.memory_space<vmem>>, vector<8x32xf32>
    %388 = tpu.concatenate %386, %387 in 1 : vector<8x32xf32>, vector<8x32xf32> -> vector<8x64xf32>
    %c4 = arith.constant 4 : index
    %c0_162 = arith.constant 0 : index
    %c0_163 = arith.constant 0 : index
    %389 = vector.load %arg1[%c4, %c0_162, %c0_163] : memref<7x8x208xf32, #tpu.memory_space<vmem>>, vector<1x8x208xf32>
    %390 = vector.shape_cast %389 : vector<1x8x208xf32> to vector<8x208xf32>
    %cst_164 = arith.constant dense<0.000000e+00> : vector<8x208xf32>
    %391 = tpu.matmul %388, %3, %cst_164 {dimension_numbers = #tpu.dot_dimension_numbers<[1], [0], [0], [1], [0, 0, 1, 1], [], []>} : vector<8x64xf32>, vector<64x208xf32>, vector<8x208xf32> -> vector<8x208xf32>
    %392 = arith.addf %390, %391 : vector<8x208xf32>
    %393 = vector.extract_strided_slice %392 {offsets = [0, 0], sizes = [8, 144], strides = [1, 1]} : vector<8x208xf32> to vector<8x144xf32>
    %394 = arith.negf %393 : vector<8x144xf32>
    %395 = math.exp %394 : vector<8x144xf32>
    %cst_165 = arith.constant 1.000000e+00 : f32
    %396 = vector.broadcast %cst_165 : f32 to vector<8x144xf32>
    %397 = arith.addf %396, %395 : vector<8x144xf32>
    %398 = arith.divf %396, %397 : vector<8x144xf32>
    %399 = vector.extract_strided_slice %392 {offsets = [0, 144], sizes = [8, 64], strides = [1, 1]} : vector<8x208xf32> to vector<8x64xf32>
    %400 = math.tanh %399 : vector<8x64xf32>
    %401 = vector.extract_strided_slice %398 {offsets = [0, 0], sizes = [8, 64], strides = [1, 1]} : vector<8x144xf32> to vector<8x64xf32>
    %402 = vector.extract_strided_slice %398 {offsets = [0, 64], sizes = [8, 64], strides = [1, 1]} : vector<8x144xf32> to vector<8x64xf32>
    %403 = vector.extract_strided_slice %398 {offsets = [0, 128], sizes = [8, 16], strides = [1, 1]} : vector<8x144xf32> to vector<8x16xf32>
    %404 = arith.mulf %402, %400 : vector<8x64xf32>
    %cst_166 = arith.constant dense<0.000000e+00> : vector<8x512xf32>
    %405 = tpu.matmul %403, %4, %cst_166 {dimension_numbers = #tpu.dot_dimension_numbers<[1], [0], [0], [1], [0, 0, 1, 1], [], []>} : vector<8x16xf32>, vector<16x512xf32>, vector<8x512xf32> -> vector<8x512xf32>
    %406 = tpu.concatenate %401, %404 in 1 : vector<8x64xf32>, vector<8x64xf32> -> vector<8x128xf32>
    %cst_167 = arith.constant dense<0.000000e+00> : vector<8x1024xf32>
    %407 = tpu.matmul %406, %5, %cst_167 {dimension_numbers = #tpu.dot_dimension_numbers<[1], [0], [0], [1], [0, 0, 1, 1], [], []>} : vector<8x128xf32>, vector<128x1024xf32>, vector<8x1024xf32> -> vector<8x1024xf32>
    %408 = vector.extract_strided_slice %405 {offsets = [0, 0], sizes = [8, 256], strides = [1, 1]} : vector<8x512xf32> to vector<8x256xf32>
    %409 = vector.extract_strided_slice %405 {offsets = [0, 256], sizes = [8, 256], strides = [1, 1]} : vector<8x512xf32> to vector<8x256xf32>
    %410 = vector.extract_strided_slice %407 {offsets = [0, 0], sizes = [8, 256], strides = [1, 1]} : vector<8x1024xf32> to vector<8x256xf32>
    %411 = vector.extract_strided_slice %407 {offsets = [0, 256], sizes = [8, 256], strides = [1, 1]} : vector<8x1024xf32> to vector<8x256xf32>
    %412 = vector.extract_strided_slice %407 {offsets = [0, 512], sizes = [8, 256], strides = [1, 1]} : vector<8x1024xf32> to vector<8x256xf32>
    %413 = vector.extract_strided_slice %407 {offsets = [0, 768], sizes = [8, 256], strides = [1, 1]} : vector<8x1024xf32> to vector<8x256xf32>
    %c4_168 = arith.constant 4 : index
    %c0_169 = arith.constant 0 : index
    %c0_170 = arith.constant 0 : index
    %414 = vector.load %arg2[%c4_168, %c0_169, %c0_170] : memref<7x8x512xf32, #tpu.memory_space<vmem>>, vector<1x8x512xf32>
    %415 = vector.shape_cast %414 : vector<1x8x512xf32> to vector<8x512xf32>
    %416 = vector.extract_strided_slice %415 {offsets = [0, 0], sizes = [8, 256], strides = [1, 1]} : vector<8x512xf32> to vector<8x256xf32>
    %417 = vector.extract_strided_slice %415 {offsets = [0, 256], sizes = [8, 256], strides = [1, 1]} : vector<8x512xf32> to vector<8x256xf32>
    %c0_171 = arith.constant 0 : index
    %c0_172 = arith.constant 0 : index
    %418 = vector.load %arg13[%c0_171, %c0_172] : memref<8x512xf32, #tpu.memory_space<vmem>>, vector<8x512xf32>
    %c0_173 = arith.constant 0 : index
    %c0_174 = arith.constant 0 : index
    %419 = vector.load %arg14[%c0_173, %c0_174] : memref<8x512xf32, #tpu.memory_space<vmem>>, vector<8x512xf32>
    %420 = arith.mulf %408, %410 : vector<8x256xf32>
    %421 = arith.mulf %409, %411 : vector<8x256xf32>
    %422 = vector.extract_strided_slice %418 {offsets = [0, 0], sizes = [8, 256], strides = [1, 1]} : vector<8x512xf32> to vector<8x256xf32>
    %423 = arith.mulf %420, %422 : vector<8x256xf32>
    %424 = arith.mulf %412, %416 : vector<8x256xf32>
    %425 = arith.addf %423, %424 : vector<8x256xf32>
    %426 = vector.extract_strided_slice %418 {offsets = [0, 256], sizes = [8, 256], strides = [1, 1]} : vector<8x512xf32> to vector<8x256xf32>
    %427 = arith.mulf %420, %426 : vector<8x256xf32>
    %428 = arith.mulf %412, %417 : vector<8x256xf32>
    %429 = arith.addf %427, %428 : vector<8x256xf32>
    %430 = vector.extract_strided_slice %419 {offsets = [0, 0], sizes = [8, 256], strides = [1, 1]} : vector<8x512xf32> to vector<8x256xf32>
    %431 = arith.mulf %421, %430 : vector<8x256xf32>
    %432 = arith.mulf %413, %416 : vector<8x256xf32>
    %433 = arith.addf %431, %432 : vector<8x256xf32>
    %434 = vector.extract_strided_slice %419 {offsets = [0, 256], sizes = [8, 256], strides = [1, 1]} : vector<8x512xf32> to vector<8x256xf32>
    %435 = arith.mulf %421, %434 : vector<8x256xf32>
    %436 = arith.mulf %413, %417 : vector<8x256xf32>
    %437 = arith.addf %435, %436 : vector<8x256xf32>
    %438 = arith.mulf %425, %425 : vector<8x256xf32>
    %439 = arith.mulf %429, %429 : vector<8x256xf32>
    %440 = arith.addf %438, %439 : vector<8x256xf32>
    %441 = arith.mulf %433, %433 : vector<8x256xf32>
    %442 = arith.mulf %437, %437 : vector<8x256xf32>
    %443 = arith.addf %441, %442 : vector<8x256xf32>
    %444 = tpu.concatenate %440, %443 in 1 : vector<8x256xf32>, vector<8x256xf32> -> vector<8x512xf32>
    %cst_175 = arith.constant dense<0.000000e+00> : vector<8x64xf32>
    %445 = tpu.matmul %444, %6, %cst_175 {dimension_numbers = #tpu.dot_dimension_numbers<[1], [0], [0], [1], [0, 0, 1, 1], [], []>} : vector<8x512xf32>, vector<512x64xf32>, vector<8x64xf32> -> vector<8x64xf32>
    %446 = arith.addf %445, %10 : vector<8x64xf32>
    %447 = math.tanh %446 : vector<8x64xf32>
    %cst_176 = arith.constant dense<0.000000e+00> : vector<8x64xf32>
    %448 = tpu.matmul %447, %7, %cst_176 {dimension_numbers = #tpu.dot_dimension_numbers<[1], [0], [0], [1], [0, 0, 1, 1], [], []>} : vector<8x64xf32>, vector<64x64xf32>, vector<8x64xf32> -> vector<8x64xf32>
    %449 = arith.addf %448, %13 : vector<8x64xf32>
    %cst_177 = arith.constant 1.000000e+00 : f32
    %450 = vector.broadcast %cst_177 : f32 to vector<8x64xf32>
    %451 = arith.subf %450, %401 : vector<8x64xf32>
    %452 = arith.mulf %451, %388 : vector<8x64xf32>
    %453 = arith.mulf %401, %400 : vector<8x64xf32>
    %454 = arith.addf %452, %453 : vector<8x64xf32>
    %455 = arith.addf %454, %449 : vector<8x64xf32>
    %456 = arith.negf %455 : vector<8x64xf32>
    %457 = math.exp %456 : vector<8x64xf32>
    %cst_178 = arith.constant 1.000000e+00 : f32
    %458 = vector.broadcast %cst_178 : f32 to vector<8x64xf32>
    %459 = arith.addf %458, %457 : vector<8x64xf32>
    %460 = arith.divf %458, %459 : vector<8x64xf32>
    %461 = arith.mulf %460, %447 : vector<8x64xf32>
    %c4_179 = arith.constant 4 : index
    %c0_180 = arith.constant 0 : index
    %c0_181 = arith.constant 0 : index
    %462 = vector.load %arg10[%c4_179, %c0_180, %c0_181] : memref<7x8x64xf32, #tpu.memory_space<vmem>>, vector<1x8x64xf32>
    %463 = vector.shape_cast %462 : vector<1x8x64xf32> to vector<8x64xf32>
    %464 = vector.shape_cast %461 : vector<8x64xf32> to vector<1x8x64xf32>
    tpu.vector_store %arg10[%c4_179, %c0_180, %c0_181], %464 {strides = array<i32>} : memref<7x8x64xf32, #tpu.memory_space<vmem>>, vector<1x8x64xf32>,
    %465 = vector.extract_strided_slice %461 {offsets = [0, 0], sizes = [8, 32], strides = [1, 1]} : vector<8x64xf32> to vector<8x32xf32>
    %c0_182 = arith.constant 0 : index
    %c0_183 = arith.constant 0 : index
    %466 = vector.load %arg11[%c0_182, %c0_183] : memref<8x32xf32, #tpu.memory_space<vmem>>, vector<8x32xf32>
    tpu.vector_store %arg11[%c0_182, %c0_183], %465 {strides = array<i32>} : memref<8x32xf32, #tpu.memory_space<vmem>>, vector<8x32xf32>,
    %467 = tpu.concatenate %425, %429 in 1 : vector<8x256xf32>, vector<8x256xf32> -> vector<8x512xf32>
    %c0_184 = arith.constant 0 : index
    %c0_185 = arith.constant 0 : index
    %468 = vector.load %arg13[%c0_184, %c0_185] : memref<8x512xf32, #tpu.memory_space<vmem>>, vector<8x512xf32>
    tpu.vector_store %arg13[%c0_184, %c0_185], %467 {strides = array<i32>} : memref<8x512xf32, #tpu.memory_space<vmem>>, vector<8x512xf32>,
    %469 = vector.extract_strided_slice %461 {offsets = [0, 32], sizes = [8, 32], strides = [1, 1]} : vector<8x64xf32> to vector<8x32xf32>
    %470 = tpu.concatenate %433, %437 in 1 : vector<8x256xf32>, vector<8x256xf32> -> vector<8x512xf32>
    %471 = vector.extract_strided_slice %469 {offsets = [6, 0], sizes = [2, 32], strides = [1, 1]} : vector<8x32xf32> to vector<2x32xf32>
    %c0_186 = arith.constant 0 : index
    %c0_187 = arith.constant 0 : index
    %472 = vector.load %arg12[%c0_186, %c0_187] : memref<8x32xf32, #tpu.memory_space<vmem>>, vector<2x32xf32>
    tpu.vector_store %arg12[%c0_186, %c0_187], %471 {strides = array<i32>} : memref<8x32xf32, #tpu.memory_space<vmem>>, vector<2x32xf32>,
    %473 = vector.extract_strided_slice %469 {offsets = [0, 0], sizes = [6, 32], strides = [1, 1]} : vector<8x32xf32> to vector<6x32xf32>
    %c2_188 = arith.constant 2 : index
    %c0_189 = arith.constant 0 : index
    %474 = vector.load %arg12[%c2_188, %c0_189] : memref<8x32xf32, #tpu.memory_space<vmem>>, vector<6x32xf32>
    tpu.vector_store %arg12[%c2_188, %c0_189], %473 {strides = array<i32>} : memref<8x32xf32, #tpu.memory_space<vmem>>, vector<6x32xf32>,
    %475 = vector.extract_strided_slice %470 {offsets = [6, 0], sizes = [2, 512], strides = [1, 1]} : vector<8x512xf32> to vector<2x512xf32>
    %c0_190 = arith.constant 0 : index
    %c0_191 = arith.constant 0 : index
    %476 = vector.load %arg14[%c0_190, %c0_191] : memref<8x512xf32, #tpu.memory_space<vmem>>, vector<2x512xf32>
    tpu.vector_store %arg14[%c0_190, %c0_191], %475 {strides = array<i32>} : memref<8x512xf32, #tpu.memory_space<vmem>>, vector<2x512xf32>,
    %477 = vector.extract_strided_slice %470 {offsets = [0, 0], sizes = [6, 512], strides = [1, 1]} : vector<8x512xf32> to vector<6x512xf32>
    %c2_192 = arith.constant 2 : index
    %c0_193 = arith.constant 0 : index
    %478 = vector.load %arg14[%c2_192, %c0_193] : memref<8x512xf32, #tpu.memory_space<vmem>>, vector<6x512xf32>
    tpu.vector_store %arg14[%c2_192, %c0_193], %477 {strides = array<i32>} : memref<8x512xf32, #tpu.memory_space<vmem>>, vector<6x512xf32>,
    %c0_194 = arith.constant 0 : index
    %c0_195 = arith.constant 0 : index
    %479 = vector.load %arg11[%c0_194, %c0_195] : memref<8x32xf32, #tpu.memory_space<vmem>>, vector<8x32xf32>
    %c0_196 = arith.constant 0 : index
    %c0_197 = arith.constant 0 : index
    %480 = vector.load %arg12[%c0_196, %c0_197] : memref<8x32xf32, #tpu.memory_space<vmem>>, vector<8x32xf32>
    %481 = tpu.concatenate %479, %480 in 1 : vector<8x32xf32>, vector<8x32xf32> -> vector<8x64xf32>
    %c5 = arith.constant 5 : index
    %c0_198 = arith.constant 0 : index
    %c0_199 = arith.constant 0 : index
    %482 = vector.load %arg1[%c5, %c0_198, %c0_199] : memref<7x8x208xf32, #tpu.memory_space<vmem>>, vector<1x8x208xf32>
    %483 = vector.shape_cast %482 : vector<1x8x208xf32> to vector<8x208xf32>
    %cst_200 = arith.constant dense<0.000000e+00> : vector<8x208xf32>
    %484 = tpu.matmul %481, %3, %cst_200 {dimension_numbers = #tpu.dot_dimension_numbers<[1], [0], [0], [1], [0, 0, 1, 1], [], []>} : vector<8x64xf32>, vector<64x208xf32>, vector<8x208xf32> -> vector<8x208xf32>
    %485 = arith.addf %483, %484 : vector<8x208xf32>
    %486 = vector.extract_strided_slice %485 {offsets = [0, 0], sizes = [8, 144], strides = [1, 1]} : vector<8x208xf32> to vector<8x144xf32>
    %487 = arith.negf %486 : vector<8x144xf32>
    %488 = math.exp %487 : vector<8x144xf32>
    %cst_201 = arith.constant 1.000000e+00 : f32
    %489 = vector.broadcast %cst_201 : f32 to vector<8x144xf32>
    %490 = arith.addf %489, %488 : vector<8x144xf32>
    %491 = arith.divf %489, %490 : vector<8x144xf32>
    %492 = vector.extract_strided_slice %485 {offsets = [0, 144], sizes = [8, 64], strides = [1, 1]} : vector<8x208xf32> to vector<8x64xf32>
    %493 = math.tanh %492 : vector<8x64xf32>
    %494 = vector.extract_strided_slice %491 {offsets = [0, 0], sizes = [8, 64], strides = [1, 1]} : vector<8x144xf32> to vector<8x64xf32>
    %495 = vector.extract_strided_slice %491 {offsets = [0, 64], sizes = [8, 64], strides = [1, 1]} : vector<8x144xf32> to vector<8x64xf32>
    %496 = vector.extract_strided_slice %491 {offsets = [0, 128], sizes = [8, 16], strides = [1, 1]} : vector<8x144xf32> to vector<8x16xf32>
    %497 = arith.mulf %495, %493 : vector<8x64xf32>
    %cst_202 = arith.constant dense<0.000000e+00> : vector<8x512xf32>
    %498 = tpu.matmul %496, %4, %cst_202 {dimension_numbers = #tpu.dot_dimension_numbers<[1], [0], [0], [1], [0, 0, 1, 1], [], []>} : vector<8x16xf32>, vector<16x512xf32>, vector<8x512xf32> -> vector<8x512xf32>
    %499 = tpu.concatenate %494, %497 in 1 : vector<8x64xf32>, vector<8x64xf32> -> vector<8x128xf32>
    %cst_203 = arith.constant dense<0.000000e+00> : vector<8x1024xf32>
    %500 = tpu.matmul %499, %5, %cst_203 {dimension_numbers = #tpu.dot_dimension_numbers<[1], [0], [0], [1], [0, 0, 1, 1], [], []>} : vector<8x128xf32>, vector<128x1024xf32>, vector<8x1024xf32> -> vector<8x1024xf32>
    %501 = vector.extract_strided_slice %498 {offsets = [0, 0], sizes = [8, 256], strides = [1, 1]} : vector<8x512xf32> to vector<8x256xf32>
    %502 = vector.extract_strided_slice %498 {offsets = [0, 256], sizes = [8, 256], strides = [1, 1]} : vector<8x512xf32> to vector<8x256xf32>
    %503 = vector.extract_strided_slice %500 {offsets = [0, 0], sizes = [8, 256], strides = [1, 1]} : vector<8x1024xf32> to vector<8x256xf32>
    %504 = vector.extract_strided_slice %500 {offsets = [0, 256], sizes = [8, 256], strides = [1, 1]} : vector<8x1024xf32> to vector<8x256xf32>
    %505 = vector.extract_strided_slice %500 {offsets = [0, 512], sizes = [8, 256], strides = [1, 1]} : vector<8x1024xf32> to vector<8x256xf32>
    %506 = vector.extract_strided_slice %500 {offsets = [0, 768], sizes = [8, 256], strides = [1, 1]} : vector<8x1024xf32> to vector<8x256xf32>
    %c5_204 = arith.constant 5 : index
    %c0_205 = arith.constant 0 : index
    %c0_206 = arith.constant 0 : index
    %507 = vector.load %arg2[%c5_204, %c0_205, %c0_206] : memref<7x8x512xf32, #tpu.memory_space<vmem>>, vector<1x8x512xf32>
    %508 = vector.shape_cast %507 : vector<1x8x512xf32> to vector<8x512xf32>
    %509 = vector.extract_strided_slice %508 {offsets = [0, 0], sizes = [8, 256], strides = [1, 1]} : vector<8x512xf32> to vector<8x256xf32>
    %510 = vector.extract_strided_slice %508 {offsets = [0, 256], sizes = [8, 256], strides = [1, 1]} : vector<8x512xf32> to vector<8x256xf32>
    %c0_207 = arith.constant 0 : index
    %c0_208 = arith.constant 0 : index
    %511 = vector.load %arg13[%c0_207, %c0_208] : memref<8x512xf32, #tpu.memory_space<vmem>>, vector<8x512xf32>
    %c0_209 = arith.constant 0 : index
    %c0_210 = arith.constant 0 : index
    %512 = vector.load %arg14[%c0_209, %c0_210] : memref<8x512xf32, #tpu.memory_space<vmem>>, vector<8x512xf32>
    %513 = arith.mulf %501, %503 : vector<8x256xf32>
    %514 = arith.mulf %502, %504 : vector<8x256xf32>
    %515 = vector.extract_strided_slice %511 {offsets = [0, 0], sizes = [8, 256], strides = [1, 1]} : vector<8x512xf32> to vector<8x256xf32>
    %516 = arith.mulf %513, %515 : vector<8x256xf32>
    %517 = arith.mulf %505, %509 : vector<8x256xf32>
    %518 = arith.addf %516, %517 : vector<8x256xf32>
    %519 = vector.extract_strided_slice %511 {offsets = [0, 256], sizes = [8, 256], strides = [1, 1]} : vector<8x512xf32> to vector<8x256xf32>
    %520 = arith.mulf %513, %519 : vector<8x256xf32>
    %521 = arith.mulf %505, %510 : vector<8x256xf32>
    %522 = arith.addf %520, %521 : vector<8x256xf32>
    %523 = vector.extract_strided_slice %512 {offsets = [0, 0], sizes = [8, 256], strides = [1, 1]} : vector<8x512xf32> to vector<8x256xf32>
    %524 = arith.mulf %514, %523 : vector<8x256xf32>
    %525 = arith.mulf %506, %509 : vector<8x256xf32>
    %526 = arith.addf %524, %525 : vector<8x256xf32>
    %527 = vector.extract_strided_slice %512 {offsets = [0, 256], sizes = [8, 256], strides = [1, 1]} : vector<8x512xf32> to vector<8x256xf32>
    %528 = arith.mulf %514, %527 : vector<8x256xf32>
    %529 = arith.mulf %506, %510 : vector<8x256xf32>
    %530 = arith.addf %528, %529 : vector<8x256xf32>
    %531 = arith.mulf %518, %518 : vector<8x256xf32>
    %532 = arith.mulf %522, %522 : vector<8x256xf32>
    %533 = arith.addf %531, %532 : vector<8x256xf32>
    %534 = arith.mulf %526, %526 : vector<8x256xf32>
    %535 = arith.mulf %530, %530 : vector<8x256xf32>
    %536 = arith.addf %534, %535 : vector<8x256xf32>
    %537 = tpu.concatenate %533, %536 in 1 : vector<8x256xf32>, vector<8x256xf32> -> vector<8x512xf32>
    %cst_211 = arith.constant dense<0.000000e+00> : vector<8x64xf32>
    %538 = tpu.matmul %537, %6, %cst_211 {dimension_numbers = #tpu.dot_dimension_numbers<[1], [0], [0], [1], [0, 0, 1, 1], [], []>} : vector<8x512xf32>, vector<512x64xf32>, vector<8x64xf32> -> vector<8x64xf32>
    %539 = arith.addf %538, %10 : vector<8x64xf32>
    %540 = math.tanh %539 : vector<8x64xf32>
    %cst_212 = arith.constant dense<0.000000e+00> : vector<8x64xf32>
    %541 = tpu.matmul %540, %7, %cst_212 {dimension_numbers = #tpu.dot_dimension_numbers<[1], [0], [0], [1], [0, 0, 1, 1], [], []>} : vector<8x64xf32>, vector<64x64xf32>, vector<8x64xf32> -> vector<8x64xf32>
    %542 = arith.addf %541, %13 : vector<8x64xf32>
    %cst_213 = arith.constant 1.000000e+00 : f32
    %543 = vector.broadcast %cst_213 : f32 to vector<8x64xf32>
    %544 = arith.subf %543, %494 : vector<8x64xf32>
    %545 = arith.mulf %544, %481 : vector<8x64xf32>
    %546 = arith.mulf %494, %493 : vector<8x64xf32>
    %547 = arith.addf %545, %546 : vector<8x64xf32>
    %548 = arith.addf %547, %542 : vector<8x64xf32>
    %549 = arith.negf %548 : vector<8x64xf32>
    %550 = math.exp %549 : vector<8x64xf32>
    %cst_214 = arith.constant 1.000000e+00 : f32
    %551 = vector.broadcast %cst_214 : f32 to vector<8x64xf32>
    %552 = arith.addf %551, %550 : vector<8x64xf32>
    %553 = arith.divf %551, %552 : vector<8x64xf32>
    %554 = arith.mulf %553, %540 : vector<8x64xf32>
    %c5_215 = arith.constant 5 : index
    %c0_216 = arith.constant 0 : index
    %c0_217 = arith.constant 0 : index
    %555 = vector.load %arg10[%c5_215, %c0_216, %c0_217] : memref<7x8x64xf32, #tpu.memory_space<vmem>>, vector<1x8x64xf32>
    %556 = vector.shape_cast %555 : vector<1x8x64xf32> to vector<8x64xf32>
    %557 = vector.shape_cast %554 : vector<8x64xf32> to vector<1x8x64xf32>
    tpu.vector_store %arg10[%c5_215, %c0_216, %c0_217], %557 {strides = array<i32>} : memref<7x8x64xf32, #tpu.memory_space<vmem>>, vector<1x8x64xf32>,
    %558 = vector.extract_strided_slice %554 {offsets = [0, 0], sizes = [8, 32], strides = [1, 1]} : vector<8x64xf32> to vector<8x32xf32>
    %c0_218 = arith.constant 0 : index
    %c0_219 = arith.constant 0 : index
    %559 = vector.load %arg11[%c0_218, %c0_219] : memref<8x32xf32, #tpu.memory_space<vmem>>, vector<8x32xf32>
    tpu.vector_store %arg11[%c0_218, %c0_219], %558 {strides = array<i32>} : memref<8x32xf32, #tpu.memory_space<vmem>>, vector<8x32xf32>,
    %560 = tpu.concatenate %518, %522 in 1 : vector<8x256xf32>, vector<8x256xf32> -> vector<8x512xf32>
    %c0_220 = arith.constant 0 : index
    %c0_221 = arith.constant 0 : index
    %561 = vector.load %arg13[%c0_220, %c0_221] : memref<8x512xf32, #tpu.memory_space<vmem>>, vector<8x512xf32>
    tpu.vector_store %arg13[%c0_220, %c0_221], %560 {strides = array<i32>} : memref<8x512xf32, #tpu.memory_space<vmem>>, vector<8x512xf32>,
    %562 = vector.extract_strided_slice %554 {offsets = [0, 32], sizes = [8, 32], strides = [1, 1]} : vector<8x64xf32> to vector<8x32xf32>
    %563 = tpu.concatenate %526, %530 in 1 : vector<8x256xf32>, vector<8x256xf32> -> vector<8x512xf32>
    %564 = vector.extract_strided_slice %562 {offsets = [6, 0], sizes = [2, 32], strides = [1, 1]} : vector<8x32xf32> to vector<2x32xf32>
    %c0_222 = arith.constant 0 : index
    %c0_223 = arith.constant 0 : index
    %565 = vector.load %arg12[%c0_222, %c0_223] : memref<8x32xf32, #tpu.memory_space<vmem>>, vector<2x32xf32>
    tpu.vector_store %arg12[%c0_222, %c0_223], %564 {strides = array<i32>} : memref<8x32xf32, #tpu.memory_space<vmem>>, vector<2x32xf32>,
    %566 = vector.extract_strided_slice %562 {offsets = [0, 0], sizes = [6, 32], strides = [1, 1]} : vector<8x32xf32> to vector<6x32xf32>
    %c2_224 = arith.constant 2 : index
    %c0_225 = arith.constant 0 : index
    %567 = vector.load %arg12[%c2_224, %c0_225] : memref<8x32xf32, #tpu.memory_space<vmem>>, vector<6x32xf32>
    tpu.vector_store %arg12[%c2_224, %c0_225], %566 {strides = array<i32>} : memref<8x32xf32, #tpu.memory_space<vmem>>, vector<6x32xf32>,
    %568 = vector.extract_strided_slice %563 {offsets = [6, 0], sizes = [2, 512], strides = [1, 1]} : vector<8x512xf32> to vector<2x512xf32>
    %c0_226 = arith.constant 0 : index
    %c0_227 = arith.constant 0 : index
    %569 = vector.load %arg14[%c0_226, %c0_227] : memref<8x512xf32, #tpu.memory_space<vmem>>, vector<2x512xf32>
    tpu.vector_store %arg14[%c0_226, %c0_227], %568 {strides = array<i32>} : memref<8x512xf32, #tpu.memory_space<vmem>>, vector<2x512xf32>,
    %570 = vector.extract_strided_slice %563 {offsets = [0, 0], sizes = [6, 512], strides = [1, 1]} : vector<8x512xf32> to vector<6x512xf32>
    %c2_228 = arith.constant 2 : index
    %c0_229 = arith.constant 0 : index
    %571 = vector.load %arg14[%c2_228, %c0_229] : memref<8x512xf32, #tpu.memory_space<vmem>>, vector<6x512xf32>
    tpu.vector_store %arg14[%c2_228, %c0_229], %570 {strides = array<i32>} : memref<8x512xf32, #tpu.memory_space<vmem>>, vector<6x512xf32>,
    %c0_230 = arith.constant 0 : index
    %c0_231 = arith.constant 0 : index
    %572 = vector.load %arg11[%c0_230, %c0_231] : memref<8x32xf32, #tpu.memory_space<vmem>>, vector<8x32xf32>
    %c0_232 = arith.constant 0 : index
    %c0_233 = arith.constant 0 : index
    %573 = vector.load %arg12[%c0_232, %c0_233] : memref<8x32xf32, #tpu.memory_space<vmem>>, vector<8x32xf32>
    %574 = tpu.concatenate %572, %573 in 1 : vector<8x32xf32>, vector<8x32xf32> -> vector<8x64xf32>
    %c6 = arith.constant 6 : index
    %c0_234 = arith.constant 0 : index
    %c0_235 = arith.constant 0 : index
    %575 = vector.load %arg1[%c6, %c0_234, %c0_235] : memref<7x8x208xf32, #tpu.memory_space<vmem>>, vector<1x8x208xf32>
    %576 = vector.shape_cast %575 : vector<1x8x208xf32> to vector<8x208xf32>
    %cst_236 = arith.constant dense<0.000000e+00> : vector<8x208xf32>
    %577 = tpu.matmul %574, %3, %cst_236 {dimension_numbers = #tpu.dot_dimension_numbers<[1], [0], [0], [1], [0, 0, 1, 1], [], []>} : vector<8x64xf32>, vector<64x208xf32>, vector<8x208xf32> -> vector<8x208xf32>
    %578 = arith.addf %576, %577 : vector<8x208xf32>
    %579 = vector.extract_strided_slice %578 {offsets = [0, 0], sizes = [8, 144], strides = [1, 1]} : vector<8x208xf32> to vector<8x144xf32>
    %580 = arith.negf %579 : vector<8x144xf32>
    %581 = math.exp %580 : vector<8x144xf32>
    %cst_237 = arith.constant 1.000000e+00 : f32
    %582 = vector.broadcast %cst_237 : f32 to vector<8x144xf32>
    %583 = arith.addf %582, %581 : vector<8x144xf32>
    %584 = arith.divf %582, %583 : vector<8x144xf32>
    %585 = vector.extract_strided_slice %578 {offsets = [0, 144], sizes = [8, 64], strides = [1, 1]} : vector<8x208xf32> to vector<8x64xf32>
    %586 = math.tanh %585 : vector<8x64xf32>
    %587 = vector.extract_strided_slice %584 {offsets = [0, 0], sizes = [8, 64], strides = [1, 1]} : vector<8x144xf32> to vector<8x64xf32>
    %588 = vector.extract_strided_slice %584 {offsets = [0, 64], sizes = [8, 64], strides = [1, 1]} : vector<8x144xf32> to vector<8x64xf32>
    %589 = vector.extract_strided_slice %584 {offsets = [0, 128], sizes = [8, 16], strides = [1, 1]} : vector<8x144xf32> to vector<8x16xf32>
    %590 = arith.mulf %588, %586 : vector<8x64xf32>
    %cst_238 = arith.constant dense<0.000000e+00> : vector<8x512xf32>
    %591 = tpu.matmul %589, %4, %cst_238 {dimension_numbers = #tpu.dot_dimension_numbers<[1], [0], [0], [1], [0, 0, 1, 1], [], []>} : vector<8x16xf32>, vector<16x512xf32>, vector<8x512xf32> -> vector<8x512xf32>
    %592 = tpu.concatenate %587, %590 in 1 : vector<8x64xf32>, vector<8x64xf32> -> vector<8x128xf32>
    %cst_239 = arith.constant dense<0.000000e+00> : vector<8x1024xf32>
    %593 = tpu.matmul %592, %5, %cst_239 {dimension_numbers = #tpu.dot_dimension_numbers<[1], [0], [0], [1], [0, 0, 1, 1], [], []>} : vector<8x128xf32>, vector<128x1024xf32>, vector<8x1024xf32> -> vector<8x1024xf32>
    %594 = vector.extract_strided_slice %591 {offsets = [0, 0], sizes = [8, 256], strides = [1, 1]} : vector<8x512xf32> to vector<8x256xf32>
    %595 = vector.extract_strided_slice %591 {offsets = [0, 256], sizes = [8, 256], strides = [1, 1]} : vector<8x512xf32> to vector<8x256xf32>
    %596 = vector.extract_strided_slice %593 {offsets = [0, 0], sizes = [8, 256], strides = [1, 1]} : vector<8x1024xf32> to vector<8x256xf32>
    %597 = vector.extract_strided_slice %593 {offsets = [0, 256], sizes = [8, 256], strides = [1, 1]} : vector<8x1024xf32> to vector<8x256xf32>
    %598 = vector.extract_strided_slice %593 {offsets = [0, 512], sizes = [8, 256], strides = [1, 1]} : vector<8x1024xf32> to vector<8x256xf32>
    %599 = vector.extract_strided_slice %593 {offsets = [0, 768], sizes = [8, 256], strides = [1, 1]} : vector<8x1024xf32> to vector<8x256xf32>
    %c6_240 = arith.constant 6 : index
    %c0_241 = arith.constant 0 : index
    %c0_242 = arith.constant 0 : index
    %600 = vector.load %arg2[%c6_240, %c0_241, %c0_242] : memref<7x8x512xf32, #tpu.memory_space<vmem>>, vector<1x8x512xf32>
    %601 = vector.shape_cast %600 : vector<1x8x512xf32> to vector<8x512xf32>
    %602 = vector.extract_strided_slice %601 {offsets = [0, 0], sizes = [8, 256], strides = [1, 1]} : vector<8x512xf32> to vector<8x256xf32>
    %603 = vector.extract_strided_slice %601 {offsets = [0, 256], sizes = [8, 256], strides = [1, 1]} : vector<8x512xf32> to vector<8x256xf32>
    %c0_243 = arith.constant 0 : index
    %c0_244 = arith.constant 0 : index
    %604 = vector.load %arg13[%c0_243, %c0_244] : memref<8x512xf32, #tpu.memory_space<vmem>>, vector<8x512xf32>
    %c0_245 = arith.constant 0 : index
    %c0_246 = arith.constant 0 : index
    %605 = vector.load %arg14[%c0_245, %c0_246] : memref<8x512xf32, #tpu.memory_space<vmem>>, vector<8x512xf32>
    %606 = arith.mulf %594, %596 : vector<8x256xf32>
    %607 = arith.mulf %595, %597 : vector<8x256xf32>
    %608 = vector.extract_strided_slice %604 {offsets = [0, 0], sizes = [8, 256], strides = [1, 1]} : vector<8x512xf32> to vector<8x256xf32>
    %609 = arith.mulf %606, %608 : vector<8x256xf32>
    %610 = arith.mulf %598, %602 : vector<8x256xf32>
    %611 = arith.addf %609, %610 : vector<8x256xf32>
    %612 = vector.extract_strided_slice %604 {offsets = [0, 256], sizes = [8, 256], strides = [1, 1]} : vector<8x512xf32> to vector<8x256xf32>
    %613 = arith.mulf %606, %612 : vector<8x256xf32>
    %614 = arith.mulf %598, %603 : vector<8x256xf32>
    %615 = arith.addf %613, %614 : vector<8x256xf32>
    %616 = vector.extract_strided_slice %605 {offsets = [0, 0], sizes = [8, 256], strides = [1, 1]} : vector<8x512xf32> to vector<8x256xf32>
    %617 = arith.mulf %607, %616 : vector<8x256xf32>
    %618 = arith.mulf %599, %602 : vector<8x256xf32>
    %619 = arith.addf %617, %618 : vector<8x256xf32>
    %620 = vector.extract_strided_slice %605 {offsets = [0, 256], sizes = [8, 256], strides = [1, 1]} : vector<8x512xf32> to vector<8x256xf32>
    %621 = arith.mulf %607, %620 : vector<8x256xf32>
    %622 = arith.mulf %599, %603 : vector<8x256xf32>
    %623 = arith.addf %621, %622 : vector<8x256xf32>
    %624 = arith.mulf %611, %611 : vector<8x256xf32>
    %625 = arith.mulf %615, %615 : vector<8x256xf32>
    %626 = arith.addf %624, %625 : vector<8x256xf32>
    %627 = arith.mulf %619, %619 : vector<8x256xf32>
    %628 = arith.mulf %623, %623 : vector<8x256xf32>
    %629 = arith.addf %627, %628 : vector<8x256xf32>
    %630 = tpu.concatenate %626, %629 in 1 : vector<8x256xf32>, vector<8x256xf32> -> vector<8x512xf32>
    %cst_247 = arith.constant dense<0.000000e+00> : vector<8x64xf32>
    %631 = tpu.matmul %630, %6, %cst_247 {dimension_numbers = #tpu.dot_dimension_numbers<[1], [0], [0], [1], [0, 0, 1, 1], [], []>} : vector<8x512xf32>, vector<512x64xf32>, vector<8x64xf32> -> vector<8x64xf32>
    %632 = arith.addf %631, %10 : vector<8x64xf32>
    %633 = math.tanh %632 : vector<8x64xf32>
    %cst_248 = arith.constant dense<0.000000e+00> : vector<8x64xf32>
    %634 = tpu.matmul %633, %7, %cst_248 {dimension_numbers = #tpu.dot_dimension_numbers<[1], [0], [0], [1], [0, 0, 1, 1], [], []>} : vector<8x64xf32>, vector<64x64xf32>, vector<8x64xf32> -> vector<8x64xf32>
    %635 = arith.addf %634, %13 : vector<8x64xf32>
    %cst_249 = arith.constant 1.000000e+00 : f32
    %636 = vector.broadcast %cst_249 : f32 to vector<8x64xf32>
    %637 = arith.subf %636, %587 : vector<8x64xf32>
    %638 = arith.mulf %637, %574 : vector<8x64xf32>
    %639 = arith.mulf %587, %586 : vector<8x64xf32>
    %640 = arith.addf %638, %639 : vector<8x64xf32>
    %641 = arith.addf %640, %635 : vector<8x64xf32>
    %642 = arith.negf %641 : vector<8x64xf32>
    %643 = math.exp %642 : vector<8x64xf32>
    %cst_250 = arith.constant 1.000000e+00 : f32
    %644 = vector.broadcast %cst_250 : f32 to vector<8x64xf32>
    %645 = arith.addf %644, %643 : vector<8x64xf32>
    %646 = arith.divf %644, %645 : vector<8x64xf32>
    %647 = arith.mulf %646, %633 : vector<8x64xf32>
    %c6_251 = arith.constant 6 : index
    %c0_252 = arith.constant 0 : index
    %c0_253 = arith.constant 0 : index
    %648 = vector.load %arg10[%c6_251, %c0_252, %c0_253] : memref<7x8x64xf32, #tpu.memory_space<vmem>>, vector<1x8x64xf32>
    %649 = vector.shape_cast %648 : vector<1x8x64xf32> to vector<8x64xf32>
    %650 = vector.shape_cast %647 : vector<8x64xf32> to vector<1x8x64xf32>
    tpu.vector_store %arg10[%c6_251, %c0_252, %c0_253], %650 {strides = array<i32>} : memref<7x8x64xf32, #tpu.memory_space<vmem>>, vector<1x8x64xf32>,
    %651 = vector.extract_strided_slice %647 {offsets = [0, 0], sizes = [8, 32], strides = [1, 1]} : vector<8x64xf32> to vector<8x32xf32>
    %c0_254 = arith.constant 0 : index
    %c0_255 = arith.constant 0 : index
    %652 = vector.load %arg11[%c0_254, %c0_255] : memref<8x32xf32, #tpu.memory_space<vmem>>, vector<8x32xf32>
    tpu.vector_store %arg11[%c0_254, %c0_255], %651 {strides = array<i32>} : memref<8x32xf32, #tpu.memory_space<vmem>>, vector<8x32xf32>,
    %653 = tpu.concatenate %611, %615 in 1 : vector<8x256xf32>, vector<8x256xf32> -> vector<8x512xf32>
    %c0_256 = arith.constant 0 : index
    %c0_257 = arith.constant 0 : index
    %654 = vector.load %arg13[%c0_256, %c0_257] : memref<8x512xf32, #tpu.memory_space<vmem>>, vector<8x512xf32>
    tpu.vector_store %arg13[%c0_256, %c0_257], %653 {strides = array<i32>} : memref<8x512xf32, #tpu.memory_space<vmem>>, vector<8x512xf32>,
    %655 = vector.extract_strided_slice %647 {offsets = [0, 32], sizes = [8, 32], strides = [1, 1]} : vector<8x64xf32> to vector<8x32xf32>
    %656 = tpu.concatenate %619, %623 in 1 : vector<8x256xf32>, vector<8x256xf32> -> vector<8x512xf32>
    %657 = vector.extract_strided_slice %655 {offsets = [6, 0], sizes = [2, 32], strides = [1, 1]} : vector<8x32xf32> to vector<2x32xf32>
    %c0_258 = arith.constant 0 : index
    %c0_259 = arith.constant 0 : index
    %658 = vector.load %arg12[%c0_258, %c0_259] : memref<8x32xf32, #tpu.memory_space<vmem>>, vector<2x32xf32>
    tpu.vector_store %arg12[%c0_258, %c0_259], %657 {strides = array<i32>} : memref<8x32xf32, #tpu.memory_space<vmem>>, vector<2x32xf32>,
    %659 = vector.extract_strided_slice %655 {offsets = [0, 0], sizes = [6, 32], strides = [1, 1]} : vector<8x32xf32> to vector<6x32xf32>
    %c2_260 = arith.constant 2 : index
    %c0_261 = arith.constant 0 : index
    %660 = vector.load %arg12[%c2_260, %c0_261] : memref<8x32xf32, #tpu.memory_space<vmem>>, vector<6x32xf32>
    tpu.vector_store %arg12[%c2_260, %c0_261], %659 {strides = array<i32>} : memref<8x32xf32, #tpu.memory_space<vmem>>, vector<6x32xf32>,
    %661 = vector.extract_strided_slice %656 {offsets = [6, 0], sizes = [2, 512], strides = [1, 1]} : vector<8x512xf32> to vector<2x512xf32>
    %c0_262 = arith.constant 0 : index
    %c0_263 = arith.constant 0 : index
    %662 = vector.load %arg14[%c0_262, %c0_263] : memref<8x512xf32, #tpu.memory_space<vmem>>, vector<2x512xf32>
    tpu.vector_store %arg14[%c0_262, %c0_263], %661 {strides = array<i32>} : memref<8x512xf32, #tpu.memory_space<vmem>>, vector<2x512xf32>,
    %663 = vector.extract_strided_slice %656 {offsets = [0, 0], sizes = [6, 512], strides = [1, 1]} : vector<8x512xf32> to vector<6x512xf32>
    %c2_264 = arith.constant 2 : index
    %c0_265 = arith.constant 0 : index
    %664 = vector.load %arg14[%c2_264, %c0_265] : memref<8x512xf32, #tpu.memory_space<vmem>>, vector<6x512xf32>
    tpu.vector_store %arg14[%c2_264, %c0_265], %663 {strides = array<i32>} : memref<8x512xf32, #tpu.memory_space<vmem>>, vector<6x512xf32>,
    return
  }
  func.func @transform_0(%arg0: i32) -> (i32, i32, i32) {
    %c0_i32 = arith.constant 0 : i32
    %c0_i32_0 = arith.constant 0 : i32
    %c0_i32_1 = arith.constant 0 : i32
    return %arg0, %c0_i32, %c0_i32_0 : i32, i32, i32
  }
  func.func @transform_1(%arg0: i32) -> (i32, i32, i32) {
    %c0_i32 = arith.constant 0 : i32
    %c0_i32_0 = arith.constant 0 : i32
    %c0_i32_1 = arith.constant 0 : i32
    return %arg0, %c0_i32, %c0_i32_0 : i32, i32, i32
  }
  func.func @transform_2(%arg0: i32) -> (i32, i32) {
    %c0_i32 = arith.constant 0 : i32
    %c0_i32_0 = arith.constant 0 : i32
    %c0_i32_1 = arith.constant 0 : i32
    return %c0_i32, %c0_i32_0 : i32, i32
  }
  func.func @transform_3(%arg0: i32) -> (i32, i32) {
    %c0_i32 = arith.constant 0 : i32
    %c0_i32_0 = arith.constant 0 : i32
    %c0_i32_1 = arith.constant 0 : i32
    return %c0_i32, %c0_i32_0 : i32, i32
  }
  func.func @transform_4(%arg0: i32) -> (i32, i32) {
    %c0_i32 = arith.constant 0 : i32
    %c0_i32_0 = arith.constant 0 : i32
    %c0_i32_1 = arith.constant 0 : i32
    return %c0_i32, %c0_i32_0 : i32, i32
  }
  func.func @transform_5(%arg0: i32) -> (i32, i32) {
    %c0_i32 = arith.constant 0 : i32
    %c0_i32_0 = arith.constant 0 : i32
    %c0_i32_1 = arith.constant 0 : i32
    return %c0_i32, %c0_i32_0 : i32, i32
  }
  func.func @transform_6(%arg0: i32) -> (i32, i32) {
    %c0_i32 = arith.constant 0 : i32
    %c0_i32_0 = arith.constant 0 : i32
    %c0_i32_1 = arith.constant 0 : i32
    return %c0_i32, %c0_i32_0 : i32, i32
  }
  func.func @transform_7(%arg0: i32) -> (i32, i32) {
    %c0_i32 = arith.constant 0 : i32
    %c0_i32_0 = arith.constant 0 : i32
    %c0_i32_1 = arith.constant 0 : i32
    return %c0_i32, %c0_i32_0 : i32, i32
  }
  func.func @transform_8(%arg0: i32) -> (i32, i32) {
    %c0_i32 = arith.constant 0 : i32
    %c0_i32_0 = arith.constant 0 : i32
    %c0_i32_1 = arith.constant 0 : i32
    return %c0_i32, %c0_i32_0 : i32, i32
  }
  func.func @transform_9(%arg0: i32) -> (i32, i32, i32) {
    %c0_i32 = arith.constant 0 : i32
    %c0_i32_0 = arith.constant 0 : i32
    %c0_i32_1 = arith.constant 0 : i32
    return %arg0, %c0_i32, %c0_i32_0 : i32, i32, i32
  }
}

</mosaic_0001>

<llo_original>
// kernel: tpu_custom_call.1
$region0: #{tpu_custom_call.1}
  #allocation0 [shape = 'u32[]', space=smem, size = 0x4, offset = 0x4, fixed_abs, tag = 'smem constant byte address 0x4 - core index']
  #allocation1 [shape = 'u32[144,128]{1,0:T(1,128)}', space=vmem, size = 0x12000, scoped, tag = 'internal scratch']
  #allocation2 [shape = 'f32[8,32]{1,0:T(8,128)}', space=vmem, size = 0x1000, scoped, tag = 'scratch operand']
  #allocation3 [shape = 'f32[8,32]{1,0:T(8,128)}', space=vmem, size = 0x1000, scoped, tag = 'scratch operand']
  #allocation4 [shape = 'f32[8,512]{1,0:T(8,128)}', space=vmem, size = 0x4000, scoped, tag = 'scratch operand']
  #allocation5 [shape = 'f32[8,512]{1,0:T(8,128)}', space=vmem, size = 0x4000, scoped, tag = 'scratch operand']
  %s0 = inlined_call_operand.vmem [shape: f32[7,8,208], index: 0, kind: input, shape index: {}]
  %s1 = inlined_call_operand.vmem [shape: f32[7,8,512], index: 1, kind: input, shape index: {}]
  %s2 = inlined_call_operand.vmem [shape: f32[64,208], index: 2, kind: input, shape index: {}]
  %s3 = inlined_call_operand.vmem [shape: f32[16,512], index: 3, kind: input, shape index: {}]
  %s4 = inlined_call_operand.hbm [shape: f32[128,1024], index: 4, kind: input, shape index: {}]
  %s5 = inlined_call_operand.vmem [shape: f32[512,64], index: 5, kind: input, shape index: {}]
  %s6 = inlined_call_operand.vmem [shape: f32[1,64], index: 6, kind: input, shape index: {}]
  %s7 = inlined_call_operand.vmem [shape: f32[64,64], index: 7, kind: input, shape index: {}]
  %s8 = inlined_call_operand.vmem [shape: f32[1,64], index: 8, kind: input, shape index: {}]
  %s9 = inlined_call_operand.hbm [shape: f32[7,8,64], index: 9, kind: output, shape index: {}]
  %s10 = sld [smem:[#allocation0]]
  $region54: #{tpu_custom_call.1} parent=0
    _
  %s12 = ssub.s32 1, %s10
  %s13 = scalar_select 0, %s12, %s10
  $region1: #{tpu_custom_call.1} parent=0
    #allocation6 [shape = 'u8[524288]{0}', space=vmem, size = 0x80000, scoped, tag = 'input window, operand 4, single buffered']
    #allocation7 [shape = 's32[1]{0}', space=sflag, size = 0x4, scoped, tag = 'scoped memory for tpu_custom_call.1']
    #allocation8 [shape = 's32[1]{0}', space=sflag, size = 0x4, scoped, tag = 'scoped memory for tpu_custom_call.1']
    #allocation9 [shape = 'u8[28672]{0}', space=vmem, size = 0x7000, scoped, tag = 'output window, operand 0, single buffered']
    %14 = vsyncpa [#allocation7], 0
    %15 = vsyncpa [#allocation8], 0
    // Predicated region
    $region2: #{tpu_custom_call.1} parent=1 // pred_check
      _
    $region3: #{tpu_custom_call.1} parent=1 // pred_check_branch
      %17 = sbr.rel (0) target = $region5
    $region4: #{tpu_custom_call.1} parent=1 // pred_region
      _
    $region5: #{tpu_custom_call.1} parent=1 // pred_fallthru
      _
    // Predicated region
    $region6: #{tpu_custom_call.1} parent=1 // pred_check
      _
    $region7: #{tpu_custom_call.1} parent=1 // pred_check_branch
      %19 = sbr.rel (0) target = $region9
    $region8: #{tpu_custom_call.1} parent=1 // pred_region
      _
    $region9: #{tpu_custom_call.1} parent=1 // pred_fallthru
      _
    // Predicated region
    $region10: #{tpu_custom_call.1} parent=1 // pred_check
      _
    $region11: #{tpu_custom_call.1} parent=1 // pred_check_branch
      %21 = sbr.rel (0) target = $region13
    $region12: #{tpu_custom_call.1} parent=1 // pred_region
      _
    $region13: #{tpu_custom_call.1} parent=1 // pred_fallthru
      _
    // Predicated region
    $region14: #{tpu_custom_call.1} parent=1 // pred_check
      _
    $region15: #{tpu_custom_call.1} parent=1 // pred_check_branch
      %23 = sbr.rel (0) target = $region17
    $region16: #{tpu_custom_call.1} parent=1 // pred_region
      _
    $region17: #{tpu_custom_call.1} parent=1 // pred_fallthru
      _
    // Predicated region
    $region18: #{tpu_custom_call.1} parent=1 // pred_check
      _
    $region19: #{tpu_custom_call.1} parent=1 // pred_check_branch
      %25 = sbr.rel (0) target = $region21
    $region20: #{tpu_custom_call.1} parent=1 // pred_region
      %s27 = ssub.s32 16384, 16384
      %28 = vsyncadd [#allocation7], %s27
      %s29 = sshll.u32 [#allocation6], 4
      %s30 = int_to_ptr.vmem [resolvable:$true] %s29
      %35 = dma.hbm_to_vmem [thread:$0]  %s4, 16384, %s30, [#allocation7], 1024, 1024, 64
    $region21: #{tpu_custom_call.1} parent=1 // pred_fallthru
      _
    // Predicated region
    $region22: #{tpu_custom_call.1} parent=1 // pred_check
      _
    $region23: #{tpu_custom_call.1} parent=1 // pred_check_branch
      %37 = sbr.rel (0) target = $region25
    $region24: #{tpu_custom_call.1} parent=1 // pred_region
      _
    $region25: #{tpu_custom_call.1} parent=1 // pred_fallthru
      _
    // Predicated region
    $region26: #{tpu_custom_call.1} parent=1 // pred_check
      _
    $region27: #{tpu_custom_call.1} parent=1 // pred_check_branch
      %39 = sbr.rel (0) target = $region29
    $region28: #{tpu_custom_call.1} parent=1 // pred_region
      _
    $region29: #{tpu_custom_call.1} parent=1 // pred_fallthru
      _
    // Predicated region
    $region30: #{tpu_custom_call.1} parent=1 // pred_check
      _
    $region31: #{tpu_custom_call.1} parent=1 // pred_check_branch
      %41 = sbr.rel (0) target = $region33
    $region32: #{tpu_custom_call.1} parent=1 // pred_region
      _
    $region33: #{tpu_custom_call.1} parent=1 // pred_fallthru
      _
    // Predicated region
    $region34: #{tpu_custom_call.1} parent=1 // pred_check
      _
    $region35: #{tpu_custom_call.1} parent=1 // pred_check_branch
      %43 = sbr.rel (0) target = $region37
    $region36: #{tpu_custom_call.1} parent=1 // pred_region
      _
    $region37: #{tpu_custom_call.1} parent=1 // pred_fallthru
      _
    // Predicated region
    $region38: #{tpu_custom_call.1} parent=1 // pred_check
      _
    $region39: #{tpu_custom_call.1} parent=1 // pred_check_branch
      %45 = sbr.rel (0) target = $region41
    $region40: #{tpu_custom_call.1} parent=1 // pred_region
      %46 = dma.done [#allocation7], 16384
    $region41: #{tpu_custom_call.1} parent=1 // pred_fallthru
      _
    %p47 = scmp.eq.s32.totalorder 0, 0
    // Predicated region
    $region42: #{tpu_custom_call.1} parent=1 // pred_check
      %p48 = pneg %p47
    $region43: #{tpu_custom_call.1} parent=1 // pred_check_branch
      %50 = sbr.rel (%p48) target = $region45
    $region44: #{tpu_custom_call.1} parent=1 // pred_region
      %vm51 = vcmask 261120
      %52 = vst.msk [vmem:[#allocation2] sm:$0xff] %vm51, 0.0
      %53 = vst.msk [vmem:[#allocation3] sm:$0xff] %vm51, 0.0
      %54 = vst [vmem:[#allocation4] sm:$0xff] 0.1
      %55 = vst [vmem:[#allocation4 + $0x8] sm:$0xff] 0.1
      %56 = vst [vmem:[#allocation4 + $0x10] sm:$0xff] 0.1
      %57 = vst [vmem:[#allocation4 + $0x18] sm:$0xff] 0.1
      %58 = vst [vmem:[#allocation5] sm:$0xff] 0.1
      %59 = vst [vmem:[#allocation5 + $0x8] sm:$0xff] 0.1
      %60 = vst [vmem:[#allocation5 + $0x10] sm:$0xff] 0.1
      %61 = vst [vmem:[#allocation5 + $0x18] sm:$0xff] 0.1
    $region45: #{tpu_custom_call.1} parent=1 // pred_fallthru
      _
    %v62 = vld [vmem:[%s2] sm:$0xff]
    %v63 = vld [vmem:[%s2 + $0x8] sm:$0xff]
    %v64 = vld [vmem:[%s2 + $0x10] sm:$0xff]
    %v65 = vld [vmem:[%s2 + $0x18] sm:$0xff]
    %v66 = vld [vmem:[%s2 + $0x20] sm:$0xff]
    %v67 = vld [vmem:[%s2 + $0x28] sm:$0xff]
    %v68 = vld [vmem:[%s2 + $0x30] sm:$0xff]
    %v69 = vld [vmem:[%s2 + $0x38] sm:$0xff]
    %v70 = vld [vmem:[%s2 + $0x40] sm:$0xff]
    %v71 = vld [vmem:[%s2 + $0x48] sm:$0xff]
    %v72 = vld [vmem:[%s2 + $0x50] sm:$0xff]
    %v73 = vld [vmem:[%s2 + $0x58] sm:$0xff]
    %v74 = vld [vmem:[%s2 + $0x60] sm:$0xff]
    %v75 = vld [vmem:[%s2 + $0x68] sm:$0xff]
    %v76 = vld [vmem:[%s2 + $0x70] sm:$0xff]
    %v77 = vld [vmem:[%s2 + $0x78] sm:$0xff]
    %v78 = vld [vmem:[%s3] sm:$0xff]
    %v79 = vld [vmem:[%s3 + $0x8] sm:$0xff]
    %v80 = vld [vmem:[%s3 + $0x10] sm:$0xff]
    %v81 = vld [vmem:[%s3 + $0x18] sm:$0xff]
    %v82 = vld [vmem:[%s3 + $0x20] sm:$0xff]
    %v83 = vld [vmem:[%s3 + $0x28] sm:$0xff]
    %v84 = vld [vmem:[%s3 + $0x30] sm:$0xff]
    %v85 = vld [vmem:[%s3 + $0x38] sm:$0xff]
    %v86 = vld [vmem:[#allocation6] sm:$0xff]
    %v87 = vld [vmem:[#allocation6 + $0x8] sm:$0xff]
    %v88 = vld [vmem:[#allocation6 + $0x10] sm:$0xff]
    %v89 = vld [vmem:[#allocation6 + $0x18] sm:$0xff]
    %v90 = vld [vmem:[#allocation6 + $0x20] sm:$0xff]
    %v91 = vld [vmem:[#allocation6 + $0x28] sm:$0xff]
    %v92 = vld [vmem:[#allocation6 + $0x30] sm:$0xff]
    %v93 = vld [vmem:[#allocation6 + $0x38] sm:$0xff]
    %v94 = vld [vmem:[#allocation6 + $0x40] sm:$0xff]
    %v95 = vld [vmem:[#allocation6 + $0x48] sm:$0xff]
    %v96 = vld [vmem:[#allocation6 + $0x50] sm:$0xff]
    %v97 = vld [vmem:[#allocation6 + $0x58] sm:$0xff]
    %v98 = vld [vmem:[#allocation6 + $0x60] sm:$0xff]
    %v99 = vld [vmem:[#allocation6 + $0x68] sm:$0xff]
    %v100 = vld [vmem:[#allocation6 + $0x70] sm:$0xff]
    %v101 = vld [vmem:[#allocation6 + $0x78] sm:$0xff]
    %v102 = vld [vmem:[#allocation6 + $0x80] sm:$0xff]
    %v103 = vld [vmem:[#allocation6 + $0x88] sm:$0xff]
    %v104 = vld [vmem:[#allocation6 + $0x90] sm:$0xff]
    %v105 = vld [vmem:[#allocation6 + $0x98] sm:$0xff]
    %v106 = vld [vmem:[#allocation6 + $0xa0] sm:$0xff]
    %v107 = vld [vmem:[#allocation6 + $0xa8] sm:$0xff]
    %v108 = vld [vmem:[#allocation6 + $0xb0] sm:$0xff]
    %v109 = vld [vmem:[#allocation6 + $0xb8] sm:$0xff]
    %v110 = vld [vmem:[#allocation6 + $0xc0] sm:$0xff]
    %v111 = vld [vmem:[#allocation6 + $0xc8] sm:$0xff]
    %v112 = vld [vmem:[#allocation6 + $0xd0] sm:$0xff]
    %v113 = vld [vmem:[#allocation6 + $0xd8] sm:$0xff]
    %v114 = vld [vmem:[#allocation6 + $0xe0] sm:$0xff]
    %v115 = vld [vmem:[#allocation6 + $0xe8] sm:$0xff]
    %v116 = vld [vmem:[#allocation6 + $0xf0] sm:$0xff]
    %v117 = vld [vmem:[#allocation6 + $0xf8] sm:$0xff]
    %v118 = vld [vmem:[#allocation6 + $0x100] sm:$0xff]
    %v119 = vld [vmem:[#allocation6 + $0x108] sm:$0xff]
    %v120 = vld [vmem:[#allocation6 + $0x110] sm:$0xff]
    %v121 = vld [vmem:[#allocation6 + $0x118] sm:$0xff]
    %v122 = vld [vmem:[#allocation6 + $0x120] sm:$0xff]
    %v123 = vld [vmem:[#allocation6 + $0x128] sm:$0xff]
    %v124 = vld [vmem:[#allocation6 + $0x130] sm:$0xff]
    %v125 = vld [vmem:[#allocation6 + $0x138] sm:$0xff]
    %v126 = vld [vmem:[#allocation6 + $0x140] sm:$0xff]
    %v127 = vld [vmem:[#allocation6 + $0x148] sm:$0xff]
    %v128 = vld [vmem:[#allocation6 + $0x150] sm:$0xff]
    %v129 = vld [vmem:[#allocation6 + $0x158] sm:$0xff]
    %v130 = vld [vmem:[#allocation6 + $0x160] sm:$0xff]
    %v131 = vld [vmem:[#allocation6 + $0x168] sm:$0xff]
    %v132 = vld [vmem:[#allocation6 + $0x170] sm:$0xff]
    %v133 = vld [vmem:[#allocation6 + $0x178] sm:$0xff]
    %v134 = vld [vmem:[#allocation6 + $0x180] sm:$0xff]
    %v135 = vld [vmem:[#allocation6 + $0x188] sm:$0xff]
    %v136 = vld [vmem:[#allocation6 + $0x190] sm:$0xff]
    %v137 = vld [vmem:[#allocation6 + $0x198] sm:$0xff]
    %v138 = vld [vmem:[#allocation6 + $0x1a0] sm:$0xff]
    %v139 = vld [vmem:[#allocation6 + $0x1a8] sm:$0xff]
    %v140 = vld [vmem:[#allocation6 + $0x1b0] sm:$0xff]
    %v141 = vld [vmem:[#allocation6 + $0x1b8] sm:$0xff]
    %v142 = vld [vmem:[#allocation6 + $0x1c0] sm:$0xff]
    %v143 = vld [vmem:[#allocation6 + $0x1c8] sm:$0xff]
    %v144 = vld [vmem:[#allocation6 + $0x1d0] sm:$0xff]
    %v145 = vld [vmem:[#allocation6 + $0x1d8] sm:$0xff]
    %v146 = vld [vmem:[#allocation6 + $0x1e0] sm:$0xff]
    %v147 = vld [vmem:[#allocation6 + $0x1e8] sm:$0xff]
    %v148 = vld [vmem:[#allocation6 + $0x1f0] sm:$0xff]
    %v149 = vld [vmem:[#allocation6 + $0x1f8] sm:$0xff]
    %v150 = vld [vmem:[#allocation6 + $0x200] sm:$0xff]
    %v151 = vld [vmem:[#allocation6 + $0x208] sm:$0xff]
    %v152 = vld [vmem:[#allocation6 + $0x210] sm:$0xff]
    %v153 = vld [vmem:[#allocation6 + $0x218] sm:$0xff]
    %v154 = vld [vmem:[#allocation6 + $0x220] sm:$0xff]
    %v155 = vld [vmem:[#allocation6 + $0x228] sm:$0xff]
    %v156 = vld [vmem:[#allocation6 + $0x230] sm:$0xff]
    %v157 = vld [vmem:[#allocation6 + $0x238] sm:$0xff]
    %v158 = vld [vmem:[#allocation6 + $0x240] sm:$0xff]
    %v159 = vld [vmem:[#allocation6 + $0x248] sm:$0xff]
    %v160 = vld [vmem:[#allocation6 + $0x250] sm:$0xff]
    %v161 = vld [vmem:[#allocation6 + $0x258] sm:$0xff]
    %v162 = vld [vmem:[#allocation6 + $0x260] sm:$0xff]
    %v163 = vld [vmem:[#allocation6 + $0x268] sm:$0xff]
    %v164 = vld [vmem:[#allocation6 + $0x270] sm:$0xff]
    %v165 = vld [vmem:[#allocation6 + $0x278] sm:$0xff]
    %v166 = vld [vmem:[#allocation6 + $0x280] sm:$0xff]
    %v167 = vld [vmem:[#allocation6 + $0x288] sm:$0xff]
    %v168 = vld [vmem:[#allocation6 + $0x290] sm:$0xff]
    %v169 = vld [vmem:[#allocation6 + $0x298] sm:$0xff]
    %v170 = vld [vmem:[#allocation6 + $0x2a0] sm:$0xff]
    %v171 = vld [vmem:[#allocation6 + $0x2a8] sm:$0xff]
    %v172 = vld [vmem:[#allocation6 + $0x2b0] sm:$0xff]
    %v173 = vld [vmem:[#allocation6 + $0x2b8] sm:$0xff]
    %v174 = vld [vmem:[#allocation6 + $0x2c0] sm:$0xff]
    %v175 = vld [vmem:[#allocation6 + $0x2c8] sm:$0xff]
    %v176 = vld [vmem:[#allocation6 + $0x2d0] sm:$0xff]
    %v177 = vld [vmem:[#allocation6 + $0x2d8] sm:$0xff]
    %v178 = vld [vmem:[#allocation6 + $0x2e0] sm:$0xff]
    %v179 = vld [vmem:[#allocation6 + $0x2e8] sm:$0xff]
    %v180 = vld [vmem:[#allocation6 + $0x2f0] sm:$0xff]
    %v181 = vld [vmem:[#allocation6 + $0x2f8] sm:$0xff]
    %v182 = vld [vmem:[#allocation6 + $0x300] sm:$0xff]
    %v183 = vld [vmem:[#allocation6 + $0x308] sm:$0xff]
    %v184 = vld [vmem:[#allocation6 + $0x310] sm:$0xff]
    %v185 = vld [vmem:[#allocation6 + $0x318] sm:$0xff]
    %v186 = vld [vmem:[#allocation6 + $0x320] sm:$0xff]
    %v187 = vld [vmem:[#allocation6 + $0x328] sm:$0xff]
    %v188 = vld [vmem:[#allocation6 + $0x330] sm:$0xff]
    %v189 = vld [vmem:[#allocation6 + $0x338] sm:$0xff]
    %v190 = vld [vmem:[#allocation6 + $0x340] sm:$0xff]
    %v191 = vld [vmem:[#allocation6 + $0x348] sm:$0xff]
    %v192 = vld [vmem:[#allocation6 + $0x350] sm:$0xff]
    %v193 = vld [vmem:[#allocation6 + $0x358] sm:$0xff]
    %v194 = vld [vmem:[#allocation6 + $0x360] sm:$0xff]
    %v195 = vld [vmem:[#allocation6 + $0x368] sm:$0xff]
    %v196 = vld [vmem:[#allocation6 + $0x370] sm:$0xff]
    %v197 = vld [vmem:[#allocation6 + $0x378] sm:$0xff]
    %v198 = vld [vmem:[#allocation6 + $0x380] sm:$0xff]
    %v199 = vld [vmem:[#allocation6 + $0x388] sm:$0xff]
    %v200 = vld [vmem:[#allocation6 + $0x390] sm:$0xff]
    %v201 = vld [vmem:[#allocation6 + $0x398] sm:$0xff]
    %v202 = vld [vmem:[#allocation6 + $0x3a0] sm:$0xff]
    %v203 = vld [vmem:[#allocation6 + $0x3a8] sm:$0xff]
    %v204 = vld [vmem:[#allocation6 + $0x3b0] sm:$0xff]
    %v205 = vld [vmem:[#allocation6 + $0x3b8] sm:$0xff]
    %v206 = vld [vmem:[#allocation6 + $0x3c0] sm:$0xff]
    %v207 = vld [vmem:[#allocation6 + $0x3c8] sm:$0xff]
    %v208 = vld [vmem:[#allocation6 + $0x3d0] sm:$0xff]
    %v209 = vld [vmem:[#allocation6 + $0x3d8] sm:$0xff]
    %v210 = vld [vmem:[#allocation6 + $0x3e0] sm:$0xff]
    %v211 = vld [vmem:[#allocation6 + $0x3e8] sm:$0xff]
    %v212 = vld [vmem:[#allocation6 + $0x3f0] sm:$0xff]
    %v213 = vld [vmem:[#allocation6 + $0x3f8] sm:$0xff]
    %v214 = vld [vmem:[%s5] sm:$0xff]
    %v215 = vld [vmem:[%s5 + $0x8] sm:$0xff]
    %v216 = vld [vmem:[%s5 + $0x10] sm:$0xff]
    %v217 = vld [vmem:[%s5 + $0x18] sm:$0xff]
    %v218 = vld [vmem:[%s5 + $0x20] sm:$0xff]
    %v219 = vld [vmem:[%s5 + $0x28] sm:$0xff]
    %v220 = vld [vmem:[%s5 + $0x30] sm:$0xff]
    %v221 = vld [vmem:[%s5 + $0x38] sm:$0xff]
    %v222 = vld [vmem:[%s5 + $0x40] sm:$0xff]
    %v223 = vld [vmem:[%s5 + $0x48] sm:$0xff]
    %v224 = vld [vmem:[%s5 + $0x50] sm:$0xff]
    %v225 = vld [vmem:[%s5 + $0x58] sm:$0xff]
    %v226 = vld [vmem:[%s5 + $0x60] sm:$0xff]
    %v227 = vld [vmem:[%s5 + $0x68] sm:$0xff]
    %v228 = vld [vmem:[%s5 + $0x70] sm:$0xff]
    %v229 = vld [vmem:[%s5 + $0x78] sm:$0xff]
    %v230 = vld [vmem:[%s5 + $0x80] sm:$0xff]
    %v231 = vld [vmem:[%s5 + $0x88] sm:$0xff]
    %v232 = vld [vmem:[%s5 + $0x90] sm:$0xff]
    %v233 = vld [vmem:[%s5 + $0x98] sm:$0xff]
    %v234 = vld [vmem:[%s5 + $0xa0] sm:$0xff]
    %v235 = vld [vmem:[%s5 + $0xa8] sm:$0xff]
    %v236 = vld [vmem:[%s5 + $0xb0] sm:$0xff]
    %v237 = vld [vmem:[%s5 + $0xb8] sm:$0xff]
    %v238 = vld [vmem:[%s5 + $0xc0] sm:$0xff]
    %v239 = vld [vmem:[%s5 + $0xc8] sm:$0xff]
    %v240 = vld [vmem:[%s5 + $0xd0] sm:$0xff]
    %v241 = vld [vmem:[%s5 + $0xd8] sm:$0xff]
    %v242 = vld [vmem:[%s5 + $0xe0] sm:$0xff]
    %v243 = vld [vmem:[%s5 + $0xe8] sm:$0xff]
    %v244 = vld [vmem:[%s5 + $0xf0] sm:$0xff]
    %v245 = vld [vmem:[%s5 + $0xf8] sm:$0xff]
    %v246 = vld [vmem:[%s5 + $0x100] sm:$0xff]
    %v247 = vld [vmem:[%s5 + $0x108] sm:$0xff]
    %v248 = vld [vmem:[%s5 + $0x110] sm:$0xff]
    %v249 = vld [vmem:[%s5 + $0x118] sm:$0xff]
    %v250 = vld [vmem:[%s5 + $0x120] sm:$0xff]
    %v251 = vld [vmem:[%s5 + $0x128] sm:$0xff]
    %v252 = vld [vmem:[%s5 + $0x130] sm:$0xff]
    %v253 = vld [vmem:[%s5 + $0x138] sm:$0xff]
    %v254 = vld [vmem:[%s5 + $0x140] sm:$0xff]
    %v255 = vld [vmem:[%s5 + $0x148] sm:$0xff]
    %v256 = vld [vmem:[%s5 + $0x150] sm:$0xff]
    %v257 = vld [vmem:[%s5 + $0x158] sm:$0xff]
    %v258 = vld [vmem:[%s5 + $0x160] sm:$0xff]
    %v259 = vld [vmem:[%s5 + $0x168] sm:$0xff]
    %v260 = vld [vmem:[%s5 + $0x170] sm:$0xff]
    %v261 = vld [vmem:[%s5 + $0x178] sm:$0xff]
    %v262 = vld [vmem:[%s5 + $0x180] sm:$0xff]
    %v263 = vld [vmem:[%s5 + $0x188] sm:$0xff]
    %v264 = vld [vmem:[%s5 + $0x190] sm:$0xff]
    %v265 = vld [vmem:[%s5 + $0x198] sm:$0xff]
    %v266 = vld [vmem:[%s5 + $0x1a0] sm:$0xff]
    %v267 = vld [vmem:[%s5 + $0x1a8] sm:$0xff]
    %v268 = vld [vmem:[%s5 + $0x1b0] sm:$0xff]
    %v269 = vld [vmem:[%s5 + $0x1b8] sm:$0xff]
    %v270 = vld [vmem:[%s5 + $0x1c0] sm:$0xff]
    %v271 = vld [vmem:[%s5 + $0x1c8] sm:$0xff]
    %v272 = vld [vmem:[%s5 + $0x1d0] sm:$0xff]
    %v273 = vld [vmem:[%s5 + $0x1d8] sm:$0xff]
    %v274 = vld [vmem:[%s5 + $0x1e0] sm:$0xff]
    %v275 = vld [vmem:[%s5 + $0x1e8] sm:$0xff]
    %v276 = vld [vmem:[%s5 + $0x1f0] sm:$0xff]
    %v277 = vld [vmem:[%s5 + $0x1f8] sm:$0xff]
    %v278 = vld [vmem:[%s7] sm:$0xff]
    %v279 = vld [vmem:[%s7 + $0x8] sm:$0xff]
    %v280 = vld [vmem:[%s7 + $0x10] sm:$0xff]
    %v281 = vld [vmem:[%s7 + $0x18] sm:$0xff]
    %v282 = vld [vmem:[%s7 + $0x20] sm:$0xff]
    %v283 = vld [vmem:[%s7 + $0x28] sm:$0xff]
    %v284 = vld [vmem:[%s7 + $0x30] sm:$0xff]
    %v285 = vld [vmem:[%s7 + $0x38] sm:$0xff]
    %v286 = vld [vmem:[%s6] sm:$0x1]
    %v288 = vlaneseq
    %v289 = vshrl.u32 %v288, 7
    %v290 = vsub.s32 0, %v289
    %v291 = vrot.slane %v286, %v290
    %v293 = vld [vmem:[%s8] sm:$0x1]
    %v295 = vlaneseq
    %v296 = vshrl.u32 %v295, 7
    %v297 = vsub.s32 0, %v296
    %v298 = vrot.slane %v293, %v297
    %v300 = vld [vmem:[#allocation2] sm:$0xff]
    %v301 = vld [vmem:[#allocation3] sm:$0xff]
    %303 = vrot.lane.b32.xlu0 %v301, 32
    %v304 = vpop.permute.xlu0 %303
    %vm306 = vcmask 261120
    %v307 = vsel %vm306, %v300, %v304
    %v308 = vld [vmem:[%s0] sm:$0xff]
    %v309 = vld [vmem:[%s0 + $0x8] sm:$0xff]
    %vm310 = vcmask 523264
    %v312 = vsel %vm310, %v307, 0
    %314 = vmatprep.subr.mxu0 0.0
    %315 = vmatpush1.msra.mxu0 0.0
    %316 = vmatprep.subr.mxu0 0.0
    %317 = vmatpush1.msra.mxu0 0.0
    %318 = vmatprep.subr.mxu0 0.0
    %319 = vmatpush1.msra.mxu0 0.0
    %320 = vmatprep.subr.mxu0 0.0
    %321 = vmatpush1.msra.mxu0 0.0
    %322 = vmatprep.subr.mxu0 0.0
    %323 = vmatpush1.msra.mxu0 0.0
    %324 = vmatprep.subr.mxu0 0.0
    %325 = vmatpush1.msra.mxu0 0.0
    %326 = vmatprep.subr.mxu0 0.0
    %327 = vmatpush1.msra.mxu0 0.0
    %328 = vmatprep.subr.mxu0 0.0
    %329 = vmatpush1.msra.mxu0 0.0
    %330 = vmatprep.subr.mxu0 %v77
    %331 = vmatpush1.msra.mxu0 %v76
    %332 = vmatprep.subr.mxu0 %v75
    %333 = vmatpush1.msra.mxu0 %v74
    %334 = vmatprep.subr.mxu0 %v73
    %335 = vmatpush1.msra.mxu0 %v72
    %336 = vmatprep.subr.mxu0 %v71
    %337 = vmatpush1.msra.mxu0 %v70
    %338 = vmatprep.subr.mxu0 %v69
    %339 = vmatpush1.msra.mxu0 %v68
    %340 = vmatprep.subr.mxu0 %v67
    %341 = vmatpush1.msra.mxu0 %v66
    %342 = vmatprep.subr.mxu0 %v65
    %343 = vmatpush1.msra.mxu0 %v64
    %344 = vmatprep.subr.mxu0 %v63
    %345 = vmatpush1.msra.mxu0 %v62
    %346 = vmatprep.subr.mxu0 0.0
    %347 = vmatpush2.msra.mxu0 0.0
    %348 = vmatprep.subr.mxu0 0.0
    %349 = vmatpush2.msra.mxu0 0.0
    %350 = vmatprep.subr.mxu0 0.0
    %351 = vmatpush2.msra.mxu0 0.0
    %352 = vmatprep.subr.mxu0 0.0
    %353 = vmatpush2.msra.mxu0 0.0
    %354 = vmatprep.subr.mxu0 0.0
    %355 = vmatpush2.msra.mxu0 0.0
    %356 = vmatprep.subr.mxu0 0.0
    %357 = vmatpush2.msra.mxu0 0.0
    %358 = vmatprep.subr.mxu0 0.0
    %359 = vmatpush2.msra.mxu0 0.0
    %360 = vmatprep.subr.mxu0 0.0
    %361 = vmatpush2.msra.mxu0 0.0
    %362 = vmatprep.subr.mxu0 0.0
    %363 = vmatpush2.msra.mxu0 0.0
    %364 = vmatprep.subr.mxu0 0.0
    %365 = vmatpush2.msra.mxu0 0.0
    %366 = vmatprep.subr.mxu0 0.0
    %367 = vmatpush2.msra.mxu0 0.0
    %368 = vmatprep.subr.mxu0 0.0
    %369 = vmatpush2.msra.mxu0 0.0
    %370 = vmatprep.subr.mxu0 0.0
    %371 = vmatpush2.msra.mxu0 0.0
    %372 = vmatprep.subr.mxu0 0.0
    %373 = vmatpush2.msra.mxu0 0.0
    %374 = vmatprep.subr.mxu0 0.0
    %375 = vmatpush2.msra.mxu0 0.0
    %376 = vmatprep.subr.mxu0 0.0
    %377 = vmatpush2.msra.mxu0 0.0
    %378 = vmatprep.mubr.f32.mxu0 0.0
    %379 = vmatmul.mubr.f32.gmra.mxu0 %v312
    %v380 = vpop.f32.mrf.mxu0
    %v381 = vadd.f32 0.0, %v380
    %v382 = vpop.f32.mrf.mxu0
    %v383 = vadd.f32 0.0, %v382
    %384 = vdwg.mxu0
    %v385 = vadd.f32 %v308, %v381
    %v386 = vadd.f32 %v309, %v383
    %v387 = vxor.u32 %v385, 2147483648
    %v388 = vxor.u32 %v386, 2147483648
    %v389 = vmul.f32 %v387, 1.442695
    %v390 = vpow.pop %v389
    %v391 = vmul.f32 %v388, 1.442695
    %v392 = vpow.pop %v391
    %v393 = vadd.f32 %v390, 1.0
    %v394 = vadd.f32 %v392, 1.0
    %v395 = vrcp.pop %v393
    %v396 = vmul.f32 1.0, %v395
    %v397 = vrcp.pop %v394
    %v398 = vmul.f32 1.0, %v397
    %v399 = vtanh.pop %v386
    %401 = vrot.lane.b32.xlu0 %v399, 48
    %v402 = vpop.permute.xlu0 %401
    %v404 = vmul.f32 %v396, %v402
    %vm405 = vcmask 130048
    %v407 = vsel %vm405, %v398, 0
    %409 = vmatprep.subr.mxu0 0.0
    %410 = vmatpush1.msra.mxu0 0.0
    %411 = vmatprep.subr.mxu0 0.0
    %412 = vmatpush1.msra.mxu0 0.0
    %413 = vmatprep.subr.mxu0 0.0
    %414 = vmatpush1.msra.mxu0 0.0
    %415 = vmatprep.subr.mxu0 0.0
    %416 = vmatpush1.msra.mxu0 0.0
    %417 = vmatprep.subr.mxu0 0.0
    %418 = vmatpush1.msra.mxu0 0.0
    %419 = vmatprep.subr.mxu0 0.0
    %420 = vmatpush1.msra.mxu0 0.0
    %421 = vmatprep.subr.mxu0 0.0
    %422 = vmatpush1.msra.mxu0 0.0
    %423 = vmatprep.subr.mxu0 0.0
    %424 = vmatpush1.msra.mxu0 0.0
    %425 = vmatprep.subr.mxu0 0.0
    %426 = vmatpush1.msra.mxu0 0.0
    %427 = vmatprep.subr.mxu0 0.0
    %428 = vmatpush1.msra.mxu0 0.0
    %429 = vmatprep.subr.mxu0 0.0
    %430 = vmatpush1.msra.mxu0 0.0
    %431 = vmatprep.subr.mxu0 0.0
    %432 = vmatpush1.msra.mxu0 0.0
    %433 = vmatprep.subr.mxu0 0.0
    %434 = vmatpush1.msra.mxu0 0.0
    %435 = vmatprep.subr.mxu0 0.0
    %436 = vmatpush1.msra.mxu0 0.0
    %437 = vmatprep.subr.mxu0 %v83
    %438 = vmatpush1.msra.mxu0 %v82
    %439 = vmatprep.subr.mxu0 %v79
    %440 = vmatpush1.msra.mxu0 %v78
    %441 = vmatprep.subr.mxu0 0.0
    %442 = vmatpush2.msra.mxu0 0.0
    %443 = vmatprep.subr.mxu0 0.0
    %444 = vmatpush2.msra.mxu0 0.0
    %445 = vmatprep.subr.mxu0 0.0
    %446 = vmatpush2.msra.mxu0 0.0
    %447 = vmatprep.subr.mxu0 0.0
    %448 = vmatpush2.msra.mxu0 0.0
    %449 = vmatprep.subr.mxu0 0.0
    %450 = vmatpush2.msra.mxu0 0.0
    %451 = vmatprep.subr.mxu0 0.0
    %452 = vmatpush2.msra.mxu0 0.0
    %453 = vmatprep.subr.mxu0 0.0
    %454 = vmatpush2.msra.mxu0 0.0
    %455 = vmatprep.subr.mxu0 0.0
    %456 = vmatpush2.msra.mxu0 0.0
    %457 = vmatprep.subr.mxu0 0.0
    %458 = vmatpush2.msra.mxu0 0.0
    %459 = vmatprep.subr.mxu0 0.0
    %460 = vmatpush2.msra.mxu0 0.0
    %461 = vmatprep.subr.mxu0 0.0
    %462 = vmatpush2.msra.mxu0 0.0
    %463 = vmatprep.subr.mxu0 0.0
    %464 = vmatpush2.msra.mxu0 0.0
    %465 = vmatprep.subr.mxu0 0.0
    %466 = vmatpush2.msra.mxu0 0.0
    %467 = vmatprep.subr.mxu0 0.0
    %468 = vmatpush2.msra.mxu0 0.0
    %469 = vmatprep.subr.mxu0 0.0
    %470 = vmatpush2.msra.mxu0 0.0
    %471 = vmatprep.subr.mxu0 0.0
    %472 = vmatpush2.msra.mxu0 0.0
    %473 = vmatprep.mubr.f32.mxu0 0.0
    %474 = vmatmul.mubr.f32.gmra.mxu0 %v407
    %v475 = vpop.f32.mrf.mxu0
    %v476 = vadd.f32 0.0, %v475
    %v477 = vpop.f32.mrf.mxu0
    %v478 = vadd.f32 0.0, %v477
    %479 = vdwg.mxu0
    %480 = vmatprep.subr.mxu0 0.0
    %481 = vmatpush1.msra.mxu0 0.0
    %482 = vmatprep.subr.mxu0 0.0
    %483 = vmatpush1.msra.mxu0 0.0
    %484 = vmatprep.subr.mxu0 0.0
    %485 = vmatpush1.msra.mxu0 0.0
    %486 = vmatprep.subr.mxu0 0.0
    %487 = vmatpush1.msra.mxu0 0.0
    %488 = vmatprep.subr.mxu0 0.0
    %489 = vmatpush1.msra.mxu0 0.0
    %490 = vmatprep.subr.mxu0 0.0
    %491 = vmatpush1.msra.mxu0 0.0
    %492 = vmatprep.subr.mxu0 0.0
    %493 = vmatpush1.msra.mxu0 0.0
    %494 = vmatprep.subr.mxu0 0.0
    %495 = vmatpush1.msra.mxu0 0.0
    %496 = vmatprep.subr.mxu0 0.0
    %497 = vmatpush1.msra.mxu0 0.0
    %498 = vmatprep.subr.mxu0 0.0
    %499 = vmatpush1.msra.mxu0 0.0
    %500 = vmatprep.subr.mxu0 0.0
    %501 = vmatpush1.msra.mxu0 0.0
    %502 = vmatprep.subr.mxu0 0.0
    %503 = vmatpush1.msra.mxu0 0.0
    %504 = vmatprep.subr.mxu0 0.0
    %505 = vmatpush1.msra.mxu0 0.0
    %506 = vmatprep.subr.mxu0 0.0
    %507 = vmatpush1.msra.mxu0 0.0
    %508 = vmatprep.subr.mxu0 %v85
    %509 = vmatpush1.msra.mxu0 %v84
    %510 = vmatprep.subr.mxu0 %v81
    %511 = vmatpush1.msra.mxu0 %v80
    %512 = vmatprep.subr.mxu0 0.0
    %513 = vmatpush2.msra.mxu0 0.0
    %514 = vmatprep.subr.mxu0 0.0
    %515 = vmatpush2.msra.mxu0 0.0
    %516 = vmatprep.subr.mxu0 0.0
    %517 = vmatpush2.msra.mxu0 0.0
    %518 = vmatprep.subr.mxu0 0.0
    %519 = vmatpush2.msra.mxu0 0.0
    %520 = vmatprep.subr.mxu0 0.0
    %521 = vmatpush2.msra.mxu0 0.0
    %522 = vmatprep.subr.mxu0 0.0
    %523 = vmatpush2.msra.mxu0 0.0
    %524 = vmatprep.subr.mxu0 0.0
    %525 = vmatpush2.msra.mxu0 0.0
    %526 = vmatprep.subr.mxu0 0.0
    %527 = vmatpush2.msra.mxu0 0.0
    %528 = vmatprep.subr.mxu0 0.0
    %529 = vmatpush2.msra.mxu0 0.0
    %530 = vmatprep.subr.mxu0 0.0
    %531 = vmatpush2.msra.mxu0 0.0
    %532 = vmatprep.subr.mxu0 0.0
    %533 = vmatpush2.msra.mxu0 0.0
    %534 = vmatprep.subr.mxu0 0.0
    %535 = vmatpush2.msra.mxu0 0.0
    %536 = vmatprep.subr.mxu0 0.0
    %537 = vmatpush2.msra.mxu0 0.0
    %538 = vmatprep.subr.mxu0 0.0
    %539 = vmatpush2.msra.mxu0 0.0
    %540 = vmatprep.subr.mxu0 0.0
    %541 = vmatpush2.msra.mxu0 0.0
    %542 = vmatprep.subr.mxu0 0.0
    %543 = vmatpush2.msra.mxu0 0.0
    %544 = vmatprep.mubr.f32.mxu0 0.0
    %545 = vmatmul.mubr.f32.gmra.mxu0 %v407
    %v546 = vpop.f32.mrf.mxu0
    %v547 = vadd.f32 0.0, %v546
    %v548 = vpop.f32.mrf.mxu0
    %v549 = vadd.f32 0.0, %v548
    %550 = vdwg.mxu0
    %v551 = vsel %vm310, %v396, %v404
    %552 = vmatprep.subr.mxu0 %v207
    %553 = vmatpush1.msra.mxu0 %v206
    %554 = vmatprep.subr.mxu0 %v199
    %555 = vmatpush1.msra.mxu0 %v198
    %556 = vmatprep.subr.mxu0 %v191
    %557 = vmatpush1.msra.mxu0 %v190
    %558 = vmatprep.subr.mxu0 %v183
    %559 = vmatpush1.msra.mxu0 %v182
    %560 = vmatprep.subr.mxu0 %v175
    %561 = vmatpush1.msra.mxu0 %v174
    %562 = vmatprep.subr.mxu0 %v167
    %563 = vmatpush1.msra.mxu0 %v166
    %564 = vmatprep.subr.mxu0 %v159
    %565 = vmatpush1.msra.mxu0 %v158
    %566 = vmatprep.subr.mxu0 %v151
    %567 = vmatpush1.msra.mxu0 %v150
    %568 = vmatprep.subr.mxu0 %v143
    %569 = vmatpush1.msra.mxu0 %v142
    %570 = vmatprep.subr.mxu0 %v135
    %571 = vmatpush1.msra.mxu0 %v134
    %572 = vmatprep.subr.mxu0 %v127
    %573 = vmatpush1.msra.mxu0 %v126
    %574 = vmatprep.subr.mxu0 %v119
    %575 = vmatpush1.msra.mxu0 %v118
    %576 = vmatprep.subr.mxu0 %v111
    %577 = vmatpush1.msra.mxu0 %v110
    %578 = vmatprep.subr.mxu0 %v103
    %579 = vmatpush1.msra.mxu0 %v102
    %580 = vmatprep.subr.mxu0 %v95
    %581 = vmatpush1.msra.mxu0 %v94
    %582 = vmatprep.subr.mxu0 %v87
    %583 = vmatpush1.msra.mxu0 %v86
    %584 = vmatprep.subr.mxu0 0.0
    %585 = vmatpush2.msra.mxu0 0.0
    %586 = vmatprep.subr.mxu0 0.0
    %587 = vmatpush2.msra.mxu0 0.0
    %588 = vmatprep.subr.mxu0 0.0
    %589 = vmatpush2.msra.mxu0 0.0
    %590 = vmatprep.subr.mxu0 0.0
    %591 = vmatpush2.msra.mxu0 0.0
    %592 = vmatprep.subr.mxu0 0.0
    %593 = vmatpush2.msra.mxu0 0.0
    %594 = vmatprep.subr.mxu0 0.0
    %595 = vmatpush2.msra.mxu0 0.0
    %596 = vmatprep.subr.mxu0 0.0
    %597 = vmatpush2.msra.mxu0 0.0
    %598 = vmatprep.subr.mxu0 0.0
    %599 = vmatpush2.msra.mxu0 0.0
    %600 = vmatprep.subr.mxu0 0.0
    %601 = vmatpush2.msra.mxu0 0.0
    %602 = vmatprep.subr.mxu0 0.0
    %603 = vmatpush2.msra.mxu0 0.0
    %604 = vmatprep.subr.mxu0 0.0
    %605 = vmatpush2.msra.mxu0 0.0
    %606 = vmatprep.subr.mxu0 0.0
    %607 = vmatpush2.msra.mxu0 0.0
    %608 = vmatprep.subr.mxu0 0.0
    %609 = vmatpush2.msra.mxu0 0.0
    %610 = vmatprep.subr.mxu0 0.0
    %611 = vmatpush2.msra.mxu0 0.0
    %612 = vmatprep.subr.mxu0 0.0
    %613 = vmatpush2.msra.mxu0 0.0
    %614 = vmatprep.subr.mxu0 0.0
    %615 = vmatpush2.msra.mxu0 0.0
    %616 = vmatprep.mubr.f32.mxu0 0.0
    %617 = vmatmul.mubr.f32.gmra.mxu0 %v551
    %v618 = vpop.f32.mrf.mxu0
    %v619 = vadd.f32 0.0, %v618
    %v620 = vpop.f32.mrf.mxu0
    %v621 = vadd.f32 0.0, %v620
    %622 = vdwg.mxu0
    %623 = vmatprep.subr.mxu0 %v209
    %624 = vmatpush1.msra.mxu0 %v208
    %625 = vmatprep.subr.mxu0 %v201
    %626 = vmatpush1.msra.mxu0 %v200
    %627 = vmatprep.subr.mxu0 %v193
    %628 = vmatpush1.msra.mxu0 %v192
    %629 = vmatprep.subr.mxu0 %v185
    %630 = vmatpush1.msra.mxu0 %v184
    %631 = vmatprep.subr.mxu0 %v177
    %632 = vmatpush1.msra.mxu0 %v176
    %633 = vmatprep.subr.mxu0 %v169
    %634 = vmatpush1.msra.mxu0 %v168
    %635 = vmatprep.subr.mxu0 %v161
    %636 = vmatpush1.msra.mxu0 %v160
    %637 = vmatprep.subr.mxu0 %v153
    %638 = vmatpush1.msra.mxu0 %v152
    %639 = vmatprep.subr.mxu0 %v145
    %640 = vmatpush1.msra.mxu0 %v144
    %641 = vmatprep.subr.mxu0 %v137
    %642 = vmatpush1.msra.mxu0 %v136
    %643 = vmatprep.subr.mxu0 %v129
    %644 = vmatpush1.msra.mxu0 %v128
    %645 = vmatprep.subr.mxu0 %v121
    %646 = vmatpush1.msra.mxu0 %v120
    %647 = vmatprep.subr.mxu0 %v113
    %648 = vmatpush1.msra.mxu0 %v112
    %649 = vmatprep.subr.mxu0 %v105
    %650 = vmatpush1.msra.mxu0 %v104
    %651 = vmatprep.subr.mxu0 %v97
    %652 = vmatpush1.msra.mxu0 %v96
    %653 = vmatprep.subr.mxu0 %v89
    %654 = vmatpush1.msra.mxu0 %v88
    %655 = vmatprep.subr.mxu0 0.0
    %656 = vmatpush2.msra.mxu0 0.0
    %657 = vmatprep.subr.mxu0 0.0
    %658 = vmatpush2.msra.mxu0 0.0
    %659 = vmatprep.subr.mxu0 0.0
    %660 = vmatpush2.msra.mxu0 0.0
    %661 = vmatprep.subr.mxu0 0.0
    %662 = vmatpush2.msra.mxu0 0.0
    %663 = vmatprep.subr.mxu0 0.0
    %664 = vmatpush2.msra.mxu0 0.0
    %665 = vmatprep.subr.mxu0 0.0
    %666 = vmatpush2.msra.mxu0 0.0
    %667 = vmatprep.subr.mxu0 0.0
    %668 = vmatpush2.msra.mxu0 0.0
    %669 = vmatprep.subr.mxu0 0.0
    %670 = vmatpush2.msra.mxu0 0.0
    %671 = vmatprep.subr.mxu0 0.0
    %672 = vmatpush2.msra.mxu0 0.0
    %673 = vmatprep.subr.mxu0 0.0
    %674 = vmatpush2.msra.mxu0 0.0
    %675 = vmatprep.subr.mxu0 0.0
    %676 = vmatpush2.msra.mxu0 0.0
    %677 = vmatprep.subr.mxu0 0.0
    %678 = vmatpush2.msra.mxu0 0.0
    %679 = vmatprep.subr.mxu0 0.0
    %680 = vmatpush2.msra.mxu0 0.0
    %681 = vmatprep.subr.mxu0 0.0
    %682 = vmatpush2.msra.mxu0 0.0
    %683 = vmatprep.subr.mxu0 0.0
    %684 = vmatpush2.msra.mxu0 0.0
    %685 = vmatprep.subr.mxu0 0.0
    %686 = vmatpush2.msra.mxu0 0.0
    %687 = vmatprep.mubr.f32.mxu0 0.0
    %688 = vmatmul.mubr.f32.gmra.mxu0 %v551
    %v689 = vpop.f32.mrf.mxu0
    %v690 = vadd.f32 0.0, %v689
    %v691 = vpop.f32.mrf.mxu0
    %v692 = vadd.f32 0.0, %v691
    %693 = vdwg.mxu0
    %694 = vmatprep.subr.mxu0 %v211
    %695 = vmatpush1.msra.mxu0 %v210
    %696 = vmatprep.subr.mxu0 %v203
    %697 = vmatpush1.msra.mxu0 %v202
    %698 = vmatprep.subr.mxu0 %v195
    %699 = vmatpush1.msra.mxu0 %v194
    %700 = vmatprep.subr.mxu0 %v187
    %701 = vmatpush1.msra.mxu0 %v186
    %702 = vmatprep.subr.mxu0 %v179
    %703 = vmatpush1.msra.mxu0 %v178
    %704 = vmatprep.subr.mxu0 %v171
    %705 = vmatpush1.msra.mxu0 %v170
    %706 = vmatprep.subr.mxu0 %v163
    %707 = vmatpush1.msra.mxu0 %v162
    %708 = vmatprep.subr.mxu0 %v155
    %709 = vmatpush1.msra.mxu0 %v154
    %710 = vmatprep.subr.mxu0 %v147
    %711 = vmatpush1.msra.mxu0 %v146
    %712 = vmatprep.subr.mxu0 %v139
    %713 = vmatpush1.msra.mxu0 %v138
    %714 = vmatprep.subr.mxu0 %v131
    %715 = vmatpush1.msra.mxu0 %v130
    %716 = vmatprep.subr.mxu0 %v123
    %717 = vmatpush1.msra.mxu0 %v122
    %718 = vmatprep.subr.mxu0 %v115
    %719 = vmatpush1.msra.mxu0 %v114
    %720 = vmatprep.subr.mxu0 %v107
    %721 = vmatpush1.msra.mxu0 %v106
    %722 = vmatprep.subr.mxu0 %v99
    %723 = vmatpush1.msra.mxu0 %v98
    %724 = vmatprep.subr.mxu0 %v91
    %725 = vmatpush1.msra.mxu0 %v90
    %726 = vmatprep.subr.mxu0 0.0
    %727 = vmatpush2.msra.mxu0 0.0
    %728 = vmatprep.subr.mxu0 0.0
    %729 = vmatpush2.msra.mxu0 0.0
    %730 = vmatprep.subr.mxu0 0.0
    %731 = vmatpush2.msra.mxu0 0.0
    %732 = vmatprep.subr.mxu0 0.0
    %733 = vmatpush2.msra.mxu0 0.0
    %734 = vmatprep.subr.mxu0 0.0
    %735 = vmatpush2.msra.mxu0 0.0
    %736 = vmatprep.subr.mxu0 0.0
    %737 = vmatpush2.msra.mxu0 0.0
    %738 = vmatprep.subr.mxu0 0.0
    %739 = vmatpush2.msra.mxu0 0.0
    %740 = vmatprep.subr.mxu0 0.0
    %741 = vmatpush2.msra.mxu0 0.0
    %742 = vmatprep.subr.mxu0 0.0
    %743 = vmatpush2.msra.mxu0 0.0
    %744 = vmatprep.subr.mxu0 0.0
    %745 = vmatpush2.msra.mxu0 0.0
    %746 = vmatprep.subr.mxu0 0.0
    %747 = vmatpush2.msra.mxu0 0.0
    %748 = vmatprep.subr.mxu0 0.0
    %749 = vmatpush2.msra.mxu0 0.0
    %750 = vmatprep.subr.mxu0 0.0
    %751 = vmatpush2.msra.mxu0 0.0
    %752 = vmatprep.subr.mxu0 0.0
    %753 = vmatpush2.msra.mxu0 0.0
    %754 = vmatprep.subr.mxu0 0.0
    %755 = vmatpush2.msra.mxu0 0.0
    %756 = vmatprep.subr.mxu0 0.0
    %757 = vmatpush2.msra.mxu0 0.0
    %758 = vmatprep.mubr.f32.mxu0 0.0
    %759 = vmatmul.mubr.f32.gmra.mxu0 %v551
    %v760 = vpop.f32.mrf.mxu0
    %v761 = vadd.f32 0.0, %v760
    %v762 = vpop.f32.mrf.mxu0
    %v763 = vadd.f32 0.0, %v762
    %764 = vdwg.mxu0
    %765 = vmatprep.subr.mxu0 %v213
    %766 = vmatpush1.msra.mxu0 %v212
    %767 = vmatprep.subr.mxu0 %v205
    %768 = vmatpush1.msra.mxu0 %v204
    %769 = vmatprep.subr.mxu0 %v197
    %770 = vmatpush1.msra.mxu0 %v196
    %771 = vmatprep.subr.mxu0 %v189
    %772 = vmatpush1.msra.mxu0 %v188
    %773 = vmatprep.subr.mxu0 %v181
    %774 = vmatpush1.msra.mxu0 %v180
    %775 = vmatprep.subr.mxu0 %v173
    %776 = vmatpush1.msra.mxu0 %v172
    %777 = vmatprep.subr.mxu0 %v165
    %778 = vmatpush1.msra.mxu0 %v164
    %779 = vmatprep.subr.mxu0 %v157
    %780 = vmatpush1.msra.mxu0 %v156
    %781 = vmatprep.subr.mxu0 %v149
    %782 = vmatpush1.msra.mxu0 %v148
    %783 = vmatprep.subr.mxu0 %v141
    %784 = vmatpush1.msra.mxu0 %v140
    %785 = vmatprep.subr.mxu0 %v133
    %786 = vmatpush1.msra.mxu0 %v132
    %787 = vmatprep.subr.mxu0 %v125
    %788 = vmatpush1.msra.mxu0 %v124
    %789 = vmatprep.subr.mxu0 %v117
    %790 = vmatpush1.msra.mxu0 %v116
    %791 = vmatprep.subr.mxu0 %v109
    %792 = vmatpush1.msra.mxu0 %v108
    %793 = vmatprep.subr.mxu0 %v101
    %794 = vmatpush1.msra.mxu0 %v100
    %795 = vmatprep.subr.mxu0 %v93
    %796 = vmatpush1.msra.mxu0 %v92
    %797 = vmatprep.subr.mxu0 0.0
    %798 = vmatpush2.msra.mxu0 0.0
    %799 = vmatprep.subr.mxu0 0.0
    %800 = vmatpush2.msra.mxu0 0.0
    %801 = vmatprep.subr.mxu0 0.0
    %802 = vmatpush2.msra.mxu0 0.0
    %803 = vmatprep.subr.mxu0 0.0
    %804 = vmatpush2.msra.mxu0 0.0
    %805 = vmatprep.subr.mxu0 0.0
    %806 = vmatpush2.msra.mxu0 0.0
    %807 = vmatprep.subr.mxu0 0.0
    %808 = vmatpush2.msra.mxu0 0.0
    %809 = vmatprep.subr.mxu0 0.0
    %810 = vmatpush2.msra.mxu0 0.0
    %811 = vmatprep.subr.mxu0 0.0
    %812 = vmatpush2.msra.mxu0 0.0
    %813 = vmatprep.subr.mxu0 0.0
    %814 = vmatpush2.msra.mxu0 0.0
    %815 = vmatprep.subr.mxu0 0.0
    %816 = vmatpush2.msra.mxu0 0.0
    %817 = vmatprep.subr.mxu0 0.0
    %818 = vmatpush2.msra.mxu0 0.0
    %819 = vmatprep.subr.mxu0 0.0
    %820 = vmatpush2.msra.mxu0 0.0
    %821 = vmatprep.subr.mxu0 0.0
    %822 = vmatpush2.msra.mxu0 0.0
    %823 = vmatprep.subr.mxu0 0.0
    %824 = vmatpush2.msra.mxu0 0.0
    %825 = vmatprep.subr.mxu0 0.0
    %826 = vmatpush2.msra.mxu0 0.0
    %827 = vmatprep.subr.mxu0 0.0
    %828 = vmatpush2.msra.mxu0 0.0
    %829 = vmatprep.mubr.f32.mxu0 0.0
    %830 = vmatmul.mubr.f32.gmra.mxu0 %v551
    %v831 = vpop.f32.mrf.mxu0
    %v832 = vadd.f32 0.0, %v831
    %v833 = vpop.f32.mrf.mxu0
    %v834 = vadd.f32 0.0, %v833
    %835 = vdwg.mxu0
    %v836 = vld [vmem:[%s1] sm:$0xff]
    %v837 = vld [vmem:[%s1 + $0x8] sm:$0xff]
    %v838 = vld [vmem:[%s1 + $0x10] sm:$0xff]
    %v839 = vld [vmem:[%s1 + $0x18] sm:$0xff]
    %v840 = vld [vmem:[#allocation4] sm:$0xff]
    %v841 = vld [vmem:[#allocation4 + $0x8] sm:$0xff]
    %v842 = vld [vmem:[#allocation4 + $0x10] sm:$0xff]
    %v843 = vld [vmem:[#allocation4 + $0x18] sm:$0xff]
    %v844 = vld [vmem:[#allocation5] sm:$0xff]
    %v845 = vld [vmem:[#allocation5 + $0x8] sm:$0xff]
    %v846 = vld [vmem:[#allocation5 + $0x10] sm:$0xff]
    %v847 = vld [vmem:[#allocation5 + $0x18] sm:$0xff]
    %v848 = vmul.f32 %v476, %v619
    %v849 = vmul.f32 %v478, %v621
    %v850 = vmul.f32 %v547, %v690
    %v851 = vmul.f32 %v549, %v692
    %v852 = vmul.f32 %v848, %v840
    %v853 = vmul.f32 %v849, %v841
    %v854 = vmul.f32 %v761, %v836
    %v855 = vmul.f32 %v763, %v837
    %v856 = vadd.f32 %v852, %v854
    %v857 = vadd.f32 %v853, %v855
    %v858 = vmul.f32 %v848, %v842
    %v859 = vmul.f32 %v849, %v843
    %v860 = vmul.f32 %v761, %v838
    %v861 = vmul.f32 %v763, %v839
    %v862 = vadd.f32 %v858, %v860
    %v863 = vadd.f32 %v859, %v861
    %v864 = vmul.f32 %v850, %v844
    %v865 = vmul.f32 %v851, %v845
    %v866 = vmul.f32 %v832, %v836
    %v867 = vmul.f32 %v834, %v837
    %v868 = vadd.f32 %v864, %v866
    %v869 = vadd.f32 %v865, %v867
    %v870 = vmul.f32 %v850, %v846
    %v871 = vmul.f32 %v851, %v847
    %v872 = vmul.f32 %v832, %v838
    %v873 = vmul.f32 %v834, %v839
    %v874 = vadd.f32 %v870, %v872
    %v875 = vadd.f32 %v871, %v873
    %v876 = vmul.f32 %v856, %v856
    %v877 = vmul.f32 %v857, %v857
    %v878 = vmul.f32 %v862, %v862
    %v879 = vmul.f32 %v863, %v863
    %v880 = vadd.f32 %v876, %v878
    %v881 = vadd.f32 %v877, %v879
    %v882 = vmul.f32 %v868, %v868
    %v883 = vmul.f32 %v869, %v869
    %v884 = vmul.f32 %v874, %v874
    %v885 = vmul.f32 %v875, %v875
    %v886 = vadd.f32 %v882, %v884
    %v887 = vadd.f32 %v883, %v885
    %888 = vmatprep.subr.mxu0 0.0
    %889 = vmatpush1.msra.mxu0 %v229
    %890 = vmatprep.subr.mxu0 0.0
    %891 = vmatpush1.msra.mxu0 %v228
    %892 = vmatprep.subr.mxu0 0.0
    %893 = vmatpush1.msra.mxu0 %v227
    %894 = vmatprep.subr.mxu0 0.0
    %895 = vmatpush1.msra.mxu0 %v226
    %896 = vmatprep.subr.mxu0 0.0
    %897 = vmatpush1.msra.mxu0 %v225
    %898 = vmatprep.subr.mxu0 0.0
    %899 = vmatpush1.msra.mxu0 %v224
    %900 = vmatprep.subr.mxu0 0.0
    %901 = vmatpush1.msra.mxu0 %v223
    %902 = vmatprep.subr.mxu0 0.0
    %903 = vmatpush1.msra.mxu0 %v222
    %904 = vmatprep.subr.mxu0 0.0
    %905 = vmatpush1.msra.mxu0 %v221
    %906 = vmatprep.subr.mxu0 0.0
    %907 = vmatpush1.msra.mxu0 %v220
    %908 = vmatprep.subr.mxu0 0.0
    %909 = vmatpush1.msra.mxu0 %v219
    %910 = vmatprep.subr.mxu0 0.0
    %911 = vmatpush1.msra.mxu0 %v218
    %912 = vmatprep.subr.mxu0 0.0
    %913 = vmatpush1.msra.mxu0 %v217
    %914 = vmatprep.subr.mxu0 0.0
    %915 = vmatpush1.msra.mxu0 %v216
    %916 = vmatprep.subr.mxu0 0.0
    %917 = vmatpush1.msra.mxu0 %v215
    %918 = vmatprep.subr.mxu0 0.0
    %919 = vmatpush1.msra.mxu0 %v214
    %920 = vmatprep.subr.mxu0 0.0
    %921 = vmatpush2.msra.mxu0 %v245
    %922 = vmatprep.subr.mxu0 0.0
    %923 = vmatpush2.msra.mxu0 %v244
    %924 = vmatprep.subr.mxu0 0.0
    %925 = vmatpush2.msra.mxu0 %v243
    %926 = vmatprep.subr.mxu0 0.0
    %927 = vmatpush2.msra.mxu0 %v242
    %928 = vmatprep.subr.mxu0 0.0
    %929 = vmatpush2.msra.mxu0 %v241
    %930 = vmatprep.subr.mxu0 0.0
    %931 = vmatpush2.msra.mxu0 %v240
    %932 = vmatprep.subr.mxu0 0.0
    %933 = vmatpush2.msra.mxu0 %v239
    %934 = vmatprep.subr.mxu0 0.0
    %935 = vmatpush2.msra.mxu0 %v238
    %936 = vmatprep.subr.mxu0 0.0
    %937 = vmatpush2.msra.mxu0 %v237
    %938 = vmatprep.subr.mxu0 0.0
    %939 = vmatpush2.msra.mxu0 %v236
    %940 = vmatprep.subr.mxu0 0.0
    %941 = vmatpush2.msra.mxu0 %v235
    %942 = vmatprep.subr.mxu0 0.0
    %943 = vmatpush2.msra.mxu0 %v234
    %944 = vmatprep.subr.mxu0 0.0
    %945 = vmatpush2.msra.mxu0 %v233
    %946 = vmatprep.subr.mxu0 0.0
    %947 = vmatpush2.msra.mxu0 %v232
    %948 = vmatprep.subr.mxu0 0.0
    %949 = vmatpush2.msra.mxu0 %v231
    %950 = vmatprep.subr.mxu0 0.0
    %951 = vmatpush2.msra.mxu0 %v230
    %952 = vmatprep.mubr.f32.mxu0 %v881
    %953 = vmatmul.mubr.f32.gmra.mxu0 %v880
    %v954 = vpop.f32.mrf.mxu0
    %v955 = vadd.f32 %v291, %v954
    %v956 = vpop.f32.mrf.mxu0
    %957 = vdwg.mxu0
    %958 = vmatprep.subr.mxu0 0.0
    %959 = vmatpush1.msra.mxu0 %v261
    %960 = vmatprep.subr.mxu0 0.0
    %961 = vmatpush1.msra.mxu0 %v260
    %962 = vmatprep.subr.mxu0 0.0
    %963 = vmatpush1.msra.mxu0 %v259
    %964 = vmatprep.subr.mxu0 0.0
    %965 = vmatpush1.msra.mxu0 %v258
    %966 = vmatprep.subr.mxu0 0.0
    %967 = vmatpush1.msra.mxu0 %v257
    %968 = vmatprep.subr.mxu0 0.0
    %969 = vmatpush1.msra.mxu0 %v256
    %970 = vmatprep.subr.mxu0 0.0
    %971 = vmatpush1.msra.mxu0 %v255
    %972 = vmatprep.subr.mxu0 0.0
    %973 = vmatpush1.msra.mxu0 %v254
    %974 = vmatprep.subr.mxu0 0.0
    %975 = vmatpush1.msra.mxu0 %v253
    %976 = vmatprep.subr.mxu0 0.0
    %977 = vmatpush1.msra.mxu0 %v252
    %978 = vmatprep.subr.mxu0 0.0
    %979 = vmatpush1.msra.mxu0 %v251
    %980 = vmatprep.subr.mxu0 0.0
    %981 = vmatpush1.msra.mxu0 %v250
    %982 = vmatprep.subr.mxu0 0.0
    %983 = vmatpush1.msra.mxu0 %v249
    %984 = vmatprep.subr.mxu0 0.0
    %985 = vmatpush1.msra.mxu0 %v248
    %986 = vmatprep.subr.mxu0 0.0
    %987 = vmatpush1.msra.mxu0 %v247
    %988 = vmatprep.subr.mxu0 0.0
    %989 = vmatpush1.msra.mxu0 %v246
    %990 = vmatprep.subr.mxu0 0.0
    %991 = vmatpush2.msra.mxu0 %v277
    %992 = vmatprep.subr.mxu0 0.0
    %993 = vmatpush2.msra.mxu0 %v276
    %994 = vmatprep.subr.mxu0 0.0
    %995 = vmatpush2.msra.mxu0 %v275
    %996 = vmatprep.subr.mxu0 0.0
    %997 = vmatpush2.msra.mxu0 %v274
    %998 = vmatprep.subr.mxu0 0.0
    %999 = vmatpush2.msra.mxu0 %v273
    %1000 = vmatprep.subr.mxu0 0.0
    %1001 = vmatpush2.msra.mxu0 %v272
    %1002 = vmatprep.subr.mxu0 0.0
    %1003 = vmatpush2.msra.mxu0 %v271
    %1004 = vmatprep.subr.mxu0 0.0
    %1005 = vmatpush2.msra.mxu0 %v270
    %1006 = vmatprep.subr.mxu0 0.0
    %1007 = vmatpush2.msra.mxu0 %v269
    %1008 = vmatprep.subr.mxu0 0.0
    %1009 = vmatpush2.msra.mxu0 %v268
    %1010 = vmatprep.subr.mxu0 0.0
    %1011 = vmatpush2.msra.mxu0 %v267
    %1012 = vmatprep.subr.mxu0 0.0
    %1013 = vmatpush2.msra.mxu0 %v266
    %1014 = vmatprep.subr.mxu0 0.0
    %1015 = vmatpush2.msra.mxu0 %v265
    %1016 = vmatprep.subr.mxu0 0.0
    %1017 = vmatpush2.msra.mxu0 %v264
    %1018 = vmatprep.subr.mxu0 0.0
    %1019 = vmatpush2.msra.mxu0 %v263
    %1020 = vmatprep.subr.mxu0 0.0
    %1021 = vmatpush2.msra.mxu0 %v262
    %1022 = vmatprep.mubr.f32.mxu0 %v887
    %1023 = vmatmul.mubr.f32.gmra.mxu0 %v886
    %v1024 = vpop.f32.mrf.mxu0
    %v1025 = vadd.f32 %v955, %v1024
    %v1026 = vpop.f32.mrf.mxu0
    %1027 = vdwg.mxu0
    %v1028 = vtanh.pop %v1025
    %v1030 = vsel %vm310, %v1028, 0
    %1032 = vmatprep.subr.mxu0 0.0
    %1033 = vmatpush1.msra.mxu0 0.0
    %1034 = vmatprep.subr.mxu0 0.0
    %1035 = vmatpush1.msra.mxu0 0.0
    %1036 = vmatprep.subr.mxu0 0.0
    %1037 = vmatpush1.msra.mxu0 0.0
    %1038 = vmatprep.subr.mxu0 0.0
    %1039 = vmatpush1.msra.mxu0 0.0
    %1040 = vmatprep.subr.mxu0 0.0
    %1041 = vmatpush1.msra.mxu0 0.0
    %1042 = vmatprep.subr.mxu0 0.0
    %1043 = vmatpush1.msra.mxu0 0.0
    %1044 = vmatprep.subr.mxu0 0.0
    %1045 = vmatpush1.msra.mxu0 0.0
    %1046 = vmatprep.subr.mxu0 0.0
    %1047 = vmatpush1.msra.mxu0 0.0
    %1048 = vmatprep.subr.mxu0 0.0
    %1049 = vmatpush1.msra.mxu0 %v285
    %1050 = vmatprep.subr.mxu0 0.0
    %1051 = vmatpush1.msra.mxu0 %v284
    %1052 = vmatprep.subr.mxu0 0.0
    %1053 = vmatpush1.msra.mxu0 %v283
    %1054 = vmatprep.subr.mxu0 0.0
    %1055 = vmatpush1.msra.mxu0 %v282
    %1056 = vmatprep.subr.mxu0 0.0
    %1057 = vmatpush1.msra.mxu0 %v281
    %1058 = vmatprep.subr.mxu0 0.0
    %1059 = vmatpush1.msra.mxu0 %v280
    %1060 = vmatprep.subr.mxu0 0.0
    %1061 = vmatpush1.msra.mxu0 %v279
    %1062 = vmatprep.subr.mxu0 0.0
    %1063 = vmatpush1.msra.mxu0 %v278
    %1064 = vmatprep.subr.mxu0 0.0
    %1065 = vmatpush2.msra.mxu0 0.0
    %1066 = vmatprep.subr.mxu0 0.0
    %1067 = vmatpush2.msra.mxu0 0.0
    %1068 = vmatprep.subr.mxu0 0.0
    %1069 = vmatpush2.msra.mxu0 0.0
    %1070 = vmatprep.subr.mxu0 0.0
    %1071 = vmatpush2.msra.mxu0 0.0
    %1072 = vmatprep.subr.mxu0 0.0
    %1073 = vmatpush2.msra.mxu0 0.0
    %1074 = vmatprep.subr.mxu0 0.0
    %1075 = vmatpush2.msra.mxu0 0.0
    %1076 = vmatprep.subr.mxu0 0.0
    %1077 = vmatpush2.msra.mxu0 0.0
    %1078 = vmatprep.subr.mxu0 0.0
    %1079 = vmatpush2.msra.mxu0 0.0
    %1080 = vmatprep.subr.mxu0 0.0
    %1081 = vmatpush2.msra.mxu0 0.0
    %1082 = vmatprep.subr.mxu0 0.0
    %1083 = vmatpush2.msra.mxu0 0.0
    %1084 = vmatprep.subr.mxu0 0.0
    %1085 = vmatpush2.msra.mxu0 0.0
    %1086 = vmatprep.subr.mxu0 0.0
    %1087 = vmatpush2.msra.mxu0 0.0
    %1088 = vmatprep.subr.mxu0 0.0
    %1089 = vmatpush2.msra.mxu0 0.0
    %1090 = vmatprep.subr.mxu0 0.0
    %1091 = vmatpush2.msra.mxu0 0.0
    %1092 = vmatprep.subr.mxu0 0.0
    %1093 = vmatpush2.msra.mxu0 0.0
    %1094 = vmatprep.subr.mxu0 0.0
    %1095 = vmatpush2.msra.mxu0 0.0
    %1096 = vmatprep.mubr.f32.mxu0 0.0
    %1097 = vmatmul.mubr.f32.gmra.mxu0 %v1030
    %v1098 = vpop.f32.mrf.mxu0
    %v1099 = vadd.f32 %v298, %v1098
    %v1100 = vpop.f32.mrf.mxu0
    %1101 = vdwg.mxu0
    %v1102 = vsub.f32 1.0, %v396
    %v1103 = vmul.f32 %v1102, %v307
    %1104 = vrot.lane.b32.xlu0 %v399, 112
    %v1105 = vpop.permute.xlu0 %1104
    %v1107 = vmul.f32 %v396, %v1105
    %v1108 = vadd.f32 %v1103, %v1107
    %v1109 = vadd.f32 %v1108, %v1099
    %v1110 = vxor.u32 %v1109, 2147483648
    %v1111 = vmul.f32 %v1110, 1.442695
    %v1112 = vpow.pop %v1111
    %v1113 = vadd.f32 %v1112, 1.0
    %v1114 = vrcp.pop %v1113
    %v1115 = vmul.f32 1.0, %v1114
    %v1116 = vmul.f32 %v1115, %v1028
    %1117 = vst.msk [vmem:[#allocation9] sm:$0xff] %vm310, %v1116
    %1118 = vst.msk [vmem:[#allocation2] sm:$0xff] %vm306, %v1116
    %1119 = vst [vmem:[#allocation4] sm:$0xff] %v856
    %1120 = vst [vmem:[#allocation4 + $0x8] sm:$0xff] %v857
    %1121 = vst [vmem:[#allocation4 + $0x10] sm:$0xff] %v862
    %1122 = vst [vmem:[#allocation4 + $0x18] sm:$0xff] %v863
    %1124 = vrot.lane.b32.xlu0 %v1116, 96
    %v1125 = vpop.permute.xlu0 %1124
    %vm1127 = vcmask 261126
    %1128 = vst.msk [vmem:[#allocation3 - $0x6] sm:$0xc0] %vm1127, %v1125
    %vm1129 = vcmask 259072
    %1130 = vst.msk [vmem:[#allocation3 + $0x2] sm:$0x3f] %vm1129, %v1125
    %v1135 = vrot.slane %v868, 6
    %v1136 = vrot.slane %v869, 6
    %v1137 = vrot.slane %v874, 6
    %v1138 = vrot.slane %v875, 6
    %1143 = vst [vmem:[#allocation5] sm:$0x3] %v1135
    %1144 = vst [vmem:[#allocation5 + $0x8] sm:$0x3] %v1136
    %1145 = vst [vmem:[#allocation5 + $0x10] sm:$0x3] %v1137
    %1146 = vst [vmem:[#allocation5 + $0x18] sm:$0x3] %v1138
    %1147 = vst [vmem:[#allocation5] sm:$0xfc] %v1135
    %1148 = vst [vmem:[#allocation5 + $0x8] sm:$0xfc] %v1136
    %1149 = vst [vmem:[#allocation5 + $0x10] sm:$0xfc] %v1137
    %1150 = vst [vmem:[#allocation5 + $0x18] sm:$0xfc] %v1138
    %v1151 = vld [vmem:[#allocation2] sm:$0xff]
    %v1152 = vld [vmem:[#allocation3] sm:$0xff]
    %1154 = vrot.lane.b32.xlu0 %v1152, 32
    %v1155 = vpop.permute.xlu0 %1154
    %v1157 = vsel %vm306, %v1151, %v1155
    %s1158 = scalar_lea.vmem %s0, 16
    %v1159 = vld [vmem:[%s1158] sm:$0xff]
    %v1160 = vld [vmem:[%s1158 + $0x8] sm:$0xff]
    %v1162 = vsel %vm310, %v1157, 0
    %1164 = vmatprep.subr.mxu0 0.0
    %1165 = vmatpush1.msra.mxu0 0.0
    %1166 = vmatprep.subr.mxu0 0.0
    %1167 = vmatpush1.msra.mxu0 0.0
    %1168 = vmatprep.subr.mxu0 0.0
    %1169 = vmatpush1.msra.mxu0 0.0
    %1170 = vmatprep.subr.mxu0 0.0
    %1171 = vmatpush1.msra.mxu0 0.0
    %1172 = vmatprep.subr.mxu0 0.0
    %1173 = vmatpush1.msra.mxu0 0.0
    %1174 = vmatprep.subr.mxu0 0.0
    %1175 = vmatpush1.msra.mxu0 0.0
    %1176 = vmatprep.subr.mxu0 0.0
    %1177 = vmatpush1.msra.mxu0 0.0
    %1178 = vmatprep.subr.mxu0 0.0
    %1179 = vmatpush1.msra.mxu0 0.0
    %1180 = vmatprep.subr.mxu0 %v77
    %1181 = vmatpush1.msra.mxu0 %v76
    %1182 = vmatprep.subr.mxu0 %v75
    %1183 = vmatpush1.msra.mxu0 %v74
    %1184 = vmatprep.subr.mxu0 %v73
    %1185 = vmatpush1.msra.mxu0 %v72
    %1186 = vmatprep.subr.mxu0 %v71
    %1187 = vmatpush1.msra.mxu0 %v70
    %1188 = vmatprep.subr.mxu0 %v69
    %1189 = vmatpush1.msra.mxu0 %v68
    %1190 = vmatprep.subr.mxu0 %v67
    %1191 = vmatpush1.msra.mxu0 %v66
    %1192 = vmatprep.subr.mxu0 %v65
    %1193 = vmatpush1.msra.mxu0 %v64
    %1194 = vmatprep.subr.mxu0 %v63
    %1195 = vmatpush1.msra.mxu0 %v62
    %1196 = vmatprep.subr.mxu0 0.0
    %1197 = vmatpush2.msra.mxu0 0.0
    %1198 = vmatprep.subr.mxu0 0.0
    %1199 = vmatpush2.msra.mxu0 0.0
    %1200 = vmatprep.subr.mxu0 0.0
    %1201 = vmatpush2.msra.mxu0 0.0
    %1202 = vmatprep.subr.mxu0 0.0
    %1203 = vmatpush2.msra.mxu0 0.0
    %1204 = vmatprep.subr.mxu0 0.0
    %1205 = vmatpush2.msra.mxu0 0.0
    %1206 = vmatprep.subr.mxu0 0.0
    %1207 = vmatpush2.msra.mxu0 0.0
    %1208 = vmatprep.subr.mxu0 0.0
    %1209 = vmatpush2.msra.mxu0 0.0
    %1210 = vmatprep.subr.mxu0 0.0
    %1211 = vmatpush2.msra.mxu0 0.0
    %1212 = vmatprep.subr.mxu0 0.0
    %1213 = vmatpush2.msra.mxu0 0.0
    %1214 = vmatprep.subr.mxu0 0.0
    %1215 = vmatpush2.msra.mxu0 0.0
    %1216 = vmatprep.subr.mxu0 0.0
    %1217 = vmatpush2.msra.mxu0 0.0
    %1218 = vmatprep.subr.mxu0 0.0
    %1219 = vmatpush2.msra.mxu0 0.0
    %1220 = vmatprep.subr.mxu0 0.0
    %1221 = vmatpush2.msra.mxu0 0.0
    %1222 = vmatprep.subr.mxu0 0.0
    %1223 = vmatpush2.msra.mxu0 0.0
    %1224 = vmatprep.subr.mxu0 0.0
    %1225 = vmatpush2.msra.mxu0 0.0
    %1226 = vmatprep.subr.mxu0 0.0
    %1227 = vmatpush2.msra.mxu0 0.0
    %1228 = vmatprep.mubr.f32.mxu0 0.0
    %1229 = vmatmul.mubr.f32.gmra.mxu0 %v1162
    %v1230 = vpop.f32.mrf.mxu0
    %v1231 = vadd.f32 0.0, %v1230
    %v1232 = vpop.f32.mrf.mxu0
    %v1233 = vadd.f32 0.0, %v1232
    %1234 = vdwg.mxu0
    %v1235 = vadd.f32 %v1159, %v1231
    %v1236 = vadd.f32 %v1160, %v1233
    %v1237 = vxor.u32 %v1235, 2147483648
    %v1238 = vxor.u32 %v1236, 2147483648
    %v1239 = vmul.f32 %v1237, 1.442695
    %v1240 = vpow.pop %v1239
    %v1241 = vmul.f32 %v1238, 1.442695
    %v1242 = vpow.pop %v1241
    %v1243 = vadd.f32 %v1240, 1.0
    %v1244 = vadd.f32 %v1242, 1.0
    %v1245 = vrcp.pop %v1243
    %v1246 = vmul.f32 1.0, %v1245
    %v1247 = vrcp.pop %v1244
    %v1248 = vmul.f32 1.0, %v1247
    %v1249 = vtanh.pop %v1236
    %1251 = vrot.lane.b32.xlu0 %v1249, 48
    %v1252 = vpop.permute.xlu0 %1251
    %v1254 = vmul.f32 %v1246, %v1252
    %v1256 = vsel %vm405, %v1248, 0
    %1258 = vmatprep.subr.mxu0 0.0
    %1259 = vmatpush1.msra.mxu0 0.0
    %1260 = vmatprep.subr.mxu0 0.0
    %1261 = vmatpush1.msra.mxu0 0.0
    %1262 = vmatprep.subr.mxu0 0.0
    %1263 = vmatpush1.msra.mxu0 0.0
    %1264 = vmatprep.subr.mxu0 0.0
    %1265 = vmatpush1.msra.mxu0 0.0
    %1266 = vmatprep.subr.mxu0 0.0
    %1267 = vmatpush1.msra.mxu0 0.0
    %1268 = vmatprep.subr.mxu0 0.0
    %1269 = vmatpush1.msra.mxu0 0.0
    %1270 = vmatprep.subr.mxu0 0.0
    %1271 = vmatpush1.msra.mxu0 0.0
    %1272 = vmatprep.subr.mxu0 0.0
    %1273 = vmatpush1.msra.mxu0 0.0
    %1274 = vmatprep.subr.mxu0 0.0
    %1275 = vmatpush1.msra.mxu0 0.0
    %1276 = vmatprep.subr.mxu0 0.0
    %1277 = vmatpush1.msra.mxu0 0.0
    %1278 = vmatprep.subr.mxu0 0.0
    %1279 = vmatpush1.msra.mxu0 0.0
    %1280 = vmatprep.subr.mxu0 0.0
    %1281 = vmatpush1.msra.mxu0 0.0
    %1282 = vmatprep.subr.mxu0 0.0
    %1283 = vmatpush1.msra.mxu0 0.0
    %1284 = vmatprep.subr.mxu0 0.0
    %1285 = vmatpush1.msra.mxu0 0.0
    %1286 = vmatprep.subr.mxu0 %v83
    %1287 = vmatpush1.msra.mxu0 %v82
    %1288 = vmatprep.subr.mxu0 %v79
    %1289 = vmatpush1.msra.mxu0 %v78
    %1290 = vmatprep.subr.mxu0 0.0
    %1291 = vmatpush2.msra.mxu0 0.0
    %1292 = vmatprep.subr.mxu0 0.0
    %1293 = vmatpush2.msra.mxu0 0.0
    %1294 = vmatprep.subr.mxu0 0.0
    %1295 = vmatpush2.msra.mxu0 0.0
    %1296 = vmatprep.subr.mxu0 0.0
    %1297 = vmatpush2.msra.mxu0 0.0
    %1298 = vmatprep.subr.mxu0 0.0
    %1299 = vmatpush2.msra.mxu0 0.0
    %1300 = vmatprep.subr.mxu0 0.0
    %1301 = vmatpush2.msra.mxu0 0.0
    %1302 = vmatprep.subr.mxu0 0.0
    %1303 = vmatpush2.msra.mxu0 0.0
    %1304 = vmatprep.subr.mxu0 0.0
    %1305 = vmatpush2.msra.mxu0 0.0
    %1306 = vmatprep.subr.mxu0 0.0
    %1307 = vmatpush2.msra.mxu0 0.0
    %1308 = vmatprep.subr.mxu0 0.0
    %1309 = vmatpush2.msra.mxu0 0.0
    %1310 = vmatprep.subr.mxu0 0.0
    %1311 = vmatpush2.msra.mxu0 0.0
    %1312 = vmatprep.subr.mxu0 0.0
    %1313 = vmatpush2.msra.mxu0 0.0
    %1314 = vmatprep.subr.mxu0 0.0
    %1315 = vmatpush2.msra.mxu0 0.0
    %1316 = vmatprep.subr.mxu0 0.0
    %1317 = vmatpush2.msra.mxu0 0.0
    %1318 = vmatprep.subr.mxu0 0.0
    %1319 = vmatpush2.msra.mxu0 0.0
    %1320 = vmatprep.subr.mxu0 0.0
    %1321 = vmatpush2.msra.mxu0 0.0
    %1322 = vmatprep.mubr.f32.mxu0 0.0
    %1323 = vmatmul.mubr.f32.gmra.mxu0 %v1256
    %v1324 = vpop.f32.mrf.mxu0
    %v1325 = vadd.f32 0.0, %v1324
    %v1326 = vpop.f32.mrf.mxu0
    %v1327 = vadd.f32 0.0, %v1326
    %1328 = vdwg.mxu0
    %1329 = vmatprep.subr.mxu0 0.0
    %1330 = vmatpush1.msra.mxu0 0.0
    %1331 = vmatprep.subr.mxu0 0.0
    %1332 = vmatpush1.msra.mxu0 0.0
    %1333 = vmatprep.subr.mxu0 0.0
    %1334 = vmatpush1.msra.mxu0 0.0
    %1335 = vmatprep.subr.mxu0 0.0
    %1336 = vmatpush1.msra.mxu0 0.0
    %1337 = vmatprep.subr.mxu0 0.0
    %1338 = vmatpush1.msra.mxu0 0.0
    %1339 = vmatprep.subr.mxu0 0.0
    %1340 = vmatpush1.msra.mxu0 0.0
    %1341 = vmatprep.subr.mxu0 0.0
    %1342 = vmatpush1.msra.mxu0 0.0
    %1343 = vmatprep.subr.mxu0 0.0
    %1344 = vmatpush1.msra.mxu0 0.0
    %1345 = vmatprep.subr.mxu0 0.0
    %1346 = vmatpush1.msra.mxu0 0.0
    %1347 = vmatprep.subr.mxu0 0.0
    %1348 = vmatpush1.msra.mxu0 0.0
    %1349 = vmatprep.subr.mxu0 0.0
    %1350 = vmatpush1.msra.mxu0 0.0
    %1351 = vmatprep.subr.mxu0 0.0
    %1352 = vmatpush1.msra.mxu0 0.0
    %1353 = vmatprep.subr.mxu0 0.0
    %1354 = vmatpush1.msra.mxu0 0.0
    %1355 = vmatprep.subr.mxu0 0.0
    %1356 = vmatpush1.msra.mxu0 0.0
    %1357 = vmatprep.subr.mxu0 %v85
    %1358 = vmatpush1.msra.mxu0 %v84
    %1359 = vmatprep.subr.mxu0 %v81
    %1360 = vmatpush1.msra.mxu0 %v80
    %1361 = vmatprep.subr.mxu0 0.0
    %1362 = vmatpush2.msra.mxu0 0.0
    %1363 = vmatprep.subr.mxu0 0.0
    %1364 = vmatpush2.msra.mxu0 0.0
    %1365 = vmatprep.subr.mxu0 0.0
    %1366 = vmatpush2.msra.mxu0 0.0
    %1367 = vmatprep.subr.mxu0 0.0
    %1368 = vmatpush2.msra.mxu0 0.0
    %1369 = vmatprep.subr.mxu0 0.0
    %1370 = vmatpush2.msra.mxu0 0.0
    %1371 = vmatprep.subr.mxu0 0.0
    %1372 = vmatpush2.msra.mxu0 0.0
    %1373 = vmatprep.subr.mxu0 0.0
    %1374 = vmatpush2.msra.mxu0 0.0
    %1375 = vmatprep.subr.mxu0 0.0
    %1376 = vmatpush2.msra.mxu0 0.0
    %1377 = vmatprep.subr.mxu0 0.0
    %1378 = vmatpush2.msra.mxu0 0.0
    %1379 = vmatprep.subr.mxu0 0.0
    %1380 = vmatpush2.msra.mxu0 0.0
    %1381 = vmatprep.subr.mxu0 0.0
    %1382 = vmatpush2.msra.mxu0 0.0
    %1383 = vmatprep.subr.mxu0 0.0
    %1384 = vmatpush2.msra.mxu0 0.0
    %1385 = vmatprep.subr.mxu0 0.0
    %1386 = vmatpush2.msra.mxu0 0.0
    %1387 = vmatprep.subr.mxu0 0.0
    %1388 = vmatpush2.msra.mxu0 0.0
    %1389 = vmatprep.subr.mxu0 0.0
    %1390 = vmatpush2.msra.mxu0 0.0
    %1391 = vmatprep.subr.mxu0 0.0
    %1392 = vmatpush2.msra.mxu0 0.0
    %1393 = vmatprep.mubr.f32.mxu0 0.0
    %1394 = vmatmul.mubr.f32.gmra.mxu0 %v1256
    %v1395 = vpop.f32.mrf.mxu0
    %v1396 = vadd.f32 0.0, %v1395
    %v1397 = vpop.f32.mrf.mxu0
    %v1398 = vadd.f32 0.0, %v1397
    %1399 = vdwg.mxu0
    %v1400 = vsel %vm310, %v1246, %v1254
    %1401 = vmatprep.subr.mxu0 %v207
    %1402 = vmatpush1.msra.mxu0 %v206
    %1403 = vmatprep.subr.mxu0 %v199
    %1404 = vmatpush1.msra.mxu0 %v198
    %1405 = vmatprep.subr.mxu0 %v191
    %1406 = vmatpush1.msra.mxu0 %v190
    %1407 = vmatprep.subr.mxu0 %v183
    %1408 = vmatpush1.msra.mxu0 %v182
    %1409 = vmatprep.subr.mxu0 %v175
    %1410 = vmatpush1.msra.mxu0 %v174
    %1411 = vmatprep.subr.mxu0 %v167
    %1412 = vmatpush1.msra.mxu0 %v166
    %1413 = vmatprep.subr.mxu0 %v159
    %1414 = vmatpush1.msra.mxu0 %v158
    %1415 = vmatprep.subr.mxu0 %v151
    %1416 = vmatpush1.msra.mxu0 %v150
    %1417 = vmatprep.subr.mxu0 %v143
    %1418 = vmatpush1.msra.mxu0 %v142
    %1419 = vmatprep.subr.mxu0 %v135
    %1420 = vmatpush1.msra.mxu0 %v134
    %1421 = vmatprep.subr.mxu0 %v127
    %1422 = vmatpush1.msra.mxu0 %v126
    %1423 = vmatprep.subr.mxu0 %v119
    %1424 = vmatpush1.msra.mxu0 %v118
    %1425 = vmatprep.subr.mxu0 %v111
    %1426 = vmatpush1.msra.mxu0 %v110
    %1427 = vmatprep.subr.mxu0 %v103
    %1428 = vmatpush1.msra.mxu0 %v102
    %1429 = vmatprep.subr.mxu0 %v95
    %1430 = vmatpush1.msra.mxu0 %v94
    %1431 = vmatprep.subr.mxu0 %v87
    %1432 = vmatpush1.msra.mxu0 %v86
    %1433 = vmatprep.subr.mxu0 0.0
    %1434 = vmatpush2.msra.mxu0 0.0
    %1435 = vmatprep.subr.mxu0 0.0
    %1436 = vmatpush2.msra.mxu0 0.0
    %1437 = vmatprep.subr.mxu0 0.0
    %1438 = vmatpush2.msra.mxu0 0.0
    %1439 = vmatprep.subr.mxu0 0.0
    %1440 = vmatpush2.msra.mxu0 0.0
    %1441 = vmatprep.subr.mxu0 0.0
    %1442 = vmatpush2.msra.mxu0 0.0
    %1443 = vmatprep.subr.mxu0 0.0
    %1444 = vmatpush2.msra.mxu0 0.0
    %1445 = vmatprep.subr.mxu0 0.0
    %1446 = vmatpush2.msra.mxu0 0.0
    %1447 = vmatprep.subr.mxu0 0.0
    %1448 = vmatpush2.msra.mxu0 0.0
    %1449 = vmatprep.subr.mxu0 0.0
    %1450 = vmatpush2.msra.mxu0 0.0
    %1451 = vmatprep.subr.mxu0 0.0
    %1452 = vmatpush2.msra.mxu0 0.0
    %1453 = vmatprep.subr.mxu0 0.0
    %1454 = vmatpush2.msra.mxu0 0.0
    %1455 = vmatprep.subr.mxu0 0.0
    %1456 = vmatpush2.msra.mxu0 0.0
    %1457 = vmatprep.subr.mxu0 0.0
    %1458 = vmatpush2.msra.mxu0 0.0
    %1459 = vmatprep.subr.mxu0 0.0
    %1460 = vmatpush2.msra.mxu0 0.0
    %1461 = vmatprep.subr.mxu0 0.0
    %1462 = vmatpush2.msra.mxu0 0.0
    %1463 = vmatprep.subr.mxu0 0.0
    %1464 = vmatpush2.msra.mxu0 0.0
    %1465 = vmatprep.mubr.f32.mxu0 0.0
    %1466 = vmatmul.mubr.f32.gmra.mxu0 %v1400
    %v1467 = vpop.f32.mrf.mxu0
    %v1468 = vadd.f32 0.0, %v1467
    %v1469 = vpop.f32.mrf.mxu0
    %v1470 = vadd.f32 0.0, %v1469
    %1471 = vdwg.mxu0
    %1472 = vmatprep.subr.mxu0 %v209
    %1473 = vmatpush1.msra.mxu0 %v208
    %1474 = vmatprep.subr.mxu0 %v201
    %1475 = vmatpush1.msra.mxu0 %v200
    %1476 = vmatprep.subr.mxu0 %v193
    %1477 = vmatpush1.msra.mxu0 %v192
    %1478 = vmatprep.subr.mxu0 %v185
    %1479 = vmatpush1.msra.mxu0 %v184
    %1480 = vmatprep.subr.mxu0 %v177
    %1481 = vmatpush1.msra.mxu0 %v176
    %1482 = vmatprep.subr.mxu0 %v169
    %1483 = vmatpush1.msra.mxu0 %v168
    %1484 = vmatprep.subr.mxu0 %v161
    %1485 = vmatpush1.msra.mxu0 %v160
    %1486 = vmatprep.subr.mxu0 %v153
    %1487 = vmatpush1.msra.mxu0 %v152
    %1488 = vmatprep.subr.mxu0 %v145
    %1489 = vmatpush1.msra.mxu0 %v144
    %1490 = vmatprep.subr.mxu0 %v137
    %1491 = vmatpush1.msra.mxu0 %v136
    %1492 = vmatprep.subr.mxu0 %v129
    %1493 = vmatpush1.msra.mxu0 %v128
    %1494 = vmatprep.subr.mxu0 %v121
    %1495 = vmatpush1.msra.mxu0 %v120
    %1496 = vmatprep.subr.mxu0 %v113
    %1497 = vmatpush1.msra.mxu0 %v112
    %1498 = vmatprep.subr.mxu0 %v105
    %1499 = vmatpush1.msra.mxu0 %v104
    %1500 = vmatprep.subr.mxu0 %v97
    %1501 = vmatpush1.msra.mxu0 %v96
    %1502 = vmatprep.subr.mxu0 %v89
    %1503 = vmatpush1.msra.mxu0 %v88
    %1504 = vmatprep.subr.mxu0 0.0
    %1505 = vmatpush2.msra.mxu0 0.0
    %1506 = vmatprep.subr.mxu0 0.0
    %1507 = vmatpush2.msra.mxu0 0.0
    %1508 = vmatprep.subr.mxu0 0.0
    %1509 = vmatpush2.msra.mxu0 0.0
    %1510 = vmatprep.subr.mxu0 0.0
    %1511 = vmatpush2.msra.mxu0 0.0
    %1512 = vmatprep.subr.mxu0 0.0
    %1513 = vmatpush2.msra.mxu0 0.0
    %1514 = vmatprep.subr.mxu0 0.0
    %1515 = vmatpush2.msra.mxu0 0.0
    %1516 = vmatprep.subr.mxu0 0.0
    %1517 = vmatpush2.msra.mxu0 0.0
    %1518 = vmatprep.subr.mxu0 0.0
    %1519 = vmatpush2.msra.mxu0 0.0
    %1520 = vmatprep.subr.mxu0 0.0
    %1521 = vmatpush2.msra.mxu0 0.0
    %1522 = vmatprep.subr.mxu0 0.0
    %1523 = vmatpush2.msra.mxu0 0.0
    %1524 = vmatprep.subr.mxu0 0.0
    %1525 = vmatpush2.msra.mxu0 0.0
    %1526 = vmatprep.subr.mxu0 0.0
    %1527 = vmatpush2.msra.mxu0 0.0
    %1528 = vmatprep.subr.mxu0 0.0
    %1529 = vmatpush2.msra.mxu0 0.0
    %1530 = vmatprep.subr.mxu0 0.0
    %1531 = vmatpush2.msra.mxu0 0.0
    %1532 = vmatprep.subr.mxu0 0.0
    %1533 = vmatpush2.msra.mxu0 0.0
    %1534 = vmatprep.subr.mxu0 0.0
    %1535 = vmatpush2.msra.mxu0 0.0
    %1536 = vmatprep.mubr.f32.mxu0 0.0
    %1537 = vmatmul.mubr.f32.gmra.mxu0 %v1400
    %v1538 = vpop.f32.mrf.mxu0
    %v1539 = vadd.f32 0.0, %v1538
    %v1540 = vpop.f32.mrf.mxu0
    %v1541 = vadd.f32 0.0, %v1540
    %1542 = vdwg.mxu0
    %1543 = vmatprep.subr.mxu0 %v211
    %1544 = vmatpush1.msra.mxu0 %v210
    %1545 = vmatprep.subr.mxu0 %v203
    %1546 = vmatpush1.msra.mxu0 %v202
    %1547 = vmatprep.subr.mxu0 %v195
    %1548 = vmatpush1.msra.mxu0 %v194
    %1549 = vmatprep.subr.mxu0 %v187
    %1550 = vmatpush1.msra.mxu0 %v186
    %1551 = vmatprep.subr.mxu0 %v179
    %1552 = vmatpush1.msra.mxu0 %v178
    %1553 = vmatprep.subr.mxu0 %v171
    %1554 = vmatpush1.msra.mxu0 %v170
    %1555 = vmatprep.subr.mxu0 %v163
    %1556 = vmatpush1.msra.mxu0 %v162
    %1557 = vmatprep.subr.mxu0 %v155
    %1558 = vmatpush1.msra.mxu0 %v154
    %1559 = vmatprep.subr.mxu0 %v147
    %1560 = vmatpush1.msra.mxu0 %v146
    %1561 = vmatprep.subr.mxu0 %v139
    %1562 = vmatpush1.msra.mxu0 %v138
    %1563 = vmatprep.subr.mxu0 %v131
    %1564 = vmatpush1.msra.mxu0 %v130
    %1565 = vmatprep.subr.mxu0 %v123
    %1566 = vmatpush1.msra.mxu0 %v122
    %1567 = vmatprep.subr.mxu0 %v115
    %1568 = vmatpush1.msra.mxu0 %v114
    %1569 = vmatprep.subr.mxu0 %v107
    %1570 = vmatpush1.msra.mxu0 %v106
    %1571 = vmatprep.subr.mxu0 %v99
    %1572 = vmatpush1.msra.mxu0 %v98
    %1573 = vmatprep.subr.mxu0 %v91
    %1574 = vmatpush1.msra.mxu0 %v90
    %1575 = vmatprep.subr.mxu0 0.0
    %1576 = vmatpush2.msra.mxu0 0.0
    %1577 = vmatprep.subr.mxu0 0.0
    %1578 = vmatpush2.msra.mxu0 0.0
    %1579 = vmatprep.subr.mxu0 0.0
    %1580 = vmatpush2.msra.mxu0 0.0
    %1581 = vmatprep.subr.mxu0 0.0
    %1582 = vmatpush2.msra.mxu0 0.0
    %1583 = vmatprep.subr.mxu0 0.0
    %1584 = vmatpush2.msra.mxu0 0.0
    %1585 = vmatprep.subr.mxu0 0.0
    %1586 = vmatpush2.msra.mxu0 0.0
    %1587 = vmatprep.subr.mxu0 0.0
    %1588 = vmatpush2.msra.mxu0 0.0
    %1589 = vmatprep.subr.mxu0 0.0
    %1590 = vmatpush2.msra.mxu0 0.0
    %1591 = vmatprep.subr.mxu0 0.0
    %1592 = vmatpush2.msra.mxu0 0.0
    %1593 = vmatprep.subr.mxu0 0.0
    %1594 = vmatpush2.msra.mxu0 0.0
    %1595 = vmatprep.subr.mxu0 0.0
    %1596 = vmatpush2.msra.mxu0 0.0
    %1597 = vmatprep.subr.mxu0 0.0
    %1598 = vmatpush2.msra.mxu0 0.0
    %1599 = vmatprep.subr.mxu0 0.0
    %1600 = vmatpush2.msra.mxu0 0.0
    %1601 = vmatprep.subr.mxu0 0.0
    %1602 = vmatpush2.msra.mxu0 0.0
    %1603 = vmatprep.subr.mxu0 0.0
    %1604 = vmatpush2.msra.mxu0 0.0
    %1605 = vmatprep.subr.mxu0 0.0
    %1606 = vmatpush2.msra.mxu0 0.0
    %1607 = vmatprep.mubr.f32.mxu0 0.0
    %1608 = vmatmul.mubr.f32.gmra.mxu0 %v1400
    %v1609 = vpop.f32.mrf.mxu0
    %v1610 = vadd.f32 0.0, %v1609
    %v1611 = vpop.f32.mrf.mxu0
    %v1612 = vadd.f32 0.0, %v1611
    %1613 = vdwg.mxu0
    %1614 = vmatprep.subr.mxu0 %v213
    %1615 = vmatpush1.msra.mxu0 %v212
    %1616 = vmatprep.subr.mxu0 %v205
    %1617 = vmatpush1.msra.mxu0 %v204
    %1618 = vmatprep.subr.mxu0 %v197
    %1619 = vmatpush1.msra.mxu0 %v196
    %1620 = vmatprep.subr.mxu0 %v189
    %1621 = vmatpush1.msra.mxu0 %v188
    %1622 = vmatprep.subr.mxu0 %v181
    %1623 = vmatpush1.msra.mxu0 %v180
    %1624 = vmatprep.subr.mxu0 %v173
    %1625 = vmatpush1.msra.mxu0 %v172
    %1626 = vmatprep.subr.mxu0 %v165
    %1627 = vmatpush1.msra.mxu0 %v164
    %1628 = vmatprep.subr.mxu0 %v157
    %1629 = vmatpush1.msra.mxu0 %v156
    %1630 = vmatprep.subr.mxu0 %v149
    %1631 = vmatpush1.msra.mxu0 %v148
    %1632 = vmatprep.subr.mxu0 %v141
    %1633 = vmatpush1.msra.mxu0 %v140
    %1634 = vmatprep.subr.mxu0 %v133
    %1635 = vmatpush1.msra.mxu0 %v132
    %1636 = vmatprep.subr.mxu0 %v125
    %1637 = vmatpush1.msra.mxu0 %v124
    %1638 = vmatprep.subr.mxu0 %v117
    %1639 = vmatpush1.msra.mxu0 %v116
    %1640 = vmatprep.subr.mxu0 %v109
    %1641 = vmatpush1.msra.mxu0 %v108
    %1642 = vmatprep.subr.mxu0 %v101
    %1643 = vmatpush1.msra.mxu0 %v100
    %1644 = vmatprep.subr.mxu0 %v93
    %1645 = vmatpush1.msra.mxu0 %v92
    %1646 = vmatprep.subr.mxu0 0.0
    %1647 = vmatpush2.msra.mxu0 0.0
    %1648 = vmatprep.subr.mxu0 0.0
    %1649 = vmatpush2.msra.mxu0 0.0
    %1650 = vmatprep.subr.mxu0 0.0
    %1651 = vmatpush2.msra.mxu0 0.0
    %1652 = vmatprep.subr.mxu0 0.0
    %1653 = vmatpush2.msra.mxu0 0.0
    %1654 = vmatprep.subr.mxu0 0.0
    %1655 = vmatpush2.msra.mxu0 0.0
    %1656 = vmatprep.subr.mxu0 0.0
    %1657 = vmatpush2.msra.mxu0 0.0
    %1658 = vmatprep.subr.mxu0 0.0
    %1659 = vmatpush2.msra.mxu0 0.0
    %1660 = vmatprep.subr.mxu0 0.0
    %1661 = vmatpush2.msra.mxu0 0.0
    %1662 = vmatprep.subr.mxu0 0.0
    %1663 = vmatpush2.msra.mxu0 0.0
    %1664 = vmatprep.subr.mxu0 0.0
    %1665 = vmatpush2.msra.mxu0 0.0
    %1666 = vmatprep.subr.mxu0 0.0
    %1667 = vmatpush2.msra.mxu0 0.0
    %1668 = vmatprep.subr.mxu0 0.0
    %1669 = vmatpush2.msra.mxu0 0.0
    %1670 = vmatprep.subr.mxu0 0.0
    %1671 = vmatpush2.msra.mxu0 0.0
    %1672 = vmatprep.subr.mxu0 0.0
    %1673 = vmatpush2.msra.mxu0 0.0
    %1674 = vmatprep.subr.mxu0 0.0
    %1675 = vmatpush2.msra.mxu0 0.0
    %1676 = vmatprep.subr.mxu0 0.0
    %1677 = vmatpush2.msra.mxu0 0.0
    %1678 = vmatprep.mubr.f32.mxu0 0.0
    %1679 = vmatmul.mubr.f32.gmra.mxu0 %v1400
    %v1680 = vpop.f32.mrf.mxu0
    %v1681 = vadd.f32 0.0, %v1680
    %v1682 = vpop.f32.mrf.mxu0
    %v1683 = vadd.f32 0.0, %v1682
    %1684 = vdwg.mxu0
    %s1685 = scalar_lea.vmem %s1, 32
    %v1686 = vld [vmem:[%s1685] sm:$0xff]
    %v1687 = vld [vmem:[%s1685 + $0x8] sm:$0xff]
    %v1688 = vld [vmem:[%s1685 + $0x10] sm:$0xff]
    %v1689 = vld [vmem:[%s1685 + $0x18] sm:$0xff]
    %v1690 = vld [vmem:[#allocation4] sm:$0xff]
    %v1691 = vld [vmem:[#allocation4 + $0x8] sm:$0xff]
    %v1692 = vld [vmem:[#allocation4 + $0x10] sm:$0xff]
    %v1693 = vld [vmem:[#allocation4 + $0x18] sm:$0xff]
    %v1694 = vld [vmem:[#allocation5] sm:$0xff]
    %v1695 = vld [vmem:[#allocation5 + $0x8] sm:$0xff]
    %v1696 = vld [vmem:[#allocation5 + $0x10] sm:$0xff]
    %v1697 = vld [vmem:[#allocation5 + $0x18] sm:$0xff]
    %v1698 = vmul.f32 %v1325, %v1468
    %v1699 = vmul.f32 %v1327, %v1470
    %v1700 = vmul.f32 %v1396, %v1539
    %v1701 = vmul.f32 %v1398, %v1541
    %v1702 = vmul.f32 %v1698, %v1690
    %v1703 = vmul.f32 %v1699, %v1691
    %v1704 = vmul.f32 %v1610, %v1686
    %v1705 = vmul.f32 %v1612, %v1687
    %v1706 = vadd.f32 %v1702, %v1704
    %v1707 = vadd.f32 %v1703, %v1705
    %v1708 = vmul.f32 %v1698, %v1692
    %v1709 = vmul.f32 %v1699, %v1693
    %v1710 = vmul.f32 %v1610, %v1688
    %v1711 = vmul.f32 %v1612, %v1689
    %v1712 = vadd.f32 %v1708, %v1710
    %v1713 = vadd.f32 %v1709, %v1711
    %v1714 = vmul.f32 %v1700, %v1694
    %v1715 = vmul.f32 %v1701, %v1695
    %v1716 = vmul.f32 %v1681, %v1686
    %v1717 = vmul.f32 %v1683, %v1687
    %v1718 = vadd.f32 %v1714, %v1716
    %v1719 = vadd.f32 %v1715, %v1717
    %v1720 = vmul.f32 %v1700, %v1696
    %v1721 = vmul.f32 %v1701, %v1697
    %v1722 = vmul.f32 %v1681, %v1688
    %v1723 = vmul.f32 %v1683, %v1689
    %v1724 = vadd.f32 %v1720, %v1722
    %v1725 = vadd.f32 %v1721, %v1723
    %v1726 = vmul.f32 %v1706, %v1706
    %v1727 = vmul.f32 %v1707, %v1707
    %v1728 = vmul.f32 %v1712, %v1712
    %v1729 = vmul.f32 %v1713, %v1713
    %v1730 = vadd.f32 %v1726, %v1728
    %v1731 = vadd.f32 %v1727, %v1729
    %v1732 = vmul.f32 %v1718, %v1718
    %v1733 = vmul.f32 %v1719, %v1719
    %v1734 = vmul.f32 %v1724, %v1724
    %v1735 = vmul.f32 %v1725, %v1725
    %v1736 = vadd.f32 %v1732, %v1734
    %v1737 = vadd.f32 %v1733, %v1735
    %1738 = vmatprep.subr.mxu0 0.0
    %1739 = vmatpush1.msra.mxu0 %v229
    %1740 = vmatprep.subr.mxu0 0.0
    %1741 = vmatpush1.msra.mxu0 %v228
    %1742 = vmatprep.subr.mxu0 0.0
    %1743 = vmatpush1.msra.mxu0 %v227
    %1744 = vmatprep.subr.mxu0 0.0
    %1745 = vmatpush1.msra.mxu0 %v226
    %1746 = vmatprep.subr.mxu0 0.0
    %1747 = vmatpush1.msra.mxu0 %v225
    %1748 = vmatprep.subr.mxu0 0.0
    %1749 = vmatpush1.msra.mxu0 %v224
    %1750 = vmatprep.subr.mxu0 0.0
    %1751 = vmatpush1.msra.mxu0 %v223
    %1752 = vmatprep.subr.mxu0 0.0
    %1753 = vmatpush1.msra.mxu0 %v222
    %1754 = vmatprep.subr.mxu0 0.0
    %1755 = vmatpush1.msra.mxu0 %v221
    %1756 = vmatprep.subr.mxu0 0.0
    %1757 = vmatpush1.msra.mxu0 %v220
    %1758 = vmatprep.subr.mxu0 0.0
    %1759 = vmatpush1.msra.mxu0 %v219
    %1760 = vmatprep.subr.mxu0 0.0
    %1761 = vmatpush1.msra.mxu0 %v218
    %1762 = vmatprep.subr.mxu0 0.0
    %1763 = vmatpush1.msra.mxu0 %v217
    %1764 = vmatprep.subr.mxu0 0.0
    %1765 = vmatpush1.msra.mxu0 %v216
    %1766 = vmatprep.subr.mxu0 0.0
    %1767 = vmatpush1.msra.mxu0 %v215
    %1768 = vmatprep.subr.mxu0 0.0
    %1769 = vmatpush1.msra.mxu0 %v214
    %1770 = vmatprep.subr.mxu0 0.0
    %1771 = vmatpush2.msra.mxu0 %v245
    %1772 = vmatprep.subr.mxu0 0.0
    %1773 = vmatpush2.msra.mxu0 %v244
    %1774 = vmatprep.subr.mxu0 0.0
    %1775 = vmatpush2.msra.mxu0 %v243
    %1776 = vmatprep.subr.mxu0 0.0
    %1777 = vmatpush2.msra.mxu0 %v242
    %1778 = vmatprep.subr.mxu0 0.0
    %1779 = vmatpush2.msra.mxu0 %v241
    %1780 = vmatprep.subr.mxu0 0.0
    %1781 = vmatpush2.msra.mxu0 %v240
    %1782 = vmatprep.subr.mxu0 0.0
    %1783 = vmatpush2.msra.mxu0 %v239
    %1784 = vmatprep.subr.mxu0 0.0
    %1785 = vmatpush2.msra.mxu0 %v238
    %1786 = vmatprep.subr.mxu0 0.0
    %1787 = vmatpush2.msra.mxu0 %v237
    %1788 = vmatprep.subr.mxu0 0.0
    %1789 = vmatpush2.msra.mxu0 %v236
    %1790 = vmatprep.subr.mxu0 0.0
    %1791 = vmatpush2.msra.mxu0 %v235
    %1792 = vmatprep.subr.mxu0 0.0
    %1793 = vmatpush2.msra.mxu0 %v234
    %1794 = vmatprep.subr.mxu0 0.0
    %1795 = vmatpush2.msra.mxu0 %v233
    %1796 = vmatprep.subr.mxu0 0.0
    %1797 = vmatpush2.msra.mxu0 %v232
    %1798 = vmatprep.subr.mxu0 0.0
    %1799 = vmatpush2.msra.mxu0 %v231
    %1800 = vmatprep.subr.mxu0 0.0
    %1801 = vmatpush2.msra.mxu0 %v230
    %1802 = vmatprep.mubr.f32.mxu0 %v1731
    %1803 = vmatmul.mubr.f32.gmra.mxu0 %v1730
    %v1804 = vpop.f32.mrf.mxu0
    %v1805 = vadd.f32 %v291, %v1804
    %v1806 = vpop.f32.mrf.mxu0
    %1807 = vdwg.mxu0
    %1808 = vmatprep.subr.mxu0 0.0
    %1809 = vmatpush1.msra.mxu0 %v261
    %1810 = vmatprep.subr.mxu0 0.0
    %1811 = vmatpush1.msra.mxu0 %v260
    %1812 = vmatprep.subr.mxu0 0.0
    %1813 = vmatpush1.msra.mxu0 %v259
    %1814 = vmatprep.subr.mxu0 0.0
    %1815 = vmatpush1.msra.mxu0 %v258
    %1816 = vmatprep.subr.mxu0 0.0
    %1817 = vmatpush1.msra.mxu0 %v257
    %1818 = vmatprep.subr.mxu0 0.0
    %1819 = vmatpush1.msra.mxu0 %v256
    %1820 = vmatprep.subr.mxu0 0.0
    %1821 = vmatpush1.msra.mxu0 %v255
    %1822 = vmatprep.subr.mxu0 0.0
    %1823 = vmatpush1.msra.mxu0 %v254
    %1824 = vmatprep.subr.mxu0 0.0
    %1825 = vmatpush1.msra.mxu0 %v253
    %1826 = vmatprep.subr.mxu0 0.0
    %1827 = vmatpush1.msra.mxu0 %v252
    %1828 = vmatprep.subr.mxu0 0.0
    %1829 = vmatpush1.msra.mxu0 %v251
    %1830 = vmatprep.subr.mxu0 0.0
    %1831 = vmatpush1.msra.mxu0 %v250
    %1832 = vmatprep.subr.mxu0 0.0
    %1833 = vmatpush1.msra.mxu0 %v249
    %1834 = vmatprep.subr.mxu0 0.0
    %1835 = vmatpush1.msra.mxu0 %v248
    %1836 = vmatprep.subr.mxu0 0.0
    %1837 = vmatpush1.msra.mxu0 %v247
    %1838 = vmatprep.subr.mxu0 0.0
    %1839 = vmatpush1.msra.mxu0 %v246
    %1840 = vmatprep.subr.mxu0 0.0
    %1841 = vmatpush2.msra.mxu0 %v277
    %1842 = vmatprep.subr.mxu0 0.0
    %1843 = vmatpush2.msra.mxu0 %v276
    %1844 = vmatprep.subr.mxu0 0.0
    %1845 = vmatpush2.msra.mxu0 %v275
    %1846 = vmatprep.subr.mxu0 0.0
    %1847 = vmatpush2.msra.mxu0 %v274
    %1848 = vmatprep.subr.mxu0 0.0
    %1849 = vmatpush2.msra.mxu0 %v273
    %1850 = vmatprep.subr.mxu0 0.0
    %1851 = vmatpush2.msra.mxu0 %v272
    %1852 = vmatprep.subr.mxu0 0.0
    %1853 = vmatpush2.msra.mxu0 %v271
    %1854 = vmatprep.subr.mxu0 0.0
    %1855 = vmatpush2.msra.mxu0 %v270
    %1856 = vmatprep.subr.mxu0 0.0
    %1857 = vmatpush2.msra.mxu0 %v269
    %1858 = vmatprep.subr.mxu0 0.0
    %1859 = vmatpush2.msra.mxu0 %v268
    %1860 = vmatprep.subr.mxu0 0.0
    %1861 = vmatpush2.msra.mxu0 %v267
    %1862 = vmatprep.subr.mxu0 0.0
    %1863 = vmatpush2.msra.mxu0 %v266
    %1864 = vmatprep.subr.mxu0 0.0
    %1865 = vmatpush2.msra.mxu0 %v265
    %1866 = vmatprep.subr.mxu0 0.0
    %1867 = vmatpush2.msra.mxu0 %v264
    %1868 = vmatprep.subr.mxu0 0.0
    %1869 = vmatpush2.msra.mxu0 %v263
    %1870 = vmatprep.subr.mxu0 0.0
    %1871 = vmatpush2.msra.mxu0 %v262
    %1872 = vmatprep.mubr.f32.mxu0 %v1737
    %1873 = vmatmul.mubr.f32.gmra.mxu0 %v1736
    %v1874 = vpop.f32.mrf.mxu0
    %v1875 = vadd.f32 %v1805, %v1874
    %v1876 = vpop.f32.mrf.mxu0
    %1877 = vdwg.mxu0
    %v1878 = vtanh.pop %v1875
    %v1880 = vsel %vm310, %v1878, 0
    %1882 = vmatprep.subr.mxu0 0.0
    %1883 = vmatpush1.msra.mxu0 0.0
    %1884 = vmatprep.subr.mxu0 0.0
    %1885 = vmatpush1.msra.mxu0 0.0
    %1886 = vmatprep.subr.mxu0 0.0
    %1887 = vmatpush1.msra.mxu0 0.0
    %1888 = vmatprep.subr.mxu0 0.0
    %1889 = vmatpush1.msra.mxu0 0.0
    %1890 = vmatprep.subr.mxu0 0.0
    %1891 = vmatpush1.msra.mxu0 0.0
    %1892 = vmatprep.subr.mxu0 0.0
    %1893 = vmatpush1.msra.mxu0 0.0
    %1894 = vmatprep.subr.mxu0 0.0
    %1895 = vmatpush1.msra.mxu0 0.0
    %1896 = vmatprep.subr.mxu0 0.0
    %1897 = vmatpush1.msra.mxu0 0.0
    %1898 = vmatprep.subr.mxu0 0.0
    %1899 = vmatpush1.msra.mxu0 %v285
    %1900 = vmatprep.subr.mxu0 0.0
    %1901 = vmatpush1.msra.mxu0 %v284
    %1902 = vmatprep.subr.mxu0 0.0
    %1903 = vmatpush1.msra.mxu0 %v283
    %1904 = vmatprep.subr.mxu0 0.0
    %1905 = vmatpush1.msra.mxu0 %v282
    %1906 = vmatprep.subr.mxu0 0.0
    %1907 = vmatpush1.msra.mxu0 %v281
    %1908 = vmatprep.subr.mxu0 0.0
    %1909 = vmatpush1.msra.mxu0 %v280
    %1910 = vmatprep.subr.mxu0 0.0
    %1911 = vmatpush1.msra.mxu0 %v279
    %1912 = vmatprep.subr.mxu0 0.0
    %1913 = vmatpush1.msra.mxu0 %v278
    %1914 = vmatprep.subr.mxu0 0.0
    %1915 = vmatpush2.msra.mxu0 0.0
    %1916 = vmatprep.subr.mxu0 0.0
    %1917 = vmatpush2.msra.mxu0 0.0
    %1918 = vmatprep.subr.mxu0 0.0
    %1919 = vmatpush2.msra.mxu0 0.0
    %1920 = vmatprep.subr.mxu0 0.0
    %1921 = vmatpush2.msra.mxu0 0.0
    %1922 = vmatprep.subr.mxu0 0.0
    %1923 = vmatpush2.msra.mxu0 0.0
    %1924 = vmatprep.subr.mxu0 0.0
    %1925 = vmatpush2.msra.mxu0 0.0
    %1926 = vmatprep.subr.mxu0 0.0
    %1927 = vmatpush2.msra.mxu0 0.0
    %1928 = vmatprep.subr.mxu0 0.0
    %1929 = vmatpush2.msra.mxu0 0.0
    %1930 = vmatprep.subr.mxu0 0.0
    %1931 = vmatpush2.msra.mxu0 0.0
    %1932 = vmatprep.subr.mxu0 0.0
    %1933 = vmatpush2.msra.mxu0 0.0
    %1934 = vmatprep.subr.mxu0 0.0
    %1935 = vmatpush2.msra.mxu0 0.0
    %1936 = vmatprep.subr.mxu0 0.0
    %1937 = vmatpush2.msra.mxu0 0.0
    %1938 = vmatprep.subr.mxu0 0.0
    %1939 = vmatpush2.msra.mxu0 0.0
    %1940 = vmatprep.subr.mxu0 0.0
    %1941 = vmatpush2.msra.mxu0 0.0
    %1942 = vmatprep.subr.mxu0 0.0
    %1943 = vmatpush2.msra.mxu0 0.0
    %1944 = vmatprep.subr.mxu0 0.0
    %1945 = vmatpush2.msra.mxu0 0.0
    %1946 = vmatprep.mubr.f32.mxu0 0.0
    %1947 = vmatmul.mubr.f32.gmra.mxu0 %v1880
    %v1948 = vpop.f32.mrf.mxu0
    %v1949 = vadd.f32 %v298, %v1948
    %v1950 = vpop.f32.mrf.mxu0
    %1951 = vdwg.mxu0
    %v1952 = vsub.f32 1.0, %v1246
    %v1953 = vmul.f32 %v1952, %v1157
    %1954 = vrot.lane.b32.xlu0 %v1249, 112
    %v1955 = vpop.permute.xlu0 %1954
    %v1957 = vmul.f32 %v1246, %v1955
    %v1958 = vadd.f32 %v1953, %v1957
    %v1959 = vadd.f32 %v1958, %v1949
    %v1960 = vxor.u32 %v1959, 2147483648
    %v1961 = vmul.f32 %v1960, 1.442695
    %v1962 = vpow.pop %v1961
    %v1963 = vadd.f32 %v1962, 1.0
    %v1964 = vrcp.pop %v1963
    %v1965 = vmul.f32 1.0, %v1964
    %v1966 = vmul.f32 %v1965, %v1878
    %s1967 = scalar_lea.vmem [#allocation9], 8
    %1968 = vst.msk [vmem:[%s1967] sm:$0xff] %vm310, %v1966
    %1969 = vst.msk [vmem:[#allocation2] sm:$0xff] %vm306, %v1966
    %1970 = vst [vmem:[#allocation4] sm:$0xff] %v1706
    %1971 = vst [vmem:[#allocation4 + $0x8] sm:$0xff] %v1707
    %1972 = vst [vmem:[#allocation4 + $0x10] sm:$0xff] %v1712
    %1973 = vst [vmem:[#allocation4 + $0x18] sm:$0xff] %v1713
    %1975 = vrot.lane.b32.xlu0 %v1966, 96
    %v1976 = vpop.permute.xlu0 %1975
    %1978 = vst.msk [vmem:[#allocation3 - $0x6] sm:$0xc0] %vm1127, %v1976
    %1979 = vst.msk [vmem:[#allocation3 + $0x2] sm:$0x3f] %vm1129, %v1976
    %v1984 = vrot.slane %v1718, 6
    %v1985 = vrot.slane %v1719, 6
    %v1986 = vrot.slane %v1724, 6
    %v1987 = vrot.slane %v1725, 6
    %1992 = vst [vmem:[#allocation5] sm:$0x3] %v1984
    %1993 = vst [vmem:[#allocation5 + $0x8] sm:$0x3] %v1985
    %1994 = vst [vmem:[#allocation5 + $0x10] sm:$0x3] %v1986
    %1995 = vst [vmem:[#allocation5 + $0x18] sm:$0x3] %v1987
    %1996 = vst [vmem:[#allocation5] sm:$0xfc] %v1984
    %1997 = vst [vmem:[#allocation5 + $0x8] sm:$0xfc] %v1985
    %1998 = vst [vmem:[#allocation5 + $0x10] sm:$0xfc] %v1986
    %1999 = vst [vmem:[#allocation5 + $0x18] sm:$0xfc] %v1987
    %v2000 = vld [vmem:[#allocation2] sm:$0xff]
    %v2001 = vld [vmem:[#allocation3] sm:$0xff]
    %2003 = vrot.lane.b32.xlu0 %v2001, 32
    %v2004 = vpop.permute.xlu0 %2003
    %v2006 = vsel %vm306, %v2000, %v2004
    %s2007 = scalar_lea.vmem %s0, 32
    %v2008 = vld [vmem:[%s2007] sm:$0xff]
    %v2009 = vld [vmem:[%s2007 + $0x8] sm:$0xff]
    %v2011 = vsel %vm310, %v2006, 0
    %2013 = vmatprep.subr.mxu0 0.0
    %2014 = vmatpush1.msra.mxu0 0.0
    %2015 = vmatprep.subr.mxu0 0.0
    %2016 = vmatpush1.msra.mxu0 0.0
    %2017 = vmatprep.subr.mxu0 0.0
    %2018 = vmatpush1.msra.mxu0 0.0
    %2019 = vmatprep.subr.mxu0 0.0
    %2020 = vmatpush1.msra.mxu0 0.0
    %2021 = vmatprep.subr.mxu0 0.0
    %2022 = vmatpush1.msra.mxu0 0.0
    %2023 = vmatprep.subr.mxu0 0.0
    %2024 = vmatpush1.msra.mxu0 0.0
    %2025 = vmatprep.subr.mxu0 0.0
    %2026 = vmatpush1.msra.mxu0 0.0
    %2027 = vmatprep.subr.mxu0 0.0
    %2028 = vmatpush1.msra.mxu0 0.0
    %2029 = vmatprep.subr.mxu0 %v77
    %2030 = vmatpush1.msra.mxu0 %v76
    %2031 = vmatprep.subr.mxu0 %v75
    %2032 = vmatpush1.msra.mxu0 %v74
    %2033 = vmatprep.subr.mxu0 %v73
    %2034 = vmatpush1.msra.mxu0 %v72
    %2035 = vmatprep.subr.mxu0 %v71
    %2036 = vmatpush1.msra.mxu0 %v70
    %2037 = vmatprep.subr.mxu0 %v69
    %2038 = vmatpush1.msra.mxu0 %v68
    %2039 = vmatprep.subr.mxu0 %v67
    %2040 = vmatpush1.msra.mxu0 %v66
    %2041 = vmatprep.subr.mxu0 %v65
    %2042 = vmatpush1.msra.mxu0 %v64
    %2043 = vmatprep.subr.mxu0 %v63
    %2044 = vmatpush1.msra.mxu0 %v62
    %2045 = vmatprep.subr.mxu0 0.0
    %2046 = vmatpush2.msra.mxu0 0.0
    %2047 = vmatprep.subr.mxu0 0.0
    %2048 = vmatpush2.msra.mxu0 0.0
    %2049 = vmatprep.subr.mxu0 0.0
    %2050 = vmatpush2.msra.mxu0 0.0
    %2051 = vmatprep.subr.mxu0 0.0
    %2052 = vmatpush2.msra.mxu0 0.0
    %2053 = vmatprep.subr.mxu0 0.0
    %2054 = vmatpush2.msra.mxu0 0.0
    %2055 = vmatprep.subr.mxu0 0.0
    %2056 = vmatpush2.msra.mxu0 0.0
    %2057 = vmatprep.subr.mxu0 0.0
    %2058 = vmatpush2.msra.mxu0 0.0
    %2059 = vmatprep.subr.mxu0 0.0
    %2060 = vmatpush2.msra.mxu0 0.0
    %2061 = vmatprep.subr.mxu0 0.0
    %2062 = vmatpush2.msra.mxu0 0.0
    %2063 = vmatprep.subr.mxu0 0.0
    %2064 = vmatpush2.msra.mxu0 0.0
    %2065 = vmatprep.subr.mxu0 0.0
    %2066 = vmatpush2.msra.mxu0 0.0
    %2067 = vmatprep.subr.mxu0 0.0
    %2068 = vmatpush2.msra.mxu0 0.0
    %2069 = vmatprep.subr.mxu0 0.0
    %2070 = vmatpush2.msra.mxu0 0.0
    %2071 = vmatprep.subr.mxu0 0.0
    %2072 = vmatpush2.msra.mxu0 0.0
    %2073 = vmatprep.subr.mxu0 0.0
    %2074 = vmatpush2.msra.mxu0 0.0
    %2075 = vmatprep.subr.mxu0 0.0
    %2076 = vmatpush2.msra.mxu0 0.0
    %2077 = vmatprep.mubr.f32.mxu0 0.0
    %2078 = vmatmul.mubr.f32.gmra.mxu0 %v2011
    %v2079 = vpop.f32.mrf.mxu0
    %v2080 = vadd.f32 0.0, %v2079
    %v2081 = vpop.f32.mrf.mxu0
    %v2082 = vadd.f32 0.0, %v2081
    %2083 = vdwg.mxu0
    %v2084 = vadd.f32 %v2008, %v2080
    %v2085 = vadd.f32 %v2009, %v2082
    %v2086 = vxor.u32 %v2084, 2147483648
    %v2087 = vxor.u32 %v2085, 2147483648
    %v2088 = vmul.f32 %v2086, 1.442695
    %v2089 = vpow.pop %v2088
    %v2090 = vmul.f32 %v2087, 1.442695
    %v2091 = vpow.pop %v2090
    %v2092 = vadd.f32 %v2089, 1.0
    %v2093 = vadd.f32 %v2091, 1.0
    %v2094 = vrcp.pop %v2092
    %v2095 = vmul.f32 1.0, %v2094
    %v2096 = vrcp.pop %v2093
    %v2097 = vmul.f32 1.0, %v2096
    %v2098 = vtanh.pop %v2085
    %2100 = vrot.lane.b32.xlu0 %v2098, 48
    %v2101 = vpop.permute.xlu0 %2100
    %v2103 = vmul.f32 %v2095, %v2101
    %v2105 = vsel %vm405, %v2097, 0
    %2107 = vmatprep.subr.mxu0 0.0
    %2108 = vmatpush1.msra.mxu0 0.0
    %2109 = vmatprep.subr.mxu0 0.0
    %2110 = vmatpush1.msra.mxu0 0.0
    %2111 = vmatprep.subr.mxu0 0.0
    %2112 = vmatpush1.msra.mxu0 0.0
    %2113 = vmatprep.subr.mxu0 0.0
    %2114 = vmatpush1.msra.mxu0 0.0
    %2115 = vmatprep.subr.mxu0 0.0
    %2116 = vmatpush1.msra.mxu0 0.0
    %2117 = vmatprep.subr.mxu0 0.0
    %2118 = vmatpush1.msra.mxu0 0.0
    %2119 = vmatprep.subr.mxu0 0.0
    %2120 = vmatpush1.msra.mxu0 0.0
    %2121 = vmatprep.subr.mxu0 0.0
    %2122 = vmatpush1.msra.mxu0 0.0
    %2123 = vmatprep.subr.mxu0 0.0
    %2124 = vmatpush1.msra.mxu0 0.0
    %2125 = vmatprep.subr.mxu0 0.0
    %2126 = vmatpush1.msra.mxu0 0.0
    %2127 = vmatprep.subr.mxu0 0.0
    %2128 = vmatpush1.msra.mxu0 0.0
    %2129 = vmatprep.subr.mxu0 0.0
    %2130 = vmatpush1.msra.mxu0 0.0
    %2131 = vmatprep.subr.mxu0 0.0
    %2132 = vmatpush1.msra.mxu0 0.0
    %2133 = vmatprep.subr.mxu0 0.0
    %2134 = vmatpush1.msra.mxu0 0.0
    %2135 = vmatprep.subr.mxu0 %v83
    %2136 = vmatpush1.msra.mxu0 %v82
    %2137 = vmatprep.subr.mxu0 %v79
    %2138 = vmatpush1.msra.mxu0 %v78
    %2139 = vmatprep.subr.mxu0 0.0
    %2140 = vmatpush2.msra.mxu0 0.0
    %2141 = vmatprep.subr.mxu0 0.0
    %2142 = vmatpush2.msra.mxu0 0.0
    %2143 = vmatprep.subr.mxu0 0.0
    %2144 = vmatpush2.msra.mxu0 0.0
    %2145 = vmatprep.subr.mxu0 0.0
    %2146 = vmatpush2.msra.mxu0 0.0
    %2147 = vmatprep.subr.mxu0 0.0
    %2148 = vmatpush2.msra.mxu0 0.0
    %2149 = vmatprep.subr.mxu0 0.0
    %2150 = vmatpush2.msra.mxu0 0.0
    %2151 = vmatprep.subr.mxu0 0.0
    %2152 = vmatpush2.msra.mxu0 0.0
    %2153 = vmatprep.subr.mxu0 0.0
    %2154 = vmatpush2.msra.mxu0 0.0
    %2155 = vmatprep.subr.mxu0 0.0
    %2156 = vmatpush2.msra.mxu0 0.0
    %2157 = vmatprep.subr.mxu0 0.0
    %2158 = vmatpush2.msra.mxu0 0.0
    %2159 = vmatprep.subr.mxu0 0.0
    %2160 = vmatpush2.msra.mxu0 0.0
    %2161 = vmatprep.subr.mxu0 0.0
    %2162 = vmatpush2.msra.mxu0 0.0
    %2163 = vmatprep.subr.mxu0 0.0
    %2164 = vmatpush2.msra.mxu0 0.0
    %2165 = vmatprep.subr.mxu0 0.0
    %2166 = vmatpush2.msra.mxu0 0.0
    %2167 = vmatprep.subr.mxu0 0.0
    %2168 = vmatpush2.msra.mxu0 0.0
    %2169 = vmatprep.subr.mxu0 0.0
    %2170 = vmatpush2.msra.mxu0 0.0
    %2171 = vmatprep.mubr.f32.mxu0 0.0
    %2172 = vmatmul.mubr.f32.gmra.mxu0 %v2105
    %v2173 = vpop.f32.mrf.mxu0
    %v2174 = vadd.f32 0.0, %v2173
    %v2175 = vpop.f32.mrf.mxu0
    %v2176 = vadd.f32 0.0, %v2175
    %2177 = vdwg.mxu0
    %2178 = vmatprep.subr.mxu0 0.0
    %2179 = vmatpush1.msra.mxu0 0.0
    %2180 = vmatprep.subr.mxu0 0.0
    %2181 = vmatpush1.msra.mxu0 0.0
    %2182 = vmatprep.subr.mxu0 0.0
    %2183 = vmatpush1.msra.mxu0 0.0
    %2184 = vmatprep.subr.mxu0 0.0
    %2185 = vmatpush1.msra.mxu0 0.0
    %2186 = vmatprep.subr.mxu0 0.0
    %2187 = vmatpush1.msra.mxu0 0.0
    %2188 = vmatprep.subr.mxu0 0.0
    %2189 = vmatpush1.msra.mxu0 0.0
    %2190 = vmatprep.subr.mxu0 0.0
    %2191 = vmatpush1.msra.mxu0 0.0
    %2192 = vmatprep.subr.mxu0 0.0
    %2193 = vmatpush1.msra.mxu0 0.0
    %2194 = vmatprep.subr.mxu0 0.0
    %2195 = vmatpush1.msra.mxu0 0.0
    %2196 = vmatprep.subr.mxu0 0.0
    %2197 = vmatpush1.msra.mxu0 0.0
    %2198 = vmatprep.subr.mxu0 0.0
    %2199 = vmatpush1.msra.mxu0 0.0
    %2200 = vmatprep.subr.mxu0 0.0
    %2201 = vmatpush1.msra.mxu0 0.0
    %2202 = vmatprep.subr.mxu0 0.0
    %2203 = vmatpush1.msra.mxu0 0.0
    %2204 = vmatprep.subr.mxu0 0.0
    %2205 = vmatpush1.msra.mxu0 0.0
    %2206 = vmatprep.subr.mxu0 %v85
    %2207 = vmatpush1.msra.mxu0 %v84
    %2208 = vmatprep.subr.mxu0 %v81
    %2209 = vmatpush1.msra.mxu0 %v80
    %2210 = vmatprep.subr.mxu0 0.0
    %2211 = vmatpush2.msra.mxu0 0.0
    %2212 = vmatprep.subr.mxu0 0.0
    %2213 = vmatpush2.msra.mxu0 0.0
    %2214 = vmatprep.subr.mxu0 0.0
    %2215 = vmatpush2.msra.mxu0 0.0
    %2216 = vmatprep.subr.mxu0 0.0
    %2217 = vmatpush2.msra.mxu0 0.0
    %2218 = vmatprep.subr.mxu0 0.0
    %2219 = vmatpush2.msra.mxu0 0.0
    %2220 = vmatprep.subr.mxu0 0.0
    %2221 = vmatpush2.msra.mxu0 0.0
    %2222 = vmatprep.subr.mxu0 0.0
    %2223 = vmatpush2.msra.mxu0 0.0
    %2224 = vmatprep.subr.mxu0 0.0
    %2225 = vmatpush2.msra.mxu0 0.0
    %2226 = vmatprep.subr.mxu0 0.0
    %2227 = vmatpush2.msra.mxu0 0.0
    %2228 = vmatprep.subr.mxu0 0.0
    %2229 = vmatpush2.msra.mxu0 0.0
    %2230 = vmatprep.subr.mxu0 0.0
    %2231 = vmatpush2.msra.mxu0 0.0
    %2232 = vmatprep.subr.mxu0 0.0
    %2233 = vmatpush2.msra.mxu0 0.0
    %2234 = vmatprep.subr.mxu0 0.0
    %2235 = vmatpush2.msra.mxu0 0.0
    %2236 = vmatprep.subr.mxu0 0.0
    %2237 = vmatpush2.msra.mxu0 0.0
    %2238 = vmatprep.subr.mxu0 0.0
    %2239 = vmatpush2.msra.mxu0 0.0
    %2240 = vmatprep.subr.mxu0 0.0
    %2241 = vmatpush2.msra.mxu0 0.0
    %2242 = vmatprep.mubr.f32.mxu0 0.0
    %2243 = vmatmul.mubr.f32.gmra.mxu0 %v2105
    %v2244 = vpop.f32.mrf.mxu0
    %v2245 = vadd.f32 0.0, %v2244
    %v2246 = vpop.f32.mrf.mxu0
    %v2247 = vadd.f32 0.0, %v2246
    %2248 = vdwg.mxu0
    %v2249 = vsel %vm310, %v2095, %v2103
    %2250 = vmatprep.subr.mxu0 %v207
    %2251 = vmatpush1.msra.mxu0 %v206
    %2252 = vmatprep.subr.mxu0 %v199
    %2253 = vmatpush1.msra.mxu0 %v198
    %2254 = vmatprep.subr.mxu0 %v191
    %2255 = vmatpush1.msra.mxu0 %v190
    %2256 = vmatprep.subr.mxu0 %v183
    %2257 = vmatpush1.msra.mxu0 %v182
    %2258 = vmatprep.subr.mxu0 %v175
    %2259 = vmatpush1.msra.mxu0 %v174
    %2260 = vmatprep.subr.mxu0 %v167
    %2261 = vmatpush1.msra.mxu0 %v166
    %2262 = vmatprep.subr.mxu0 %v159
    %2263 = vmatpush1.msra.mxu0 %v158
    %2264 = vmatprep.subr.mxu0 %v151
    %2265 = vmatpush1.msra.mxu0 %v150
    %2266 = vmatprep.subr.mxu0 %v143
    %2267 = vmatpush1.msra.mxu0 %v142
    %2268 = vmatprep.subr.mxu0 %v135
    %2269 = vmatpush1.msra.mxu0 %v134
    %2270 = vmatprep.subr.mxu0 %v127
    %2271 = vmatpush1.msra.mxu0 %v126
    %2272 = vmatprep.subr.mxu0 %v119
    %2273 = vmatpush1.msra.mxu0 %v118
    %2274 = vmatprep.subr.mxu0 %v111
    %2275 = vmatpush1.msra.mxu0 %v110
    %2276 = vmatprep.subr.mxu0 %v103
    %2277 = vmatpush1.msra.mxu0 %v102
    %2278 = vmatprep.subr.mxu0 %v95
    %2279 = vmatpush1.msra.mxu0 %v94
    %2280 = vmatprep.subr.mxu0 %v87
    %2281 = vmatpush1.msra.mxu0 %v86
    %2282 = vmatprep.subr.mxu0 0.0
    %2283 = vmatpush2.msra.mxu0 0.0
    %2284 = vmatprep.subr.mxu0 0.0
    %2285 = vmatpush2.msra.mxu0 0.0
    %2286 = vmatprep.subr.mxu0 0.0
    %2287 = vmatpush2.msra.mxu0 0.0
    %2288 = vmatprep.subr.mxu0 0.0
    %2289 = vmatpush2.msra.mxu0 0.0
    %2290 = vmatprep.subr.mxu0 0.0
    %2291 = vmatpush2.msra.mxu0 0.0
    %2292 = vmatprep.subr.mxu0 0.0
    %2293 = vmatpush2.msra.mxu0 0.0
    %2294 = vmatprep.subr.mxu0 0.0
    %2295 = vmatpush2.msra.mxu0 0.0
    %2296 = vmatprep.subr.mxu0 0.0
    %2297 = vmatpush2.msra.mxu0 0.0
    %2298 = vmatprep.subr.mxu0 0.0
    %2299 = vmatpush2.msra.mxu0 0.0
    %2300 = vmatprep.subr.mxu0 0.0
    %2301 = vmatpush2.msra.mxu0 0.0
    %2302 = vmatprep.subr.mxu0 0.0
    %2303 = vmatpush2.msra.mxu0 0.0
    %2304 = vmatprep.subr.mxu0 0.0
    %2305 = vmatpush2.msra.mxu0 0.0
    %2306 = vmatprep.subr.mxu0 0.0
    %2307 = vmatpush2.msra.mxu0 0.0
    %2308 = vmatprep.subr.mxu0 0.0
    %2309 = vmatpush2.msra.mxu0 0.0
    %2310 = vmatprep.subr.mxu0 0.0
    %2311 = vmatpush2.msra.mxu0 0.0
    %2312 = vmatprep.subr.mxu0 0.0
    %2313 = vmatpush2.msra.mxu0 0.0
    %2314 = vmatprep.mubr.f32.mxu0 0.0
    %2315 = vmatmul.mubr.f32.gmra.mxu0 %v2249
    %v2316 = vpop.f32.mrf.mxu0
    %v2317 = vadd.f32 0.0, %v2316
    %v2318 = vpop.f32.mrf.mxu0
    %v2319 = vadd.f32 0.0, %v2318
    %2320 = vdwg.mxu0
    %2321 = vmatprep.subr.mxu0 %v209
    %2322 = vmatpush1.msra.mxu0 %v208
    %2323 = vmatprep.subr.mxu0 %v201
    %2324 = vmatpush1.msra.mxu0 %v200
    %2325 = vmatprep.subr.mxu0 %v193
    %2326 = vmatpush1.msra.mxu0 %v192
    %2327 = vmatprep.subr.mxu0 %v185
    %2328 = vmatpush1.msra.mxu0 %v184
    %2329 = vmatprep.subr.mxu0 %v177
    %2330 = vmatpush1.msra.mxu0 %v176
    %2331 = vmatprep.subr.mxu0 %v169
    %2332 = vmatpush1.msra.mxu0 %v168
    %2333 = vmatprep.subr.mxu0 %v161
    %2334 = vmatpush1.msra.mxu0 %v160
    %2335 = vmatprep.subr.mxu0 %v153
    %2336 = vmatpush1.msra.mxu0 %v152
    %2337 = vmatprep.subr.mxu0 %v145
    %2338 = vmatpush1.msra.mxu0 %v144
    %2339 = vmatprep.subr.mxu0 %v137
    %2340 = vmatpush1.msra.mxu0 %v136
    %2341 = vmatprep.subr.mxu0 %v129
    %2342 = vmatpush1.msra.mxu0 %v128
    %2343 = vmatprep.subr.mxu0 %v121
    %2344 = vmatpush1.msra.mxu0 %v120
    %2345 = vmatprep.subr.mxu0 %v113
    %2346 = vmatpush1.msra.mxu0 %v112
    %2347 = vmatprep.subr.mxu0 %v105
    %2348 = vmatpush1.msra.mxu0 %v104
    %2349 = vmatprep.subr.mxu0 %v97
    %2350 = vmatpush1.msra.mxu0 %v96
    %2351 = vmatprep.subr.mxu0 %v89
    %2352 = vmatpush1.msra.mxu0 %v88
    %2353 = vmatprep.subr.mxu0 0.0
    %2354 = vmatpush2.msra.mxu0 0.0
    %2355 = vmatprep.subr.mxu0 0.0
    %2356 = vmatpush2.msra.mxu0 0.0
    %2357 = vmatprep.subr.mxu0 0.0
    %2358 = vmatpush2.msra.mxu0 0.0
    %2359 = vmatprep.subr.mxu0 0.0
    %2360 = vmatpush2.msra.mxu0 0.0
    %2361 = vmatprep.subr.mxu0 0.0
    %2362 = vmatpush2.msra.mxu0 0.0
    %2363 = vmatprep.subr.mxu0 0.0
    %2364 = vmatpush2.msra.mxu0 0.0
    %2365 = vmatprep.subr.mxu0 0.0
    %2366 = vmatpush2.msra.mxu0 0.0
    %2367 = vmatprep.subr.mxu0 0.0
    %2368 = vmatpush2.msra.mxu0 0.0
    %2369 = vmatprep.subr.mxu0 0.0
    %2370 = vmatpush2.msra.mxu0 0.0
    %2371 = vmatprep.subr.mxu0 0.0
    %2372 = vmatpush2.msra.mxu0 0.0
    %2373 = vmatprep.subr.mxu0 0.0
    %2374 = vmatpush2.msra.mxu0 0.0
    %2375 = vmatprep.subr.mxu0 0.0
    %2376 = vmatpush2.msra.mxu0 0.0
    %2377 = vmatprep.subr.mxu0 0.0
    %2378 = vmatpush2.msra.mxu0 0.0
    %2379 = vmatprep.subr.mxu0 0.0
    %2380 = vmatpush2.msra.mxu0 0.0
    %2381 = vmatprep.subr.mxu0 0.0
    %2382 = vmatpush2.msra.mxu0 0.0
    %2383 = vmatprep.subr.mxu0 0.0
    %2384 = vmatpush2.msra.mxu0 0.0
    %2385 = vmatprep.mubr.f32.mxu0 0.0
    %2386 = vmatmul.mubr.f32.gmra.mxu0 %v2249
    %v2387 = vpop.f32.mrf.mxu0
    %v2388 = vadd.f32 0.0, %v2387
    %v2389 = vpop.f32.mrf.mxu0
    %v2390 = vadd.f32 0.0, %v2389
    %2391 = vdwg.mxu0
    %2392 = vmatprep.subr.mxu0 %v211
    %2393 = vmatpush1.msra.mxu0 %v210
    %2394 = vmatprep.subr.mxu0 %v203
    %2395 = vmatpush1.msra.mxu0 %v202
    %2396 = vmatprep.subr.mxu0 %v195
    %2397 = vmatpush1.msra.mxu0 %v194
    %2398 = vmatprep.subr.mxu0 %v187
    %2399 = vmatpush1.msra.mxu0 %v186
    %2400 = vmatprep.subr.mxu0 %v179
    %2401 = vmatpush1.msra.mxu0 %v178
    %2402 = vmatprep.subr.mxu0 %v171
    %2403 = vmatpush1.msra.mxu0 %v170
    %2404 = vmatprep.subr.mxu0 %v163
    %2405 = vmatpush1.msra.mxu0 %v162
    %2406 = vmatprep.subr.mxu0 %v155
    %2407 = vmatpush1.msra.mxu0 %v154
    %2408 = vmatprep.subr.mxu0 %v147
    %2409 = vmatpush1.msra.mxu0 %v146
    %2410 = vmatprep.subr.mxu0 %v139
    %2411 = vmatpush1.msra.mxu0 %v138
    %2412 = vmatprep.subr.mxu0 %v131
    %2413 = vmatpush1.msra.mxu0 %v130
    %2414 = vmatprep.subr.mxu0 %v123
    %2415 = vmatpush1.msra.mxu0 %v122
    %2416 = vmatprep.subr.mxu0 %v115
    %2417 = vmatpush1.msra.mxu0 %v114
    %2418 = vmatprep.subr.mxu0 %v107
    %2419 = vmatpush1.msra.mxu0 %v106
    %2420 = vmatprep.subr.mxu0 %v99
    %2421 = vmatpush1.msra.mxu0 %v98
    %2422 = vmatprep.subr.mxu0 %v91
    %2423 = vmatpush1.msra.mxu0 %v90
    %2424 = vmatprep.subr.mxu0 0.0
    %2425 = vmatpush2.msra.mxu0 0.0
    %2426 = vmatprep.subr.mxu0 0.0
    %2427 = vmatpush2.msra.mxu0 0.0
    %2428 = vmatprep.subr.mxu0 0.0
    %2429 = vmatpush2.msra.mxu0 0.0
    %2430 = vmatprep.subr.mxu0 0.0
    %2431 = vmatpush2.msra.mxu0 0.0
    %2432 = vmatprep.subr.mxu0 0.0
    %2433 = vmatpush2.msra.mxu0 0.0
    %2434 = vmatprep.subr.mxu0 0.0
    %2435 = vmatpush2.msra.mxu0 0.0
    %2436 = vmatprep.subr.mxu0 0.0
    %2437 = vmatpush2.msra.mxu0 0.0
    %2438 = vmatprep.subr.mxu0 0.0
    %2439 = vmatpush2.msra.mxu0 0.0
    %2440 = vmatprep.subr.mxu0 0.0
    %2441 = vmatpush2.msra.mxu0 0.0
    %2442 = vmatprep.subr.mxu0 0.0
    %2443 = vmatpush2.msra.mxu0 0.0
    %2444 = vmatprep.subr.mxu0 0.0
    %2445 = vmatpush2.msra.mxu0 0.0
    %2446 = vmatprep.subr.mxu0 0.0
    %2447 = vmatpush2.msra.mxu0 0.0
    %2448 = vmatprep.subr.mxu0 0.0
    %2449 = vmatpush2.msra.mxu0 0.0
    %2450 = vmatprep.subr.mxu0 0.0
    %2451 = vmatpush2.msra.mxu0 0.0
    %2452 = vmatprep.subr.mxu0 0.0
    %2453 = vmatpush2.msra.mxu0 0.0
    %2454 = vmatprep.subr.mxu0 0.0
    %2455 = vmatpush2.msra.mxu0 0.0
    %2456 = vmatprep.mubr.f32.mxu0 0.0
    %2457 = vmatmul.mubr.f32.gmra.mxu0 %v2249
    %v2458 = vpop.f32.mrf.mxu0
    %v2459 = vadd.f32 0.0, %v2458
    %v2460 = vpop.f32.mrf.mxu0
    %v2461 = vadd.f32 0.0, %v2460
    %2462 = vdwg.mxu0
    %2463 = vmatprep.subr.mxu0 %v213
    %2464 = vmatpush1.msra.mxu0 %v212
    %2465 = vmatprep.subr.mxu0 %v205
    %2466 = vmatpush1.msra.mxu0 %v204
    %2467 = vmatprep.subr.mxu0 %v197
    %2468 = vmatpush1.msra.mxu0 %v196
    %2469 = vmatprep.subr.mxu0 %v189
    %2470 = vmatpush1.msra.mxu0 %v188
    %2471 = vmatprep.subr.mxu0 %v181
    %2472 = vmatpush1.msra.mxu0 %v180
    %2473 = vmatprep.subr.mxu0 %v173
    %2474 = vmatpush1.msra.mxu0 %v172
    %2475 = vmatprep.subr.mxu0 %v165
    %2476 = vmatpush1.msra.mxu0 %v164
    %2477 = vmatprep.subr.mxu0 %v157
    %2478 = vmatpush1.msra.mxu0 %v156
    %2479 = vmatprep.subr.mxu0 %v149
    %2480 = vmatpush1.msra.mxu0 %v148
    %2481 = vmatprep.subr.mxu0 %v141
    %2482 = vmatpush1.msra.mxu0 %v140
    %2483 = vmatprep.subr.mxu0 %v133
    %2484 = vmatpush1.msra.mxu0 %v132
    %2485 = vmatprep.subr.mxu0 %v125
    %2486 = vmatpush1.msra.mxu0 %v124
    %2487 = vmatprep.subr.mxu0 %v117
    %2488 = vmatpush1.msra.mxu0 %v116
    %2489 = vmatprep.subr.mxu0 %v109
    %2490 = vmatpush1.msra.mxu0 %v108
    %2491 = vmatprep.subr.mxu0 %v101
    %2492 = vmatpush1.msra.mxu0 %v100
    %2493 = vmatprep.subr.mxu0 %v93
    %2494 = vmatpush1.msra.mxu0 %v92
    %2495 = vmatprep.subr.mxu0 0.0
    %2496 = vmatpush2.msra.mxu0 0.0
    %2497 = vmatprep.subr.mxu0 0.0
    %2498 = vmatpush2.msra.mxu0 0.0
    %2499 = vmatprep.subr.mxu0 0.0
    %2500 = vmatpush2.msra.mxu0 0.0
    %2501 = vmatprep.subr.mxu0 0.0
    %2502 = vmatpush2.msra.mxu0 0.0
    %2503 = vmatprep.subr.mxu0 0.0
    %2504 = vmatpush2.msra.mxu0 0.0
    %2505 = vmatprep.subr.mxu0 0.0
    %2506 = vmatpush2.msra.mxu0 0.0
    %2507 = vmatprep.subr.mxu0 0.0
    %2508 = vmatpush2.msra.mxu0 0.0
    %2509 = vmatprep.subr.mxu0 0.0
    %2510 = vmatpush2.msra.mxu0 0.0
    %2511 = vmatprep.subr.mxu0 0.0
    %2512 = vmatpush2.msra.mxu0 0.0
    %2513 = vmatprep.subr.mxu0 0.0
    %2514 = vmatpush2.msra.mxu0 0.0
    %2515 = vmatprep.subr.mxu0 0.0
    %2516 = vmatpush2.msra.mxu0 0.0
    %2517 = vmatprep.subr.mxu0 0.0
    %2518 = vmatpush2.msra.mxu0 0.0
    %2519 = vmatprep.subr.mxu0 0.0
    %2520 = vmatpush2.msra.mxu0 0.0
    %2521 = vmatprep.subr.mxu0 0.0
    %2522 = vmatpush2.msra.mxu0 0.0
    %2523 = vmatprep.subr.mxu0 0.0
    %2524 = vmatpush2.msra.mxu0 0.0
    %2525 = vmatprep.subr.mxu0 0.0
    %2526 = vmatpush2.msra.mxu0 0.0
    %2527 = vmatprep.mubr.f32.mxu0 0.0
    %2528 = vmatmul.mubr.f32.gmra.mxu0 %v2249
    %v2529 = vpop.f32.mrf.mxu0
    %v2530 = vadd.f32 0.0, %v2529
    %v2531 = vpop.f32.mrf.mxu0
    %v2532 = vadd.f32 0.0, %v2531
    %2533 = vdwg.mxu0
    %s2534 = scalar_lea.vmem %s1, 64
    %v2535 = vld [vmem:[%s2534] sm:$0xff]
    %v2536 = vld [vmem:[%s2534 + $0x8] sm:$0xff]
    %v2537 = vld [vmem:[%s2534 + $0x10] sm:$0xff]
    %v2538 = vld [vmem:[%s2534 + $0x18] sm:$0xff]
    %v2539 = vld [vmem:[#allocation4] sm:$0xff]
    %v2540 = vld [vmem:[#allocation4 + $0x8] sm:$0xff]
    %v2541 = vld [vmem:[#allocation4 + $0x10] sm:$0xff]
    %v2542 = vld [vmem:[#allocation4 + $0x18] sm:$0xff]
    %v2543 = vld [vmem:[#allocation5] sm:$0xff]
    %v2544 = vld [vmem:[#allocation5 + $0x8] sm:$0xff]
    %v2545 = vld [vmem:[#allocation5 + $0x10] sm:$0xff]
    %v2546 = vld [vmem:[#allocation5 + $0x18] sm:$0xff]
    %v2547 = vmul.f32 %v2174, %v2317
    %v2548 = vmul.f32 %v2176, %v2319
    %v2549 = vmul.f32 %v2245, %v2388
    %v2550 = vmul.f32 %v2247, %v2390
    %v2551 = vmul.f32 %v2547, %v2539
    %v2552 = vmul.f32 %v2548, %v2540
    %v2553 = vmul.f32 %v2459, %v2535
    %v2554 = vmul.f32 %v2461, %v2536
    %v2555 = vadd.f32 %v2551, %v2553
    %v2556 = vadd.f32 %v2552, %v2554
    %v2557 = vmul.f32 %v2547, %v2541
    %v2558 = vmul.f32 %v2548, %v2542
    %v2559 = vmul.f32 %v2459, %v2537
    %v2560 = vmul.f32 %v2461, %v2538
    %v2561 = vadd.f32 %v2557, %v2559
    %v2562 = vadd.f32 %v2558, %v2560
    %v2563 = vmul.f32 %v2549, %v2543
    %v2564 = vmul.f32 %v2550, %v2544
    %v2565 = vmul.f32 %v2530, %v2535
    %v2566 = vmul.f32 %v2532, %v2536
    %v2567 = vadd.f32 %v2563, %v2565
    %v2568 = vadd.f32 %v2564, %v2566
    %v2569 = vmul.f32 %v2549, %v2545
    %v2570 = vmul.f32 %v2550, %v2546
    %v2571 = vmul.f32 %v2530, %v2537
    %v2572 = vmul.f32 %v2532, %v2538
    %v2573 = vadd.f32 %v2569, %v2571
    %v2574 = vadd.f32 %v2570, %v2572
    %v2575 = vmul.f32 %v2555, %v2555
    %v2576 = vmul.f32 %v2556, %v2556
    %v2577 = vmul.f32 %v2561, %v2561
    %v2578 = vmul.f32 %v2562, %v2562
    %v2579 = vadd.f32 %v2575, %v2577
    %v2580 = vadd.f32 %v2576, %v2578
    %v2581 = vmul.f32 %v2567, %v2567
    %v2582 = vmul.f32 %v2568, %v2568
    %v2583 = vmul.f32 %v2573, %v2573
    %v2584 = vmul.f32 %v2574, %v2574
    %v2585 = vadd.f32 %v2581, %v2583
    %v2586 = vadd.f32 %v2582, %v2584
    %2587 = vmatprep.subr.mxu0 0.0
    %2588 = vmatpush1.msra.mxu0 %v229
    %2589 = vmatprep.subr.mxu0 0.0
    %2590 = vmatpush1.msra.mxu0 %v228
    %2591 = vmatprep.subr.mxu0 0.0
    %2592 = vmatpush1.msra.mxu0 %v227
    %2593 = vmatprep.subr.mxu0 0.0
    %2594 = vmatpush1.msra.mxu0 %v226
    %2595 = vmatprep.subr.mxu0 0.0
    %2596 = vmatpush1.msra.mxu0 %v225
    %2597 = vmatprep.subr.mxu0 0.0
    %2598 = vmatpush1.msra.mxu0 %v224
    %2599 = vmatprep.subr.mxu0 0.0
    %2600 = vmatpush1.msra.mxu0 %v223
    %2601 = vmatprep.subr.mxu0 0.0
    %2602 = vmatpush1.msra.mxu0 %v222
    %2603 = vmatprep.subr.mxu0 0.0
    %2604 = vmatpush1.msra.mxu0 %v221
    %2605 = vmatprep.subr.mxu0 0.0
    %2606 = vmatpush1.msra.mxu0 %v220
    %2607 = vmatprep.subr.mxu0 0.0
    %2608 = vmatpush1.msra.mxu0 %v219
    %2609 = vmatprep.subr.mxu0 0.0
    %2610 = vmatpush1.msra.mxu0 %v218
    %2611 = vmatprep.subr.mxu0 0.0
    %2612 = vmatpush1.msra.mxu0 %v217
    %2613 = vmatprep.subr.mxu0 0.0
    %2614 = vmatpush1.msra.mxu0 %v216
    %2615 = vmatprep.subr.mxu0 0.0
    %2616 = vmatpush1.msra.mxu0 %v215
    %2617 = vmatprep.subr.mxu0 0.0
    %2618 = vmatpush1.msra.mxu0 %v214
    %2619 = vmatprep.subr.mxu0 0.0
    %2620 = vmatpush2.msra.mxu0 %v245
    %2621 = vmatprep.subr.mxu0 0.0
    %2622 = vmatpush2.msra.mxu0 %v244
    %2623 = vmatprep.subr.mxu0 0.0
    %2624 = vmatpush2.msra.mxu0 %v243
    %2625 = vmatprep.subr.mxu0 0.0
    %2626 = vmatpush2.msra.mxu0 %v242
    %2627 = vmatprep.subr.mxu0 0.0
    %2628 = vmatpush2.msra.mxu0 %v241
    %2629 = vmatprep.subr.mxu0 0.0
    %2630 = vmatpush2.msra.mxu0 %v240
    %2631 = vmatprep.subr.mxu0 0.0
    %2632 = vmatpush2.msra.mxu0 %v239
    %2633 = vmatprep.subr.mxu0 0.0
    %2634 = vmatpush2.msra.mxu0 %v238
    %2635 = vmatprep.subr.mxu0 0.0
    %2636 = vmatpush2.msra.mxu0 %v237
    %2637 = vmatprep.subr.mxu0 0.0
    %2638 = vmatpush2.msra.mxu0 %v236
    %2639 = vmatprep.subr.mxu0 0.0
    %2640 = vmatpush2.msra.mxu0 %v235
    %2641 = vmatprep.subr.mxu0 0.0
    %2642 = vmatpush2.msra.mxu0 %v234
    %2643 = vmatprep.subr.mxu0 0.0
    %2644 = vmatpush2.msra.mxu0 %v233
    %2645 = vmatprep.subr.mxu0 0.0
    %2646 = vmatpush2.msra.mxu0 %v232
    %2647 = vmatprep.subr.mxu0 0.0
    %2648 = vmatpush2.msra.mxu0 %v231
    %2649 = vmatprep.subr.mxu0 0.0
    %2650 = vmatpush2.msra.mxu0 %v230
    %2651 = vmatprep.mubr.f32.mxu0 %v2580
    %2652 = vmatmul.mubr.f32.gmra.mxu0 %v2579
    %v2653 = vpop.f32.mrf.mxu0
    %v2654 = vadd.f32 %v291, %v2653
    %v2655 = vpop.f32.mrf.mxu0
    %2656 = vdwg.mxu0
    %2657 = vmatprep.subr.mxu0 0.0
    %2658 = vmatpush1.msra.mxu0 %v261
    %2659 = vmatprep.subr.mxu0 0.0
    %2660 = vmatpush1.msra.mxu0 %v260
    %2661 = vmatprep.subr.mxu0 0.0
    %2662 = vmatpush1.msra.mxu0 %v259
    %2663 = vmatprep.subr.mxu0 0.0
    %2664 = vmatpush1.msra.mxu0 %v258
    %2665 = vmatprep.subr.mxu0 0.0
    %2666 = vmatpush1.msra.mxu0 %v257
    %2667 = vmatprep.subr.mxu0 0.0
    %2668 = vmatpush1.msra.mxu0 %v256
    %2669 = vmatprep.subr.mxu0 0.0
    %2670 = vmatpush1.msra.mxu0 %v255
    %2671 = vmatprep.subr.mxu0 0.0
    %2672 = vmatpush1.msra.mxu0 %v254
    %2673 = vmatprep.subr.mxu0 0.0
    %2674 = vmatpush1.msra.mxu0 %v253
    %2675 = vmatprep.subr.mxu0 0.0
    %2676 = vmatpush1.msra.mxu0 %v252
    %2677 = vmatprep.subr.mxu0 0.0
    %2678 = vmatpush1.msra.mxu0 %v251
    %2679 = vmatprep.subr.mxu0 0.0
    %2680 = vmatpush1.msra.mxu0 %v250
    %2681 = vmatprep.subr.mxu0 0.0
    %2682 = vmatpush1.msra.mxu0 %v249
    %2683 = vmatprep.subr.mxu0 0.0
    %2684 = vmatpush1.msra.mxu0 %v248
    %2685 = vmatprep.subr.mxu0 0.0
    %2686 = vmatpush1.msra.mxu0 %v247
    %2687 = vmatprep.subr.mxu0 0.0
    %2688 = vmatpush1.msra.mxu0 %v246
    %2689 = vmatprep.subr.mxu0 0.0
    %2690 = vmatpush2.msra.mxu0 %v277
    %2691 = vmatprep.subr.mxu0 0.0
    %2692 = vmatpush2.msra.mxu0 %v276
    %2693 = vmatprep.subr.mxu0 0.0
    %2694 = vmatpush2.msra.mxu0 %v275
    %2695 = vmatprep.subr.mxu0 0.0
    %2696 = vmatpush2.msra.mxu0 %v274
    %2697 = vmatprep.subr.mxu0 0.0
    %2698 = vmatpush2.msra.mxu0 %v273
    %2699 = vmatprep.subr.mxu0 0.0
    %2700 = vmatpush2.msra.mxu0 %v272
    %2701 = vmatprep.subr.mxu0 0.0
    %2702 = vmatpush2.msra.mxu0 %v271
    %2703 = vmatprep.subr.mxu0 0.0
    %2704 = vmatpush2.msra.mxu0 %v270
    %2705 = vmatprep.subr.mxu0 0.0
    %2706 = vmatpush2.msra.mxu0 %v269
    %2707 = vmatprep.subr.mxu0 0.0
    %2708 = vmatpush2.msra.mxu0 %v268
    %2709 = vmatprep.subr.mxu0 0.0
    %2710 = vmatpush2.msra.mxu0 %v267
    %2711 = vmatprep.subr.mxu0 0.0
    %2712 = vmatpush2.msra.mxu0 %v266
    %2713 = vmatprep.subr.mxu0 0.0
    %2714 = vmatpush2.msra.mxu0 %v265
    %2715 = vmatprep.subr.mxu0 0.0
    %2716 = vmatpush2.msra.mxu0 %v264
    %2717 = vmatprep.subr.mxu0 0.0
    %2718 = vmatpush2.msra.mxu0 %v263
    %2719 = vmatprep.subr.mxu0 0.0
    %2720 = vmatpush2.msra.mxu0 %v262
    %2721 = vmatprep.mubr.f32.mxu0 %v2586
    %2722 = vmatmul.mubr.f32.gmra.mxu0 %v2585
    %v2723 = vpop.f32.mrf.mxu0
    %v2724 = vadd.f32 %v2654, %v2723
    %v2725 = vpop.f32.mrf.mxu0
    %2726 = vdwg.mxu0
    %v2727 = vtanh.pop %v2724
    %v2729 = vsel %vm310, %v2727, 0
    %2731 = vmatprep.subr.mxu0 0.0
    %2732 = vmatpush1.msra.mxu0 0.0
    %2733 = vmatprep.subr.mxu0 0.0
    %2734 = vmatpush1.msra.mxu0 0.0
    %2735 = vmatprep.subr.mxu0 0.0
    %2736 = vmatpush1.msra.mxu0 0.0
    %2737 = vmatprep.subr.mxu0 0.0
    %2738 = vmatpush1.msra.mxu0 0.0
    %2739 = vmatprep.subr.mxu0 0.0
    %2740 = vmatpush1.msra.mxu0 0.0
    %2741 = vmatprep.subr.mxu0 0.0
    %2742 = vmatpush1.msra.mxu0 0.0
    %2743 = vmatprep.subr.mxu0 0.0
    %2744 = vmatpush1.msra.mxu0 0.0
    %2745 = vmatprep.subr.mxu0 0.0
    %2746 = vmatpush1.msra.mxu0 0.0
    %2747 = vmatprep.subr.mxu0 0.0
    %2748 = vmatpush1.msra.mxu0 %v285
    %2749 = vmatprep.subr.mxu0 0.0
    %2750 = vmatpush1.msra.mxu0 %v284
    %2751 = vmatprep.subr.mxu0 0.0
    %2752 = vmatpush1.msra.mxu0 %v283
    %2753 = vmatprep.subr.mxu0 0.0
    %2754 = vmatpush1.msra.mxu0 %v282
    %2755 = vmatprep.subr.mxu0 0.0
    %2756 = vmatpush1.msra.mxu0 %v281
    %2757 = vmatprep.subr.mxu0 0.0
    %2758 = vmatpush1.msra.mxu0 %v280
    %2759 = vmatprep.subr.mxu0 0.0
    %2760 = vmatpush1.msra.mxu0 %v279
    %2761 = vmatprep.subr.mxu0 0.0
    %2762 = vmatpush1.msra.mxu0 %v278
    %2763 = vmatprep.subr.mxu0 0.0
    %2764 = vmatpush2.msra.mxu0 0.0
    %2765 = vmatprep.subr.mxu0 0.0
    %2766 = vmatpush2.msra.mxu0 0.0
    %2767 = vmatprep.subr.mxu0 0.0
    %2768 = vmatpush2.msra.mxu0 0.0
    %2769 = vmatprep.subr.mxu0 0.0
    %2770 = vmatpush2.msra.mxu0 0.0
    %2771 = vmatprep.subr.mxu0 0.0
    %2772 = vmatpush2.msra.mxu0 0.0
    %2773 = vmatprep.subr.mxu0 0.0
    %2774 = vmatpush2.msra.mxu0 0.0
    %2775 = vmatprep.subr.mxu0 0.0
    %2776 = vmatpush2.msra.mxu0 0.0
    %2777 = vmatprep.subr.mxu0 0.0
    %2778 = vmatpush2.msra.mxu0 0.0
    %2779 = vmatprep.subr.mxu0 0.0
    %2780 = vmatpush2.msra.mxu0 0.0
    %2781 = vmatprep.subr.mxu0 0.0
    %2782 = vmatpush2.msra.mxu0 0.0
    %2783 = vmatprep.subr.mxu0 0.0
    %2784 = vmatpush2.msra.mxu0 0.0
    %2785 = vmatprep.subr.mxu0 0.0
    %2786 = vmatpush2.msra.mxu0 0.0
    %2787 = vmatprep.subr.mxu0 0.0
    %2788 = vmatpush2.msra.mxu0 0.0
    %2789 = vmatprep.subr.mxu0 0.0
    %2790 = vmatpush2.msra.mxu0 0.0
    %2791 = vmatprep.subr.mxu0 0.0
    %2792 = vmatpush2.msra.mxu0 0.0
    %2793 = vmatprep.subr.mxu0 0.0
    %2794 = vmatpush2.msra.mxu0 0.0
    %2795 = vmatprep.mubr.f32.mxu0 0.0
    %2796 = vmatmul.mubr.f32.gmra.mxu0 %v2729
    %v2797 = vpop.f32.mrf.mxu0
    %v2798 = vadd.f32 %v298, %v2797
    %v2799 = vpop.f32.mrf.mxu0
    %2800 = vdwg.mxu0
    %v2801 = vsub.f32 1.0, %v2095
    %v2802 = vmul.f32 %v2801, %v2006
    %2803 = vrot.lane.b32.xlu0 %v2098, 112
    %v2804 = vpop.permute.xlu0 %2803
    %v2806 = vmul.f32 %v2095, %v2804
    %v2807 = vadd.f32 %v2802, %v2806
    %v2808 = vadd.f32 %v2807, %v2798
    %v2809 = vxor.u32 %v2808, 2147483648
    %v2810 = vmul.f32 %v2809, 1.442695
    %v2811 = vpow.pop %v2810
    %v2812 = vadd.f32 %v2811, 1.0
    %v2813 = vrcp.pop %v2812
    %v2814 = vmul.f32 1.0, %v2813
    %v2815 = vmul.f32 %v2814, %v2727
    %s2816 = scalar_lea.vmem [#allocation9], 16
    %2817 = vst.msk [vmem:[%s2816] sm:$0xff] %vm310, %v2815
    %2818 = vst.msk [vmem:[#allocation2] sm:$0xff] %vm306, %v2815
    %2819 = vst [vmem:[#allocation4] sm:$0xff] %v2555
    %2820 = vst [vmem:[#allocation4 + $0x8] sm:$0xff] %v2556
    %2821 = vst [vmem:[#allocation4 + $0x10] sm:$0xff] %v2561
    %2822 = vst [vmem:[#allocation4 + $0x18] sm:$0xff] %v2562
    %2824 = vrot.lane.b32.xlu0 %v2815, 96
    %v2825 = vpop.permute.xlu0 %2824
    %2827 = vst.msk [vmem:[#allocation3 - $0x6] sm:$0xc0] %vm1127, %v2825
    %2828 = vst.msk [vmem:[#allocation3 + $0x2] sm:$0x3f] %vm1129, %v2825
    %v2833 = vrot.slane %v2567, 6
    %v2834 = vrot.slane %v2568, 6
    %v2835 = vrot.slane %v2573, 6
    %v2836 = vrot.slane %v2574, 6
    %2841 = vst [vmem:[#allocation5] sm:$0x3] %v2833
    %2842 = vst [vmem:[#allocation5 + $0x8] sm:$0x3] %v2834
    %2843 = vst [vmem:[#allocation5 + $0x10] sm:$0x3] %v2835
    %2844 = vst [vmem:[#allocation5 + $0x18] sm:$0x3] %v2836
    %2845 = vst [vmem:[#allocation5] sm:$0xfc] %v2833
    %2846 = vst [vmem:[#allocation5 + $0x8] sm:$0xfc] %v2834
    %2847 = vst [vmem:[#allocation5 + $0x10] sm:$0xfc] %v2835
    %2848 = vst [vmem:[#allocation5 + $0x18] sm:$0xfc] %v2836
    %v2849 = vld [vmem:[#allocation2] sm:$0xff]
    %v2850 = vld [vmem:[#allocation3] sm:$0xff]
    %2852 = vrot.lane.b32.xlu0 %v2850, 32
    %v2853 = vpop.permute.xlu0 %2852
    %v2855 = vsel %vm306, %v2849, %v2853
    %s2856 = scalar_lea.vmem %s0, 48
    %v2857 = vld [vmem:[%s2856] sm:$0xff]
    %v2858 = vld [vmem:[%s2856 + $0x8] sm:$0xff]
    %v2860 = vsel %vm310, %v2855, 0
    %2862 = vmatprep.subr.mxu0 0.0
    %2863 = vmatpush1.msra.mxu0 0.0
    %2864 = vmatprep.subr.mxu0 0.0
    %2865 = vmatpush1.msra.mxu0 0.0
    %2866 = vmatprep.subr.mxu0 0.0
    %2867 = vmatpush1.msra.mxu0 0.0
    %2868 = vmatprep.subr.mxu0 0.0
    %2869 = vmatpush1.msra.mxu0 0.0
    %2870 = vmatprep.subr.mxu0 0.0
    %2871 = vmatpush1.msra.mxu0 0.0
    %2872 = vmatprep.subr.mxu0 0.0
    %2873 = vmatpush1.msra.mxu0 0.0
    %2874 = vmatprep.subr.mxu0 0.0
    %2875 = vmatpush1.msra.mxu0 0.0
    %2876 = vmatprep.subr.mxu0 0.0
    %2877 = vmatpush1.msra.mxu0 0.0
    %2878 = vmatprep.subr.mxu0 %v77
    %2879 = vmatpush1.msra.mxu0 %v76
    %2880 = vmatprep.subr.mxu0 %v75
    %2881 = vmatpush1.msra.mxu0 %v74
    %2882 = vmatprep.subr.mxu0 %v73
    %2883 = vmatpush1.msra.mxu0 %v72
    %2884 = vmatprep.subr.mxu0 %v71
    %2885 = vmatpush1.msra.mxu0 %v70
    %2886 = vmatprep.subr.mxu0 %v69
    %2887 = vmatpush1.msra.mxu0 %v68
    %2888 = vmatprep.subr.mxu0 %v67
    %2889 = vmatpush1.msra.mxu0 %v66
    %2890 = vmatprep.subr.mxu0 %v65
    %2891 = vmatpush1.msra.mxu0 %v64
    %2892 = vmatprep.subr.mxu0 %v63
    %2893 = vmatpush1.msra.mxu0 %v62
    %2894 = vmatprep.subr.mxu0 0.0
    %2895 = vmatpush2.msra.mxu0 0.0
    %2896 = vmatprep.subr.mxu0 0.0
    %2897 = vmatpush2.msra.mxu0 0.0
    %2898 = vmatprep.subr.mxu0 0.0
    %2899 = vmatpush2.msra.mxu0 0.0
    %2900 = vmatprep.subr.mxu0 0.0
    %2901 = vmatpush2.msra.mxu0 0.0
    %2902 = vmatprep.subr.mxu0 0.0
    %2903 = vmatpush2.msra.mxu0 0.0
    %2904 = vmatprep.subr.mxu0 0.0
    %2905 = vmatpush2.msra.mxu0 0.0
    %2906 = vmatprep.subr.mxu0 0.0
    %2907 = vmatpush2.msra.mxu0 0.0
    %2908 = vmatprep.subr.mxu0 0.0
    %2909 = vmatpush2.msra.mxu0 0.0
    %2910 = vmatprep.subr.mxu0 0.0
    %2911 = vmatpush2.msra.mxu0 0.0
    %2912 = vmatprep.subr.mxu0 0.0
    %2913 = vmatpush2.msra.mxu0 0.0
    %2914 = vmatprep.subr.mxu0 0.0
    %2915 = vmatpush2.msra.mxu0 0.0
    %2916 = vmatprep.subr.mxu0 0.0
    %2917 = vmatpush2.msra.mxu0 0.0
    %2918 = vmatprep.subr.mxu0 0.0
    %2919 = vmatpush2.msra.mxu0 0.0
    %2920 = vmatprep.subr.mxu0 0.0
    %2921 = vmatpush2.msra.mxu0 0.0
    %2922 = vmatprep.subr.mxu0 0.0
    %2923 = vmatpush2.msra.mxu0 0.0
    %2924 = vmatprep.subr.mxu0 0.0
    %2925 = vmatpush2.msra.mxu0 0.0
    %2926 = vmatprep.mubr.f32.mxu0 0.0
    %2927 = vmatmul.mubr.f32.gmra.mxu0 %v2860
    %v2928 = vpop.f32.mrf.mxu0
    %v2929 = vadd.f32 0.0, %v2928
    %v2930 = vpop.f32.mrf.mxu0
    %v2931 = vadd.f32 0.0, %v2930
    %2932 = vdwg.mxu0
    %v2933 = vadd.f32 %v2857, %v2929
    %v2934 = vadd.f32 %v2858, %v2931
    %v2935 = vxor.u32 %v2933, 2147483648
    %v2936 = vxor.u32 %v2934, 2147483648
    %v2937 = vmul.f32 %v2935, 1.442695
    %v2938 = vpow.pop %v2937
    %v2939 = vmul.f32 %v2936, 1.442695
    %v2940 = vpow.pop %v2939
    %v2941 = vadd.f32 %v2938, 1.0
    %v2942 = vadd.f32 %v2940, 1.0
    %v2943 = vrcp.pop %v2941
    %v2944 = vmul.f32 1.0, %v2943
    %v2945 = vrcp.pop %v2942
    %v2946 = vmul.f32 1.0, %v2945
    %v2947 = vtanh.pop %v2934
    %2949 = vrot.lane.b32.xlu0 %v2947, 48
    %v2950 = vpop.permute.xlu0 %2949
    %v2952 = vmul.f32 %v2944, %v2950
    %v2954 = vsel %vm405, %v2946, 0
    %2956 = vmatprep.subr.mxu0 0.0
    %2957 = vmatpush1.msra.mxu0 0.0
    %2958 = vmatprep.subr.mxu0 0.0
    %2959 = vmatpush1.msra.mxu0 0.0
    %2960 = vmatprep.subr.mxu0 0.0
    %2961 = vmatpush1.msra.mxu0 0.0
    %2962 = vmatprep.subr.mxu0 0.0
    %2963 = vmatpush1.msra.mxu0 0.0
    %2964 = vmatprep.subr.mxu0 0.0
    %2965 = vmatpush1.msra.mxu0 0.0
    %2966 = vmatprep.subr.mxu0 0.0
    %2967 = vmatpush1.msra.mxu0 0.0
    %2968 = vmatprep.subr.mxu0 0.0
    %2969 = vmatpush1.msra.mxu0 0.0
    %2970 = vmatprep.subr.mxu0 0.0
    %2971 = vmatpush1.msra.mxu0 0.0
    %2972 = vmatprep.subr.mxu0 0.0
    %2973 = vmatpush1.msra.mxu0 0.0
    %2974 = vmatprep.subr.mxu0 0.0
    %2975 = vmatpush1.msra.mxu0 0.0
    %2976 = vmatprep.subr.mxu0 0.0
    %2977 = vmatpush1.msra.mxu0 0.0
    %2978 = vmatprep.subr.mxu0 0.0
    %2979 = vmatpush1.msra.mxu0 0.0
    %2980 = vmatprep.subr.mxu0 0.0
    %2981 = vmatpush1.msra.mxu0 0.0
    %2982 = vmatprep.subr.mxu0 0.0
    %2983 = vmatpush1.msra.mxu0 0.0
    %2984 = vmatprep.subr.mxu0 %v83
    %2985 = vmatpush1.msra.mxu0 %v82
    %2986 = vmatprep.subr.mxu0 %v79
    %2987 = vmatpush1.msra.mxu0 %v78
    %2988 = vmatprep.subr.mxu0 0.0
    %2989 = vmatpush2.msra.mxu0 0.0
    %2990 = vmatprep.subr.mxu0 0.0
    %2991 = vmatpush2.msra.mxu0 0.0
    %2992 = vmatprep.subr.mxu0 0.0
    %2993 = vmatpush2.msra.mxu0 0.0
    %2994 = vmatprep.subr.mxu0 0.0
    %2995 = vmatpush2.msra.mxu0 0.0
    %2996 = vmatprep.subr.mxu0 0.0
    %2997 = vmatpush2.msra.mxu0 0.0
    %2998 = vmatprep.subr.mxu0 0.0
    %2999 = vmatpush2.msra.mxu0 0.0
    %3000 = vmatprep.subr.mxu0 0.0
    %3001 = vmatpush2.msra.mxu0 0.0
    %3002 = vmatprep.subr.mxu0 0.0
    %3003 = vmatpush2.msra.mxu0 0.0
    %3004 = vmatprep.subr.mxu0 0.0
    %3005 = vmatpush2.msra.mxu0 0.0
    %3006 = vmatprep.subr.mxu0 0.0
    %3007 = vmatpush2.msra.mxu0 0.0
    %3008 = vmatprep.subr.mxu0 0.0
    %3009 = vmatpush2.msra.mxu0 0.0
    %3010 = vmatprep.subr.mxu0 0.0
    %3011 = vmatpush2.msra.mxu0 0.0
    %3012 = vmatprep.subr.mxu0 0.0
    %3013 = vmatpush2.msra.mxu0 0.0
    %3014 = vmatprep.subr.mxu0 0.0
    %3015 = vmatpush2.msra.mxu0 0.0
    %3016 = vmatprep.subr.mxu0 0.0
    %3017 = vmatpush2.msra.mxu0 0.0
    %3018 = vmatprep.subr.mxu0 0.0
    %3019 = vmatpush2.msra.mxu0 0.0
    %3020 = vmatprep.mubr.f32.mxu0 0.0
    %3021 = vmatmul.mubr.f32.gmra.mxu0 %v2954
    %v3022 = vpop.f32.mrf.mxu0
    %v3023 = vadd.f32 0.0, %v3022
    %v3024 = vpop.f32.mrf.mxu0
    %v3025 = vadd.f32 0.0, %v3024
    %3026 = vdwg.mxu0
    %3027 = vmatprep.subr.mxu0 0.0
    %3028 = vmatpush1.msra.mxu0 0.0
    %3029 = vmatprep.subr.mxu0 0.0
    %3030 = vmatpush1.msra.mxu0 0.0
    %3031 = vmatprep.subr.mxu0 0.0
    %3032 = vmatpush1.msra.mxu0 0.0
    %3033 = vmatprep.subr.mxu0 0.0
    %3034 = vmatpush1.msra.mxu0 0.0
    %3035 = vmatprep.subr.mxu0 0.0
    %3036 = vmatpush1.msra.mxu0 0.0
    %3037 = vmatprep.subr.mxu0 0.0
    %3038 = vmatpush1.msra.mxu0 0.0
    %3039 = vmatprep.subr.mxu0 0.0
    %3040 = vmatpush1.msra.mxu0 0.0
    %3041 = vmatprep.subr.mxu0 0.0
    %3042 = vmatpush1.msra.mxu0 0.0
    %3043 = vmatprep.subr.mxu0 0.0
    %3044 = vmatpush1.msra.mxu0 0.0
    %3045 = vmatprep.subr.mxu0 0.0
    %3046 = vmatpush1.msra.mxu0 0.0
    %3047 = vmatprep.subr.mxu0 0.0
    %3048 = vmatpush1.msra.mxu0 0.0
    %3049 = vmatprep.subr.mxu0 0.0
    %3050 = vmatpush1.msra.mxu0 0.0
    %3051 = vmatprep.subr.mxu0 0.0
    %3052 = vmatpush1.msra.mxu0 0.0
    %3053 = vmatprep.subr.mxu0 0.0
    %3054 = vmatpush1.msra.mxu0 0.0
    %3055 = vmatprep.subr.mxu0 %v85
    %3056 = vmatpush1.msra.mxu0 %v84
    %3057 = vmatprep.subr.mxu0 %v81
    %3058 = vmatpush1.msra.mxu0 %v80
    %3059 = vmatprep.subr.mxu0 0.0
    %3060 = vmatpush2.msra.mxu0 0.0
    %3061 = vmatprep.subr.mxu0 0.0
    %3062 = vmatpush2.msra.mxu0 0.0
    %3063 = vmatprep.subr.mxu0 0.0
    %3064 = vmatpush2.msra.mxu0 0.0
    %3065 = vmatprep.subr.mxu0 0.0
    %3066 = vmatpush2.msra.mxu0 0.0
    %3067 = vmatprep.subr.mxu0 0.0
    %3068 = vmatpush2.msra.mxu0 0.0
    %3069 = vmatprep.subr.mxu0 0.0
    %3070 = vmatpush2.msra.mxu0 0.0
    %3071 = vmatprep.subr.mxu0 0.0
    %3072 = vmatpush2.msra.mxu0 0.0
    %3073 = vmatprep.subr.mxu0 0.0
    %3074 = vmatpush2.msra.mxu0 0.0
    %3075 = vmatprep.subr.mxu0 0.0
    %3076 = vmatpush2.msra.mxu0 0.0
    %3077 = vmatprep.subr.mxu0 0.0
    %3078 = vmatpush2.msra.mxu0 0.0
    %3079 = vmatprep.subr.mxu0 0.0
    %3080 = vmatpush2.msra.mxu0 0.0
    %3081 = vmatprep.subr.mxu0 0.0
    %3082 = vmatpush2.msra.mxu0 0.0
    %3083 = vmatprep.subr.mxu0 0.0
    %3084 = vmatpush2.msra.mxu0 0.0
    %3085 = vmatprep.subr.mxu0 0.0
    %3086 = vmatpush2.msra.mxu0 0.0
    %3087 = vmatprep.subr.mxu0 0.0
    %3088 = vmatpush2.msra.mxu0 0.0
    %3089 = vmatprep.subr.mxu0 0.0
    %3090 = vmatpush2.msra.mxu0 0.0
    %3091 = vmatprep.mubr.f32.mxu0 0.0
    %3092 = vmatmul.mubr.f32.gmra.mxu0 %v2954
    %v3093 = vpop.f32.mrf.mxu0
    %v3094 = vadd.f32 0.0, %v3093
    %v3095 = vpop.f32.mrf.mxu0
    %v3096 = vadd.f32 0.0, %v3095
    %3097 = vdwg.mxu0
    %v3098 = vsel %vm310, %v2944, %v2952
    %3099 = vmatprep.subr.mxu0 %v207
    %3100 = vmatpush1.msra.mxu0 %v206
    %3101 = vmatprep.subr.mxu0 %v199
    %3102 = vmatpush1.msra.mxu0 %v198
    %3103 = vmatprep.subr.mxu0 %v191
    %3104 = vmatpush1.msra.mxu0 %v190
    %3105 = vmatprep.subr.mxu0 %v183
    %3106 = vmatpush1.msra.mxu0 %v182
    %3107 = vmatprep.subr.mxu0 %v175
    %3108 = vmatpush1.msra.mxu0 %v174
    %3109 = vmatprep.subr.mxu0 %v167
    %3110 = vmatpush1.msra.mxu0 %v166
    %3111 = vmatprep.subr.mxu0 %v159
    %3112 = vmatpush1.msra.mxu0 %v158
    %3113 = vmatprep.subr.mxu0 %v151
    %3114 = vmatpush1.msra.mxu0 %v150
    %3115 = vmatprep.subr.mxu0 %v143
    %3116 = vmatpush1.msra.mxu0 %v142
    %3117 = vmatprep.subr.mxu0 %v135
    %3118 = vmatpush1.msra.mxu0 %v134
    %3119 = vmatprep.subr.mxu0 %v127
    %3120 = vmatpush1.msra.mxu0 %v126
    %3121 = vmatprep.subr.mxu0 %v119
    %3122 = vmatpush1.msra.mxu0 %v118
    %3123 = vmatprep.subr.mxu0 %v111
    %3124 = vmatpush1.msra.mxu0 %v110
    %3125 = vmatprep.subr.mxu0 %v103
    %3126 = vmatpush1.msra.mxu0 %v102
    %3127 = vmatprep.subr.mxu0 %v95
    %3128 = vmatpush1.msra.mxu0 %v94
    %3129 = vmatprep.subr.mxu0 %v87
    %3130 = vmatpush1.msra.mxu0 %v86
    %3131 = vmatprep.subr.mxu0 0.0
    %3132 = vmatpush2.msra.mxu0 0.0
    %3133 = vmatprep.subr.mxu0 0.0
    %3134 = vmatpush2.msra.mxu0 0.0
    %3135 = vmatprep.subr.mxu0 0.0
    %3136 = vmatpush2.msra.mxu0 0.0
    %3137 = vmatprep.subr.mxu0 0.0
    %3138 = vmatpush2.msra.mxu0 0.0
    %3139 = vmatprep.subr.mxu0 0.0
    %3140 = vmatpush2.msra.mxu0 0.0
    %3141 = vmatprep.subr.mxu0 0.0
    %3142 = vmatpush2.msra.mxu0 0.0
    %3143 = vmatprep.subr.mxu0 0.0
    %3144 = vmatpush2.msra.mxu0 0.0
    %3145 = vmatprep.subr.mxu0 0.0
    %3146 = vmatpush2.msra.mxu0 0.0
    %3147 = vmatprep.subr.mxu0 0.0
    %3148 = vmatpush2.msra.mxu0 0.0
    %3149 = vmatprep.subr.mxu0 0.0
    %3150 = vmatpush2.msra.mxu0 0.0
    %3151 = vmatprep.subr.mxu0 0.0
    %3152 = vmatpush2.msra.mxu0 0.0
    %3153 = vmatprep.subr.mxu0 0.0
    %3154 = vmatpush2.msra.mxu0 0.0
    %3155 = vmatprep.subr.mxu0 0.0
    %3156 = vmatpush2.msra.mxu0 0.0
    %3157 = vmatprep.subr.mxu0 0.0
    %3158 = vmatpush2.msra.mxu0 0.0
    %3159 = vmatprep.subr.mxu0 0.0
    %3160 = vmatpush2.msra.mxu0 0.0
    %3161 = vmatprep.subr.mxu0 0.0
    %3162 = vmatpush2.msra.mxu0 0.0
    %3163 = vmatprep.mubr.f32.mxu0 0.0
    %3164 = vmatmul.mubr.f32.gmra.mxu0 %v3098
    %v3165 = vpop.f32.mrf.mxu0
    %v3166 = vadd.f32 0.0, %v3165
    %v3167 = vpop.f32.mrf.mxu0
    %v3168 = vadd.f32 0.0, %v3167
    %3169 = vdwg.mxu0
    %3170 = vmatprep.subr.mxu0 %v209
    %3171 = vmatpush1.msra.mxu0 %v208
    %3172 = vmatprep.subr.mxu0 %v201
    %3173 = vmatpush1.msra.mxu0 %v200
    %3174 = vmatprep.subr.mxu0 %v193
    %3175 = vmatpush1.msra.mxu0 %v192
    %3176 = vmatprep.subr.mxu0 %v185
    %3177 = vmatpush1.msra.mxu0 %v184
    %3178 = vmatprep.subr.mxu0 %v177
    %3179 = vmatpush1.msra.mxu0 %v176
    %3180 = vmatprep.subr.mxu0 %v169
    %3181 = vmatpush1.msra.mxu0 %v168
    %3182 = vmatprep.subr.mxu0 %v161
    %3183 = vmatpush1.msra.mxu0 %v160
    %3184 = vmatprep.subr.mxu0 %v153
    %3185 = vmatpush1.msra.mxu0 %v152
    %3186 = vmatprep.subr.mxu0 %v145
    %3187 = vmatpush1.msra.mxu0 %v144
    %3188 = vmatprep.subr.mxu0 %v137
    %3189 = vmatpush1.msra.mxu0 %v136
    %3190 = vmatprep.subr.mxu0 %v129
    %3191 = vmatpush1.msra.mxu0 %v128
    %3192 = vmatprep.subr.mxu0 %v121
    %3193 = vmatpush1.msra.mxu0 %v120
    %3194 = vmatprep.subr.mxu0 %v113
    %3195 = vmatpush1.msra.mxu0 %v112
    %3196 = vmatprep.subr.mxu0 %v105
    %3197 = vmatpush1.msra.mxu0 %v104
    %3198 = vmatprep.subr.mxu0 %v97
    %3199 = vmatpush1.msra.mxu0 %v96
    %3200 = vmatprep.subr.mxu0 %v89
    %3201 = vmatpush1.msra.mxu0 %v88
    %3202 = vmatprep.subr.mxu0 0.0
    %3203 = vmatpush2.msra.mxu0 0.0
    %3204 = vmatprep.subr.mxu0 0.0
    %3205 = vmatpush2.msra.mxu0 0.0
    %3206 = vmatprep.subr.mxu0 0.0
    %3207 = vmatpush2.msra.mxu0 0.0
    %3208 = vmatprep.subr.mxu0 0.0
    %3209 = vmatpush2.msra.mxu0 0.0
    %3210 = vmatprep.subr.mxu0 0.0
    %3211 = vmatpush2.msra.mxu0 0.0
    %3212 = vmatprep.subr.mxu0 0.0
    %3213 = vmatpush2.msra.mxu0 0.0
    %3214 = vmatprep.subr.mxu0 0.0
    %3215 = vmatpush2.msra.mxu0 0.0
    %3216 = vmatprep.subr.mxu0 0.0
    %3217 = vmatpush2.msra.mxu0 0.0
    %3218 = vmatprep.subr.mxu0 0.0
    %3219 = vmatpush2.msra.mxu0 0.0
    %3220 = vmatprep.subr.mxu0 0.0
    %3221 = vmatpush2.msra.mxu0 0.0
    %3222 = vmatprep.subr.mxu0 0.0
    %3223 = vmatpush2.msra.mxu0 0.0
    %3224 = vmatprep.subr.mxu0 0.0
    %3225 = vmatpush2.msra.mxu0 0.0
    %3226 = vmatprep.subr.mxu0 0.0
    %3227 = vmatpush2.msra.mxu0 0.0
    %3228 = vmatprep.subr.mxu0 0.0
    %3229 = vmatpush2.msra.mxu0 0.0
    %3230 = vmatprep.subr.mxu0 0.0
    %3231 = vmatpush2.msra.mxu0 0.0
    %3232 = vmatprep.subr.mxu0 0.0
    %3233 = vmatpush2.msra.mxu0 0.0
    %3234 = vmatprep.mubr.f32.mxu0 0.0
    %3235 = vmatmul.mubr.f32.gmra.mxu0 %v3098
    %v3236 = vpop.f32.mrf.mxu0
    %v3237 = vadd.f32 0.0, %v3236
    %v3238 = vpop.f32.mrf.mxu0
    %v3239 = vadd.f32 0.0, %v3238
    %3240 = vdwg.mxu0
    %3241 = vmatprep.subr.mxu0 %v211
    %3242 = vmatpush1.msra.mxu0 %v210
    %3243 = vmatprep.subr.mxu0 %v203
    %3244 = vmatpush1.msra.mxu0 %v202
    %3245 = vmatprep.subr.mxu0 %v195
    %3246 = vmatpush1.msra.mxu0 %v194
    %3247 = vmatprep.subr.mxu0 %v187
    %3248 = vmatpush1.msra.mxu0 %v186
    %3249 = vmatprep.subr.mxu0 %v179
    %3250 = vmatpush1.msra.mxu0 %v178
    %3251 = vmatprep.subr.mxu0 %v171
    %3252 = vmatpush1.msra.mxu0 %v170
    %3253 = vmatprep.subr.mxu0 %v163
    %3254 = vmatpush1.msra.mxu0 %v162
    %3255 = vmatprep.subr.mxu0 %v155
    %3256 = vmatpush1.msra.mxu0 %v154
    %3257 = vmatprep.subr.mxu0 %v147
    %3258 = vmatpush1.msra.mxu0 %v146
    %3259 = vmatprep.subr.mxu0 %v139
    %3260 = vmatpush1.msra.mxu0 %v138
    %3261 = vmatprep.subr.mxu0 %v131
    %3262 = vmatpush1.msra.mxu0 %v130
    %3263 = vmatprep.subr.mxu0 %v123
    %3264 = vmatpush1.msra.mxu0 %v122
    %3265 = vmatprep.subr.mxu0 %v115
    %3266 = vmatpush1.msra.mxu0 %v114
    %3267 = vmatprep.subr.mxu0 %v107
    %3268 = vmatpush1.msra.mxu0 %v106
    %3269 = vmatprep.subr.mxu0 %v99
    %3270 = vmatpush1.msra.mxu0 %v98
    %3271 = vmatprep.subr.mxu0 %v91
    %3272 = vmatpush1.msra.mxu0 %v90
    %3273 = vmatprep.subr.mxu0 0.0
    %3274 = vmatpush2.msra.mxu0 0.0
    %3275 = vmatprep.subr.mxu0 0.0
    %3276 = vmatpush2.msra.mxu0 0.0
    %3277 = vmatprep.subr.mxu0 0.0
    %3278 = vmatpush2.msra.mxu0 0.0
    %3279 = vmatprep.subr.mxu0 0.0
    %3280 = vmatpush2.msra.mxu0 0.0
    %3281 = vmatprep.subr.mxu0 0.0
    %3282 = vmatpush2.msra.mxu0 0.0
    %3283 = vmatprep.subr.mxu0 0.0
    %3284 = vmatpush2.msra.mxu0 0.0
    %3285 = vmatprep.subr.mxu0 0.0
    %3286 = vmatpush2.msra.mxu0 0.0
    %3287 = vmatprep.subr.mxu0 0.0
    %3288 = vmatpush2.msra.mxu0 0.0
    %3289 = vmatprep.subr.mxu0 0.0
    %3290 = vmatpush2.msra.mxu0 0.0
    %3291 = vmatprep.subr.mxu0 0.0
    %3292 = vmatpush2.msra.mxu0 0.0
    %3293 = vmatprep.subr.mxu0 0.0
    %3294 = vmatpush2.msra.mxu0 0.0
    %3295 = vmatprep.subr.mxu0 0.0
    %3296 = vmatpush2.msra.mxu0 0.0
    %3297 = vmatprep.subr.mxu0 0.0
    %3298 = vmatpush2.msra.mxu0 0.0
    %3299 = vmatprep.subr.mxu0 0.0
    %3300 = vmatpush2.msra.mxu0 0.0
    %3301 = vmatprep.subr.mxu0 0.0
    %3302 = vmatpush2.msra.mxu0 0.0
    %3303 = vmatprep.subr.mxu0 0.0
    %3304 = vmatpush2.msra.mxu0 0.0
    %3305 = vmatprep.mubr.f32.mxu0 0.0
    %3306 = vmatmul.mubr.f32.gmra.mxu0 %v3098
    %v3307 = vpop.f32.mrf.mxu0
    %v3308 = vadd.f32 0.0, %v3307
    %v3309 = vpop.f32.mrf.mxu0
    %v3310 = vadd.f32 0.0, %v3309
    %3311 = vdwg.mxu0
    %3312 = vmatprep.subr.mxu0 %v213
    %3313 = vmatpush1.msra.mxu0 %v212
    %3314 = vmatprep.subr.mxu0 %v205
    %3315 = vmatpush1.msra.mxu0 %v204
    %3316 = vmatprep.subr.mxu0 %v197
    %3317 = vmatpush1.msra.mxu0 %v196
    %3318 = vmatprep.subr.mxu0 %v189
    %3319 = vmatpush1.msra.mxu0 %v188
    %3320 = vmatprep.subr.mxu0 %v181
    %3321 = vmatpush1.msra.mxu0 %v180
    %3322 = vmatprep.subr.mxu0 %v173
    %3323 = vmatpush1.msra.mxu0 %v172
    %3324 = vmatprep.subr.mxu0 %v165
    %3325 = vmatpush1.msra.mxu0 %v164
    %3326 = vmatprep.subr.mxu0 %v157
    %3327 = vmatpush1.msra.mxu0 %v156
    %3328 = vmatprep.subr.mxu0 %v149
    %3329 = vmatpush1.msra.mxu0 %v148
    %3330 = vmatprep.subr.mxu0 %v141
    %3331 = vmatpush1.msra.mxu0 %v140
    %3332 = vmatprep.subr.mxu0 %v133
    %3333 = vmatpush1.msra.mxu0 %v132
    %3334 = vmatprep.subr.mxu0 %v125
    %3335 = vmatpush1.msra.mxu0 %v124
    %3336 = vmatprep.subr.mxu0 %v117
    %3337 = vmatpush1.msra.mxu0 %v116
    %3338 = vmatprep.subr.mxu0 %v109
    %3339 = vmatpush1.msra.mxu0 %v108
    %3340 = vmatprep.subr.mxu0 %v101
    %3341 = vmatpush1.msra.mxu0 %v100
    %3342 = vmatprep.subr.mxu0 %v93
    %3343 = vmatpush1.msra.mxu0 %v92
    %3344 = vmatprep.subr.mxu0 0.0
    %3345 = vmatpush2.msra.mxu0 0.0
    %3346 = vmatprep.subr.mxu0 0.0
    %3347 = vmatpush2.msra.mxu0 0.0
    %3348 = vmatprep.subr.mxu0 0.0
    %3349 = vmatpush2.msra.mxu0 0.0
    %3350 = vmatprep.subr.mxu0 0.0
    %3351 = vmatpush2.msra.mxu0 0.0
    %3352 = vmatprep.subr.mxu0 0.0
    %3353 = vmatpush2.msra.mxu0 0.0
    %3354 = vmatprep.subr.mxu0 0.0
    %3355 = vmatpush2.msra.mxu0 0.0
    %3356 = vmatprep.subr.mxu0 0.0
    %3357 = vmatpush2.msra.mxu0 0.0
    %3358 = vmatprep.subr.mxu0 0.0
    %3359 = vmatpush2.msra.mxu0 0.0
    %3360 = vmatprep.subr.mxu0 0.0
    %3361 = vmatpush2.msra.mxu0 0.0
    %3362 = vmatprep.subr.mxu0 0.0
    %3363 = vmatpush2.msra.mxu0 0.0
    %3364 = vmatprep.subr.mxu0 0.0
    %3365 = vmatpush2.msra.mxu0 0.0
    %3366 = vmatprep.subr.mxu0 0.0
    %3367 = vmatpush2.msra.mxu0 0.0
    %3368 = vmatprep.subr.mxu0 0.0
    %3369 = vmatpush2.msra.mxu0 0.0
    %3370 = vmatprep.subr.mxu0 0.0
    %3371 = vmatpush2.msra.mxu0 0.0
    %3372 = vmatprep.subr.mxu0 0.0
    %3373 = vmatpush2.msra.mxu0 0.0
    %3374 = vmatprep.subr.mxu0 0.0
    %3375 = vmatpush2.msra.mxu0 0.0
    %3376 = vmatprep.mubr.f32.mxu0 0.0
    %3377 = vmatmul.mubr.f32.gmra.mxu0 %v3098
    %v3378 = vpop.f32.mrf.mxu0
    %v3379 = vadd.f32 0.0, %v3378
    %v3380 = vpop.f32.mrf.mxu0
    %v3381 = vadd.f32 0.0, %v3380
    %3382 = vdwg.mxu0
    %s3383 = scalar_lea.vmem %s1, 96
    %v3384 = vld [vmem:[%s3383] sm:$0xff]
    %v3385 = vld [vmem:[%s3383 + $0x8] sm:$0xff]
    %v3386 = vld [vmem:[%s3383 + $0x10] sm:$0xff]
    %v3387 = vld [vmem:[%s3383 + $0x18] sm:$0xff]
    %v3388 = vld [vmem:[#allocation4] sm:$0xff]
    %v3389 = vld [vmem:[#allocation4 + $0x8] sm:$0xff]
    %v3390 = vld [vmem:[#allocation4 + $0x10] sm:$0xff]
    %v3391 = vld [vmem:[#allocation4 + $0x18] sm:$0xff]
    %v3392 = vld [vmem:[#allocation5] sm:$0xff]
    %v3393 = vld [vmem:[#allocation5 + $0x8] sm:$0xff]
    %v3394 = vld [vmem:[#allocation5 + $0x10] sm:$0xff]
    %v3395 = vld [vmem:[#allocation5 + $0x18] sm:$0xff]
    %v3396 = vmul.f32 %v3023, %v3166
    %v3397 = vmul.f32 %v3025, %v3168
    %v3398 = vmul.f32 %v3094, %v3237
    %v3399 = vmul.f32 %v3096, %v3239
    %v3400 = vmul.f32 %v3396, %v3388
    %v3401 = vmul.f32 %v3397, %v3389
    %v3402 = vmul.f32 %v3308, %v3384
    %v3403 = vmul.f32 %v3310, %v3385
    %v3404 = vadd.f32 %v3400, %v3402
    %v3405 = vadd.f32 %v3401, %v3403
    %v3406 = vmul.f32 %v3396, %v3390
    %v3407 = vmul.f32 %v3397, %v3391
    %v3408 = vmul.f32 %v3308, %v3386
    %v3409 = vmul.f32 %v3310, %v3387
    %v3410 = vadd.f32 %v3406, %v3408
    %v3411 = vadd.f32 %v3407, %v3409
    %v3412 = vmul.f32 %v3398, %v3392
    %v3413 = vmul.f32 %v3399, %v3393
    %v3414 = vmul.f32 %v3379, %v3384
    %v3415 = vmul.f32 %v3381, %v3385
    %v3416 = vadd.f32 %v3412, %v3414
    %v3417 = vadd.f32 %v3413, %v3415
    %v3418 = vmul.f32 %v3398, %v3394
    %v3419 = vmul.f32 %v3399, %v3395
    %v3420 = vmul.f32 %v3379, %v3386
    %v3421 = vmul.f32 %v3381, %v3387
    %v3422 = vadd.f32 %v3418, %v3420
    %v3423 = vadd.f32 %v3419, %v3421
    %v3424 = vmul.f32 %v3404, %v3404
    %v3425 = vmul.f32 %v3405, %v3405
    %v3426 = vmul.f32 %v3410, %v3410
    %v3427 = vmul.f32 %v3411, %v3411
    %v3428 = vadd.f32 %v3424, %v3426
    %v3429 = vadd.f32 %v3425, %v3427
    %v3430 = vmul.f32 %v3416, %v3416
    %v3431 = vmul.f32 %v3417, %v3417
    %v3432 = vmul.f32 %v3422, %v3422
    %v3433 = vmul.f32 %v3423, %v3423
    %v3434 = vadd.f32 %v3430, %v3432
    %v3435 = vadd.f32 %v3431, %v3433
    %3436 = vmatprep.subr.mxu0 0.0
    %3437 = vmatpush1.msra.mxu0 %v229
    %3438 = vmatprep.subr.mxu0 0.0
    %3439 = vmatpush1.msra.mxu0 %v228
    %3440 = vmatprep.subr.mxu0 0.0
    %3441 = vmatpush1.msra.mxu0 %v227
    %3442 = vmatprep.subr.mxu0 0.0
    %3443 = vmatpush1.msra.mxu0 %v226
    %3444 = vmatprep.subr.mxu0 0.0
    %3445 = vmatpush1.msra.mxu0 %v225
    %3446 = vmatprep.subr.mxu0 0.0
    %3447 = vmatpush1.msra.mxu0 %v224
    %3448 = vmatprep.subr.mxu0 0.0
    %3449 = vmatpush1.msra.mxu0 %v223
    %3450 = vmatprep.subr.mxu0 0.0
    %3451 = vmatpush1.msra.mxu0 %v222
    %3452 = vmatprep.subr.mxu0 0.0
    %3453 = vmatpush1.msra.mxu0 %v221
    %3454 = vmatprep.subr.mxu0 0.0
    %3455 = vmatpush1.msra.mxu0 %v220
    %3456 = vmatprep.subr.mxu0 0.0
    %3457 = vmatpush1.msra.mxu0 %v219
    %3458 = vmatprep.subr.mxu0 0.0
    %3459 = vmatpush1.msra.mxu0 %v218
    %3460 = vmatprep.subr.mxu0 0.0
    %3461 = vmatpush1.msra.mxu0 %v217
    %3462 = vmatprep.subr.mxu0 0.0
    %3463 = vmatpush1.msra.mxu0 %v216
    %3464 = vmatprep.subr.mxu0 0.0
    %3465 = vmatpush1.msra.mxu0 %v215
    %3466 = vmatprep.subr.mxu0 0.0
    %3467 = vmatpush1.msra.mxu0 %v214
    %3468 = vmatprep.subr.mxu0 0.0
    %3469 = vmatpush2.msra.mxu0 %v245
    %3470 = vmatprep.subr.mxu0 0.0
    %3471 = vmatpush2.msra.mxu0 %v244
    %3472 = vmatprep.subr.mxu0 0.0
    %3473 = vmatpush2.msra.mxu0 %v243
    %3474 = vmatprep.subr.mxu0 0.0
    %3475 = vmatpush2.msra.mxu0 %v242
    %3476 = vmatprep.subr.mxu0 0.0
    %3477 = vmatpush2.msra.mxu0 %v241
    %3478 = vmatprep.subr.mxu0 0.0
    %3479 = vmatpush2.msra.mxu0 %v240
    %3480 = vmatprep.subr.mxu0 0.0
    %3481 = vmatpush2.msra.mxu0 %v239
    %3482 = vmatprep.subr.mxu0 0.0
    %3483 = vmatpush2.msra.mxu0 %v238
    %3484 = vmatprep.subr.mxu0 0.0
    %3485 = vmatpush2.msra.mxu0 %v237
    %3486 = vmatprep.subr.mxu0 0.0
    %3487 = vmatpush2.msra.mxu0 %v236
    %3488 = vmatprep.subr.mxu0 0.0
    %3489 = vmatpush2.msra.mxu0 %v235
    %3490 = vmatprep.subr.mxu0 0.0
    %3491 = vmatpush2.msra.mxu0 %v234
    %3492 = vmatprep.subr.mxu0 0.0
    %3493 = vmatpush2.msra.mxu0 %v233
    %3494 = vmatprep.subr.mxu0 0.0
    %3495 = vmatpush2.msra.mxu0 %v232
    %3496 = vmatprep.subr.mxu0 0.0
    %3497 = vmatpush2.msra.mxu0 %v231
    %3498 = vmatprep.subr.mxu0 0.0
    %3499 = vmatpush2.msra.mxu0 %v230
    %3500 = vmatprep.mubr.f32.mxu0 %v3429
    %3501 = vmatmul.mubr.f32.gmra.mxu0 %v3428
    %v3502 = vpop.f32.mrf.mxu0
    %v3503 = vadd.f32 %v291, %v3502
    %v3504 = vpop.f32.mrf.mxu0
    %3505 = vdwg.mxu0
    %3506 = vmatprep.subr.mxu0 0.0
    %3507 = vmatpush1.msra.mxu0 %v261
    %3508 = vmatprep.subr.mxu0 0.0
    %3509 = vmatpush1.msra.mxu0 %v260
    %3510 = vmatprep.subr.mxu0 0.0
    %3511 = vmatpush1.msra.mxu0 %v259
    %3512 = vmatprep.subr.mxu0 0.0
    %3513 = vmatpush1.msra.mxu0 %v258
    %3514 = vmatprep.subr.mxu0 0.0
    %3515 = vmatpush1.msra.mxu0 %v257
    %3516 = vmatprep.subr.mxu0 0.0
    %3517 = vmatpush1.msra.mxu0 %v256
    %3518 = vmatprep.subr.mxu0 0.0
    %3519 = vmatpush1.msra.mxu0 %v255
    %3520 = vmatprep.subr.mxu0 0.0
    %3521 = vmatpush1.msra.mxu0 %v254
    %3522 = vmatprep.subr.mxu0 0.0
    %3523 = vmatpush1.msra.mxu0 %v253
    %3524 = vmatprep.subr.mxu0 0.0
    %3525 = vmatpush1.msra.mxu0 %v252
    %3526 = vmatprep.subr.mxu0 0.0
    %3527 = vmatpush1.msra.mxu0 %v251
    %3528 = vmatprep.subr.mxu0 0.0
    %3529 = vmatpush1.msra.mxu0 %v250
    %3530 = vmatprep.subr.mxu0 0.0
    %3531 = vmatpush1.msra.mxu0 %v249
    %3532 = vmatprep.subr.mxu0 0.0
    %3533 = vmatpush1.msra.mxu0 %v248
    %3534 = vmatprep.subr.mxu0 0.0
    %3535 = vmatpush1.msra.mxu0 %v247
    %3536 = vmatprep.subr.mxu0 0.0
    %3537 = vmatpush1.msra.mxu0 %v246
    %3538 = vmatprep.subr.mxu0 0.0
    %3539 = vmatpush2.msra.mxu0 %v277
    %3540 = vmatprep.subr.mxu0 0.0
    %3541 = vmatpush2.msra.mxu0 %v276
    %3542 = vmatprep.subr.mxu0 0.0
    %3543 = vmatpush2.msra.mxu0 %v275
    %3544 = vmatprep.subr.mxu0 0.0
    %3545 = vmatpush2.msra.mxu0 %v274
    %3546 = vmatprep.subr.mxu0 0.0
    %3547 = vmatpush2.msra.mxu0 %v273
    %3548 = vmatprep.subr.mxu0 0.0
    %3549 = vmatpush2.msra.mxu0 %v272
    %3550 = vmatprep.subr.mxu0 0.0
    %3551 = vmatpush2.msra.mxu0 %v271
    %3552 = vmatprep.subr.mxu0 0.0
    %3553 = vmatpush2.msra.mxu0 %v270
    %3554 = vmatprep.subr.mxu0 0.0
    %3555 = vmatpush2.msra.mxu0 %v269
    %3556 = vmatprep.subr.mxu0 0.0
    %3557 = vmatpush2.msra.mxu0 %v268
    %3558 = vmatprep.subr.mxu0 0.0
    %3559 = vmatpush2.msra.mxu0 %v267
    %3560 = vmatprep.subr.mxu0 0.0
    %3561 = vmatpush2.msra.mxu0 %v266
    %3562 = vmatprep.subr.mxu0 0.0
    %3563 = vmatpush2.msra.mxu0 %v265
    %3564 = vmatprep.subr.mxu0 0.0
    %3565 = vmatpush2.msra.mxu0 %v264
    %3566 = vmatprep.subr.mxu0 0.0
    %3567 = vmatpush2.msra.mxu0 %v263
    %3568 = vmatprep.subr.mxu0 0.0
    %3569 = vmatpush2.msra.mxu0 %v262
    %3570 = vmatprep.mubr.f32.mxu0 %v3435
    %3571 = vmatmul.mubr.f32.gmra.mxu0 %v3434
    %v3572 = vpop.f32.mrf.mxu0
    %v3573 = vadd.f32 %v3503, %v3572
    %v3574 = vpop.f32.mrf.mxu0
    %3575 = vdwg.mxu0
    %v3576 = vtanh.pop %v3573
    %v3578 = vsel %vm310, %v3576, 0
    %3580 = vmatprep.subr.mxu0 0.0
    %3581 = vmatpush1.msra.mxu0 0.0
    %3582 = vmatprep.subr.mxu0 0.0
    %3583 = vmatpush1.msra.mxu0 0.0
    %3584 = vmatprep.subr.mxu0 0.0
    %3585 = vmatpush1.msra.mxu0 0.0
    %3586 = vmatprep.subr.mxu0 0.0
    %3587 = vmatpush1.msra.mxu0 0.0
    %3588 = vmatprep.subr.mxu0 0.0
    %3589 = vmatpush1.msra.mxu0 0.0
    %3590 = vmatprep.subr.mxu0 0.0
    %3591 = vmatpush1.msra.mxu0 0.0
    %3592 = vmatprep.subr.mxu0 0.0
    %3593 = vmatpush1.msra.mxu0 0.0
    %3594 = vmatprep.subr.mxu0 0.0
    %3595 = vmatpush1.msra.mxu0 0.0
    %3596 = vmatprep.subr.mxu0 0.0
    %3597 = vmatpush1.msra.mxu0 %v285
    %3598 = vmatprep.subr.mxu0 0.0
    %3599 = vmatpush1.msra.mxu0 %v284
    %3600 = vmatprep.subr.mxu0 0.0
    %3601 = vmatpush1.msra.mxu0 %v283
    %3602 = vmatprep.subr.mxu0 0.0
    %3603 = vmatpush1.msra.mxu0 %v282
    %3604 = vmatprep.subr.mxu0 0.0
    %3605 = vmatpush1.msra.mxu0 %v281
    %3606 = vmatprep.subr.mxu0 0.0
    %3607 = vmatpush1.msra.mxu0 %v280
    %3608 = vmatprep.subr.mxu0 0.0
    %3609 = vmatpush1.msra.mxu0 %v279
    %3610 = vmatprep.subr.mxu0 0.0
    %3611 = vmatpush1.msra.mxu0 %v278
    %3612 = vmatprep.subr.mxu0 0.0
    %3613 = vmatpush2.msra.mxu0 0.0
    %3614 = vmatprep.subr.mxu0 0.0
    %3615 = vmatpush2.msra.mxu0 0.0
    %3616 = vmatprep.subr.mxu0 0.0
    %3617 = vmatpush2.msra.mxu0 0.0
    %3618 = vmatprep.subr.mxu0 0.0
    %3619 = vmatpush2.msra.mxu0 0.0
    %3620 = vmatprep.subr.mxu0 0.0
    %3621 = vmatpush2.msra.mxu0 0.0
    %3622 = vmatprep.subr.mxu0 0.0
    %3623 = vmatpush2.msra.mxu0 0.0
    %3624 = vmatprep.subr.mxu0 0.0
    %3625 = vmatpush2.msra.mxu0 0.0
    %3626 = vmatprep.subr.mxu0 0.0
    %3627 = vmatpush2.msra.mxu0 0.0
    %3628 = vmatprep.subr.mxu0 0.0
    %3629 = vmatpush2.msra.mxu0 0.0
    %3630 = vmatprep.subr.mxu0 0.0
    %3631 = vmatpush2.msra.mxu0 0.0
    %3632 = vmatprep.subr.mxu0 0.0
    %3633 = vmatpush2.msra.mxu0 0.0
    %3634 = vmatprep.subr.mxu0 0.0
    %3635 = vmatpush2.msra.mxu0 0.0
    %3636 = vmatprep.subr.mxu0 0.0
    %3637 = vmatpush2.msra.mxu0 0.0
    %3638 = vmatprep.subr.mxu0 0.0
    %3639 = vmatpush2.msra.mxu0 0.0
    %3640 = vmatprep.subr.mxu0 0.0
    %3641 = vmatpush2.msra.mxu0 0.0
    %3642 = vmatprep.subr.mxu0 0.0
    %3643 = vmatpush2.msra.mxu0 0.0
    %3644 = vmatprep.mubr.f32.mxu0 0.0
    %3645 = vmatmul.mubr.f32.gmra.mxu0 %v3578
    %v3646 = vpop.f32.mrf.mxu0
    %v3647 = vadd.f32 %v298, %v3646
    %v3648 = vpop.f32.mrf.mxu0
    %3649 = vdwg.mxu0
    %v3650 = vsub.f32 1.0, %v2944
    %v3651 = vmul.f32 %v3650, %v2855
    %3652 = vrot.lane.b32.xlu0 %v2947, 112
    %v3653 = vpop.permute.xlu0 %3652
    %v3655 = vmul.f32 %v2944, %v3653
    %v3656 = vadd.f32 %v3651, %v3655
    %v3657 = vadd.f32 %v3656, %v3647
    %v3658 = vxor.u32 %v3657, 2147483648
    %v3659 = vmul.f32 %v3658, 1.442695
    %v3660 = vpow.pop %v3659
    %v3661 = vadd.f32 %v3660, 1.0
    %v3662 = vrcp.pop %v3661
    %v3663 = vmul.f32 1.0, %v3662
    %v3664 = vmul.f32 %v3663, %v3576
    %s3665 = scalar_lea.vmem [#allocation9], 24
    %3666 = vst.msk [vmem:[%s3665] sm:$0xff] %vm310, %v3664
    %3667 = vst.msk [vmem:[#allocation2] sm:$0xff] %vm306, %v3664
    %3668 = vst [vmem:[#allocation4] sm:$0xff] %v3404
    %3669 = vst [vmem:[#allocation4 + $0x8] sm:$0xff] %v3405
    %3670 = vst [vmem:[#allocation4 + $0x10] sm:$0xff] %v3410
    %3671 = vst [vmem:[#allocation4 + $0x18] sm:$0xff] %v3411
    %3673 = vrot.lane.b32.xlu0 %v3664, 96
    %v3674 = vpop.permute.xlu0 %3673
    %3676 = vst.msk [vmem:[#allocation3 - $0x6] sm:$0xc0] %vm1127, %v3674
    %3677 = vst.msk [vmem:[#allocation3 + $0x2] sm:$0x3f] %vm1129, %v3674
    %v3682 = vrot.slane %v3416, 6
    %v3683 = vrot.slane %v3417, 6
    %v3684 = vrot.slane %v3422, 6
    %v3685 = vrot.slane %v3423, 6
    %3690 = vst [vmem:[#allocation5] sm:$0x3] %v3682
    %3691 = vst [vmem:[#allocation5 + $0x8] sm:$0x3] %v3683
    %3692 = vst [vmem:[#allocation5 + $0x10] sm:$0x3] %v3684
    %3693 = vst [vmem:[#allocation5 + $0x18] sm:$0x3] %v3685
    %3694 = vst [vmem:[#allocation5] sm:$0xfc] %v3682
    %3695 = vst [vmem:[#allocation5 + $0x8] sm:$0xfc] %v3683
    %3696 = vst [vmem:[#allocation5 + $0x10] sm:$0xfc] %v3684
    %3697 = vst [vmem:[#allocation5 + $0x18] sm:$0xfc] %v3685
    %v3698 = vld [vmem:[#allocation2] sm:$0xff]
    %v3699 = vld [vmem:[#allocation3] sm:$0xff]
    %3701 = vrot.lane.b32.xlu0 %v3699, 32
    %v3702 = vpop.permute.xlu0 %3701
    %v3704 = vsel %vm306, %v3698, %v3702
    %s3705 = scalar_lea.vmem %s0, 64
    %v3706 = vld [vmem:[%s3705] sm:$0xff]
    %v3707 = vld [vmem:[%s3705 + $0x8] sm:$0xff]
    %v3709 = vsel %vm310, %v3704, 0
    %3711 = vmatprep.subr.mxu0 0.0
    %3712 = vmatpush1.msra.mxu0 0.0
    %3713 = vmatprep.subr.mxu0 0.0
    %3714 = vmatpush1.msra.mxu0 0.0
    %3715 = vmatprep.subr.mxu0 0.0
    %3716 = vmatpush1.msra.mxu0 0.0
    %3717 = vmatprep.subr.mxu0 0.0
    %3718 = vmatpush1.msra.mxu0 0.0
    %3719 = vmatprep.subr.mxu0 0.0
    %3720 = vmatpush1.msra.mxu0 0.0
    %3721 = vmatprep.subr.mxu0 0.0
    %3722 = vmatpush1.msra.mxu0 0.0
    %3723 = vmatprep.subr.mxu0 0.0
    %3724 = vmatpush1.msra.mxu0 0.0
    %3725 = vmatprep.subr.mxu0 0.0
    %3726 = vmatpush1.msra.mxu0 0.0
    %3727 = vmatprep.subr.mxu0 %v77
    %3728 = vmatpush1.msra.mxu0 %v76
    %3729 = vmatprep.subr.mxu0 %v75
    %3730 = vmatpush1.msra.mxu0 %v74
    %3731 = vmatprep.subr.mxu0 %v73
    %3732 = vmatpush1.msra.mxu0 %v72
    %3733 = vmatprep.subr.mxu0 %v71
    %3734 = vmatpush1.msra.mxu0 %v70
    %3735 = vmatprep.subr.mxu0 %v69
    %3736 = vmatpush1.msra.mxu0 %v68
    %3737 = vmatprep.subr.mxu0 %v67
    %3738 = vmatpush1.msra.mxu0 %v66
    %3739 = vmatprep.subr.mxu0 %v65
    %3740 = vmatpush1.msra.mxu0 %v64
    %3741 = vmatprep.subr.mxu0 %v63
    %3742 = vmatpush1.msra.mxu0 %v62
    %3743 = vmatprep.subr.mxu0 0.0
    %3744 = vmatpush2.msra.mxu0 0.0
    %3745 = vmatprep.subr.mxu0 0.0
    %3746 = vmatpush2.msra.mxu0 0.0
    %3747 = vmatprep.subr.mxu0 0.0
    %3748 = vmatpush2.msra.mxu0 0.0
    %3749 = vmatprep.subr.mxu0 0.0
    %3750 = vmatpush2.msra.mxu0 0.0
    %3751 = vmatprep.subr.mxu0 0.0
    %3752 = vmatpush2.msra.mxu0 0.0
    %3753 = vmatprep.subr.mxu0 0.0
    %3754 = vmatpush2.msra.mxu0 0.0
    %3755 = vmatprep.subr.mxu0 0.0
    %3756 = vmatpush2.msra.mxu0 0.0
    %3757 = vmatprep.subr.mxu0 0.0
    %3758 = vmatpush2.msra.mxu0 0.0
    %3759 = vmatprep.subr.mxu0 0.0
    %3760 = vmatpush2.msra.mxu0 0.0
    %3761 = vmatprep.subr.mxu0 0.0
    %3762 = vmatpush2.msra.mxu0 0.0
    %3763 = vmatprep.subr.mxu0 0.0
    %3764 = vmatpush2.msra.mxu0 0.0
    %3765 = vmatprep.subr.mxu0 0.0
    %3766 = vmatpush2.msra.mxu0 0.0
    %3767 = vmatprep.subr.mxu0 0.0
    %3768 = vmatpush2.msra.mxu0 0.0
    %3769 = vmatprep.subr.mxu0 0.0
    %3770 = vmatpush2.msra.mxu0 0.0
    %3771 = vmatprep.subr.mxu0 0.0
    %3772 = vmatpush2.msra.mxu0 0.0
    %3773 = vmatprep.subr.mxu0 0.0
    %3774 = vmatpush2.msra.mxu0 0.0
    %3775 = vmatprep.mubr.f32.mxu0 0.0
    %3776 = vmatmul.mubr.f32.gmra.mxu0 %v3709
    %v3777 = vpop.f32.mrf.mxu0
    %v3778 = vadd.f32 0.0, %v3777
    %v3779 = vpop.f32.mrf.mxu0
    %v3780 = vadd.f32 0.0, %v3779
    %3781 = vdwg.mxu0
    %v3782 = vadd.f32 %v3706, %v3778
    %v3783 = vadd.f32 %v3707, %v3780
    %v3784 = vxor.u32 %v3782, 2147483648
    %v3785 = vxor.u32 %v3783, 2147483648
    %v3786 = vmul.f32 %v3784, 1.442695
    %v3787 = vpow.pop %v3786
    %v3788 = vmul.f32 %v3785, 1.442695
    %v3789 = vpow.pop %v3788
    %v3790 = vadd.f32 %v3787, 1.0
    %v3791 = vadd.f32 %v3789, 1.0
    %v3792 = vrcp.pop %v3790
    %v3793 = vmul.f32 1.0, %v3792
    %v3794 = vrcp.pop %v3791
    %v3795 = vmul.f32 1.0, %v3794
    %v3796 = vtanh.pop %v3783
    %3798 = vrot.lane.b32.xlu0 %v3796, 48
    %v3799 = vpop.permute.xlu0 %3798
    %v3801 = vmul.f32 %v3793, %v3799
    %v3803 = vsel %vm405, %v3795, 0
    %3805 = vmatprep.subr.mxu0 0.0
    %3806 = vmatpush1.msra.mxu0 0.0
    %3807 = vmatprep.subr.mxu0 0.0
    %3808 = vmatpush1.msra.mxu0 0.0
    %3809 = vmatprep.subr.mxu0 0.0
    %3810 = vmatpush1.msra.mxu0 0.0
    %3811 = vmatprep.subr.mxu0 0.0
    %3812 = vmatpush1.msra.mxu0 0.0
    %3813 = vmatprep.subr.mxu0 0.0
    %3814 = vmatpush1.msra.mxu0 0.0
    %3815 = vmatprep.subr.mxu0 0.0
    %3816 = vmatpush1.msra.mxu0 0.0
    %3817 = vmatprep.subr.mxu0 0.0
    %3818 = vmatpush1.msra.mxu0 0.0
    %3819 = vmatprep.subr.mxu0 0.0
    %3820 = vmatpush1.msra.mxu0 0.0
    %3821 = vmatprep.subr.mxu0 0.0
    %3822 = vmatpush1.msra.mxu0 0.0
    %3823 = vmatprep.subr.mxu0 0.0
    %3824 = vmatpush1.msra.mxu0 0.0
    %3825 = vmatprep.subr.mxu0 0.0
    %3826 = vmatpush1.msra.mxu0 0.0
    %3827 = vmatprep.subr.mxu0 0.0
    %3828 = vmatpush1.msra.mxu0 0.0
    %3829 = vmatprep.subr.mxu0 0.0
    %3830 = vmatpush1.msra.mxu0 0.0
    %3831 = vmatprep.subr.mxu0 0.0
    %3832 = vmatpush1.msra.mxu0 0.0
    %3833 = vmatprep.subr.mxu0 %v83
    %3834 = vmatpush1.msra.mxu0 %v82
    %3835 = vmatprep.subr.mxu0 %v79
    %3836 = vmatpush1.msra.mxu0 %v78
    %3837 = vmatprep.subr.mxu0 0.0
    %3838 = vmatpush2.msra.mxu0 0.0
    %3839 = vmatprep.subr.mxu0 0.0
    %3840 = vmatpush2.msra.mxu0 0.0
    %3841 = vmatprep.subr.mxu0 0.0
    %3842 = vmatpush2.msra.mxu0 0.0
    %3843 = vmatprep.subr.mxu0 0.0
    %3844 = vmatpush2.msra.mxu0 0.0
    %3845 = vmatprep.subr.mxu0 0.0
    %3846 = vmatpush2.msra.mxu0 0.0
    %3847 = vmatprep.subr.mxu0 0.0
    %3848 = vmatpush2.msra.mxu0 0.0
    %3849 = vmatprep.subr.mxu0 0.0
    %3850 = vmatpush2.msra.mxu0 0.0
    %3851 = vmatprep.subr.mxu0 0.0
    %3852 = vmatpush2.msra.mxu0 0.0
    %3853 = vmatprep.subr.mxu0 0.0
    %3854 = vmatpush2.msra.mxu0 0.0
    %3855 = vmatprep.subr.mxu0 0.0
    %3856 = vmatpush2.msra.mxu0 0.0
    %3857 = vmatprep.subr.mxu0 0.0
    %3858 = vmatpush2.msra.mxu0 0.0
    %3859 = vmatprep.subr.mxu0 0.0
    %3860 = vmatpush2.msra.mxu0 0.0
    %3861 = vmatprep.subr.mxu0 0.0
    %3862 = vmatpush2.msra.mxu0 0.0
    %3863 = vmatprep.subr.mxu0 0.0
    %3864 = vmatpush2.msra.mxu0 0.0
    %3865 = vmatprep.subr.mxu0 0.0
    %3866 = vmatpush2.msra.mxu0 0.0
    %3867 = vmatprep.subr.mxu0 0.0
    %3868 = vmatpush2.msra.mxu0 0.0
    %3869 = vmatprep.mubr.f32.mxu0 0.0
    %3870 = vmatmul.mubr.f32.gmra.mxu0 %v3803
    %v3871 = vpop.f32.mrf.mxu0
    %v3872 = vadd.f32 0.0, %v3871
    %v3873 = vpop.f32.mrf.mxu0
    %v3874 = vadd.f32 0.0, %v3873
    %3875 = vdwg.mxu0
    %3876 = vmatprep.subr.mxu0 0.0
    %3877 = vmatpush1.msra.mxu0 0.0
    %3878 = vmatprep.subr.mxu0 0.0
    %3879 = vmatpush1.msra.mxu0 0.0
    %3880 = vmatprep.subr.mxu0 0.0
    %3881 = vmatpush1.msra.mxu0 0.0
    %3882 = vmatprep.subr.mxu0 0.0
    %3883 = vmatpush1.msra.mxu0 0.0
    %3884 = vmatprep.subr.mxu0 0.0
    %3885 = vmatpush1.msra.mxu0 0.0
    %3886 = vmatprep.subr.mxu0 0.0
    %3887 = vmatpush1.msra.mxu0 0.0
    %3888 = vmatprep.subr.mxu0 0.0
    %3889 = vmatpush1.msra.mxu0 0.0
    %3890 = vmatprep.subr.mxu0 0.0
    %3891 = vmatpush1.msra.mxu0 0.0
    %3892 = vmatprep.subr.mxu0 0.0
    %3893 = vmatpush1.msra.mxu0 0.0
    %3894 = vmatprep.subr.mxu0 0.0
    %3895 = vmatpush1.msra.mxu0 0.0
    %3896 = vmatprep.subr.mxu0 0.0
    %3897 = vmatpush1.msra.mxu0 0.0
    %3898 = vmatprep.subr.mxu0 0.0
    %3899 = vmatpush1.msra.mxu0 0.0
    %3900 = vmatprep.subr.mxu0 0.0
    %3901 = vmatpush1.msra.mxu0 0.0
    %3902 = vmatprep.subr.mxu0 0.0
    %3903 = vmatpush1.msra.mxu0 0.0
    %3904 = vmatprep.subr.mxu0 %v85
    %3905 = vmatpush1.msra.mxu0 %v84
    %3906 = vmatprep.subr.mxu0 %v81
    %3907 = vmatpush1.msra.mxu0 %v80
    %3908 = vmatprep.subr.mxu0 0.0
    %3909 = vmatpush2.msra.mxu0 0.0
    %3910 = vmatprep.subr.mxu0 0.0
    %3911 = vmatpush2.msra.mxu0 0.0
    %3912 = vmatprep.subr.mxu0 0.0
    %3913 = vmatpush2.msra.mxu0 0.0
    %3914 = vmatprep.subr.mxu0 0.0
    %3915 = vmatpush2.msra.mxu0 0.0
    %3916 = vmatprep.subr.mxu0 0.0
    %3917 = vmatpush2.msra.mxu0 0.0
    %3918 = vmatprep.subr.mxu0 0.0
    %3919 = vmatpush2.msra.mxu0 0.0
    %3920 = vmatprep.subr.mxu0 0.0
    %3921 = vmatpush2.msra.mxu0 0.0
    %3922 = vmatprep.subr.mxu0 0.0
    %3923 = vmatpush2.msra.mxu0 0.0
    %3924 = vmatprep.subr.mxu0 0.0
    %3925 = vmatpush2.msra.mxu0 0.0
    %3926 = vmatprep.subr.mxu0 0.0
    %3927 = vmatpush2.msra.mxu0 0.0
    %3928 = vmatprep.subr.mxu0 0.0
    %3929 = vmatpush2.msra.mxu0 0.0
    %3930 = vmatprep.subr.mxu0 0.0
    %3931 = vmatpush2.msra.mxu0 0.0
    %3932 = vmatprep.subr.mxu0 0.0
    %3933 = vmatpush2.msra.mxu0 0.0
    %3934 = vmatprep.subr.mxu0 0.0
    %3935 = vmatpush2.msra.mxu0 0.0
    %3936 = vmatprep.subr.mxu0 0.0
    %3937 = vmatpush2.msra.mxu0 0.0
    %3938 = vmatprep.subr.mxu0 0.0
    %3939 = vmatpush2.msra.mxu0 0.0
    %3940 = vmatprep.mubr.f32.mxu0 0.0
    %3941 = vmatmul.mubr.f32.gmra.mxu0 %v3803
    %v3942 = vpop.f32.mrf.mxu0
    %v3943 = vadd.f32 0.0, %v3942
    %v3944 = vpop.f32.mrf.mxu0
    %v3945 = vadd.f32 0.0, %v3944
    %3946 = vdwg.mxu0
    %v3947 = vsel %vm310, %v3793, %v3801
    %3948 = vmatprep.subr.mxu0 %v207
    %3949 = vmatpush1.msra.mxu0 %v206
    %3950 = vmatprep.subr.mxu0 %v199
    %3951 = vmatpush1.msra.mxu0 %v198
    %3952 = vmatprep.subr.mxu0 %v191
    %3953 = vmatpush1.msra.mxu0 %v190
    %3954 = vmatprep.subr.mxu0 %v183
    %3955 = vmatpush1.msra.mxu0 %v182
    %3956 = vmatprep.subr.mxu0 %v175
    %3957 = vmatpush1.msra.mxu0 %v174
    %3958 = vmatprep.subr.mxu0 %v167
    %3959 = vmatpush1.msra.mxu0 %v166
    %3960 = vmatprep.subr.mxu0 %v159
    %3961 = vmatpush1.msra.mxu0 %v158
    %3962 = vmatprep.subr.mxu0 %v151
    %3963 = vmatpush1.msra.mxu0 %v150
    %3964 = vmatprep.subr.mxu0 %v143
    %3965 = vmatpush1.msra.mxu0 %v142
    %3966 = vmatprep.subr.mxu0 %v135
    %3967 = vmatpush1.msra.mxu0 %v134
    %3968 = vmatprep.subr.mxu0 %v127
    %3969 = vmatpush1.msra.mxu0 %v126
    %3970 = vmatprep.subr.mxu0 %v119
    %3971 = vmatpush1.msra.mxu0 %v118
    %3972 = vmatprep.subr.mxu0 %v111
    %3973 = vmatpush1.msra.mxu0 %v110
    %3974 = vmatprep.subr.mxu0 %v103
    %3975 = vmatpush1.msra.mxu0 %v102
    %3976 = vmatprep.subr.mxu0 %v95
    %3977 = vmatpush1.msra.mxu0 %v94
    %3978 = vmatprep.subr.mxu0 %v87
    %3979 = vmatpush1.msra.mxu0 %v86
    %3980 = vmatprep.subr.mxu0 0.0
    %3981 = vmatpush2.msra.mxu0 0.0
    %3982 = vmatprep.subr.mxu0 0.0
    %3983 = vmatpush2.msra.mxu0 0.0
    %3984 = vmatprep.subr.mxu0 0.0
    %3985 = vmatpush2.msra.mxu0 0.0
    %3986 = vmatprep.subr.mxu0 0.0
    %3987 = vmatpush2.msra.mxu0 0.0
    %3988 = vmatprep.subr.mxu0 0.0
    %3989 = vmatpush2.msra.mxu0 0.0
    %3990 = vmatprep.subr.mxu0 0.0
    %3991 = vmatpush2.msra.mxu0 0.0
    %3992 = vmatprep.subr.mxu0 0.0
    %3993 = vmatpush2.msra.mxu0 0.0
    %3994 = vmatprep.subr.mxu0 0.0
    %3995 = vmatpush2.msra.mxu0 0.0
    %3996 = vmatprep.subr.mxu0 0.0
    %3997 = vmatpush2.msra.mxu0 0.0
    %3998 = vmatprep.subr.mxu0 0.0
    %3999 = vmatpush2.msra.mxu0 0.0
    %4000 = vmatprep.subr.mxu0 0.0
    %4001 = vmatpush2.msra.mxu0 0.0
    %4002 = vmatprep.subr.mxu0 0.0
    %4003 = vmatpush2.msra.mxu0 0.0
    %4004 = vmatprep.subr.mxu0 0.0
    %4005 = vmatpush2.msra.mxu0 0.0
    %4006 = vmatprep.subr.mxu0 0.0
    %4007 = vmatpush2.msra.mxu0 0.0
    %4008 = vmatprep.subr.mxu0 0.0
    %4009 = vmatpush2.msra.mxu0 0.0
    %4010 = vmatprep.subr.mxu0 0.0
    %4011 = vmatpush2.msra.mxu0 0.0
    %4012 = vmatprep.mubr.f32.mxu0 0.0
    %4013 = vmatmul.mubr.f32.gmra.mxu0 %v3947
    %v4014 = vpop.f32.mrf.mxu0
    %v4015 = vadd.f32 0.0, %v4014
    %v4016 = vpop.f32.mrf.mxu0
    %v4017 = vadd.f32 0.0, %v4016
    %4018 = vdwg.mxu0
    %4019 = vmatprep.subr.mxu0 %v209
    %4020 = vmatpush1.msra.mxu0 %v208
    %4021 = vmatprep.subr.mxu0 %v201
    %4022 = vmatpush1.msra.mxu0 %v200
    %4023 = vmatprep.subr.mxu0 %v193
    %4024 = vmatpush1.msra.mxu0 %v192
    %4025 = vmatprep.subr.mxu0 %v185
    %4026 = vmatpush1.msra.mxu0 %v184
    %4027 = vmatprep.subr.mxu0 %v177
    %4028 = vmatpush1.msra.mxu0 %v176
    %4029 = vmatprep.subr.mxu0 %v169
    %4030 = vmatpush1.msra.mxu0 %v168
    %4031 = vmatprep.subr.mxu0 %v161
    %4032 = vmatpush1.msra.mxu0 %v160
    %4033 = vmatprep.subr.mxu0 %v153
    %4034 = vmatpush1.msra.mxu0 %v152
    %4035 = vmatprep.subr.mxu0 %v145
    %4036 = vmatpush1.msra.mxu0 %v144
    %4037 = vmatprep.subr.mxu0 %v137
    %4038 = vmatpush1.msra.mxu0 %v136
    %4039 = vmatprep.subr.mxu0 %v129
    %4040 = vmatpush1.msra.mxu0 %v128
    %4041 = vmatprep.subr.mxu0 %v121
    %4042 = vmatpush1.msra.mxu0 %v120
    %4043 = vmatprep.subr.mxu0 %v113
    %4044 = vmatpush1.msra.mxu0 %v112
    %4045 = vmatprep.subr.mxu0 %v105
    %4046 = vmatpush1.msra.mxu0 %v104
    %4047 = vmatprep.subr.mxu0 %v97
    %4048 = vmatpush1.msra.mxu0 %v96
    %4049 = vmatprep.subr.mxu0 %v89
    %4050 = vmatpush1.msra.mxu0 %v88
    %4051 = vmatprep.subr.mxu0 0.0
    %4052 = vmatpush2.msra.mxu0 0.0
    %4053 = vmatprep.subr.mxu0 0.0
    %4054 = vmatpush2.msra.mxu0 0.0
    %4055 = vmatprep.subr.mxu0 0.0
    %4056 = vmatpush2.msra.mxu0 0.0
    %4057 = vmatprep.subr.mxu0 0.0
    %4058 = vmatpush2.msra.mxu0 0.0
    %4059 = vmatprep.subr.mxu0 0.0
    %4060 = vmatpush2.msra.mxu0 0.0
    %4061 = vmatprep.subr.mxu0 0.0
    %4062 = vmatpush2.msra.mxu0 0.0
    %4063 = vmatprep.subr.mxu0 0.0
    %4064 = vmatpush2.msra.mxu0 0.0
    %4065 = vmatprep.subr.mxu0 0.0
    %4066 = vmatpush2.msra.mxu0 0.0
    %4067 = vmatprep.subr.mxu0 0.0
    %4068 = vmatpush2.msra.mxu0 0.0
    %4069 = vmatprep.subr.mxu0 0.0
    %4070 = vmatpush2.msra.mxu0 0.0
    %4071 = vmatprep.subr.mxu0 0.0
    %4072 = vmatpush2.msra.mxu0 0.0
    %4073 = vmatprep.subr.mxu0 0.0
    %4074 = vmatpush2.msra.mxu0 0.0
    %4075 = vmatprep.subr.mxu0 0.0
    %4076 = vmatpush2.msra.mxu0 0.0
    %4077 = vmatprep.subr.mxu0 0.0
    %4078 = vmatpush2.msra.mxu0 0.0
    %4079 = vmatprep.subr.mxu0 0.0
    %4080 = vmatpush2.msra.mxu0 0.0
    %4081 = vmatprep.subr.mxu0 0.0
    %4082 = vmatpush2.msra.mxu0 0.0
    %4083 = vmatprep.mubr.f32.mxu0 0.0
    %4084 = vmatmul.mubr.f32.gmra.mxu0 %v3947
    %v4085 = vpop.f32.mrf.mxu0
    %v4086 = vadd.f32 0.0, %v4085
    %v4087 = vpop.f32.mrf.mxu0
    %v4088 = vadd.f32 0.0, %v4087
    %4089 = vdwg.mxu0
    %4090 = vmatprep.subr.mxu0 %v211
    %4091 = vmatpush1.msra.mxu0 %v210
    %4092 = vmatprep.subr.mxu0 %v203
    %4093 = vmatpush1.msra.mxu0 %v202
    %4094 = vmatprep.subr.mxu0 %v195
    %4095 = vmatpush1.msra.mxu0 %v194
    %4096 = vmatprep.subr.mxu0 %v187
    %4097 = vmatpush1.msra.mxu0 %v186
    %4098 = vmatprep.subr.mxu0 %v179
    %4099 = vmatpush1.msra.mxu0 %v178
    %4100 = vmatprep.subr.mxu0 %v171
    %4101 = vmatpush1.msra.mxu0 %v170
    %4102 = vmatprep.subr.mxu0 %v163
    %4103 = vmatpush1.msra.mxu0 %v162
    %4104 = vmatprep.subr.mxu0 %v155
    %4105 = vmatpush1.msra.mxu0 %v154
    %4106 = vmatprep.subr.mxu0 %v147
    %4107 = vmatpush1.msra.mxu0 %v146
    %4108 = vmatprep.subr.mxu0 %v139
    %4109 = vmatpush1.msra.mxu0 %v138
    %4110 = vmatprep.subr.mxu0 %v131
    %4111 = vmatpush1.msra.mxu0 %v130
    %4112 = vmatprep.subr.mxu0 %v123
    %4113 = vmatpush1.msra.mxu0 %v122
    %4114 = vmatprep.subr.mxu0 %v115
    %4115 = vmatpush1.msra.mxu0 %v114
    %4116 = vmatprep.subr.mxu0 %v107
    %4117 = vmatpush1.msra.mxu0 %v106
    %4118 = vmatprep.subr.mxu0 %v99
    %4119 = vmatpush1.msra.mxu0 %v98
    %4120 = vmatprep.subr.mxu0 %v91
    %4121 = vmatpush1.msra.mxu0 %v90
    %4122 = vmatprep.subr.mxu0 0.0
    %4123 = vmatpush2.msra.mxu0 0.0
    %4124 = vmatprep.subr.mxu0 0.0
    %4125 = vmatpush2.msra.mxu0 0.0
    %4126 = vmatprep.subr.mxu0 0.0
    %4127 = vmatpush2.msra.mxu0 0.0
    %4128 = vmatprep.subr.mxu0 0.0
    %4129 = vmatpush2.msra.mxu0 0.0
    %4130 = vmatprep.subr.mxu0 0.0
    %4131 = vmatpush2.msra.mxu0 0.0
    %4132 = vmatprep.subr.mxu0 0.0
    %4133 = vmatpush2.msra.mxu0 0.0
    %4134 = vmatprep.subr.mxu0 0.0
    %4135 = vmatpush2.msra.mxu0 0.0
    %4136 = vmatprep.subr.mxu0 0.0
    %4137 = vmatpush2.msra.mxu0 0.0
    %4138 = vmatprep.subr.mxu0 0.0
    %4139 = vmatpush2.msra.mxu0 0.0
    %4140 = vmatprep.subr.mxu0 0.0
    %4141 = vmatpush2.msra.mxu0 0.0
    %4142 = vmatprep.subr.mxu0 0.0
    %4143 = vmatpush2.msra.mxu0 0.0
    %4144 = vmatprep.subr.mxu0 0.0
    %4145 = vmatpush2.msra.mxu0 0.0
    %4146 = vmatprep.subr.mxu0 0.0
    %4147 = vmatpush2.msra.mxu0 0.0
    %4148 = vmatprep.subr.mxu0 0.0
    %4149 = vmatpush2.msra.mxu0 0.0
    %4150 = vmatprep.subr.mxu0 0.0
    %4151 = vmatpush2.msra.mxu0 0.0
    %4152 = vmatprep.subr.mxu0 0.0
    %4153 = vmatpush2.msra.mxu0 0.0
    %4154 = vmatprep.mubr.f32.mxu0 0.0
    %4155 = vmatmul.mubr.f32.gmra.mxu0 %v3947
    %v4156 = vpop.f32.mrf.mxu0
    %v4157 = vadd.f32 0.0, %v4156
    %v4158 = vpop.f32.mrf.mxu0
    %v4159 = vadd.f32 0.0, %v4158
    %4160 = vdwg.mxu0
    %4161 = vmatprep.subr.mxu0 %v213
    %4162 = vmatpush1.msra.mxu0 %v212
    %4163 = vmatprep.subr.mxu0 %v205
    %4164 = vmatpush1.msra.mxu0 %v204
    %4165 = vmatprep.subr.mxu0 %v197
    %4166 = vmatpush1.msra.mxu0 %v196
    %4167 = vmatprep.subr.mxu0 %v189
    %4168 = vmatpush1.msra.mxu0 %v188
    %4169 = vmatprep.subr.mxu0 %v181
    %4170 = vmatpush1.msra.mxu0 %v180
    %4171 = vmatprep.subr.mxu0 %v173
    %4172 = vmatpush1.msra.mxu0 %v172
    %4173 = vmatprep.subr.mxu0 %v165
    %4174 = vmatpush1.msra.mxu0 %v164
    %4175 = vmatprep.subr.mxu0 %v157
    %4176 = vmatpush1.msra.mxu0 %v156
    %4177 = vmatprep.subr.mxu0 %v149
    %4178 = vmatpush1.msra.mxu0 %v148
    %4179 = vmatprep.subr.mxu0 %v141
    %4180 = vmatpush1.msra.mxu0 %v140
    %4181 = vmatprep.subr.mxu0 %v133
    %4182 = vmatpush1.msra.mxu0 %v132
    %4183 = vmatprep.subr.mxu0 %v125
    %4184 = vmatpush1.msra.mxu0 %v124
    %4185 = vmatprep.subr.mxu0 %v117
    %4186 = vmatpush1.msra.mxu0 %v116
    %4187 = vmatprep.subr.mxu0 %v109
    %4188 = vmatpush1.msra.mxu0 %v108
    %4189 = vmatprep.subr.mxu0 %v101
    %4190 = vmatpush1.msra.mxu0 %v100
    %4191 = vmatprep.subr.mxu0 %v93
    %4192 = vmatpush1.msra.mxu0 %v92
    %4193 = vmatprep.subr.mxu0 0.0
    %4194 = vmatpush2.msra.mxu0 0.0
    %4195 = vmatprep.subr.mxu0 0.0
    %4196 = vmatpush2.msra.mxu0 0.0
    %4197 = vmatprep.subr.mxu0 0.0
    %4198 = vmatpush2.msra.mxu0 0.0
    %4199 = vmatprep.subr.mxu0 0.0
    %4200 = vmatpush2.msra.mxu0 0.0
    %4201 = vmatprep.subr.mxu0 0.0
    %4202 = vmatpush2.msra.mxu0 0.0
    %4203 = vmatprep.subr.mxu0 0.0
    %4204 = vmatpush2.msra.mxu0 0.0
    %4205 = vmatprep.subr.mxu0 0.0
    %4206 = vmatpush2.msra.mxu0 0.0
    %4207 = vmatprep.subr.mxu0 0.0
    %4208 = vmatpush2.msra.mxu0 0.0
    %4209 = vmatprep.subr.mxu0 0.0
    %4210 = vmatpush2.msra.mxu0 0.0
    %4211 = vmatprep.subr.mxu0 0.0
    %4212 = vmatpush2.msra.mxu0 0.0
    %4213 = vmatprep.subr.mxu0 0.0
    %4214 = vmatpush2.msra.mxu0 0.0
    %4215 = vmatprep.subr.mxu0 0.0
    %4216 = vmatpush2.msra.mxu0 0.0
    %4217 = vmatprep.subr.mxu0 0.0
    %4218 = vmatpush2.msra.mxu0 0.0
    %4219 = vmatprep.subr.mxu0 0.0
    %4220 = vmatpush2.msra.mxu0 0.0
    %4221 = vmatprep.subr.mxu0 0.0
    %4222 = vmatpush2.msra.mxu0 0.0
    %4223 = vmatprep.subr.mxu0 0.0
    %4224 = vmatpush2.msra.mxu0 0.0
    %4225 = vmatprep.mubr.f32.mxu0 0.0
    %4226 = vmatmul.mubr.f32.gmra.mxu0 %v3947
    %v4227 = vpop.f32.mrf.mxu0
    %v4228 = vadd.f32 0.0, %v4227
    %v4229 = vpop.f32.mrf.mxu0
    %v4230 = vadd.f32 0.0, %v4229
    %4231 = vdwg.mxu0
    %s4232 = scalar_lea.vmem %s1, 128
    %v4233 = vld [vmem:[%s4232] sm:$0xff]
    %v4234 = vld [vmem:[%s4232 + $0x8] sm:$0xff]
    %v4235 = vld [vmem:[%s4232 + $0x10] sm:$0xff]
    %v4236 = vld [vmem:[%s4232 + $0x18] sm:$0xff]
    %v4237 = vld [vmem:[#allocation4] sm:$0xff]
    %v4238 = vld [vmem:[#allocation4 + $0x8] sm:$0xff]
    %v4239 = vld [vmem:[#allocation4 + $0x10] sm:$0xff]
    %v4240 = vld [vmem:[#allocation4 + $0x18] sm:$0xff]
    %v4241 = vld [vmem:[#allocation5] sm:$0xff]
    %v4242 = vld [vmem:[#allocation5 + $0x8] sm:$0xff]
    %v4243 = vld [vmem:[#allocation5 + $0x10] sm:$0xff]
    %v4244 = vld [vmem:[#allocation5 + $0x18] sm:$0xff]
    %v4245 = vmul.f32 %v3872, %v4015
    %v4246 = vmul.f32 %v3874, %v4017
    %v4247 = vmul.f32 %v3943, %v4086
    %v4248 = vmul.f32 %v3945, %v4088
    %v4249 = vmul.f32 %v4245, %v4237
    %v4250 = vmul.f32 %v4246, %v4238
    %v4251 = vmul.f32 %v4157, %v4233
    %v4252 = vmul.f32 %v4159, %v4234
    %v4253 = vadd.f32 %v4249, %v4251
    %v4254 = vadd.f32 %v4250, %v4252
    %v4255 = vmul.f32 %v4245, %v4239
    %v4256 = vmul.f32 %v4246, %v4240
    %v4257 = vmul.f32 %v4157, %v4235
    %v4258 = vmul.f32 %v4159, %v4236
    %v4259 = vadd.f32 %v4255, %v4257
    %v4260 = vadd.f32 %v4256, %v4258
    %v4261 = vmul.f32 %v4247, %v4241
    %v4262 = vmul.f32 %v4248, %v4242
    %v4263 = vmul.f32 %v4228, %v4233
    %v4264 = vmul.f32 %v4230, %v4234
    %v4265 = vadd.f32 %v4261, %v4263
    %v4266 = vadd.f32 %v4262, %v4264
    %v4267 = vmul.f32 %v4247, %v4243
    %v4268 = vmul.f32 %v4248, %v4244
    %v4269 = vmul.f32 %v4228, %v4235
    %v4270 = vmul.f32 %v4230, %v4236
    %v4271 = vadd.f32 %v4267, %v4269
    %v4272 = vadd.f32 %v4268, %v4270
    %v4273 = vmul.f32 %v4253, %v4253
    %v4274 = vmul.f32 %v4254, %v4254
    %v4275 = vmul.f32 %v4259, %v4259
    %v4276 = vmul.f32 %v4260, %v4260
    %v4277 = vadd.f32 %v4273, %v4275
    %v4278 = vadd.f32 %v4274, %v4276
    %v4279 = vmul.f32 %v4265, %v4265
    %v4280 = vmul.f32 %v4266, %v4266
    %v4281 = vmul.f32 %v4271, %v4271
    %v4282 = vmul.f32 %v4272, %v4272
    %v4283 = vadd.f32 %v4279, %v4281
    %v4284 = vadd.f32 %v4280, %v4282
    %4285 = vmatprep.subr.mxu0 0.0
    %4286 = vmatpush1.msra.mxu0 %v229
    %4287 = vmatprep.subr.mxu0 0.0
    %4288 = vmatpush1.msra.mxu0 %v228
    %4289 = vmatprep.subr.mxu0 0.0
    %4290 = vmatpush1.msra.mxu0 %v227
    %4291 = vmatprep.subr.mxu0 0.0
    %4292 = vmatpush1.msra.mxu0 %v226
    %4293 = vmatprep.subr.mxu0 0.0
    %4294 = vmatpush1.msra.mxu0 %v225
    %4295 = vmatprep.subr.mxu0 0.0
    %4296 = vmatpush1.msra.mxu0 %v224
    %4297 = vmatprep.subr.mxu0 0.0
    %4298 = vmatpush1.msra.mxu0 %v223
    %4299 = vmatprep.subr.mxu0 0.0
    %4300 = vmatpush1.msra.mxu0 %v222
    %4301 = vmatprep.subr.mxu0 0.0
    %4302 = vmatpush1.msra.mxu0 %v221
    %4303 = vmatprep.subr.mxu0 0.0
    %4304 = vmatpush1.msra.mxu0 %v220
    %4305 = vmatprep.subr.mxu0 0.0
    %4306 = vmatpush1.msra.mxu0 %v219
    %4307 = vmatprep.subr.mxu0 0.0
    %4308 = vmatpush1.msra.mxu0 %v218
    %4309 = vmatprep.subr.mxu0 0.0
    %4310 = vmatpush1.msra.mxu0 %v217
    %4311 = vmatprep.subr.mxu0 0.0
    %4312 = vmatpush1.msra.mxu0 %v216
    %4313 = vmatprep.subr.mxu0 0.0
    %4314 = vmatpush1.msra.mxu0 %v215
    %4315 = vmatprep.subr.mxu0 0.0
    %4316 = vmatpush1.msra.mxu0 %v214
    %4317 = vmatprep.subr.mxu0 0.0
    %4318 = vmatpush2.msra.mxu0 %v245
    %4319 = vmatprep.subr.mxu0 0.0
    %4320 = vmatpush2.msra.mxu0 %v244
    %4321 = vmatprep.subr.mxu0 0.0
    %4322 = vmatpush2.msra.mxu0 %v243
    %4323 = vmatprep.subr.mxu0 0.0
    %4324 = vmatpush2.msra.mxu0 %v242
    %4325 = vmatprep.subr.mxu0 0.0
    %4326 = vmatpush2.msra.mxu0 %v241
    %4327 = vmatprep.subr.mxu0 0.0
    %4328 = vmatpush2.msra.mxu0 %v240
    %4329 = vmatprep.subr.mxu0 0.0
    %4330 = vmatpush2.msra.mxu0 %v239
    %4331 = vmatprep.subr.mxu0 0.0
    %4332 = vmatpush2.msra.mxu0 %v238
    %4333 = vmatprep.subr.mxu0 0.0
    %4334 = vmatpush2.msra.mxu0 %v237
    %4335 = vmatprep.subr.mxu0 0.0
    %4336 = vmatpush2.msra.mxu0 %v236
    %4337 = vmatprep.subr.mxu0 0.0
    %4338 = vmatpush2.msra.mxu0 %v235
    %4339 = vmatprep.subr.mxu0 0.0
    %4340 = vmatpush2.msra.mxu0 %v234
    %4341 = vmatprep.subr.mxu0 0.0
    %4342 = vmatpush2.msra.mxu0 %v233
    %4343 = vmatprep.subr.mxu0 0.0
    %4344 = vmatpush2.msra.mxu0 %v232
    %4345 = vmatprep.subr.mxu0 0.0
    %4346 = vmatpush2.msra.mxu0 %v231
    %4347 = vmatprep.subr.mxu0 0.0
    %4348 = vmatpush2.msra.mxu0 %v230
    %4349 = vmatprep.mubr.f32.mxu0 %v4278
    %4350 = vmatmul.mubr.f32.gmra.mxu0 %v4277
    %v4351 = vpop.f32.mrf.mxu0
    %v4352 = vadd.f32 %v291, %v4351
    %v4353 = vpop.f32.mrf.mxu0
    %4354 = vdwg.mxu0
    %4355 = vmatprep.subr.mxu0 0.0
    %4356 = vmatpush1.msra.mxu0 %v261
    %4357 = vmatprep.subr.mxu0 0.0
    %4358 = vmatpush1.msra.mxu0 %v260
    %4359 = vmatprep.subr.mxu0 0.0
    %4360 = vmatpush1.msra.mxu0 %v259
    %4361 = vmatprep.subr.mxu0 0.0
    %4362 = vmatpush1.msra.mxu0 %v258
    %4363 = vmatprep.subr.mxu0 0.0
    %4364 = vmatpush1.msra.mxu0 %v257
    %4365 = vmatprep.subr.mxu0 0.0
    %4366 = vmatpush1.msra.mxu0 %v256
    %4367 = vmatprep.subr.mxu0 0.0
    %4368 = vmatpush1.msra.mxu0 %v255
    %4369 = vmatprep.subr.mxu0 0.0
    %4370 = vmatpush1.msra.mxu0 %v254
    %4371 = vmatprep.subr.mxu0 0.0
    %4372 = vmatpush1.msra.mxu0 %v253
    %4373 = vmatprep.subr.mxu0 0.0
    %4374 = vmatpush1.msra.mxu0 %v252
    %4375 = vmatprep.subr.mxu0 0.0
    %4376 = vmatpush1.msra.mxu0 %v251
    %4377 = vmatprep.subr.mxu0 0.0
    %4378 = vmatpush1.msra.mxu0 %v250
    %4379 = vmatprep.subr.mxu0 0.0
    %4380 = vmatpush1.msra.mxu0 %v249
    %4381 = vmatprep.subr.mxu0 0.0
    %4382 = vmatpush1.msra.mxu0 %v248
    %4383 = vmatprep.subr.mxu0 0.0
    %4384 = vmatpush1.msra.mxu0 %v247
    %4385 = vmatprep.subr.mxu0 0.0
    %4386 = vmatpush1.msra.mxu0 %v246
    %4387 = vmatprep.subr.mxu0 0.0
    %4388 = vmatpush2.msra.mxu0 %v277
    %4389 = vmatprep.subr.mxu0 0.0
    %4390 = vmatpush2.msra.mxu0 %v276
    %4391 = vmatprep.subr.mxu0 0.0
    %4392 = vmatpush2.msra.mxu0 %v275
    %4393 = vmatprep.subr.mxu0 0.0
    %4394 = vmatpush2.msra.mxu0 %v274
    %4395 = vmatprep.subr.mxu0 0.0
    %4396 = vmatpush2.msra.mxu0 %v273
    %4397 = vmatprep.subr.mxu0 0.0
    %4398 = vmatpush2.msra.mxu0 %v272
    %4399 = vmatprep.subr.mxu0 0.0
    %4400 = vmatpush2.msra.mxu0 %v271
    %4401 = vmatprep.subr.mxu0 0.0
    %4402 = vmatpush2.msra.mxu0 %v270
    %4403 = vmatprep.subr.mxu0 0.0
    %4404 = vmatpush2.msra.mxu0 %v269
    %4405 = vmatprep.subr.mxu0 0.0
    %4406 = vmatpush2.msra.mxu0 %v268
    %4407 = vmatprep.subr.mxu0 0.0
    %4408 = vmatpush2.msra.mxu0 %v267
    %4409 = vmatprep.subr.mxu0 0.0
    %4410 = vmatpush2.msra.mxu0 %v266
    %4411 = vmatprep.subr.mxu0 0.0
    %4412 = vmatpush2.msra.mxu0 %v265
    %4413 = vmatprep.subr.mxu0 0.0
    %4414 = vmatpush2.msra.mxu0 %v264
    %4415 = vmatprep.subr.mxu0 0.0
    %4416 = vmatpush2.msra.mxu0 %v263
    %4417 = vmatprep.subr.mxu0 0.0
    %4418 = vmatpush2.msra.mxu0 %v262
    %4419 = vmatprep.mubr.f32.mxu0 %v4284
    %4420 = vmatmul.mubr.f32.gmra.mxu0 %v4283
    %v4421 = vpop.f32.mrf.mxu0
    %v4422 = vadd.f32 %v4352, %v4421
    %v4423 = vpop.f32.mrf.mxu0
    %4424 = vdwg.mxu0
    %v4425 = vtanh.pop %v4422
    %v4427 = vsel %vm310, %v4425, 0
    %4429 = vmatprep.subr.mxu0 0.0
    %4430 = vmatpush1.msra.mxu0 0.0
    %4431 = vmatprep.subr.mxu0 0.0
    %4432 = vmatpush1.msra.mxu0 0.0
    %4433 = vmatprep.subr.mxu0 0.0
    %4434 = vmatpush1.msra.mxu0 0.0
    %4435 = vmatprep.subr.mxu0 0.0
    %4436 = vmatpush1.msra.mxu0 0.0
    %4437 = vmatprep.subr.mxu0 0.0
    %4438 = vmatpush1.msra.mxu0 0.0
    %4439 = vmatprep.subr.mxu0 0.0
    %4440 = vmatpush1.msra.mxu0 0.0
    %4441 = vmatprep.subr.mxu0 0.0
    %4442 = vmatpush1.msra.mxu0 0.0
    %4443 = vmatprep.subr.mxu0 0.0
    %4444 = vmatpush1.msra.mxu0 0.0
    %4445 = vmatprep.subr.mxu0 0.0
    %4446 = vmatpush1.msra.mxu0 %v285
    %4447 = vmatprep.subr.mxu0 0.0
    %4448 = vmatpush1.msra.mxu0 %v284
    %4449 = vmatprep.subr.mxu0 0.0
    %4450 = vmatpush1.msra.mxu0 %v283
    %4451 = vmatprep.subr.mxu0 0.0
    %4452 = vmatpush1.msra.mxu0 %v282
    %4453 = vmatprep.subr.mxu0 0.0
    %4454 = vmatpush1.msra.mxu0 %v281
    %4455 = vmatprep.subr.mxu0 0.0
    %4456 = vmatpush1.msra.mxu0 %v280
    %4457 = vmatprep.subr.mxu0 0.0
    %4458 = vmatpush1.msra.mxu0 %v279
    %4459 = vmatprep.subr.mxu0 0.0
    %4460 = vmatpush1.msra.mxu0 %v278
    %4461 = vmatprep.subr.mxu0 0.0
    %4462 = vmatpush2.msra.mxu0 0.0
    %4463 = vmatprep.subr.mxu0 0.0
    %4464 = vmatpush2.msra.mxu0 0.0
    %4465 = vmatprep.subr.mxu0 0.0
    %4466 = vmatpush2.msra.mxu0 0.0
    %4467 = vmatprep.subr.mxu0 0.0
    %4468 = vmatpush2.msra.mxu0 0.0
    %4469 = vmatprep.subr.mxu0 0.0
    %4470 = vmatpush2.msra.mxu0 0.0
    %4471 = vmatprep.subr.mxu0 0.0
    %4472 = vmatpush2.msra.mxu0 0.0
    %4473 = vmatprep.subr.mxu0 0.0
    %4474 = vmatpush2.msra.mxu0 0.0
    %4475 = vmatprep.subr.mxu0 0.0
    %4476 = vmatpush2.msra.mxu0 0.0
    %4477 = vmatprep.subr.mxu0 0.0
    %4478 = vmatpush2.msra.mxu0 0.0
    %4479 = vmatprep.subr.mxu0 0.0
    %4480 = vmatpush2.msra.mxu0 0.0
    %4481 = vmatprep.subr.mxu0 0.0
    %4482 = vmatpush2.msra.mxu0 0.0
    %4483 = vmatprep.subr.mxu0 0.0
    %4484 = vmatpush2.msra.mxu0 0.0
    %4485 = vmatprep.subr.mxu0 0.0
    %4486 = vmatpush2.msra.mxu0 0.0
    %4487 = vmatprep.subr.mxu0 0.0
    %4488 = vmatpush2.msra.mxu0 0.0
    %4489 = vmatprep.subr.mxu0 0.0
    %4490 = vmatpush2.msra.mxu0 0.0
    %4491 = vmatprep.subr.mxu0 0.0
    %4492 = vmatpush2.msra.mxu0 0.0
    %4493 = vmatprep.mubr.f32.mxu0 0.0
    %4494 = vmatmul.mubr.f32.gmra.mxu0 %v4427
    %v4495 = vpop.f32.mrf.mxu0
    %v4496 = vadd.f32 %v298, %v4495
    %v4497 = vpop.f32.mrf.mxu0
    %4498 = vdwg.mxu0
    %v4499 = vsub.f32 1.0, %v3793
    %v4500 = vmul.f32 %v4499, %v3704
    %4501 = vrot.lane.b32.xlu0 %v3796, 112
    %v4502 = vpop.permute.xlu0 %4501
    %v4504 = vmul.f32 %v3793, %v4502
    %v4505 = vadd.f32 %v4500, %v4504
    %v4506 = vadd.f32 %v4505, %v4496
    %v4507 = vxor.u32 %v4506, 2147483648
    %v4508 = vmul.f32 %v4507, 1.442695
    %v4509 = vpow.pop %v4508
    %v4510 = vadd.f32 %v4509, 1.0
    %v4511 = vrcp.pop %v4510
    %v4512 = vmul.f32 1.0, %v4511
    %v4513 = vmul.f32 %v4512, %v4425
    %s4514 = scalar_lea.vmem [#allocation9], 32
    %4515 = vst.msk [vmem:[%s4514] sm:$0xff] %vm310, %v4513
    %4516 = vst.msk [vmem:[#allocation2] sm:$0xff] %vm306, %v4513
    %4517 = vst [vmem:[#allocation4] sm:$0xff] %v4253
    %4518 = vst [vmem:[#allocation4 + $0x8] sm:$0xff] %v4254
    %4519 = vst [vmem:[#allocation4 + $0x10] sm:$0xff] %v4259
    %4520 = vst [vmem:[#allocation4 + $0x18] sm:$0xff] %v4260
    %4522 = vrot.lane.b32.xlu0 %v4513, 96
    %v4523 = vpop.permute.xlu0 %4522
    %4525 = vst.msk [vmem:[#allocation3 - $0x6] sm:$0xc0] %vm1127, %v4523
    %4526 = vst.msk [vmem:[#allocation3 + $0x2] sm:$0x3f] %vm1129, %v4523
    %v4531 = vrot.slane %v4265, 6
    %v4532 = vrot.slane %v4266, 6
    %v4533 = vrot.slane %v4271, 6
    %v4534 = vrot.slane %v4272, 6
    %4539 = vst [vmem:[#allocation5] sm:$0x3] %v4531
    %4540 = vst [vmem:[#allocation5 + $0x8] sm:$0x3] %v4532
    %4541 = vst [vmem:[#allocation5 + $0x10] sm:$0x3] %v4533
    %4542 = vst [vmem:[#allocation5 + $0x18] sm:$0x3] %v4534
    %4543 = vst [vmem:[#allocation5] sm:$0xfc] %v4531
    %4544 = vst [vmem:[#allocation5 + $0x8] sm:$0xfc] %v4532
    %4545 = vst [vmem:[#allocation5 + $0x10] sm:$0xfc] %v4533
    %4546 = vst [vmem:[#allocation5 + $0x18] sm:$0xfc] %v4534
    %v4547 = vld [vmem:[#allocation2] sm:$0xff]
    %v4548 = vld [vmem:[#allocation3] sm:$0xff]
    %4550 = vrot.lane.b32.xlu0 %v4548, 32
    %v4551 = vpop.permute.xlu0 %4550
    %v4553 = vsel %vm306, %v4547, %v4551
    %s4554 = scalar_lea.vmem %s0, 80
    %v4555 = vld [vmem:[%s4554] sm:$0xff]
    %v4556 = vld [vmem:[%s4554 + $0x8] sm:$0xff]
    %v4558 = vsel %vm310, %v4553, 0
    %4560 = vmatprep.subr.mxu0 0.0
    %4561 = vmatpush1.msra.mxu0 0.0
    %4562 = vmatprep.subr.mxu0 0.0
    %4563 = vmatpush1.msra.mxu0 0.0
    %4564 = vmatprep.subr.mxu0 0.0
    %4565 = vmatpush1.msra.mxu0 0.0
    %4566 = vmatprep.subr.mxu0 0.0
    %4567 = vmatpush1.msra.mxu0 0.0
    %4568 = vmatprep.subr.mxu0 0.0
    %4569 = vmatpush1.msra.mxu0 0.0
    %4570 = vmatprep.subr.mxu0 0.0
    %4571 = vmatpush1.msra.mxu0 0.0
    %4572 = vmatprep.subr.mxu0 0.0
    %4573 = vmatpush1.msra.mxu0 0.0
    %4574 = vmatprep.subr.mxu0 0.0
    %4575 = vmatpush1.msra.mxu0 0.0
    %4576 = vmatprep.subr.mxu0 %v77
    %4577 = vmatpush1.msra.mxu0 %v76
    %4578 = vmatprep.subr.mxu0 %v75
    %4579 = vmatpush1.msra.mxu0 %v74
    %4580 = vmatprep.subr.mxu0 %v73
    %4581 = vmatpush1.msra.mxu0 %v72
    %4582 = vmatprep.subr.mxu0 %v71
    %4583 = vmatpush1.msra.mxu0 %v70
    %4584 = vmatprep.subr.mxu0 %v69
    %4585 = vmatpush1.msra.mxu0 %v68
    %4586 = vmatprep.subr.mxu0 %v67
    %4587 = vmatpush1.msra.mxu0 %v66
    %4588 = vmatprep.subr.mxu0 %v65
    %4589 = vmatpush1.msra.mxu0 %v64
    %4590 = vmatprep.subr.mxu0 %v63
    %4591 = vmatpush1.msra.mxu0 %v62
    %4592 = vmatprep.subr.mxu0 0.0
    %4593 = vmatpush2.msra.mxu0 0.0
    %4594 = vmatprep.subr.mxu0 0.0
    %4595 = vmatpush2.msra.mxu0 0.0
    %4596 = vmatprep.subr.mxu0 0.0
    %4597 = vmatpush2.msra.mxu0 0.0
    %4598 = vmatprep.subr.mxu0 0.0
    %4599 = vmatpush2.msra.mxu0 0.0
    %4600 = vmatprep.subr.mxu0 0.0
    %4601 = vmatpush2.msra.mxu0 0.0
    %4602 = vmatprep.subr.mxu0 0.0
    %4603 = vmatpush2.msra.mxu0 0.0
    %4604 = vmatprep.subr.mxu0 0.0
    %4605 = vmatpush2.msra.mxu0 0.0
    %4606 = vmatprep.subr.mxu0 0.0
    %4607 = vmatpush2.msra.mxu0 0.0
    %4608 = vmatprep.subr.mxu0 0.0
    %4609 = vmatpush2.msra.mxu0 0.0
    %4610 = vmatprep.subr.mxu0 0.0
    %4611 = vmatpush2.msra.mxu0 0.0
    %4612 = vmatprep.subr.mxu0 0.0
    %4613 = vmatpush2.msra.mxu0 0.0
    %4614 = vmatprep.subr.mxu0 0.0
    %4615 = vmatpush2.msra.mxu0 0.0
    %4616 = vmatprep.subr.mxu0 0.0
    %4617 = vmatpush2.msra.mxu0 0.0
    %4618 = vmatprep.subr.mxu0 0.0
    %4619 = vmatpush2.msra.mxu0 0.0
    %4620 = vmatprep.subr.mxu0 0.0
    %4621 = vmatpush2.msra.mxu0 0.0
    %4622 = vmatprep.subr.mxu0 0.0
    %4623 = vmatpush2.msra.mxu0 0.0
    %4624 = vmatprep.mubr.f32.mxu0 0.0
    %4625 = vmatmul.mubr.f32.gmra.mxu0 %v4558
    %v4626 = vpop.f32.mrf.mxu0
    %v4627 = vadd.f32 0.0, %v4626
    %v4628 = vpop.f32.mrf.mxu0
    %v4629 = vadd.f32 0.0, %v4628
    %4630 = vdwg.mxu0
    %v4631 = vadd.f32 %v4555, %v4627
    %v4632 = vadd.f32 %v4556, %v4629
    %v4633 = vxor.u32 %v4631, 2147483648
    %v4634 = vxor.u32 %v4632, 2147483648
    %v4635 = vmul.f32 %v4633, 1.442695
    %v4636 = vpow.pop %v4635
    %v4637 = vmul.f32 %v4634, 1.442695
    %v4638 = vpow.pop %v4637
    %v4639 = vadd.f32 %v4636, 1.0
    %v4640 = vadd.f32 %v4638, 1.0
    %v4641 = vrcp.pop %v4639
    %v4642 = vmul.f32 1.0, %v4641
    %v4643 = vrcp.pop %v4640
    %v4644 = vmul.f32 1.0, %v4643
    %v4645 = vtanh.pop %v4632
    %4647 = vrot.lane.b32.xlu0 %v4645, 48
    %v4648 = vpop.permute.xlu0 %4647
    %v4650 = vmul.f32 %v4642, %v4648
    %v4652 = vsel %vm405, %v4644, 0
    %4654 = vmatprep.subr.mxu0 0.0
    %4655 = vmatpush1.msra.mxu0 0.0
    %4656 = vmatprep.subr.mxu0 0.0
    %4657 = vmatpush1.msra.mxu0 0.0
    %4658 = vmatprep.subr.mxu0 0.0
    %4659 = vmatpush1.msra.mxu0 0.0
    %4660 = vmatprep.subr.mxu0 0.0
    %4661 = vmatpush1.msra.mxu0 0.0
    %4662 = vmatprep.subr.mxu0 0.0
    %4663 = vmatpush1.msra.mxu0 0.0
    %4664 = vmatprep.subr.mxu0 0.0
    %4665 = vmatpush1.msra.mxu0 0.0
    %4666 = vmatprep.subr.mxu0 0.0
    %4667 = vmatpush1.msra.mxu0 0.0
    %4668 = vmatprep.subr.mxu0 0.0
    %4669 = vmatpush1.msra.mxu0 0.0
    %4670 = vmatprep.subr.mxu0 0.0
    %4671 = vmatpush1.msra.mxu0 0.0
    %4672 = vmatprep.subr.mxu0 0.0
    %4673 = vmatpush1.msra.mxu0 0.0
    %4674 = vmatprep.subr.mxu0 0.0
    %4675 = vmatpush1.msra.mxu0 0.0
    %4676 = vmatprep.subr.mxu0 0.0
    %4677 = vmatpush1.msra.mxu0 0.0
    %4678 = vmatprep.subr.mxu0 0.0
    %4679 = vmatpush1.msra.mxu0 0.0
    %4680 = vmatprep.subr.mxu0 0.0
    %4681 = vmatpush1.msra.mxu0 0.0
    %4682 = vmatprep.subr.mxu0 %v83
    %4683 = vmatpush1.msra.mxu0 %v82
    %4684 = vmatprep.subr.mxu0 %v79
    %4685 = vmatpush1.msra.mxu0 %v78
    %4686 = vmatprep.subr.mxu0 0.0
    %4687 = vmatpush2.msra.mxu0 0.0
    %4688 = vmatprep.subr.mxu0 0.0
    %4689 = vmatpush2.msra.mxu0 0.0
    %4690 = vmatprep.subr.mxu0 0.0
    %4691 = vmatpush2.msra.mxu0 0.0
    %4692 = vmatprep.subr.mxu0 0.0
    %4693 = vmatpush2.msra.mxu0 0.0
    %4694 = vmatprep.subr.mxu0 0.0
    %4695 = vmatpush2.msra.mxu0 0.0
    %4696 = vmatprep.subr.mxu0 0.0
    %4697 = vmatpush2.msra.mxu0 0.0
    %4698 = vmatprep.subr.mxu0 0.0
    %4699 = vmatpush2.msra.mxu0 0.0
    %4700 = vmatprep.subr.mxu0 0.0
    %4701 = vmatpush2.msra.mxu0 0.0
    %4702 = vmatprep.subr.mxu0 0.0
    %4703 = vmatpush2.msra.mxu0 0.0
    %4704 = vmatprep.subr.mxu0 0.0
    %4705 = vmatpush2.msra.mxu0 0.0
    %4706 = vmatprep.subr.mxu0 0.0
    %4707 = vmatpush2.msra.mxu0 0.0
    %4708 = vmatprep.subr.mxu0 0.0
    %4709 = vmatpush2.msra.mxu0 0.0
    %4710 = vmatprep.subr.mxu0 0.0
    %4711 = vmatpush2.msra.mxu0 0.0
    %4712 = vmatprep.subr.mxu0 0.0
    %4713 = vmatpush2.msra.mxu0 0.0
    %4714 = vmatprep.subr.mxu0 0.0
    %4715 = vmatpush2.msra.mxu0 0.0
    %4716 = vmatprep.subr.mxu0 0.0
    %4717 = vmatpush2.msra.mxu0 0.0
    %4718 = vmatprep.mubr.f32.mxu0 0.0
    %4719 = vmatmul.mubr.f32.gmra.mxu0 %v4652
    %v4720 = vpop.f32.mrf.mxu0
    %v4721 = vadd.f32 0.0, %v4720
    %v4722 = vpop.f32.mrf.mxu0
    %v4723 = vadd.f32 0.0, %v4722
    %4724 = vdwg.mxu0
    %4725 = vmatprep.subr.mxu0 0.0
    %4726 = vmatpush1.msra.mxu0 0.0
    %4727 = vmatprep.subr.mxu0 0.0
    %4728 = vmatpush1.msra.mxu0 0.0
    %4729 = vmatprep.subr.mxu0 0.0
    %4730 = vmatpush1.msra.mxu0 0.0
    %4731 = vmatprep.subr.mxu0 0.0
    %4732 = vmatpush1.msra.mxu0 0.0
    %4733 = vmatprep.subr.mxu0 0.0
    %4734 = vmatpush1.msra.mxu0 0.0
    %4735 = vmatprep.subr.mxu0 0.0
    %4736 = vmatpush1.msra.mxu0 0.0
    %4737 = vmatprep.subr.mxu0 0.0
    %4738 = vmatpush1.msra.mxu0 0.0
    %4739 = vmatprep.subr.mxu0 0.0
    %4740 = vmatpush1.msra.mxu0 0.0
    %4741 = vmatprep.subr.mxu0 0.0
    %4742 = vmatpush1.msra.mxu0 0.0
    %4743 = vmatprep.subr.mxu0 0.0
    %4744 = vmatpush1.msra.mxu0 0.0
    %4745 = vmatprep.subr.mxu0 0.0
    %4746 = vmatpush1.msra.mxu0 0.0
    %4747 = vmatprep.subr.mxu0 0.0
    %4748 = vmatpush1.msra.mxu0 0.0
    %4749 = vmatprep.subr.mxu0 0.0
    %4750 = vmatpush1.msra.mxu0 0.0
    %4751 = vmatprep.subr.mxu0 0.0
    %4752 = vmatpush1.msra.mxu0 0.0
    %4753 = vmatprep.subr.mxu0 %v85
    %4754 = vmatpush1.msra.mxu0 %v84
    %4755 = vmatprep.subr.mxu0 %v81
    %4756 = vmatpush1.msra.mxu0 %v80
    %4757 = vmatprep.subr.mxu0 0.0
    %4758 = vmatpush2.msra.mxu0 0.0
    %4759 = vmatprep.subr.mxu0 0.0
    %4760 = vmatpush2.msra.mxu0 0.0
    %4761 = vmatprep.subr.mxu0 0.0
    %4762 = vmatpush2.msra.mxu0 0.0
    %4763 = vmatprep.subr.mxu0 0.0
    %4764 = vmatpush2.msra.mxu0 0.0
    %4765 = vmatprep.subr.mxu0 0.0
    %4766 = vmatpush2.msra.mxu0 0.0
    %4767 = vmatprep.subr.mxu0 0.0
    %4768 = vmatpush2.msra.mxu0 0.0
    %4769 = vmatprep.subr.mxu0 0.0
    %4770 = vmatpush2.msra.mxu0 0.0
    %4771 = vmatprep.subr.mxu0 0.0
    %4772 = vmatpush2.msra.mxu0 0.0
    %4773 = vmatprep.subr.mxu0 0.0
    %4774 = vmatpush2.msra.mxu0 0.0
    %4775 = vmatprep.subr.mxu0 0.0
    %4776 = vmatpush2.msra.mxu0 0.0
    %4777 = vmatprep.subr.mxu0 0.0
    %4778 = vmatpush2.msra.mxu0 0.0
    %4779 = vmatprep.subr.mxu0 0.0
    %4780 = vmatpush2.msra.mxu0 0.0
    %4781 = vmatprep.subr.mxu0 0.0
    %4782 = vmatpush2.msra.mxu0 0.0
    %4783 = vmatprep.subr.mxu0 0.0
    %4784 = vmatpush2.msra.mxu0 0.0
    %4785 = vmatprep.subr.mxu0 0.0
    %4786 = vmatpush2.msra.mxu0 0.0
    %4787 = vmatprep.subr.mxu0 0.0
    %4788 = vmatpush2.msra.mxu0 0.0
    %4789 = vmatprep.mubr.f32.mxu0 0.0
    %4790 = vmatmul.mubr.f32.gmra.mxu0 %v4652
    %v4791 = vpop.f32.mrf.mxu0
    %v4792 = vadd.f32 0.0, %v4791
    %v4793 = vpop.f32.mrf.mxu0
    %v4794 = vadd.f32 0.0, %v4793
    %4795 = vdwg.mxu0
    %v4796 = vsel %vm310, %v4642, %v4650
    %4797 = vmatprep.subr.mxu0 %v207
    %4798 = vmatpush1.msra.mxu0 %v206
    %4799 = vmatprep.subr.mxu0 %v199
    %4800 = vmatpush1.msra.mxu0 %v198
    %4801 = vmatprep.subr.mxu0 %v191
    %4802 = vmatpush1.msra.mxu0 %v190
    %4803 = vmatprep.subr.mxu0 %v183
    %4804 = vmatpush1.msra.mxu0 %v182
    %4805 = vmatprep.subr.mxu0 %v175
    %4806 = vmatpush1.msra.mxu0 %v174
    %4807 = vmatprep.subr.mxu0 %v167
    %4808 = vmatpush1.msra.mxu0 %v166
    %4809 = vmatprep.subr.mxu0 %v159
    %4810 = vmatpush1.msra.mxu0 %v158
    %4811 = vmatprep.subr.mxu0 %v151
    %4812 = vmatpush1.msra.mxu0 %v150
    %4813 = vmatprep.subr.mxu0 %v143
    %4814 = vmatpush1.msra.mxu0 %v142
    %4815 = vmatprep.subr.mxu0 %v135
    %4816 = vmatpush1.msra.mxu0 %v134
    %4817 = vmatprep.subr.mxu0 %v127
    %4818 = vmatpush1.msra.mxu0 %v126
    %4819 = vmatprep.subr.mxu0 %v119
    %4820 = vmatpush1.msra.mxu0 %v118
    %4821 = vmatprep.subr.mxu0 %v111
    %4822 = vmatpush1.msra.mxu0 %v110
    %4823 = vmatprep.subr.mxu0 %v103
    %4824 = vmatpush1.msra.mxu0 %v102
    %4825 = vmatprep.subr.mxu0 %v95
    %4826 = vmatpush1.msra.mxu0 %v94
    %4827 = vmatprep.subr.mxu0 %v87
    %4828 = vmatpush1.msra.mxu0 %v86
    %4829 = vmatprep.subr.mxu0 0.0
    %4830 = vmatpush2.msra.mxu0 0.0
    %4831 = vmatprep.subr.mxu0 0.0
    %4832 = vmatpush2.msra.mxu0 0.0
    %4833 = vmatprep.subr.mxu0 0.0
    %4834 = vmatpush2.msra.mxu0 0.0
    %4835 = vmatprep.subr.mxu0 0.0
    %4836 = vmatpush2.msra.mxu0 0.0
    %4837 = vmatprep.subr.mxu0 0.0
    %4838 = vmatpush2.msra.mxu0 0.0
    %4839 = vmatprep.subr.mxu0 0.0
    %4840 = vmatpush2.msra.mxu0 0.0
    %4841 = vmatprep.subr.mxu0 0.0
    %4842 = vmatpush2.msra.mxu0 0.0
    %4843 = vmatprep.subr.mxu0 0.0
    %4844 = vmatpush2.msra.mxu0 0.0
    %4845 = vmatprep.subr.mxu0 0.0
    %4846 = vmatpush2.msra.mxu0 0.0
    %4847 = vmatprep.subr.mxu0 0.0
    %4848 = vmatpush2.msra.mxu0 0.0
    %4849 = vmatprep.subr.mxu0 0.0
    %4850 = vmatpush2.msra.mxu0 0.0
    %4851 = vmatprep.subr.mxu0 0.0
    %4852 = vmatpush2.msra.mxu0 0.0
    %4853 = vmatprep.subr.mxu0 0.0
    %4854 = vmatpush2.msra.mxu0 0.0
    %4855 = vmatprep.subr.mxu0 0.0
    %4856 = vmatpush2.msra.mxu0 0.0
    %4857 = vmatprep.subr.mxu0 0.0
    %4858 = vmatpush2.msra.mxu0 0.0
    %4859 = vmatprep.subr.mxu0 0.0
    %4860 = vmatpush2.msra.mxu0 0.0
    %4861 = vmatprep.mubr.f32.mxu0 0.0
    %4862 = vmatmul.mubr.f32.gmra.mxu0 %v4796
    %v4863 = vpop.f32.mrf.mxu0
    %v4864 = vadd.f32 0.0, %v4863
    %v4865 = vpop.f32.mrf.mxu0
    %v4866 = vadd.f32 0.0, %v4865
    %4867 = vdwg.mxu0
    %4868 = vmatprep.subr.mxu0 %v209
    %4869 = vmatpush1.msra.mxu0 %v208
    %4870 = vmatprep.subr.mxu0 %v201
    %4871 = vmatpush1.msra.mxu0 %v200
    %4872 = vmatprep.subr.mxu0 %v193
    %4873 = vmatpush1.msra.mxu0 %v192
    %4874 = vmatprep.subr.mxu0 %v185
    %4875 = vmatpush1.msra.mxu0 %v184
    %4876 = vmatprep.subr.mxu0 %v177
    %4877 = vmatpush1.msra.mxu0 %v176
    %4878 = vmatprep.subr.mxu0 %v169
    %4879 = vmatpush1.msra.mxu0 %v168
    %4880 = vmatprep.subr.mxu0 %v161
    %4881 = vmatpush1.msra.mxu0 %v160
    %4882 = vmatprep.subr.mxu0 %v153
    %4883 = vmatpush1.msra.mxu0 %v152
    %4884 = vmatprep.subr.mxu0 %v145
    %4885 = vmatpush1.msra.mxu0 %v144
    %4886 = vmatprep.subr.mxu0 %v137
    %4887 = vmatpush1.msra.mxu0 %v136
    %4888 = vmatprep.subr.mxu0 %v129
    %4889 = vmatpush1.msra.mxu0 %v128
    %4890 = vmatprep.subr.mxu0 %v121
    %4891 = vmatpush1.msra.mxu0 %v120
    %4892 = vmatprep.subr.mxu0 %v113
    %4893 = vmatpush1.msra.mxu0 %v112
    %4894 = vmatprep.subr.mxu0 %v105
    %4895 = vmatpush1.msra.mxu0 %v104
    %4896 = vmatprep.subr.mxu0 %v97
    %4897 = vmatpush1.msra.mxu0 %v96
    %4898 = vmatprep.subr.mxu0 %v89
    %4899 = vmatpush1.msra.mxu0 %v88
    %4900 = vmatprep.subr.mxu0 0.0
    %4901 = vmatpush2.msra.mxu0 0.0
    %4902 = vmatprep.subr.mxu0 0.0
    %4903 = vmatpush2.msra.mxu0 0.0
    %4904 = vmatprep.subr.mxu0 0.0
    %4905 = vmatpush2.msra.mxu0 0.0
    %4906 = vmatprep.subr.mxu0 0.0
    %4907 = vmatpush2.msra.mxu0 0.0
    %4908 = vmatprep.subr.mxu0 0.0
    %4909 = vmatpush2.msra.mxu0 0.0
    %4910 = vmatprep.subr.mxu0 0.0
    %4911 = vmatpush2.msra.mxu0 0.0
    %4912 = vmatprep.subr.mxu0 0.0
    %4913 = vmatpush2.msra.mxu0 0.0
    %4914 = vmatprep.subr.mxu0 0.0
    %4915 = vmatpush2.msra.mxu0 0.0
    %4916 = vmatprep.subr.mxu0 0.0
    %4917 = vmatpush2.msra.mxu0 0.0
    %4918 = vmatprep.subr.mxu0 0.0
    %4919 = vmatpush2.msra.mxu0 0.0
    %4920 = vmatprep.subr.mxu0 0.0
    %4921 = vmatpush2.msra.mxu0 0.0
    %4922 = vmatprep.subr.mxu0 0.0
    %4923 = vmatpush2.msra.mxu0 0.0
    %4924 = vmatprep.subr.mxu0 0.0
    %4925 = vmatpush2.msra.mxu0 0.0
    %4926 = vmatprep.subr.mxu0 0.0
    %4927 = vmatpush2.msra.mxu0 0.0
    %4928 = vmatprep.subr.mxu0 0.0
    %4929 = vmatpush2.msra.mxu0 0.0
    %4930 = vmatprep.subr.mxu0 0.0
    %4931 = vmatpush2.msra.mxu0 0.0
    %4932 = vmatprep.mubr.f32.mxu0 0.0
    %4933 = vmatmul.mubr.f32.gmra.mxu0 %v4796
    %v4934 = vpop.f32.mrf.mxu0
    %v4935 = vadd.f32 0.0, %v4934
    %v4936 = vpop.f32.mrf.mxu0
    %v4937 = vadd.f32 0.0, %v4936
    %4938 = vdwg.mxu0
    %4939 = vmatprep.subr.mxu0 %v211
    %4940 = vmatpush1.msra.mxu0 %v210
    %4941 = vmatprep.subr.mxu0 %v203
    %4942 = vmatpush1.msra.mxu0 %v202
    %4943 = vmatprep.subr.mxu0 %v195
    %4944 = vmatpush1.msra.mxu0 %v194
    %4945 = vmatprep.subr.mxu0 %v187
    %4946 = vmatpush1.msra.mxu0 %v186
    %4947 = vmatprep.subr.mxu0 %v179
    %4948 = vmatpush1.msra.mxu0 %v178
    %4949 = vmatprep.subr.mxu0 %v171
    %4950 = vmatpush1.msra.mxu0 %v170
    %4951 = vmatprep.subr.mxu0 %v163
    %4952 = vmatpush1.msra.mxu0 %v162
    %4953 = vmatprep.subr.mxu0 %v155
    %4954 = vmatpush1.msra.mxu0 %v154
    %4955 = vmatprep.subr.mxu0 %v147
    %4956 = vmatpush1.msra.mxu0 %v146
    %4957 = vmatprep.subr.mxu0 %v139
    %4958 = vmatpush1.msra.mxu0 %v138
    %4959 = vmatprep.subr.mxu0 %v131
    %4960 = vmatpush1.msra.mxu0 %v130
    %4961 = vmatprep.subr.mxu0 %v123
    %4962 = vmatpush1.msra.mxu0 %v122
    %4963 = vmatprep.subr.mxu0 %v115
    %4964 = vmatpush1.msra.mxu0 %v114
    %4965 = vmatprep.subr.mxu0 %v107
    %4966 = vmatpush1.msra.mxu0 %v106
    %4967 = vmatprep.subr.mxu0 %v99
    %4968 = vmatpush1.msra.mxu0 %v98
    %4969 = vmatprep.subr.mxu0 %v91
    %4970 = vmatpush1.msra.mxu0 %v90
    %4971 = vmatprep.subr.mxu0 0.0
    %4972 = vmatpush2.msra.mxu0 0.0
    %4973 = vmatprep.subr.mxu0 0.0
    %4974 = vmatpush2.msra.mxu0 0.0
    %4975 = vmatprep.subr.mxu0 0.0
    %4976 = vmatpush2.msra.mxu0 0.0
    %4977 = vmatprep.subr.mxu0 0.0
    %4978 = vmatpush2.msra.mxu0 0.0
    %4979 = vmatprep.subr.mxu0 0.0
    %4980 = vmatpush2.msra.mxu0 0.0
    %4981 = vmatprep.subr.mxu0 0.0
    %4982 = vmatpush2.msra.mxu0 0.0
    %4983 = vmatprep.subr.mxu0 0.0
    %4984 = vmatpush2.msra.mxu0 0.0
    %4985 = vmatprep.subr.mxu0 0.0
    %4986 = vmatpush2.msra.mxu0 0.0
    %4987 = vmatprep.subr.mxu0 0.0
    %4988 = vmatpush2.msra.mxu0 0.0
    %4989 = vmatprep.subr.mxu0 0.0
    %4990 = vmatpush2.msra.mxu0 0.0
    %4991 = vmatprep.subr.mxu0 0.0
    %4992 = vmatpush2.msra.mxu0 0.0
    %4993 = vmatprep.subr.mxu0 0.0
    %4994 = vmatpush2.msra.mxu0 0.0
    %4995 = vmatprep.subr.mxu0 0.0
    %4996 = vmatpush2.msra.mxu0 0.0
    %4997 = vmatprep.subr.mxu0 0.0
    %4998 = vmatpush2.msra.mxu0 0.0
    %4999 = vmatprep.subr.mxu0 0.0
    %5000 = vmatpush2.msra.mxu0 0.0
    %5001 = vmatprep.subr.mxu0 0.0
    %5002 = vmatpush2.msra.mxu0 0.0
    %5003 = vmatprep.mubr.f32.mxu0 0.0
    %5004 = vmatmul.mubr.f32.gmra.mxu0 %v4796
    %v5005 = vpop.f32.mrf.mxu0
    %v5006 = vadd.f32 0.0, %v5005
    %v5007 = vpop.f32.mrf.mxu0
    %v5008 = vadd.f32 0.0, %v5007
    %5009 = vdwg.mxu0
    %5010 = vmatprep.subr.mxu0 %v213
    %5011 = vmatpush1.msra.mxu0 %v212
    %5012 = vmatprep.subr.mxu0 %v205
    %5013 = vmatpush1.msra.mxu0 %v204
    %5014 = vmatprep.subr.mxu0 %v197
    %5015 = vmatpush1.msra.mxu0 %v196
    %5016 = vmatprep.subr.mxu0 %v189
    %5017 = vmatpush1.msra.mxu0 %v188
    %5018 = vmatprep.subr.mxu0 %v181
    %5019 = vmatpush1.msra.mxu0 %v180
    %5020 = vmatprep.subr.mxu0 %v173
    %5021 = vmatpush1.msra.mxu0 %v172
    %5022 = vmatprep.subr.mxu0 %v165
    %5023 = vmatpush1.msra.mxu0 %v164
    %5024 = vmatprep.subr.mxu0 %v157
    %5025 = vmatpush1.msra.mxu0 %v156
    %5026 = vmatprep.subr.mxu0 %v149
    %5027 = vmatpush1.msra.mxu0 %v148
    %5028 = vmatprep.subr.mxu0 %v141
    %5029 = vmatpush1.msra.mxu0 %v140
    %5030 = vmatprep.subr.mxu0 %v133
    %5031 = vmatpush1.msra.mxu0 %v132
    %5032 = vmatprep.subr.mxu0 %v125
    %5033 = vmatpush1.msra.mxu0 %v124
    %5034 = vmatprep.subr.mxu0 %v117
    %5035 = vmatpush1.msra.mxu0 %v116
    %5036 = vmatprep.subr.mxu0 %v109
    %5037 = vmatpush1.msra.mxu0 %v108
    %5038 = vmatprep.subr.mxu0 %v101
    %5039 = vmatpush1.msra.mxu0 %v100
    %5040 = vmatprep.subr.mxu0 %v93
    %5041 = vmatpush1.msra.mxu0 %v92
    %5042 = vmatprep.subr.mxu0 0.0
    %5043 = vmatpush2.msra.mxu0 0.0
    %5044 = vmatprep.subr.mxu0 0.0
    %5045 = vmatpush2.msra.mxu0 0.0
    %5046 = vmatprep.subr.mxu0 0.0
    %5047 = vmatpush2.msra.mxu0 0.0
    %5048 = vmatprep.subr.mxu0 0.0
    %5049 = vmatpush2.msra.mxu0 0.0
    %5050 = vmatprep.subr.mxu0 0.0
    %5051 = vmatpush2.msra.mxu0 0.0
    %5052 = vmatprep.subr.mxu0 0.0
    %5053 = vmatpush2.msra.mxu0 0.0
    %5054 = vmatprep.subr.mxu0 0.0
    %5055 = vmatpush2.msra.mxu0 0.0
    %5056 = vmatprep.subr.mxu0 0.0
    %5057 = vmatpush2.msra.mxu0 0.0
    %5058 = vmatprep.subr.mxu0 0.0
    %5059 = vmatpush2.msra.mxu0 0.0
    %5060 = vmatprep.subr.mxu0 0.0
    %5061 = vmatpush2.msra.mxu0 0.0
    %5062 = vmatprep.subr.mxu0 0.0
    %5063 = vmatpush2.msra.mxu0 0.0
    %5064 = vmatprep.subr.mxu0 0.0
    %5065 = vmatpush2.msra.mxu0 0.0
    %5066 = vmatprep.subr.mxu0 0.0
    %5067 = vmatpush2.msra.mxu0 0.0
    %5068 = vmatprep.subr.mxu0 0.0
    %5069 = vmatpush2.msra.mxu0 0.0
    %5070 = vmatprep.subr.mxu0 0.0
    %5071 = vmatpush2.msra.mxu0 0.0
    %5072 = vmatprep.subr.mxu0 0.0
    %5073 = vmatpush2.msra.mxu0 0.0
    %5074 = vmatprep.mubr.f32.mxu0 0.0
    %5075 = vmatmul.mubr.f32.gmra.mxu0 %v4796
    %v5076 = vpop.f32.mrf.mxu0
    %v5077 = vadd.f32 0.0, %v5076
    %v5078 = vpop.f32.mrf.mxu0
    %v5079 = vadd.f32 0.0, %v5078
    %5080 = vdwg.mxu0
    %s5081 = scalar_lea.vmem %s1, 160
    %v5082 = vld [vmem:[%s5081] sm:$0xff]
    %v5083 = vld [vmem:[%s5081 + $0x8] sm:$0xff]
    %v5084 = vld [vmem:[%s5081 + $0x10] sm:$0xff]
    %v5085 = vld [vmem:[%s5081 + $0x18] sm:$0xff]
    %v5086 = vld [vmem:[#allocation4] sm:$0xff]
    %v5087 = vld [vmem:[#allocation4 + $0x8] sm:$0xff]
    %v5088 = vld [vmem:[#allocation4 + $0x10] sm:$0xff]
    %v5089 = vld [vmem:[#allocation4 + $0x18] sm:$0xff]
    %v5090 = vld [vmem:[#allocation5] sm:$0xff]
    %v5091 = vld [vmem:[#allocation5 + $0x8] sm:$0xff]
    %v5092 = vld [vmem:[#allocation5 + $0x10] sm:$0xff]
    %v5093 = vld [vmem:[#allocation5 + $0x18] sm:$0xff]
    %v5094 = vmul.f32 %v4721, %v4864
    %v5095 = vmul.f32 %v4723, %v4866
    %v5096 = vmul.f32 %v4792, %v4935
    %v5097 = vmul.f32 %v4794, %v4937
    %v5098 = vmul.f32 %v5094, %v5086
    %v5099 = vmul.f32 %v5095, %v5087
    %v5100 = vmul.f32 %v5006, %v5082
    %v5101 = vmul.f32 %v5008, %v5083
    %v5102 = vadd.f32 %v5098, %v5100
    %v5103 = vadd.f32 %v5099, %v5101
    %v5104 = vmul.f32 %v5094, %v5088
    %v5105 = vmul.f32 %v5095, %v5089
    %v5106 = vmul.f32 %v5006, %v5084
    %v5107 = vmul.f32 %v5008, %v5085
    %v5108 = vadd.f32 %v5104, %v5106
    %v5109 = vadd.f32 %v5105, %v5107
    %v5110 = vmul.f32 %v5096, %v5090
    %v5111 = vmul.f32 %v5097, %v5091
    %v5112 = vmul.f32 %v5077, %v5082
    %v5113 = vmul.f32 %v5079, %v5083
    %v5114 = vadd.f32 %v5110, %v5112
    %v5115 = vadd.f32 %v5111, %v5113
    %v5116 = vmul.f32 %v5096, %v5092
    %v5117 = vmul.f32 %v5097, %v5093
    %v5118 = vmul.f32 %v5077, %v5084
    %v5119 = vmul.f32 %v5079, %v5085
    %v5120 = vadd.f32 %v5116, %v5118
    %v5121 = vadd.f32 %v5117, %v5119
    %v5122 = vmul.f32 %v5102, %v5102
    %v5123 = vmul.f32 %v5103, %v5103
    %v5124 = vmul.f32 %v5108, %v5108
    %v5125 = vmul.f32 %v5109, %v5109
    %v5126 = vadd.f32 %v5122, %v5124
    %v5127 = vadd.f32 %v5123, %v5125
    %v5128 = vmul.f32 %v5114, %v5114
    %v5129 = vmul.f32 %v5115, %v5115
    %v5130 = vmul.f32 %v5120, %v5120
    %v5131 = vmul.f32 %v5121, %v5121
    %v5132 = vadd.f32 %v5128, %v5130
    %v5133 = vadd.f32 %v5129, %v5131
    %5134 = vmatprep.subr.mxu0 0.0
    %5135 = vmatpush1.msra.mxu0 %v229
    %5136 = vmatprep.subr.mxu0 0.0
    %5137 = vmatpush1.msra.mxu0 %v228
    %5138 = vmatprep.subr.mxu0 0.0
    %5139 = vmatpush1.msra.mxu0 %v227
    %5140 = vmatprep.subr.mxu0 0.0
    %5141 = vmatpush1.msra.mxu0 %v226
    %5142 = vmatprep.subr.mxu0 0.0
    %5143 = vmatpush1.msra.mxu0 %v225
    %5144 = vmatprep.subr.mxu0 0.0
    %5145 = vmatpush1.msra.mxu0 %v224
    %5146 = vmatprep.subr.mxu0 0.0
    %5147 = vmatpush1.msra.mxu0 %v223
    %5148 = vmatprep.subr.mxu0 0.0
    %5149 = vmatpush1.msra.mxu0 %v222
    %5150 = vmatprep.subr.mxu0 0.0
    %5151 = vmatpush1.msra.mxu0 %v221
    %5152 = vmatprep.subr.mxu0 0.0
    %5153 = vmatpush1.msra.mxu0 %v220
    %5154 = vmatprep.subr.mxu0 0.0
    %5155 = vmatpush1.msra.mxu0 %v219
    %5156 = vmatprep.subr.mxu0 0.0
    %5157 = vmatpush1.msra.mxu0 %v218
    %5158 = vmatprep.subr.mxu0 0.0
    %5159 = vmatpush1.msra.mxu0 %v217
    %5160 = vmatprep.subr.mxu0 0.0
    %5161 = vmatpush1.msra.mxu0 %v216
    %5162 = vmatprep.subr.mxu0 0.0
    %5163 = vmatpush1.msra.mxu0 %v215
    %5164 = vmatprep.subr.mxu0 0.0
    %5165 = vmatpush1.msra.mxu0 %v214
    %5166 = vmatprep.subr.mxu0 0.0
    %5167 = vmatpush2.msra.mxu0 %v245
    %5168 = vmatprep.subr.mxu0 0.0
    %5169 = vmatpush2.msra.mxu0 %v244
    %5170 = vmatprep.subr.mxu0 0.0
    %5171 = vmatpush2.msra.mxu0 %v243
    %5172 = vmatprep.subr.mxu0 0.0
    %5173 = vmatpush2.msra.mxu0 %v242
    %5174 = vmatprep.subr.mxu0 0.0
    %5175 = vmatpush2.msra.mxu0 %v241
    %5176 = vmatprep.subr.mxu0 0.0
    %5177 = vmatpush2.msra.mxu0 %v240
    %5178 = vmatprep.subr.mxu0 0.0
    %5179 = vmatpush2.msra.mxu0 %v239
    %5180 = vmatprep.subr.mxu0 0.0
    %5181 = vmatpush2.msra.mxu0 %v238
    %5182 = vmatprep.subr.mxu0 0.0
    %5183 = vmatpush2.msra.mxu0 %v237
    %5184 = vmatprep.subr.mxu0 0.0
    %5185 = vmatpush2.msra.mxu0 %v236
    %5186 = vmatprep.subr.mxu0 0.0
    %5187 = vmatpush2.msra.mxu0 %v235
    %5188 = vmatprep.subr.mxu0 0.0
    %5189 = vmatpush2.msra.mxu0 %v234
    %5190 = vmatprep.subr.mxu0 0.0
    %5191 = vmatpush2.msra.mxu0 %v233
    %5192 = vmatprep.subr.mxu0 0.0
    %5193 = vmatpush2.msra.mxu0 %v232
    %5194 = vmatprep.subr.mxu0 0.0
    %5195 = vmatpush2.msra.mxu0 %v231
    %5196 = vmatprep.subr.mxu0 0.0
    %5197 = vmatpush2.msra.mxu0 %v230
    %5198 = vmatprep.mubr.f32.mxu0 %v5127
    %5199 = vmatmul.mubr.f32.gmra.mxu0 %v5126
    %v5200 = vpop.f32.mrf.mxu0
    %v5201 = vadd.f32 %v291, %v5200
    %v5202 = vpop.f32.mrf.mxu0
    %5203 = vdwg.mxu0
    %5204 = vmatprep.subr.mxu0 0.0
    %5205 = vmatpush1.msra.mxu0 %v261
    %5206 = vmatprep.subr.mxu0 0.0
    %5207 = vmatpush1.msra.mxu0 %v260
    %5208 = vmatprep.subr.mxu0 0.0
    %5209 = vmatpush1.msra.mxu0 %v259
    %5210 = vmatprep.subr.mxu0 0.0
    %5211 = vmatpush1.msra.mxu0 %v258
    %5212 = vmatprep.subr.mxu0 0.0
    %5213 = vmatpush1.msra.mxu0 %v257
    %5214 = vmatprep.subr.mxu0 0.0
    %5215 = vmatpush1.msra.mxu0 %v256
    %5216 = vmatprep.subr.mxu0 0.0
    %5217 = vmatpush1.msra.mxu0 %v255
    %5218 = vmatprep.subr.mxu0 0.0
    %5219 = vmatpush1.msra.mxu0 %v254
    %5220 = vmatprep.subr.mxu0 0.0
    %5221 = vmatpush1.msra.mxu0 %v253
    %5222 = vmatprep.subr.mxu0 0.0
    %5223 = vmatpush1.msra.mxu0 %v252
    %5224 = vmatprep.subr.mxu0 0.0
    %5225 = vmatpush1.msra.mxu0 %v251
    %5226 = vmatprep.subr.mxu0 0.0
    %5227 = vmatpush1.msra.mxu0 %v250
    %5228 = vmatprep.subr.mxu0 0.0
    %5229 = vmatpush1.msra.mxu0 %v249
    %5230 = vmatprep.subr.mxu0 0.0
    %5231 = vmatpush1.msra.mxu0 %v248
    %5232 = vmatprep.subr.mxu0 0.0
    %5233 = vmatpush1.msra.mxu0 %v247
    %5234 = vmatprep.subr.mxu0 0.0
    %5235 = vmatpush1.msra.mxu0 %v246
    %5236 = vmatprep.subr.mxu0 0.0
    %5237 = vmatpush2.msra.mxu0 %v277
    %5238 = vmatprep.subr.mxu0 0.0
    %5239 = vmatpush2.msra.mxu0 %v276
    %5240 = vmatprep.subr.mxu0 0.0
    %5241 = vmatpush2.msra.mxu0 %v275
    %5242 = vmatprep.subr.mxu0 0.0
    %5243 = vmatpush2.msra.mxu0 %v274
    %5244 = vmatprep.subr.mxu0 0.0
    %5245 = vmatpush2.msra.mxu0 %v273
    %5246 = vmatprep.subr.mxu0 0.0
    %5247 = vmatpush2.msra.mxu0 %v272
    %5248 = vmatprep.subr.mxu0 0.0
    %5249 = vmatpush2.msra.mxu0 %v271
    %5250 = vmatprep.subr.mxu0 0.0
    %5251 = vmatpush2.msra.mxu0 %v270
    %5252 = vmatprep.subr.mxu0 0.0
    %5253 = vmatpush2.msra.mxu0 %v269
    %5254 = vmatprep.subr.mxu0 0.0
    %5255 = vmatpush2.msra.mxu0 %v268
    %5256 = vmatprep.subr.mxu0 0.0
    %5257 = vmatpush2.msra.mxu0 %v267
    %5258 = vmatprep.subr.mxu0 0.0
    %5259 = vmatpush2.msra.mxu0 %v266
    %5260 = vmatprep.subr.mxu0 0.0
    %5261 = vmatpush2.msra.mxu0 %v265
    %5262 = vmatprep.subr.mxu0 0.0
    %5263 = vmatpush2.msra.mxu0 %v264
    %5264 = vmatprep.subr.mxu0 0.0
    %5265 = vmatpush2.msra.mxu0 %v263
    %5266 = vmatprep.subr.mxu0 0.0
    %5267 = vmatpush2.msra.mxu0 %v262
    %5268 = vmatprep.mubr.f32.mxu0 %v5133
    %5269 = vmatmul.mubr.f32.gmra.mxu0 %v5132
    %v5270 = vpop.f32.mrf.mxu0
    %v5271 = vadd.f32 %v5201, %v5270
    %v5272 = vpop.f32.mrf.mxu0
    %5273 = vdwg.mxu0
    %v5274 = vtanh.pop %v5271
    %v5276 = vsel %vm310, %v5274, 0
    %5278 = vmatprep.subr.mxu0 0.0
    %5279 = vmatpush1.msra.mxu0 0.0
    %5280 = vmatprep.subr.mxu0 0.0
    %5281 = vmatpush1.msra.mxu0 0.0
    %5282 = vmatprep.subr.mxu0 0.0
    %5283 = vmatpush1.msra.mxu0 0.0
    %5284 = vmatprep.subr.mxu0 0.0
    %5285 = vmatpush1.msra.mxu0 0.0
    %5286 = vmatprep.subr.mxu0 0.0
    %5287 = vmatpush1.msra.mxu0 0.0
    %5288 = vmatprep.subr.mxu0 0.0
    %5289 = vmatpush1.msra.mxu0 0.0
    %5290 = vmatprep.subr.mxu0 0.0
    %5291 = vmatpush1.msra.mxu0 0.0
    %5292 = vmatprep.subr.mxu0 0.0
    %5293 = vmatpush1.msra.mxu0 0.0
    %5294 = vmatprep.subr.mxu0 0.0
    %5295 = vmatpush1.msra.mxu0 %v285
    %5296 = vmatprep.subr.mxu0 0.0
    %5297 = vmatpush1.msra.mxu0 %v284
    %5298 = vmatprep.subr.mxu0 0.0
    %5299 = vmatpush1.msra.mxu0 %v283
    %5300 = vmatprep.subr.mxu0 0.0
    %5301 = vmatpush1.msra.mxu0 %v282
    %5302 = vmatprep.subr.mxu0 0.0
    %5303 = vmatpush1.msra.mxu0 %v281
    %5304 = vmatprep.subr.mxu0 0.0
    %5305 = vmatpush1.msra.mxu0 %v280
    %5306 = vmatprep.subr.mxu0 0.0
    %5307 = vmatpush1.msra.mxu0 %v279
    %5308 = vmatprep.subr.mxu0 0.0
    %5309 = vmatpush1.msra.mxu0 %v278
    %5310 = vmatprep.subr.mxu0 0.0
    %5311 = vmatpush2.msra.mxu0 0.0
    %5312 = vmatprep.subr.mxu0 0.0
    %5313 = vmatpush2.msra.mxu0 0.0
    %5314 = vmatprep.subr.mxu0 0.0
    %5315 = vmatpush2.msra.mxu0 0.0
    %5316 = vmatprep.subr.mxu0 0.0
    %5317 = vmatpush2.msra.mxu0 0.0
    %5318 = vmatprep.subr.mxu0 0.0
    %5319 = vmatpush2.msra.mxu0 0.0
    %5320 = vmatprep.subr.mxu0 0.0
    %5321 = vmatpush2.msra.mxu0 0.0
    %5322 = vmatprep.subr.mxu0 0.0
    %5323 = vmatpush2.msra.mxu0 0.0
    %5324 = vmatprep.subr.mxu0 0.0
    %5325 = vmatpush2.msra.mxu0 0.0
    %5326 = vmatprep.subr.mxu0 0.0
    %5327 = vmatpush2.msra.mxu0 0.0
    %5328 = vmatprep.subr.mxu0 0.0
    %5329 = vmatpush2.msra.mxu0 0.0
    %5330 = vmatprep.subr.mxu0 0.0
    %5331 = vmatpush2.msra.mxu0 0.0
    %5332 = vmatprep.subr.mxu0 0.0
    %5333 = vmatpush2.msra.mxu0 0.0
    %5334 = vmatprep.subr.mxu0 0.0
    %5335 = vmatpush2.msra.mxu0 0.0
    %5336 = vmatprep.subr.mxu0 0.0
    %5337 = vmatpush2.msra.mxu0 0.0
    %5338 = vmatprep.subr.mxu0 0.0
    %5339 = vmatpush2.msra.mxu0 0.0
    %5340 = vmatprep.subr.mxu0 0.0
    %5341 = vmatpush2.msra.mxu0 0.0
    %5342 = vmatprep.mubr.f32.mxu0 0.0
    %5343 = vmatmul.mubr.f32.gmra.mxu0 %v5276
    %v5344 = vpop.f32.mrf.mxu0
    %v5345 = vadd.f32 %v298, %v5344
    %v5346 = vpop.f32.mrf.mxu0
    %5347 = vdwg.mxu0
    %v5348 = vsub.f32 1.0, %v4642
    %v5349 = vmul.f32 %v5348, %v4553
    %5350 = vrot.lane.b32.xlu0 %v4645, 112
    %v5351 = vpop.permute.xlu0 %5350
    %v5353 = vmul.f32 %v4642, %v5351
    %v5354 = vadd.f32 %v5349, %v5353
    %v5355 = vadd.f32 %v5354, %v5345
    %v5356 = vxor.u32 %v5355, 2147483648
    %v5357 = vmul.f32 %v5356, 1.442695
    %v5358 = vpow.pop %v5357
    %v5359 = vadd.f32 %v5358, 1.0
    %v5360 = vrcp.pop %v5359
    %v5361 = vmul.f32 1.0, %v5360
    %v5362 = vmul.f32 %v5361, %v5274
    %s5363 = scalar_lea.vmem [#allocation9], 40
    %5364 = vst.msk [vmem:[%s5363] sm:$0xff] %vm310, %v5362
    %5365 = vst.msk [vmem:[#allocation2] sm:$0xff] %vm306, %v5362
    %5366 = vst [vmem:[#allocation4] sm:$0xff] %v5102
    %5367 = vst [vmem:[#allocation4 + $0x8] sm:$0xff] %v5103
    %5368 = vst [vmem:[#allocation4 + $0x10] sm:$0xff] %v5108
    %5369 = vst [vmem:[#allocation4 + $0x18] sm:$0xff] %v5109
    %5371 = vrot.lane.b32.xlu0 %v5362, 96
    %v5372 = vpop.permute.xlu0 %5371
    %5374 = vst.msk [vmem:[#allocation3 - $0x6] sm:$0xc0] %vm1127, %v5372
    %5375 = vst.msk [vmem:[#allocation3 + $0x2] sm:$0x3f] %vm1129, %v5372
    %v5380 = vrot.slane %v5114, 6
    %v5381 = vrot.slane %v5115, 6
    %v5382 = vrot.slane %v5120, 6
    %v5383 = vrot.slane %v5121, 6
    %5388 = vst [vmem:[#allocation5] sm:$0x3] %v5380
    %5389 = vst [vmem:[#allocation5 + $0x8] sm:$0x3] %v5381
    %5390 = vst [vmem:[#allocation5 + $0x10] sm:$0x3] %v5382
    %5391 = vst [vmem:[#allocation5 + $0x18] sm:$0x3] %v5383
    %5392 = vst [vmem:[#allocation5] sm:$0xfc] %v5380
    %5393 = vst [vmem:[#allocation5 + $0x8] sm:$0xfc] %v5381
    %5394 = vst [vmem:[#allocation5 + $0x10] sm:$0xfc] %v5382
    %5395 = vst [vmem:[#allocation5 + $0x18] sm:$0xfc] %v5383
    %v5396 = vld [vmem:[#allocation2] sm:$0xff]
    %v5397 = vld [vmem:[#allocation3] sm:$0xff]
    %5399 = vrot.lane.b32.xlu0 %v5397, 32
    %v5400 = vpop.permute.xlu0 %5399
    %v5402 = vsel %vm306, %v5396, %v5400
    %s5403 = scalar_lea.vmem %s0, 96
    %v5404 = vld [vmem:[%s5403] sm:$0xff]
    %v5405 = vld [vmem:[%s5403 + $0x8] sm:$0xff]
    %v5407 = vsel %vm310, %v5402, 0
    %5409 = vmatprep.subr.mxu0 0.0
    %5410 = vmatpush1.msra.mxu0 0.0
    %5411 = vmatprep.subr.mxu0 0.0
    %5412 = vmatpush1.msra.mxu0 0.0
    %5413 = vmatprep.subr.mxu0 0.0
    %5414 = vmatpush1.msra.mxu0 0.0
    %5415 = vmatprep.subr.mxu0 0.0
    %5416 = vmatpush1.msra.mxu0 0.0
    %5417 = vmatprep.subr.mxu0 0.0
    %5418 = vmatpush1.msra.mxu0 0.0
    %5419 = vmatprep.subr.mxu0 0.0
    %5420 = vmatpush1.msra.mxu0 0.0
    %5421 = vmatprep.subr.mxu0 0.0
    %5422 = vmatpush1.msra.mxu0 0.0
    %5423 = vmatprep.subr.mxu0 0.0
    %5424 = vmatpush1.msra.mxu0 0.0
    %5425 = vmatprep.subr.mxu0 %v77
    %5426 = vmatpush1.msra.mxu0 %v76
    %5427 = vmatprep.subr.mxu0 %v75
    %5428 = vmatpush1.msra.mxu0 %v74
    %5429 = vmatprep.subr.mxu0 %v73
    %5430 = vmatpush1.msra.mxu0 %v72
    %5431 = vmatprep.subr.mxu0 %v71
    %5432 = vmatpush1.msra.mxu0 %v70
    %5433 = vmatprep.subr.mxu0 %v69
    %5434 = vmatpush1.msra.mxu0 %v68
    %5435 = vmatprep.subr.mxu0 %v67
    %5436 = vmatpush1.msra.mxu0 %v66
    %5437 = vmatprep.subr.mxu0 %v65
    %5438 = vmatpush1.msra.mxu0 %v64
    %5439 = vmatprep.subr.mxu0 %v63
    %5440 = vmatpush1.msra.mxu0 %v62
    %5441 = vmatprep.subr.mxu0 0.0
    %5442 = vmatpush2.msra.mxu0 0.0
    %5443 = vmatprep.subr.mxu0 0.0
    %5444 = vmatpush2.msra.mxu0 0.0
    %5445 = vmatprep.subr.mxu0 0.0
    %5446 = vmatpush2.msra.mxu0 0.0
    %5447 = vmatprep.subr.mxu0 0.0
    %5448 = vmatpush2.msra.mxu0 0.0
    %5449 = vmatprep.subr.mxu0 0.0
    %5450 = vmatpush2.msra.mxu0 0.0
    %5451 = vmatprep.subr.mxu0 0.0
    %5452 = vmatpush2.msra.mxu0 0.0
    %5453 = vmatprep.subr.mxu0 0.0
    %5454 = vmatpush2.msra.mxu0 0.0
    %5455 = vmatprep.subr.mxu0 0.0
    %5456 = vmatpush2.msra.mxu0 0.0
    %5457 = vmatprep.subr.mxu0 0.0
    %5458 = vmatpush2.msra.mxu0 0.0
    %5459 = vmatprep.subr.mxu0 0.0
    %5460 = vmatpush2.msra.mxu0 0.0
    %5461 = vmatprep.subr.mxu0 0.0
    %5462 = vmatpush2.msra.mxu0 0.0
    %5463 = vmatprep.subr.mxu0 0.0
    %5464 = vmatpush2.msra.mxu0 0.0
    %5465 = vmatprep.subr.mxu0 0.0
    %5466 = vmatpush2.msra.mxu0 0.0
    %5467 = vmatprep.subr.mxu0 0.0
    %5468 = vmatpush2.msra.mxu0 0.0
    %5469 = vmatprep.subr.mxu0 0.0
    %5470 = vmatpush2.msra.mxu0 0.0
    %5471 = vmatprep.subr.mxu0 0.0
    %5472 = vmatpush2.msra.mxu0 0.0
    %5473 = vmatprep.mubr.f32.mxu0 0.0
    %5474 = vmatmul.mubr.f32.gmra.mxu0 %v5407
    %v5475 = vpop.f32.mrf.mxu0
    %v5476 = vadd.f32 0.0, %v5475
    %v5477 = vpop.f32.mrf.mxu0
    %v5478 = vadd.f32 0.0, %v5477
    %5479 = vdwg.mxu0
    %v5480 = vadd.f32 %v5404, %v5476
    %v5481 = vadd.f32 %v5405, %v5478
    %v5482 = vxor.u32 %v5480, 2147483648
    %v5483 = vxor.u32 %v5481, 2147483648
    %v5484 = vmul.f32 %v5482, 1.442695
    %v5485 = vpow.pop %v5484
    %v5486 = vmul.f32 %v5483, 1.442695
    %v5487 = vpow.pop %v5486
    %v5488 = vadd.f32 %v5485, 1.0
    %v5489 = vadd.f32 %v5487, 1.0
    %v5490 = vrcp.pop %v5488
    %v5491 = vmul.f32 1.0, %v5490
    %v5492 = vrcp.pop %v5489
    %v5493 = vmul.f32 1.0, %v5492
    %v5494 = vtanh.pop %v5481
    %5496 = vrot.lane.b32.xlu0 %v5494, 48
    %v5497 = vpop.permute.xlu0 %5496
    %v5499 = vmul.f32 %v5491, %v5497
    %v5501 = vsel %vm405, %v5493, 0
    %5503 = vmatprep.subr.mxu0 0.0
    %5504 = vmatpush1.msra.mxu0 0.0
    %5505 = vmatprep.subr.mxu0 0.0
    %5506 = vmatpush1.msra.mxu0 0.0
    %5507 = vmatprep.subr.mxu0 0.0
    %5508 = vmatpush1.msra.mxu0 0.0
    %5509 = vmatprep.subr.mxu0 0.0
    %5510 = vmatpush1.msra.mxu0 0.0
    %5511 = vmatprep.subr.mxu0 0.0
    %5512 = vmatpush1.msra.mxu0 0.0
    %5513 = vmatprep.subr.mxu0 0.0
    %5514 = vmatpush1.msra.mxu0 0.0
    %5515 = vmatprep.subr.mxu0 0.0
    %5516 = vmatpush1.msra.mxu0 0.0
    %5517 = vmatprep.subr.mxu0 0.0
    %5518 = vmatpush1.msra.mxu0 0.0
    %5519 = vmatprep.subr.mxu0 0.0
    %5520 = vmatpush1.msra.mxu0 0.0
    %5521 = vmatprep.subr.mxu0 0.0
    %5522 = vmatpush1.msra.mxu0 0.0
    %5523 = vmatprep.subr.mxu0 0.0
    %5524 = vmatpush1.msra.mxu0 0.0
    %5525 = vmatprep.subr.mxu0 0.0
    %5526 = vmatpush1.msra.mxu0 0.0
    %5527 = vmatprep.subr.mxu0 0.0
    %5528 = vmatpush1.msra.mxu0 0.0
    %5529 = vmatprep.subr.mxu0 0.0
    %5530 = vmatpush1.msra.mxu0 0.0
    %5531 = vmatprep.subr.mxu0 %v83
    %5532 = vmatpush1.msra.mxu0 %v82
    %5533 = vmatprep.subr.mxu0 %v79
    %5534 = vmatpush1.msra.mxu0 %v78
    %5535 = vmatprep.subr.mxu0 0.0
    %5536 = vmatpush2.msra.mxu0 0.0
    %5537 = vmatprep.subr.mxu0 0.0
    %5538 = vmatpush2.msra.mxu0 0.0
    %5539 = vmatprep.subr.mxu0 0.0
    %5540 = vmatpush2.msra.mxu0 0.0
    %5541 = vmatprep.subr.mxu0 0.0
    %5542 = vmatpush2.msra.mxu0 0.0
    %5543 = vmatprep.subr.mxu0 0.0
    %5544 = vmatpush2.msra.mxu0 0.0
    %5545 = vmatprep.subr.mxu0 0.0
    %5546 = vmatpush2.msra.mxu0 0.0
    %5547 = vmatprep.subr.mxu0 0.0
    %5548 = vmatpush2.msra.mxu0 0.0
    %5549 = vmatprep.subr.mxu0 0.0
    %5550 = vmatpush2.msra.mxu0 0.0
    %5551 = vmatprep.subr.mxu0 0.0
    %5552 = vmatpush2.msra.mxu0 0.0
    %5553 = vmatprep.subr.mxu0 0.0
    %5554 = vmatpush2.msra.mxu0 0.0
    %5555 = vmatprep.subr.mxu0 0.0
    %5556 = vmatpush2.msra.mxu0 0.0
    %5557 = vmatprep.subr.mxu0 0.0
    %5558 = vmatpush2.msra.mxu0 0.0
    %5559 = vmatprep.subr.mxu0 0.0
    %5560 = vmatpush2.msra.mxu0 0.0
    %5561 = vmatprep.subr.mxu0 0.0
    %5562 = vmatpush2.msra.mxu0 0.0
    %5563 = vmatprep.subr.mxu0 0.0
    %5564 = vmatpush2.msra.mxu0 0.0
    %5565 = vmatprep.subr.mxu0 0.0
    %5566 = vmatpush2.msra.mxu0 0.0
    %5567 = vmatprep.mubr.f32.mxu0 0.0
    %5568 = vmatmul.mubr.f32.gmra.mxu0 %v5501
    %v5569 = vpop.f32.mrf.mxu0
    %v5570 = vadd.f32 0.0, %v5569
    %v5571 = vpop.f32.mrf.mxu0
    %v5572 = vadd.f32 0.0, %v5571
    %5573 = vdwg.mxu0
    %5574 = vmatprep.subr.mxu0 0.0
    %5575 = vmatpush1.msra.mxu0 0.0
    %5576 = vmatprep.subr.mxu0 0.0
    %5577 = vmatpush1.msra.mxu0 0.0
    %5578 = vmatprep.subr.mxu0 0.0
    %5579 = vmatpush1.msra.mxu0 0.0
    %5580 = vmatprep.subr.mxu0 0.0
    %5581 = vmatpush1.msra.mxu0 0.0
    %5582 = vmatprep.subr.mxu0 0.0
    %5583 = vmatpush1.msra.mxu0 0.0
    %5584 = vmatprep.subr.mxu0 0.0
    %5585 = vmatpush1.msra.mxu0 0.0
    %5586 = vmatprep.subr.mxu0 0.0
    %5587 = vmatpush1.msra.mxu0 0.0
    %5588 = vmatprep.subr.mxu0 0.0
    %5589 = vmatpush1.msra.mxu0 0.0
    %5590 = vmatprep.subr.mxu0 0.0
    %5591 = vmatpush1.msra.mxu0 0.0
    %5592 = vmatprep.subr.mxu0 0.0
    %5593 = vmatpush1.msra.mxu0 0.0
    %5594 = vmatprep.subr.mxu0 0.0
    %5595 = vmatpush1.msra.mxu0 0.0
    %5596 = vmatprep.subr.mxu0 0.0
    %5597 = vmatpush1.msra.mxu0 0.0
    %5598 = vmatprep.subr.mxu0 0.0
    %5599 = vmatpush1.msra.mxu0 0.0
    %5600 = vmatprep.subr.mxu0 0.0
    %5601 = vmatpush1.msra.mxu0 0.0
    %5602 = vmatprep.subr.mxu0 %v85
    %5603 = vmatpush1.msra.mxu0 %v84
    %5604 = vmatprep.subr.mxu0 %v81
    %5605 = vmatpush1.msra.mxu0 %v80
    %5606 = vmatprep.subr.mxu0 0.0
    %5607 = vmatpush2.msra.mxu0 0.0
    %5608 = vmatprep.subr.mxu0 0.0
    %5609 = vmatpush2.msra.mxu0 0.0
    %5610 = vmatprep.subr.mxu0 0.0
    %5611 = vmatpush2.msra.mxu0 0.0
    %5612 = vmatprep.subr.mxu0 0.0
    %5613 = vmatpush2.msra.mxu0 0.0
    %5614 = vmatprep.subr.mxu0 0.0
    %5615 = vmatpush2.msra.mxu0 0.0
    %5616 = vmatprep.subr.mxu0 0.0
    %5617 = vmatpush2.msra.mxu0 0.0
    %5618 = vmatprep.subr.mxu0 0.0
    %5619 = vmatpush2.msra.mxu0 0.0
    %5620 = vmatprep.subr.mxu0 0.0
    %5621 = vmatpush2.msra.mxu0 0.0
    %5622 = vmatprep.subr.mxu0 0.0
    %5623 = vmatpush2.msra.mxu0 0.0
    %5624 = vmatprep.subr.mxu0 0.0
    %5625 = vmatpush2.msra.mxu0 0.0
    %5626 = vmatprep.subr.mxu0 0.0
    %5627 = vmatpush2.msra.mxu0 0.0
    %5628 = vmatprep.subr.mxu0 0.0
    %5629 = vmatpush2.msra.mxu0 0.0
    %5630 = vmatprep.subr.mxu0 0.0
    %5631 = vmatpush2.msra.mxu0 0.0
    %5632 = vmatprep.subr.mxu0 0.0
    %5633 = vmatpush2.msra.mxu0 0.0
    %5634 = vmatprep.subr.mxu0 0.0
    %5635 = vmatpush2.msra.mxu0 0.0
    %5636 = vmatprep.subr.mxu0 0.0
    %5637 = vmatpush2.msra.mxu0 0.0
    %5638 = vmatprep.mubr.f32.mxu0 0.0
    %5639 = vmatmul.mubr.f32.gmra.mxu0 %v5501
    %v5640 = vpop.f32.mrf.mxu0
    %v5641 = vadd.f32 0.0, %v5640
    %v5642 = vpop.f32.mrf.mxu0
    %v5643 = vadd.f32 0.0, %v5642
    %5644 = vdwg.mxu0
    %v5645 = vsel %vm310, %v5491, %v5499
    %5646 = vmatprep.subr.mxu0 %v207
    %5647 = vmatpush1.msra.mxu0 %v206
    %5648 = vmatprep.subr.mxu0 %v199
    %5649 = vmatpush1.msra.mxu0 %v198
    %5650 = vmatprep.subr.mxu0 %v191
    %5651 = vmatpush1.msra.mxu0 %v190
    %5652 = vmatprep.subr.mxu0 %v183
    %5653 = vmatpush1.msra.mxu0 %v182
    %5654 = vmatprep.subr.mxu0 %v175
    %5655 = vmatpush1.msra.mxu0 %v174
    %5656 = vmatprep.subr.mxu0 %v167
    %5657 = vmatpush1.msra.mxu0 %v166
    %5658 = vmatprep.subr.mxu0 %v159
    %5659 = vmatpush1.msra.mxu0 %v158
    %5660 = vmatprep.subr.mxu0 %v151
    %5661 = vmatpush1.msra.mxu0 %v150
    %5662 = vmatprep.subr.mxu0 %v143
    %5663 = vmatpush1.msra.mxu0 %v142
    %5664 = vmatprep.subr.mxu0 %v135
    %5665 = vmatpush1.msra.mxu0 %v134
    %5666 = vmatprep.subr.mxu0 %v127
    %5667 = vmatpush1.msra.mxu0 %v126
    %5668 = vmatprep.subr.mxu0 %v119
    %5669 = vmatpush1.msra.mxu0 %v118
    %5670 = vmatprep.subr.mxu0 %v111
    %5671 = vmatpush1.msra.mxu0 %v110
    %5672 = vmatprep.subr.mxu0 %v103
    %5673 = vmatpush1.msra.mxu0 %v102
    %5674 = vmatprep.subr.mxu0 %v95
    %5675 = vmatpush1.msra.mxu0 %v94
    %5676 = vmatprep.subr.mxu0 %v87
    %5677 = vmatpush1.msra.mxu0 %v86
    %5678 = vmatprep.subr.mxu0 0.0
    %5679 = vmatpush2.msra.mxu0 0.0
    %5680 = vmatprep.subr.mxu0 0.0
    %5681 = vmatpush2.msra.mxu0 0.0
    %5682 = vmatprep.subr.mxu0 0.0
    %5683 = vmatpush2.msra.mxu0 0.0
    %5684 = vmatprep.subr.mxu0 0.0
    %5685 = vmatpush2.msra.mxu0 0.0
    %5686 = vmatprep.subr.mxu0 0.0
    %5687 = vmatpush2.msra.mxu0 0.0
    %5688 = vmatprep.subr.mxu0 0.0
    %5689 = vmatpush2.msra.mxu0 0.0
    %5690 = vmatprep.subr.mxu0 0.0
    %5691 = vmatpush2.msra.mxu0 0.0
    %5692 = vmatprep.subr.mxu0 0.0
    %5693 = vmatpush2.msra.mxu0 0.0
    %5694 = vmatprep.subr.mxu0 0.0
    %5695 = vmatpush2.msra.mxu0 0.0
    %5696 = vmatprep.subr.mxu0 0.0
    %5697 = vmatpush2.msra.mxu0 0.0
    %5698 = vmatprep.subr.mxu0 0.0
    %5699 = vmatpush2.msra.mxu0 0.0
    %5700 = vmatprep.subr.mxu0 0.0
    %5701 = vmatpush2.msra.mxu0 0.0
    %5702 = vmatprep.subr.mxu0 0.0
    %5703 = vmatpush2.msra.mxu0 0.0
    %5704 = vmatprep.subr.mxu0 0.0
    %5705 = vmatpush2.msra.mxu0 0.0
    %5706 = vmatprep.subr.mxu0 0.0
    %5707 = vmatpush2.msra.mxu0 0.0
    %5708 = vmatprep.subr.mxu0 0.0
    %5709 = vmatpush2.msra.mxu0 0.0
    %5710 = vmatprep.mubr.f32.mxu0 0.0
    %5711 = vmatmul.mubr.f32.gmra.mxu0 %v5645
    %v5712 = vpop.f32.mrf.mxu0
    %v5713 = vadd.f32 0.0, %v5712
    %v5714 = vpop.f32.mrf.mxu0
    %v5715 = vadd.f32 0.0, %v5714
    %5716 = vdwg.mxu0
    %5717 = vmatprep.subr.mxu0 %v209
    %5718 = vmatpush1.msra.mxu0 %v208
    %5719 = vmatprep.subr.mxu0 %v201
    %5720 = vmatpush1.msra.mxu0 %v200
    %5721 = vmatprep.subr.mxu0 %v193
    %5722 = vmatpush1.msra.mxu0 %v192
    %5723 = vmatprep.subr.mxu0 %v185
    %5724 = vmatpush1.msra.mxu0 %v184
    %5725 = vmatprep.subr.mxu0 %v177
    %5726 = vmatpush1.msra.mxu0 %v176
    %5727 = vmatprep.subr.mxu0 %v169
    %5728 = vmatpush1.msra.mxu0 %v168
    %5729 = vmatprep.subr.mxu0 %v161
    %5730 = vmatpush1.msra.mxu0 %v160
    %5731 = vmatprep.subr.mxu0 %v153
    %5732 = vmatpush1.msra.mxu0 %v152
    %5733 = vmatprep.subr.mxu0 %v145
    %5734 = vmatpush1.msra.mxu0 %v144
    %5735 = vmatprep.subr.mxu0 %v137
    %5736 = vmatpush1.msra.mxu0 %v136
    %5737 = vmatprep.subr.mxu0 %v129
    %5738 = vmatpush1.msra.mxu0 %v128
    %5739 = vmatprep.subr.mxu0 %v121
    %5740 = vmatpush1.msra.mxu0 %v120
    %5741 = vmatprep.subr.mxu0 %v113
    %5742 = vmatpush1.msra.mxu0 %v112
    %5743 = vmatprep.subr.mxu0 %v105
    %5744 = vmatpush1.msra.mxu0 %v104
    %5745 = vmatprep.subr.mxu0 %v97
    %5746 = vmatpush1.msra.mxu0 %v96
    %5747 = vmatprep.subr.mxu0 %v89
    %5748 = vmatpush1.msra.mxu0 %v88
    %5749 = vmatprep.subr.mxu0 0.0
    %5750 = vmatpush2.msra.mxu0 0.0
    %5751 = vmatprep.subr.mxu0 0.0
    %5752 = vmatpush2.msra.mxu0 0.0
    %5753 = vmatprep.subr.mxu0 0.0
    %5754 = vmatpush2.msra.mxu0 0.0
    %5755 = vmatprep.subr.mxu0 0.0
    %5756 = vmatpush2.msra.mxu0 0.0
    %5757 = vmatprep.subr.mxu0 0.0
    %5758 = vmatpush2.msra.mxu0 0.0
    %5759 = vmatprep.subr.mxu0 0.0
    %5760 = vmatpush2.msra.mxu0 0.0
    %5761 = vmatprep.subr.mxu0 0.0
    %5762 = vmatpush2.msra.mxu0 0.0
    %5763 = vmatprep.subr.mxu0 0.0
    %5764 = vmatpush2.msra.mxu0 0.0
    %5765 = vmatprep.subr.mxu0 0.0
    %5766 = vmatpush2.msra.mxu0 0.0
    %5767 = vmatprep.subr.mxu0 0.0
    %5768 = vmatpush2.msra.mxu0 0.0
    %5769 = vmatprep.subr.mxu0 0.0
    %5770 = vmatpush2.msra.mxu0 0.0
    %5771 = vmatprep.subr.mxu0 0.0
    %5772 = vmatpush2.msra.mxu0 0.0
    %5773 = vmatprep.subr.mxu0 0.0
    %5774 = vmatpush2.msra.mxu0 0.0
    %5775 = vmatprep.subr.mxu0 0.0
    %5776 = vmatpush2.msra.mxu0 0.0
    %5777 = vmatprep.subr.mxu0 0.0
    %5778 = vmatpush2.msra.mxu0 0.0
    %5779 = vmatprep.subr.mxu0 0.0
    %5780 = vmatpush2.msra.mxu0 0.0
    %5781 = vmatprep.mubr.f32.mxu0 0.0
    %5782 = vmatmul.mubr.f32.gmra.mxu0 %v5645
    %v5783 = vpop.f32.mrf.mxu0
    %v5784 = vadd.f32 0.0, %v5783
    %v5785 = vpop.f32.mrf.mxu0
    %v5786 = vadd.f32 0.0, %v5785
    %5787 = vdwg.mxu0
    %5788 = vmatprep.subr.mxu0 %v211
    %5789 = vmatpush1.msra.mxu0 %v210
    %5790 = vmatprep.subr.mxu0 %v203
    %5791 = vmatpush1.msra.mxu0 %v202
    %5792 = vmatprep.subr.mxu0 %v195
    %5793 = vmatpush1.msra.mxu0 %v194
    %5794 = vmatprep.subr.mxu0 %v187
    %5795 = vmatpush1.msra.mxu0 %v186
    %5796 = vmatprep.subr.mxu0 %v179
    %5797 = vmatpush1.msra.mxu0 %v178
    %5798 = vmatprep.subr.mxu0 %v171
    %5799 = vmatpush1.msra.mxu0 %v170
    %5800 = vmatprep.subr.mxu0 %v163
    %5801 = vmatpush1.msra.mxu0 %v162
    %5802 = vmatprep.subr.mxu0 %v155
    %5803 = vmatpush1.msra.mxu0 %v154
    %5804 = vmatprep.subr.mxu0 %v147
    %5805 = vmatpush1.msra.mxu0 %v146
    %5806 = vmatprep.subr.mxu0 %v139
    %5807 = vmatpush1.msra.mxu0 %v138
    %5808 = vmatprep.subr.mxu0 %v131
    %5809 = vmatpush1.msra.mxu0 %v130
    %5810 = vmatprep.subr.mxu0 %v123
    %5811 = vmatpush1.msra.mxu0 %v122
    %5812 = vmatprep.subr.mxu0 %v115
    %5813 = vmatpush1.msra.mxu0 %v114
    %5814 = vmatprep.subr.mxu0 %v107
    %5815 = vmatpush1.msra.mxu0 %v106
    %5816 = vmatprep.subr.mxu0 %v99
    %5817 = vmatpush1.msra.mxu0 %v98
    %5818 = vmatprep.subr.mxu0 %v91
    %5819 = vmatpush1.msra.mxu0 %v90
    %5820 = vmatprep.subr.mxu0 0.0
    %5821 = vmatpush2.msra.mxu0 0.0
    %5822 = vmatprep.subr.mxu0 0.0
    %5823 = vmatpush2.msra.mxu0 0.0
    %5824 = vmatprep.subr.mxu0 0.0
    %5825 = vmatpush2.msra.mxu0 0.0
    %5826 = vmatprep.subr.mxu0 0.0
    %5827 = vmatpush2.msra.mxu0 0.0
    %5828 = vmatprep.subr.mxu0 0.0
    %5829 = vmatpush2.msra.mxu0 0.0
    %5830 = vmatprep.subr.mxu0 0.0
    %5831 = vmatpush2.msra.mxu0 0.0
    %5832 = vmatprep.subr.mxu0 0.0
    %5833 = vmatpush2.msra.mxu0 0.0
    %5834 = vmatprep.subr.mxu0 0.0
    %5835 = vmatpush2.msra.mxu0 0.0
    %5836 = vmatprep.subr.mxu0 0.0
    %5837 = vmatpush2.msra.mxu0 0.0
    %5838 = vmatprep.subr.mxu0 0.0
    %5839 = vmatpush2.msra.mxu0 0.0
    %5840 = vmatprep.subr.mxu0 0.0
    %5841 = vmatpush2.msra.mxu0 0.0
    %5842 = vmatprep.subr.mxu0 0.0
    %5843 = vmatpush2.msra.mxu0 0.0
    %5844 = vmatprep.subr.mxu0 0.0
    %5845 = vmatpush2.msra.mxu0 0.0
    %5846 = vmatprep.subr.mxu0 0.0
    %5847 = vmatpush2.msra.mxu0 0.0
    %5848 = vmatprep.subr.mxu0 0.0
    %5849 = vmatpush2.msra.mxu0 0.0
    %5850 = vmatprep.subr.mxu0 0.0
    %5851 = vmatpush2.msra.mxu0 0.0
    %5852 = vmatprep.mubr.f32.mxu0 0.0
    %5853 = vmatmul.mubr.f32.gmra.mxu0 %v5645
    %v5854 = vpop.f32.mrf.mxu0
    %v5855 = vadd.f32 0.0, %v5854
    %v5856 = vpop.f32.mrf.mxu0
    %v5857 = vadd.f32 0.0, %v5856
    %5858 = vdwg.mxu0
    %5859 = vmatprep.subr.mxu0 %v213
    %5860 = vmatpush1.msra.mxu0 %v212
    %5861 = vmatprep.subr.mxu0 %v205
    %5862 = vmatpush1.msra.mxu0 %v204
    %5863 = vmatprep.subr.mxu0 %v197
    %5864 = vmatpush1.msra.mxu0 %v196
    %5865 = vmatprep.subr.mxu0 %v189
    %5866 = vmatpush1.msra.mxu0 %v188
    %5867 = vmatprep.subr.mxu0 %v181
    %5868 = vmatpush1.msra.mxu0 %v180
    %5869 = vmatprep.subr.mxu0 %v173
    %5870 = vmatpush1.msra.mxu0 %v172
    %5871 = vmatprep.subr.mxu0 %v165
    %5872 = vmatpush1.msra.mxu0 %v164
    %5873 = vmatprep.subr.mxu0 %v157
    %5874 = vmatpush1.msra.mxu0 %v156
    %5875 = vmatprep.subr.mxu0 %v149
    %5876 = vmatpush1.msra.mxu0 %v148
    %5877 = vmatprep.subr.mxu0 %v141
    %5878 = vmatpush1.msra.mxu0 %v140
    %5879 = vmatprep.subr.mxu0 %v133
    %5880 = vmatpush1.msra.mxu0 %v132
    %5881 = vmatprep.subr.mxu0 %v125
    %5882 = vmatpush1.msra.mxu0 %v124
    %5883 = vmatprep.subr.mxu0 %v117
    %5884 = vmatpush1.msra.mxu0 %v116
    %5885 = vmatprep.subr.mxu0 %v109
    %5886 = vmatpush1.msra.mxu0 %v108
    %5887 = vmatprep.subr.mxu0 %v101
    %5888 = vmatpush1.msra.mxu0 %v100
    %5889 = vmatprep.subr.mxu0 %v93
    %5890 = vmatpush1.msra.mxu0 %v92
    %5891 = vmatprep.subr.mxu0 0.0
    %5892 = vmatpush2.msra.mxu0 0.0
    %5893 = vmatprep.subr.mxu0 0.0
    %5894 = vmatpush2.msra.mxu0 0.0
    %5895 = vmatprep.subr.mxu0 0.0
    %5896 = vmatpush2.msra.mxu0 0.0
    %5897 = vmatprep.subr.mxu0 0.0
    %5898 = vmatpush2.msra.mxu0 0.0
    %5899 = vmatprep.subr.mxu0 0.0
    %5900 = vmatpush2.msra.mxu0 0.0
    %5901 = vmatprep.subr.mxu0 0.0
    %5902 = vmatpush2.msra.mxu0 0.0
    %5903 = vmatprep.subr.mxu0 0.0
    %5904 = vmatpush2.msra.mxu0 0.0
    %5905 = vmatprep.subr.mxu0 0.0
    %5906 = vmatpush2.msra.mxu0 0.0
    %5907 = vmatprep.subr.mxu0 0.0
    %5908 = vmatpush2.msra.mxu0 0.0
    %5909 = vmatprep.subr.mxu0 0.0
    %5910 = vmatpush2.msra.mxu0 0.0
    %5911 = vmatprep.subr.mxu0 0.0
    %5912 = vmatpush2.msra.mxu0 0.0
    %5913 = vmatprep.subr.mxu0 0.0
    %5914 = vmatpush2.msra.mxu0 0.0
    %5915 = vmatprep.subr.mxu0 0.0
    %5916 = vmatpush2.msra.mxu0 0.0
    %5917 = vmatprep.subr.mxu0 0.0
    %5918 = vmatpush2.msra.mxu0 0.0
    %5919 = vmatprep.subr.mxu0 0.0
    %5920 = vmatpush2.msra.mxu0 0.0
    %5921 = vmatprep.subr.mxu0 0.0
    %5922 = vmatpush2.msra.mxu0 0.0
    %5923 = vmatprep.mubr.f32.mxu0 0.0
    %5924 = vmatmul.mubr.f32.gmra.mxu0 %v5645
    %v5925 = vpop.f32.mrf.mxu0
    %v5926 = vadd.f32 0.0, %v5925
    %v5927 = vpop.f32.mrf.mxu0
    %v5928 = vadd.f32 0.0, %v5927
    %5929 = vdwg.mxu0
    %s5930 = scalar_lea.vmem %s1, 192
    %v5931 = vld [vmem:[%s5930] sm:$0xff]
    %v5932 = vld [vmem:[%s5930 + $0x8] sm:$0xff]
    %v5933 = vld [vmem:[%s5930 + $0x10] sm:$0xff]
    %v5934 = vld [vmem:[%s5930 + $0x18] sm:$0xff]
    %v5935 = vld [vmem:[#allocation4] sm:$0xff]
    %v5936 = vld [vmem:[#allocation4 + $0x8] sm:$0xff]
    %v5937 = vld [vmem:[#allocation4 + $0x10] sm:$0xff]
    %v5938 = vld [vmem:[#allocation4 + $0x18] sm:$0xff]
    %v5939 = vld [vmem:[#allocation5] sm:$0xff]
    %v5940 = vld [vmem:[#allocation5 + $0x8] sm:$0xff]
    %v5941 = vld [vmem:[#allocation5 + $0x10] sm:$0xff]
    %v5942 = vld [vmem:[#allocation5 + $0x18] sm:$0xff]
    %v5943 = vmul.f32 %v5570, %v5713
    %v5944 = vmul.f32 %v5572, %v5715
    %v5945 = vmul.f32 %v5641, %v5784
    %v5946 = vmul.f32 %v5643, %v5786
    %v5947 = vmul.f32 %v5943, %v5935
    %v5948 = vmul.f32 %v5944, %v5936
    %v5949 = vmul.f32 %v5855, %v5931
    %v5950 = vmul.f32 %v5857, %v5932
    %v5951 = vadd.f32 %v5947, %v5949
    %v5952 = vadd.f32 %v5948, %v5950
    %v5953 = vmul.f32 %v5943, %v5937
    %v5954 = vmul.f32 %v5944, %v5938
    %v5955 = vmul.f32 %v5855, %v5933
    %v5956 = vmul.f32 %v5857, %v5934
    %v5957 = vadd.f32 %v5953, %v5955
    %v5958 = vadd.f32 %v5954, %v5956
    %v5959 = vmul.f32 %v5945, %v5939
    %v5960 = vmul.f32 %v5946, %v5940
    %v5961 = vmul.f32 %v5926, %v5931
    %v5962 = vmul.f32 %v5928, %v5932
    %v5963 = vadd.f32 %v5959, %v5961
    %v5964 = vadd.f32 %v5960, %v5962
    %v5965 = vmul.f32 %v5945, %v5941
    %v5966 = vmul.f32 %v5946, %v5942
    %v5967 = vmul.f32 %v5926, %v5933
    %v5968 = vmul.f32 %v5928, %v5934
    %v5969 = vadd.f32 %v5965, %v5967
    %v5970 = vadd.f32 %v5966, %v5968
    %v5971 = vmul.f32 %v5951, %v5951
    %v5972 = vmul.f32 %v5952, %v5952
    %v5973 = vmul.f32 %v5957, %v5957
    %v5974 = vmul.f32 %v5958, %v5958
    %v5975 = vadd.f32 %v5971, %v5973
    %v5976 = vadd.f32 %v5972, %v5974
    %v5977 = vmul.f32 %v5963, %v5963
    %v5978 = vmul.f32 %v5964, %v5964
    %v5979 = vmul.f32 %v5969, %v5969
    %v5980 = vmul.f32 %v5970, %v5970
    %v5981 = vadd.f32 %v5977, %v5979
    %v5982 = vadd.f32 %v5978, %v5980
    %5983 = vmatprep.subr.mxu0 0.0
    %5984 = vmatpush1.msra.mxu0 %v229
    %5985 = vmatprep.subr.mxu0 0.0
    %5986 = vmatpush1.msra.mxu0 %v228
    %5987 = vmatprep.subr.mxu0 0.0
    %5988 = vmatpush1.msra.mxu0 %v227
    %5989 = vmatprep.subr.mxu0 0.0
    %5990 = vmatpush1.msra.mxu0 %v226
    %5991 = vmatprep.subr.mxu0 0.0
    %5992 = vmatpush1.msra.mxu0 %v225
    %5993 = vmatprep.subr.mxu0 0.0
    %5994 = vmatpush1.msra.mxu0 %v224
    %5995 = vmatprep.subr.mxu0 0.0
    %5996 = vmatpush1.msra.mxu0 %v223
    %5997 = vmatprep.subr.mxu0 0.0
    %5998 = vmatpush1.msra.mxu0 %v222
    %5999 = vmatprep.subr.mxu0 0.0
    %6000 = vmatpush1.msra.mxu0 %v221
    %6001 = vmatprep.subr.mxu0 0.0
    %6002 = vmatpush1.msra.mxu0 %v220
    %6003 = vmatprep.subr.mxu0 0.0
    %6004 = vmatpush1.msra.mxu0 %v219
    %6005 = vmatprep.subr.mxu0 0.0
    %6006 = vmatpush1.msra.mxu0 %v218
    %6007 = vmatprep.subr.mxu0 0.0
    %6008 = vmatpush1.msra.mxu0 %v217
    %6009 = vmatprep.subr.mxu0 0.0
    %6010 = vmatpush1.msra.mxu0 %v216
    %6011 = vmatprep.subr.mxu0 0.0
    %6012 = vmatpush1.msra.mxu0 %v215
    %6013 = vmatprep.subr.mxu0 0.0
    %6014 = vmatpush1.msra.mxu0 %v214
    %6015 = vmatprep.subr.mxu0 0.0
    %6016 = vmatpush2.msra.mxu0 %v245
    %6017 = vmatprep.subr.mxu0 0.0
    %6018 = vmatpush2.msra.mxu0 %v244
    %6019 = vmatprep.subr.mxu0 0.0
    %6020 = vmatpush2.msra.mxu0 %v243
    %6021 = vmatprep.subr.mxu0 0.0
    %6022 = vmatpush2.msra.mxu0 %v242
    %6023 = vmatprep.subr.mxu0 0.0
    %6024 = vmatpush2.msra.mxu0 %v241
    %6025 = vmatprep.subr.mxu0 0.0
    %6026 = vmatpush2.msra.mxu0 %v240
    %6027 = vmatprep.subr.mxu0 0.0
    %6028 = vmatpush2.msra.mxu0 %v239
    %6029 = vmatprep.subr.mxu0 0.0
    %6030 = vmatpush2.msra.mxu0 %v238
    %6031 = vmatprep.subr.mxu0 0.0
    %6032 = vmatpush2.msra.mxu0 %v237
    %6033 = vmatprep.subr.mxu0 0.0
    %6034 = vmatpush2.msra.mxu0 %v236
    %6035 = vmatprep.subr.mxu0 0.0
    %6036 = vmatpush2.msra.mxu0 %v235
    %6037 = vmatprep.subr.mxu0 0.0
    %6038 = vmatpush2.msra.mxu0 %v234
    %6039 = vmatprep.subr.mxu0 0.0
    %6040 = vmatpush2.msra.mxu0 %v233
    %6041 = vmatprep.subr.mxu0 0.0
    %6042 = vmatpush2.msra.mxu0 %v232
    %6043 = vmatprep.subr.mxu0 0.0
    %6044 = vmatpush2.msra.mxu0 %v231
    %6045 = vmatprep.subr.mxu0 0.0
    %6046 = vmatpush2.msra.mxu0 %v230
    %6047 = vmatprep.mubr.f32.mxu0 %v5976
    %6048 = vmatmul.mubr.f32.gmra.mxu0 %v5975
    %v6049 = vpop.f32.mrf.mxu0
    %v6050 = vadd.f32 %v291, %v6049
    %v6051 = vpop.f32.mrf.mxu0
    %6052 = vdwg.mxu0
    %6053 = vmatprep.subr.mxu0 0.0
    %6054 = vmatpush1.msra.mxu0 %v261
    %6055 = vmatprep.subr.mxu0 0.0
    %6056 = vmatpush1.msra.mxu0 %v260
    %6057 = vmatprep.subr.mxu0 0.0
    %6058 = vmatpush1.msra.mxu0 %v259
    %6059 = vmatprep.subr.mxu0 0.0
    %6060 = vmatpush1.msra.mxu0 %v258
    %6061 = vmatprep.subr.mxu0 0.0
    %6062 = vmatpush1.msra.mxu0 %v257
    %6063 = vmatprep.subr.mxu0 0.0
    %6064 = vmatpush1.msra.mxu0 %v256
    %6065 = vmatprep.subr.mxu0 0.0
    %6066 = vmatpush1.msra.mxu0 %v255
    %6067 = vmatprep.subr.mxu0 0.0
    %6068 = vmatpush1.msra.mxu0 %v254
    %6069 = vmatprep.subr.mxu0 0.0
    %6070 = vmatpush1.msra.mxu0 %v253
    %6071 = vmatprep.subr.mxu0 0.0
    %6072 = vmatpush1.msra.mxu0 %v252
    %6073 = vmatprep.subr.mxu0 0.0
    %6074 = vmatpush1.msra.mxu0 %v251
    %6075 = vmatprep.subr.mxu0 0.0
    %6076 = vmatpush1.msra.mxu0 %v250
    %6077 = vmatprep.subr.mxu0 0.0
    %6078 = vmatpush1.msra.mxu0 %v249
    %6079 = vmatprep.subr.mxu0 0.0
    %6080 = vmatpush1.msra.mxu0 %v248
    %6081 = vmatprep.subr.mxu0 0.0
    %6082 = vmatpush1.msra.mxu0 %v247
    %6083 = vmatprep.subr.mxu0 0.0
    %6084 = vmatpush1.msra.mxu0 %v246
    %6085 = vmatprep.subr.mxu0 0.0
    %6086 = vmatpush2.msra.mxu0 %v277
    %6087 = vmatprep.subr.mxu0 0.0
    %6088 = vmatpush2.msra.mxu0 %v276
    %6089 = vmatprep.subr.mxu0 0.0
    %6090 = vmatpush2.msra.mxu0 %v275
    %6091 = vmatprep.subr.mxu0 0.0
    %6092 = vmatpush2.msra.mxu0 %v274
    %6093 = vmatprep.subr.mxu0 0.0
    %6094 = vmatpush2.msra.mxu0 %v273
    %6095 = vmatprep.subr.mxu0 0.0
    %6096 = vmatpush2.msra.mxu0 %v272
    %6097 = vmatprep.subr.mxu0 0.0
    %6098 = vmatpush2.msra.mxu0 %v271
    %6099 = vmatprep.subr.mxu0 0.0
    %6100 = vmatpush2.msra.mxu0 %v270
    %6101 = vmatprep.subr.mxu0 0.0
    %6102 = vmatpush2.msra.mxu0 %v269
    %6103 = vmatprep.subr.mxu0 0.0
    %6104 = vmatpush2.msra.mxu0 %v268
    %6105 = vmatprep.subr.mxu0 0.0
    %6106 = vmatpush2.msra.mxu0 %v267
    %6107 = vmatprep.subr.mxu0 0.0
    %6108 = vmatpush2.msra.mxu0 %v266
    %6109 = vmatprep.subr.mxu0 0.0
    %6110 = vmatpush2.msra.mxu0 %v265
    %6111 = vmatprep.subr.mxu0 0.0
    %6112 = vmatpush2.msra.mxu0 %v264
    %6113 = vmatprep.subr.mxu0 0.0
    %6114 = vmatpush2.msra.mxu0 %v263
    %6115 = vmatprep.subr.mxu0 0.0
    %6116 = vmatpush2.msra.mxu0 %v262
    %6117 = vmatprep.mubr.f32.mxu0 %v5982
    %6118 = vmatmul.mubr.f32.gmra.mxu0 %v5981
    %v6119 = vpop.f32.mrf.mxu0
    %v6120 = vadd.f32 %v6050, %v6119
    %v6121 = vpop.f32.mrf.mxu0
    %6122 = vdwg.mxu0
    %v6123 = vtanh.pop %v6120
    %v6125 = vsel %vm310, %v6123, 0
    %6127 = vmatprep.subr.mxu0 0.0
    %6128 = vmatpush1.msra.mxu0 0.0
    %6129 = vmatprep.subr.mxu0 0.0
    %6130 = vmatpush1.msra.mxu0 0.0
    %6131 = vmatprep.subr.mxu0 0.0
    %6132 = vmatpush1.msra.mxu0 0.0
    %6133 = vmatprep.subr.mxu0 0.0
    %6134 = vmatpush1.msra.mxu0 0.0
    %6135 = vmatprep.subr.mxu0 0.0
    %6136 = vmatpush1.msra.mxu0 0.0
    %6137 = vmatprep.subr.mxu0 0.0
    %6138 = vmatpush1.msra.mxu0 0.0
    %6139 = vmatprep.subr.mxu0 0.0
    %6140 = vmatpush1.msra.mxu0 0.0
    %6141 = vmatprep.subr.mxu0 0.0
    %6142 = vmatpush1.msra.mxu0 0.0
    %6143 = vmatprep.subr.mxu0 0.0
    %6144 = vmatpush1.msra.mxu0 %v285
    %6145 = vmatprep.subr.mxu0 0.0
    %6146 = vmatpush1.msra.mxu0 %v284
    %6147 = vmatprep.subr.mxu0 0.0
    %6148 = vmatpush1.msra.mxu0 %v283
    %6149 = vmatprep.subr.mxu0 0.0
    %6150 = vmatpush1.msra.mxu0 %v282
    %6151 = vmatprep.subr.mxu0 0.0
    %6152 = vmatpush1.msra.mxu0 %v281
    %6153 = vmatprep.subr.mxu0 0.0
    %6154 = vmatpush1.msra.mxu0 %v280
    %6155 = vmatprep.subr.mxu0 0.0
    %6156 = vmatpush1.msra.mxu0 %v279
    %6157 = vmatprep.subr.mxu0 0.0
    %6158 = vmatpush1.msra.mxu0 %v278
    %6159 = vmatprep.subr.mxu0 0.0
    %6160 = vmatpush2.msra.mxu0 0.0
    %6161 = vmatprep.subr.mxu0 0.0
    %6162 = vmatpush2.msra.mxu0 0.0
    %6163 = vmatprep.subr.mxu0 0.0
    %6164 = vmatpush2.msra.mxu0 0.0
    %6165 = vmatprep.subr.mxu0 0.0
    %6166 = vmatpush2.msra.mxu0 0.0
    %6167 = vmatprep.subr.mxu0 0.0
    %6168 = vmatpush2.msra.mxu0 0.0
    %6169 = vmatprep.subr.mxu0 0.0
    %6170 = vmatpush2.msra.mxu0 0.0
    %6171 = vmatprep.subr.mxu0 0.0
    %6172 = vmatpush2.msra.mxu0 0.0
    %6173 = vmatprep.subr.mxu0 0.0
    %6174 = vmatpush2.msra.mxu0 0.0
    %6175 = vmatprep.subr.mxu0 0.0
    %6176 = vmatpush2.msra.mxu0 0.0
    %6177 = vmatprep.subr.mxu0 0.0
    %6178 = vmatpush2.msra.mxu0 0.0
    %6179 = vmatprep.subr.mxu0 0.0
    %6180 = vmatpush2.msra.mxu0 0.0
    %6181 = vmatprep.subr.mxu0 0.0
    %6182 = vmatpush2.msra.mxu0 0.0
    %6183 = vmatprep.subr.mxu0 0.0
    %6184 = vmatpush2.msra.mxu0 0.0
    %6185 = vmatprep.subr.mxu0 0.0
    %6186 = vmatpush2.msra.mxu0 0.0
    %6187 = vmatprep.subr.mxu0 0.0
    %6188 = vmatpush2.msra.mxu0 0.0
    %6189 = vmatprep.subr.mxu0 0.0
    %6190 = vmatpush2.msra.mxu0 0.0
    %6191 = vmatprep.mubr.f32.mxu0 0.0
    %6192 = vmatmul.mubr.f32.gmra.mxu0 %v6125
    %v6193 = vpop.f32.mrf.mxu0
    %v6194 = vadd.f32 %v298, %v6193
    %v6195 = vpop.f32.mrf.mxu0
    %6196 = vdwg.mxu0
    %v6197 = vsub.f32 1.0, %v5491
    %v6198 = vmul.f32 %v6197, %v5402
    %6199 = vrot.lane.b32.xlu0 %v5494, 112
    %v6200 = vpop.permute.xlu0 %6199
    %v6202 = vmul.f32 %v5491, %v6200
    %v6203 = vadd.f32 %v6198, %v6202
    %v6204 = vadd.f32 %v6203, %v6194
    %v6205 = vxor.u32 %v6204, 2147483648
    %v6206 = vmul.f32 %v6205, 1.442695
    %v6207 = vpow.pop %v6206
    %v6208 = vadd.f32 %v6207, 1.0
    %v6209 = vrcp.pop %v6208
    %v6210 = vmul.f32 1.0, %v6209
    %v6211 = vmul.f32 %v6210, %v6123
    %s6212 = scalar_lea.vmem [#allocation9], 48
    %6213 = vst.msk [vmem:[%s6212] sm:$0xff] %vm310, %v6211
    %6214 = vst.msk [vmem:[#allocation2] sm:$0xff] %vm306, %v6211
    %6215 = vst [vmem:[#allocation4] sm:$0xff] %v5951
    %6216 = vst [vmem:[#allocation4 + $0x8] sm:$0xff] %v5952
    %6217 = vst [vmem:[#allocation4 + $0x10] sm:$0xff] %v5957
    %6218 = vst [vmem:[#allocation4 + $0x18] sm:$0xff] %v5958
    %6220 = vrot.lane.b32.xlu0 %v6211, 96
    %v6221 = vpop.permute.xlu0 %6220
    %6223 = vst.msk [vmem:[#allocation3 - $0x6] sm:$0xc0] %vm1127, %v6221
    %6224 = vst.msk [vmem:[#allocation3 + $0x2] sm:$0x3f] %vm1129, %v6221
    %v6229 = vrot.slane %v5963, 6
    %v6230 = vrot.slane %v5964, 6
    %v6231 = vrot.slane %v5969, 6
    %v6232 = vrot.slane %v5970, 6
    %6237 = vst [vmem:[#allocation5] sm:$0x3] %v6229
    %6238 = vst [vmem:[#allocation5 + $0x8] sm:$0x3] %v6230
    %6239 = vst [vmem:[#allocation5 + $0x10] sm:$0x3] %v6231
    %6240 = vst [vmem:[#allocation5 + $0x18] sm:$0x3] %v6232
    %6241 = vst [vmem:[#allocation5] sm:$0xfc] %v6229
    %6242 = vst [vmem:[#allocation5 + $0x8] sm:$0xfc] %v6230
    %6243 = vst [vmem:[#allocation5 + $0x10] sm:$0xfc] %v6231
    %6244 = vst [vmem:[#allocation5 + $0x18] sm:$0xfc] %v6232
    // Predicated region
    $region46: #{tpu_custom_call.1} parent=1 // pred_check
      _
    $region47: #{tpu_custom_call.1} parent=1 // pred_check_branch
      %6246 = sbr.rel (0) target = $region49
    $region48: #{tpu_custom_call.1} parent=1 // pred_region
      %s6248 = ssub.s32 896, 896
      %6249 = vsyncadd [#allocation8], %s6248
      %s6250 = sshll.u32 [#allocation9], 4
      %s6251 = int_to_ptr.vmem [resolvable:$true] %s6250
      %6256 = dma.vmem_to_hbm [thread:$0]  %s6251, 896, %s9, [#allocation8], 128, 128, 8
    $region49: #{tpu_custom_call.1} parent=1 // pred_fallthru
      _
    // Predicated region
    $region50: #{tpu_custom_call.1} parent=1 // pred_check
      _
    $region51: #{tpu_custom_call.1} parent=1 // pred_check_branch
      %6258 = sbr.rel (0) target = $region53
    $region52: #{tpu_custom_call.1} parent=1 // pred_region
      %6259 = dma.done [#allocation8], 896
    $region53: #{tpu_custom_call.1} parent=1 // pred_fallthru
      _
    %6260 = vsyncpa [#allocation7], 1
    %6261 = vsyncpa [#allocation8], 1

</llo_original>
